<compile_context>
chip_gen: v7x
topology: tpu7x:2x2x1
jax: 0.10.0
libtpu: 0.0.40
codegen_flags: <defaults>
</compile_context>

<pallas_src>
import functools

import jax
import jax.numpy as jnp
from jax import lax
from jax.experimental import pallas as pl
from jax.experimental.pallas import tpu as pltpu

# ----------------------------- configuration -------------------------------
EMBED_DIM = 256        # stands in for embed_dim = 4096
PROJ_DIM = 256         # stands in for projection_dim = 4096
NUM_HEADS = 4          # stands in for 64 heads (head_dim = 64, as original)
HEAD_DIM = EMBED_DIM // NUM_HEADS
TEXT_DIM = 256         # stands in for text_embed_dim = 768
VIDEO_DIM = 256        # stands in for video_embed_dim = 768
AUDIO_DIM = 128        # audio_embed_dim = 128 (matches LSTM input_size=128)
LSTM_HIDDEN = 128      # hard-coded in the module
LN_EPS = 1e-6
MISC_W = 4 * LSTM_HIDDEN     # 512: lane width of the packed misc (bias) slab


# ------------------------------ kernel helpers ------------------------------
def _ln(x, g, b):
    mu = jnp.mean(x, axis=-1, keepdims=True)
    var = jnp.mean(jnp.square(x - mu), axis=-1, keepdims=True)
    return (x - mu) * lax.rsqrt(var + LN_EPS) * g + b


def _mm(a, b):
    # bf16 MXU operands, f32 accumulation.  Weights are already bf16-resident
    # (astype is a no-op for them); only activations actually get cast.
    return jnp.dot(a.astype(jnp.bfloat16), b.astype(jnp.bfloat16),
                   preferred_element_type=jnp.float32)


def _gated(x, w1, b1, w2, b2):
    # Gated embedding unit: y * sigmoid(W2 y + b2), y = W1 x + b1.
    y = _mm(x, w1) + b1
    return y * jax.nn.sigmoid(_mm(y, w2) + b2)


# ------------------------------- fused kernel -------------------------------
def _mult_fused_kernel(*refs, cfg):
    """Entire MULTModel forward on VMEM-resident data (single grid point)."""
    modalities, batch, lstm_t, lstm_rows, misc_off, w_off = cfg
    n_mod = len(modalities)
    seqs = [s for _, s in modalities]
    l_tot = batch * sum(seqs)
    D, H, Dh, HH, P = EMBED_DIM, NUM_HEADS, HEAD_DIM, LSTM_HIDDEN, PROJ_DIM
    has_audio = any(name == 'A' for name, _ in modalities)

    it = iter(refs)
    nxt = lambda: next(it)
    mod_in = [nxt() for _ in range(n_mod)]
    misc_ref = nxt()                       # (rows, 512) f32: biases/LN/valid
    w_ref = nxt()                          # (rows, 256) bf16: all weight mats
    lstm_w_ref = nxt() if has_audio else None   # (256, 512) bf16: [Wih; Whh]
    out_ref = nxt()
    middle_ref = nxt()
    xg_ref = nxt() if has_audio else None  # VMEM scratch for hoisted LSTM gates

    def mrow(name):
        o, r, c = misc_off[name]
        return misc_ref[o:o + r, 0:c]

    def wmat(name):
        o, r, _ = w_off[name]
        return w_ref[o:o + r, :]

    # ---- per-modality token features (LSTM only for the audio modality) ----
    slabs = []
    for idx, (name, _seq) in enumerate(modalities):
        if name == 'A':
            # Single-layer LSTM, PyTorch gate order (i, f, g, o), last hidden.
            # x @ W_ih hoisted out of the recurrence into one bf16 MXU call,
            # staged in VMEM scratch; one bf16 h @ W_hh per serial step.
            # TODO(synk): lstm 'b' is assumed to be b_ih + b_hh pre-summed.
            wih = lstm_w_ref[0:AUDIO_DIM, :]
            whh = lstm_w_ref[AUDIO_DIM:AUDIO_DIM + HH, :]
            xg_ref[...] = (jnp.dot(mod_in[idx][...].astype(jnp.bfloat16), wih,
                                   preferred_element_type=jnp.float32)
                           + mrow('lstm_b'))                 # (T*rows, 4H)
            h = jnp.zeros((lstm_rows, HH), jnp.float32)
            c = jnp.zeros((lstm_rows, HH), jnp.float32)
            for t in range(lstm_t):                          # tiny static trip
                gates = (xg_ref[t * lstm_rows:(t + 1) * lstm_rows, :]
                         + jnp.dot(h.astype(jnp.bfloat16), whh,
                                   preferred_element_type=jnp.float32))
                i_g = jax.nn.sigmoid(gates[:, 0:HH])
                f_g = jax.nn.sigmoid(gates[:, HH:2 * HH])
                g_g = jnp.tanh(gates[:, 2 * HH:3 * HH])
                o_g = jax.nn.sigmoid(gates[:, 3 * HH:4 * HH])
                c = f_g * c + i_g * g_g
                h = o_g * jnp.tanh(c)
            feat = h                                         # (B*S_A, 128)
        else:
            feat = mod_in[idx][...]
        y = _gated(feat, wmat(f'tok_w1_{idx}'), mrow(f'tok_b1_{idx}'),
                   wmat(f'tok_w2_{idx}'), mrow(f'tok_b2_{idx}'))
        slabs.append(_ln(y, mrow(f'tok_g_{idx}'), mrow(f'tok_be_{idx}')))

    # Tokens in modality-major, batch-major order.
    x = slabs[0] if n_mod == 1 else jnp.concatenate(slabs, axis=0)  # (L_tot, D)

    # ---- in-kernel mask bookkeeping from the O(L) validity row --------------
    def seg_ids(idx2d):
        """Flat token index -> (batch_id, modality_id), elementwise (no div)."""
        bid = jnp.zeros(idx2d.shape, jnp.int32)
        mid = jnp.zeros(idx2d.shape, jnp.int32)
        off = 0
        for m_i, s in enumerate(seqs):
            for b in range(batch):
                lo = off + b * s
                seg = (idx2d >= lo) & (idx2d < lo + s)
                bid = jnp.where(seg, b, bid)
                mid = jnp.where(seg, m_i, mid)
            off += batch * s
        return bid, mid

    valid_b = mrow('valid') > 0.5                       # (1, L_tot) bool

    row_t = lax.broadcasted_iota(jnp.int32, (l_tot, l_tot), 0)
    col_t = lax.broadcasted_iota(jnp.int32, (l_tot, l_tot), 1)
    row_bid, _ = seg_ids(row_t)
    col_bid, _ = seg_ids(col_t)
    attn_ok = (row_bid == col_bid) & valid_b            # (L, L) bool
    attn_okf = attn_ok.astype(jnp.float32)
    attn_bias = jnp.where(attn_ok, 0.0, -1e9)

    n_rows = n_mod * batch
    pr = lax.broadcasted_iota(jnp.int32, (n_rows, l_tot), 0)
    pc = lax.broadcasted_iota(jnp.int32, (n_rows, l_tot), 1)
    pc_bid, pc_mid = seg_ids(pc)
    pr_mid = jnp.zeros(pr.shape, jnp.int32)
    pr_bid = jnp.zeros(pr.shape, jnp.int32)
    for m_i in range(n_mod):
        for b in range(batch):
            hit = pr == (m_i * batch + b)
            pr_mid = jnp.where(hit, m_i, pr_mid)
            pr_bid = jnp.where(hit, b, pr_bid)
    sel = ((pr_mid == pc_mid) & (pr_bid == pc_bid) & valid_b).astype(jnp.float32)
    denom = jnp.maximum(jnp.sum(sel, axis=-1, keepdims=True), 1.0)
    pool_w = sel / denom                                # (n_mod*B, L_tot)

    # ---- fusion transformer: pre-norm block (depth=1, mlp_ratio=1) + final LN
    # TODO(synk): FusionTransformer internals are not in the provided source;
    # standard ViT-style block with key-padding masking is assumed.
    scale = 1.0 / (Dh ** 0.5)
    y = _ln(x, mrow('ln1g'), mrow('ln1b'))
    yb = y.astype(jnp.bfloat16)
    q = jnp.dot(yb, wmat('wq'), preferred_element_type=jnp.float32) + mrow('bq')
    k = jnp.dot(yb, wmat('wk'), preferred_element_type=jnp.float32) + mrow('bk')
    v = jnp.dot(yb, wmat('wv'), preferred_element_type=jnp.float32) + mrow('bv')
    ctx_heads = []
    for hd in range(H):
        sl = slice(hd * Dh, (hd + 1) * Dh)
        qh = q[:, sl].astype(jnp.bfloat16)
        kh = k[:, sl].astype(jnp.bfloat16)
        vh = v[:, sl].astype(jnp.bfloat16)
        logits = lax.dot_general(qh, kh, (((1,), (1,)), ((), ())),
                                 preferred_element_type=jnp.float32)
        logits = logits * scale + attn_bias
        logits = logits - jnp.max(logits, axis=-1, keepdims=True)
        p = jnp.exp(logits) * attn_okf      # guard: no cross-batch leakage
        p = p * pl.reciprocal(
            jnp.maximum(jnp.sum(p, axis=-1, keepdims=True), 1e-20), approx=True)
        ctx_heads.append(jnp.dot(p.astype(jnp.bfloat16), vh,
                                 preferred_element_type=jnp.float32))
    ctx = jnp.concatenate(ctx_heads, axis=1)            # (L_tot, H*Dh)
    x = x + _mm(ctx, wmat('wo')) + mrow('bo')
    y = _ln(x, mrow('ln2g'), mrow('ln2b'))
    h1 = jax.nn.gelu(_mm(y, wmat('wfc1')) + mrow('bfc1'), approximate=True)
    x = x + _mm(h1, wmat('wfc2')) + mrow('bfc2')
    fused = _ln(x, mrow('lnfg'), mrow('lnfb'))          # (L_tot, D)

    # ---- masked-mean pooling (one matmul) + gated projections + average ----
    # TODO(synk): per-modality 'embed' is assumed to be masked mean pooling.
    pooled = _mm(pool_w, fused)                         # (n_mod*B, D)
    mid = jnp.zeros((batch, P), jnp.float32)
    for idx in range(n_mod):
        emb = pooled[idx * batch:(idx + 1) * batch, :]  # (B, D)
        z = _gated(emb, wmat(f'proj_w1_{idx}'), mrow(f'proj_b1_{idx}'),
                   wmat(f'proj_w2_{idx}'), mrow(f'proj_b2_{idx}'))
        if n_mod > 1:   # normalize_embeddings only when fusing several modalities
            z = z * lax.rsqrt(jnp.sum(z * z, axis=-1, keepdims=True) + 1e-12)
        mid = mid + z
    mid = mid * (1.0 / n_mod)
    middle_ref[...] = mid

    # ---- prediction head (out_dropout = 0); out_layer fused as lane reduction
    hz = jnp.maximum(_mm(mid, wmat('hw1')) + mrow('hb1'), 0.0)
    hz = _mm(hz, wmat('hw2')) + mrow('hb2') + mid
    out_ref[...] = (jnp.sum(hz * mrow('hw3'), axis=-1, keepdims=True)
                    + mrow('hb3'))


# --------------------------- parameter setup --------------------------------
def init_params(key):
    keys = iter(jax.random.split(key, 64))
    nk = lambda: next(keys)
    D, P = EMBED_DIM, PROJ_DIM

    def dense_bf16(din, dout, scale=0.02):
        # Weights are bf16-resident (cast once here); biases/LN stay f32.
        return (scale * jax.random.normal(nk(), (din, dout),
                                          dtype=jnp.float32)).astype(jnp.bfloat16)

    def gated(din, dout):
        return dict(w1=dense_bf16(din, dout), b1=jnp.zeros((1, dout), jnp.float32),
                    w2=dense_bf16(dout, dout), b2=jnp.zeros((1, dout), jnp.float32))

    def norm(dim):
        return dict(g=jnp.ones((1, dim), jnp.float32),
                    b=jnp.zeros((1, dim), jnp.float32))

    p = {}
    p['lstm'] = dict(
        wih=dense_bf16(AUDIO_DIM, 4 * LSTM_HIDDEN, 0.05),
        whh=dense_bf16(LSTM_HIDDEN, 4 * LSTM_HIDDEN, 0.05),
        b=jnp.zeros((1, 4 * LSTM_HIDDEN), jnp.float32))      # = b_ih + b_hh
    p['text_token_proj'] = gated(TEXT_DIM, D)
    p['video_token_proj'] = gated(VIDEO_DIM, D)
    p['audio_token_proj'] = gated(LSTM_HIDDEN, D)
    p['text_norm'], p['video_norm'], p['audio_norm'] = norm(D), norm(D), norm(D)
    # Attention weights restacked across heads: (D, H*Dh) / (H*Dh, D).
    p['fusion'] = dict(
        ln1_g=jnp.ones((1, D), jnp.float32), ln1_b=jnp.zeros((1, D), jnp.float32),
        wq=dense_bf16(D, D), bq=jnp.zeros((1, D), jnp.float32),
        wk=dense_bf16(D, D), bk=jnp.zeros((1, D), jnp.float32),
        wv=dense_bf16(D, D), bv=jnp.zeros((1, D), jnp.float32),
        wo=dense_bf16(D, D), bo=jnp.zeros((1, D), jnp.float32),
        ln2_g=jnp.ones((1, D), jnp.float32), ln2_b=jnp.zeros((1, D), jnp.float32),
        wfc1=dense_bf16(D, D), bfc1=jnp.zeros((1, D), jnp.float32),
        wfc2=dense_bf16(D, D), bfc2=jnp.zeros((1, D), jnp.float32),
        lnf_g=jnp.ones((1, D), jnp.float32), lnf_b=jnp.zeros((1, D), jnp.float32))
    p['text_proj'] = gated(D, P)
    p['video_proj'] = gated(D, P)
    p['audio_proj'] = gated(D, P)
    p['head'] = dict(
        w1=dense_bf16(P, P), b1=jnp.zeros((1, P), jnp.float32),
        w2=dense_bf16(P, P), b2=jnp.zeros((1, P), jnp.float32),
        # out_layer weight as a row vector (1, P); applied as a lane reduction.
        w3=0.02 * jax.random.normal(nk(), (1, P), dtype=jnp.float32),
        b3=jnp.zeros((1, 1), jnp.float32))
    return p


# ------------------------------ operand packing ------------------------------
def _pack_rows(items, width, dtype):
    """Pack [(name, (r, c) array)] into one (sum_r, width) slab + offset dict."""
    rows, offsets, n = [], {}, 0
    for name, a in items:
        a = jnp.asarray(a, dtype)
        r, c = a.shape
        if c < width:
            a = jnp.concatenate([a, jnp.zeros((r, width - c), dtype)], axis=1)
        offsets[name] = (n, r, c)
        rows.append(a)
        n += r
    return jnp.concatenate(rows, axis=0), offsets


# ------------------------------- forward ------------------------------------
def mult_model_forward(params, text, audio, video,
                       text_mask, audio_mask, video_mask,
                       force_cross_modal=False, modal_lst=('T', 'V', 'A')):
    del force_cross_modal                 # unused by the reference forward too
    B, S_a = audio.shape[0], audio.shape[1]
    T_l, a_dim = audio.shape[2], audio.shape[3]
    rows_a = B * S_a

    # Time-major LSTM input flattened to a lane-dense 2-D slab: (T*rows, F).
    ax = jnp.transpose(audio.reshape(rows_a, T_l, a_dim),
                       (1, 0, 2)).reshape(T_l * rows_a, a_dim)

    entries = []
    if 'T' in modal_lst:
        s = text.shape[1]
        entries.append(dict(name='T', seq=s,
                            feat=text.reshape(B * s, text.shape[-1]),
                            mask=text_mask.astype(jnp.float32),
                            tok=params['text_token_proj'],
                            nrm=params['text_norm'], prj=params['text_proj']))
    if 'V' in modal_lst:
        s = video.shape[1]
        entries.append(dict(name='V', seq=s,
                            feat=video.reshape(B * s, video.shape[-1]),
                            mask=video_mask.astype(jnp.float32),
                            tok=params['video_token_proj'],
                            nrm=params['video_norm'], prj=params['video_proj']))
    if 'A' in modal_lst:
        # TODO(synk): PyTorch runs the LSTM (and print(audio)) even when 'A' is
        # absent from modal_lst; that dead computation is skipped here.
        entries.append(dict(name='A', seq=S_a, feat=ax,
                            mask=audio_mask.astype(jnp.float32),
                            tok=params['audio_token_proj'],
                            nrm=params['audio_norm'], prj=params['audio_proj']))
    n_mod = len(entries)
    has_audio = any(e['name'] == 'A' for e in entries)
    key_valid = jnp.concatenate(
        [e['mask'].reshape(-1) for e in entries]).astype(jnp.float32)

    # ---- pack tiny operands into one f32 misc slab + one bf16 weight slab ----
    fp, hp = params['fusion'], params['head']
    misc_items = []
    if has_audio:
        misc_items.append(('lstm_b', params['lstm']['b']))
    for i, e in enumerate(entries):
        tp, nm = e['tok'], e['nrm']
        misc_items += [(f'tok_b1_{i}', tp['b1']), (f'tok_b2_{i}', tp['b2']),
                       (f'tok_g_{i}', nm['g']), (f'tok_be_{i}', nm['b'])]
    misc_items += [('ln1g', fp['ln1_g']), ('ln1b', fp['ln1_b']),
                   ('bq', fp['bq']), ('bk', fp['bk']), ('bv', fp['bv']),
                   ('bo', fp['bo']),
                   ('ln2g', fp['ln2_g']), ('ln2b', fp['ln2_b']),
                   ('bfc1', fp['bfc1']), ('bfc2', fp['bfc2']),
                   ('lnfg', fp['lnf_g']), ('lnfb', fp['lnf_b'])]
    for i, e in enumerate(entries):
        pr = e['prj']
        misc_items += [(f'proj_b1_{i}', pr['b1']), (f'proj_b2_{i}', pr['b2'])]
    misc_items += [('hb1', hp['b1']), ('hb2', hp['b2']),
                   ('hw3', hp['w3']), ('hb3', hp['b3']),
                   ('valid', key_valid.reshape(1, -1))]
    misc_slab, misc_off = _pack_rows(misc_items, MISC_W, jnp.float32)

    w_items = []
    for i, e in enumerate(entries):
        tp = e['tok']
        w_items += [(f'tok_w1_{i}', tp['w1']), (f'tok_w2_{i}', tp['w2'])]
    w_items += [('wq', fp['wq']), ('wk', fp['wk']), ('wv', fp['wv']),
                ('wo', fp['wo']), ('wfc1', fp['wfc1']), ('wfc2', fp['wfc2'])]
    for i, e in enumerate(entries):
        pr = e['prj']
        w_items += [(f'proj_w1_{i}', pr['w1']), (f'proj_w2_{i}', pr['w2'])]
    w_items += [('hw1', hp['w1']), ('hw2', hp['w2'])]
    w_slab, w_off = _pack_rows(w_items, EMBED_DIM, jnp.bfloat16)

    flat = [e['feat'] for e in entries] + [misc_slab, w_slab]
    scratch = []
    if has_audio:
        lstm_slab = jnp.concatenate(
            [params['lstm']['wih'], params['lstm']['whh']],
            axis=0).astype(jnp.bfloat16)                     # (256, 512)
        flat.append(lstm_slab)
        scratch.append(pltpu.VMEM((T_l * rows_a, 4 * LSTM_HIDDEN), jnp.float32))

    cfg = (tuple((e['name'], e['seq']) for e in entries), B, T_l, rows_a,
           misc_off, w_off)

    out, middle = pl.pallas_call(
        functools.partial(_mult_fused_kernel, cfg=cfg),
        out_shape=(jax.ShapeDtypeStruct((B, 1), jnp.float32),
                   jax.ShapeDtypeStruct((B, PROJ_DIM), jnp.float32)),
        scratch_shapes=scratch,
        compiler_params=pltpu.CompilerParams(vmem_limit_bytes=32 * 1024 * 1024),
    )(*flat)
    return out, middle


# --------------------------------- main --------------------------------------
if __name__ == "__main__":
    key = jax.random.PRNGKey(0)
    pkey, tkey, vkey, akey = jax.random.split(key, 4)
    params = init_params(pkey)

    B, S_T, S_V, S_A, T_L = 2, 4, 4, 4, 6
    text = jax.random.normal(tkey, (B, S_T, TEXT_DIM), dtype=jnp.float32)
    video = jax.random.normal(vkey, (B, S_V, VIDEO_DIM), dtype=jnp.float32)
    audio = jax.random.normal(akey, (B, S_A, T_L, AUDIO_DIM), dtype=jnp.float32)
    text_mask = jnp.array([[1, 1, 1, 1], [1, 1, 1, 0]], dtype=jnp.float32)
    video_mask = jnp.array([[1, 1, 0, 0], [1, 1, 1, 1]], dtype=jnp.float32)
    audio_mask = jnp.ones((B, S_A), dtype=jnp.float32)

    fwd = jax.jit(functools.partial(mult_model_forward,
                                    modal_lst=('T', 'V', 'A')))
    out, middle = fwd(params, text, audio, video,
                      text_mask, audio_mask, video_mask)
    jax.block_until_ready((out, middle))
    assert out.shape == (B, 1)
    assert middle.shape == (B, PROJ_DIM)
    assert bool(jnp.all(jnp.isfinite(out))) and bool(jnp.all(jnp.isfinite(middle)))
    print("KERNEL_OK")
</pallas_src>

<mosaic_0001>
module attributes {stable_mosaic.version = 11 : i64} {
  func.func @_mult_fused_kernel(%arg0: memref<8x256xf32, #tpu.memory_space<vmem>>, %arg1: memref<8x256xf32, #tpu.memory_space<vmem>>, %arg2: memref<48x128xf32, #tpu.memory_space<vmem>>, %arg3: memref<36x512xf32, #tpu.memory_space<vmem>>, %arg4: memref<4992x256xbf16, #tpu.memory_space<vmem>>, %arg5: memref<256x512xbf16, #tpu.memory_space<vmem>>, %arg6: memref<2x1xf32, #tpu.memory_space<vmem>>, %arg7: memref<2x256xf32, #tpu.memory_space<vmem>>, %arg8: memref<48x512xf32, #tpu.memory_space<vmem>>) attributes {dimension_semantics = [], scalar_prefetch = 0 : i64, scratch_operands = 1 : i64, tpu.core_type = #tpu.core_type<tc>} {
    %c0 = arith.constant 0 : index
    %c0_0 = arith.constant 0 : index
    %0 = vector.load %arg0[%c0, %c0_0] : memref<8x256xf32, #tpu.memory_space<vmem>>, vector<8x256xf32>
    %c0_1 = arith.constant 0 : index
    %c0_2 = arith.constant 0 : index
    %1 = vector.load %arg4[%c0_1, %c0_2] : memref<4992x256xbf16, #tpu.memory_space<vmem>>, vector<256x256xbf16>
    %c1 = arith.constant 1 : index
    %c0_3 = arith.constant 0 : index
    %2 = vector.load %arg3[%c1, %c0_3] : memref<36x512xf32, #tpu.memory_space<vmem>>, vector<1x256xf32>
    %c256 = arith.constant 256 : index
    %c0_4 = arith.constant 0 : index
    %3 = vector.load %arg4[%c256, %c0_4] : memref<4992x256xbf16, #tpu.memory_space<vmem>>, vector<256x256xbf16>
    %c2 = arith.constant 2 : index
    %c0_5 = arith.constant 0 : index
    %4 = vector.load %arg3[%c2, %c0_5] : memref<36x512xf32, #tpu.memory_space<vmem>>, vector<1x256xf32>
    %5 = arith.truncf %0 : vector<8x256xf32> to vector<8x256xbf16>
    %cst = arith.constant dense<0.000000e+00> : vector<8x256xf32>
    %6 = tpu.matmul %5, %1, %cst {dimension_numbers = #tpu.dot_dimension_numbers<[1], [0], [0], [1], [0, 0, 1, 1], [], []>} : vector<8x256xbf16>, vector<256x256xbf16>, vector<8x256xf32> -> vector<8x256xf32>
    %7 = vector.broadcast %2 : vector<1x256xf32> to vector<8x256xf32>
    %8 = arith.addf %6, %7 : vector<8x256xf32>
    %9 = arith.truncf %8 : vector<8x256xf32> to vector<8x256xbf16>
    %cst_6 = arith.constant dense<0.000000e+00> : vector<8x256xf32>
    %10 = tpu.matmul %9, %3, %cst_6 {dimension_numbers = #tpu.dot_dimension_numbers<[1], [0], [0], [1], [0, 0, 1, 1], [], []>} : vector<8x256xbf16>, vector<256x256xbf16>, vector<8x256xf32> -> vector<8x256xf32>
    %11 = vector.broadcast %4 : vector<1x256xf32> to vector<8x256xf32>
    %12 = arith.addf %10, %11 : vector<8x256xf32>
    %13 = arith.negf %12 : vector<8x256xf32>
    %14 = math.exp %13 : vector<8x256xf32>
    %cst_7 = arith.constant 1.000000e+00 : f32
    %15 = vector.broadcast %cst_7 : f32 to vector<8x256xf32>
    %16 = arith.addf %15, %14 : vector<8x256xf32>
    %17 = arith.divf %15, %16 : vector<8x256xf32>
    %18 = arith.mulf %8, %17 : vector<8x256xf32>
    %c3 = arith.constant 3 : index
    %c0_8 = arith.constant 0 : index
    %19 = vector.load %arg3[%c3, %c0_8] : memref<36x512xf32, #tpu.memory_space<vmem>>, vector<1x256xf32>
    %c4 = arith.constant 4 : index
    %c0_9 = arith.constant 0 : index
    %20 = vector.load %arg3[%c4, %c0_9] : memref<36x512xf32, #tpu.memory_space<vmem>>, vector<1x256xf32>
    %cst_10 = arith.constant dense<0.000000e+00> : vector<8xf32>
    %21 = vector.multi_reduction <add>, %18, %cst_10 [1] : vector<8x256xf32> to vector<8xf32>
    %22 = vector.shape_cast %21 : vector<8xf32> to vector<8x1xf32>
    %cst_11 = arith.constant 2.560000e+02 : f32
    %23 = vector.broadcast %cst_11 : f32 to vector<8x1xf32>
    %24 = arith.divf %22, %23 : vector<8x1xf32>
    %25 = vector.broadcast %24 : vector<8x1xf32> to vector<8x256xf32>
    %26 = arith.subf %18, %25 : vector<8x256xf32>
    %27 = arith.mulf %26, %26 : vector<8x256xf32>
    %cst_12 = arith.constant dense<0.000000e+00> : vector<8xf32>
    %28 = vector.multi_reduction <add>, %27, %cst_12 [1] : vector<8x256xf32> to vector<8xf32>
    %29 = vector.shape_cast %28 : vector<8xf32> to vector<8x1xf32>
    %cst_13 = arith.constant 2.560000e+02 : f32
    %30 = vector.broadcast %cst_13 : f32 to vector<8x1xf32>
    %31 = arith.divf %29, %30 : vector<8x1xf32>
    %32 = vector.broadcast %24 : vector<8x1xf32> to vector<8x256xf32>
    %33 = arith.subf %18, %32 : vector<8x256xf32>
    %cst_14 = arith.constant 9.99999997E-7 : f32
    %34 = vector.broadcast %cst_14 : f32 to vector<8x1xf32>
    %35 = arith.addf %31, %34 : vector<8x1xf32>
    %36 = math.rsqrt %35 : vector<8x1xf32>
    %37 = vector.broadcast %36 : vector<8x1xf32> to vector<8x256xf32>
    %38 = arith.mulf %33, %37 : vector<8x256xf32>
    %39 = vector.broadcast %19 : vector<1x256xf32> to vector<8x256xf32>
    %40 = arith.mulf %38, %39 : vector<8x256xf32>
    %41 = vector.broadcast %20 : vector<1x256xf32> to vector<8x256xf32>
    %42 = arith.addf %40, %41 : vector<8x256xf32>
    %c0_15 = arith.constant 0 : index
    %c0_16 = arith.constant 0 : index
    %43 = vector.load %arg1[%c0_15, %c0_16] : memref<8x256xf32, #tpu.memory_space<vmem>>, vector<8x256xf32>
    %c512 = arith.constant 512 : index
    %c0_17 = arith.constant 0 : index
    %44 = vector.load %arg4[%c512, %c0_17] : memref<4992x256xbf16, #tpu.memory_space<vmem>>, vector<256x256xbf16>
    %c5 = arith.constant 5 : index
    %c0_18 = arith.constant 0 : index
    %45 = vector.load %arg3[%c5, %c0_18] : memref<36x512xf32, #tpu.memory_space<vmem>>, vector<1x256xf32>
    %c768 = arith.constant 768 : index
    %c0_19 = arith.constant 0 : index
    %46 = vector.load %arg4[%c768, %c0_19] : memref<4992x256xbf16, #tpu.memory_space<vmem>>, vector<256x256xbf16>
    %c6 = arith.constant 6 : index
    %c0_20 = arith.constant 0 : index
    %47 = vector.load %arg3[%c6, %c0_20] : memref<36x512xf32, #tpu.memory_space<vmem>>, vector<1x256xf32>
    %48 = arith.truncf %43 : vector<8x256xf32> to vector<8x256xbf16>
    %cst_21 = arith.constant dense<0.000000e+00> : vector<8x256xf32>
    %49 = tpu.matmul %48, %44, %cst_21 {dimension_numbers = #tpu.dot_dimension_numbers<[1], [0], [0], [1], [0, 0, 1, 1], [], []>} : vector<8x256xbf16>, vector<256x256xbf16>, vector<8x256xf32> -> vector<8x256xf32>
    %50 = vector.broadcast %45 : vector<1x256xf32> to vector<8x256xf32>
    %51 = arith.addf %49, %50 : vector<8x256xf32>
    %52 = arith.truncf %51 : vector<8x256xf32> to vector<8x256xbf16>
    %cst_22 = arith.constant dense<0.000000e+00> : vector<8x256xf32>
    %53 = tpu.matmul %52, %46, %cst_22 {dimension_numbers = #tpu.dot_dimension_numbers<[1], [0], [0], [1], [0, 0, 1, 1], [], []>} : vector<8x256xbf16>, vector<256x256xbf16>, vector<8x256xf32> -> vector<8x256xf32>
    %54 = vector.broadcast %47 : vector<1x256xf32> to vector<8x256xf32>
    %55 = arith.addf %53, %54 : vector<8x256xf32>
    %56 = arith.negf %55 : vector<8x256xf32>
    %57 = math.exp %56 : vector<8x256xf32>
    %cst_23 = arith.constant 1.000000e+00 : f32
    %58 = vector.broadcast %cst_23 : f32 to vector<8x256xf32>
    %59 = arith.addf %58, %57 : vector<8x256xf32>
    %60 = arith.divf %58, %59 : vector<8x256xf32>
    %61 = arith.mulf %51, %60 : vector<8x256xf32>
    %c7 = arith.constant 7 : index
    %c0_24 = arith.constant 0 : index
    %62 = vector.load %arg3[%c7, %c0_24] : memref<36x512xf32, #tpu.memory_space<vmem>>, vector<1x256xf32>
    %c8 = arith.constant 8 : index
    %c0_25 = arith.constant 0 : index
    %63 = vector.load %arg3[%c8, %c0_25] : memref<36x512xf32, #tpu.memory_space<vmem>>, vector<1x256xf32>
    %cst_26 = arith.constant dense<0.000000e+00> : vector<8xf32>
    %64 = vector.multi_reduction <add>, %61, %cst_26 [1] : vector<8x256xf32> to vector<8xf32>
    %65 = vector.shape_cast %64 : vector<8xf32> to vector<8x1xf32>
    %cst_27 = arith.constant 2.560000e+02 : f32
    %66 = vector.broadcast %cst_27 : f32 to vector<8x1xf32>
    %67 = arith.divf %65, %66 : vector<8x1xf32>
    %68 = vector.broadcast %67 : vector<8x1xf32> to vector<8x256xf32>
    %69 = arith.subf %61, %68 : vector<8x256xf32>
    %70 = arith.mulf %69, %69 : vector<8x256xf32>
    %cst_28 = arith.constant dense<0.000000e+00> : vector<8xf32>
    %71 = vector.multi_reduction <add>, %70, %cst_28 [1] : vector<8x256xf32> to vector<8xf32>
    %72 = vector.shape_cast %71 : vector<8xf32> to vector<8x1xf32>
    %cst_29 = arith.constant 2.560000e+02 : f32
    %73 = vector.broadcast %cst_29 : f32 to vector<8x1xf32>
    %74 = arith.divf %72, %73 : vector<8x1xf32>
    %75 = vector.broadcast %67 : vector<8x1xf32> to vector<8x256xf32>
    %76 = arith.subf %61, %75 : vector<8x256xf32>
    %cst_30 = arith.constant 9.99999997E-7 : f32
    %77 = vector.broadcast %cst_30 : f32 to vector<8x1xf32>
    %78 = arith.addf %74, %77 : vector<8x1xf32>
    %79 = math.rsqrt %78 : vector<8x1xf32>
    %80 = vector.broadcast %79 : vector<8x1xf32> to vector<8x256xf32>
    %81 = arith.mulf %76, %80 : vector<8x256xf32>
    %82 = vector.broadcast %62 : vector<1x256xf32> to vector<8x256xf32>
    %83 = arith.mulf %81, %82 : vector<8x256xf32>
    %84 = vector.broadcast %63 : vector<1x256xf32> to vector<8x256xf32>
    %85 = arith.addf %83, %84 : vector<8x256xf32>
    %c0_31 = arith.constant 0 : index
    %c0_32 = arith.constant 0 : index
    %86 = vector.load %arg5[%c0_31, %c0_32] : memref<256x512xbf16, #tpu.memory_space<vmem>>, vector<128x512xbf16>
    %c128 = arith.constant 128 : index
    %c0_33 = arith.constant 0 : index
    %87 = vector.load %arg5[%c128, %c0_33] : memref<256x512xbf16, #tpu.memory_space<vmem>>, vector<128x512xbf16>
    %c0_34 = arith.constant 0 : index
    %c0_35 = arith.constant 0 : index
    %88 = vector.load %arg2[%c0_34, %c0_35] : memref<48x128xf32, #tpu.memory_space<vmem>>, vector<48x128xf32>
    %89 = arith.truncf %88 : vector<48x128xf32> to vector<48x128xbf16>
    %cst_36 = arith.constant dense<0.000000e+00> : vector<48x512xf32>
    %90 = tpu.matmul %89, %86, %cst_36 {dimension_numbers = #tpu.dot_dimension_numbers<[1], [0], [0], [1], [0, 0, 1, 1], [], []>} : vector<48x128xbf16>, vector<128x512xbf16>, vector<48x512xf32> -> vector<48x512xf32>
    %c0_37 = arith.constant 0 : index
    %c0_38 = arith.constant 0 : index
    %91 = vector.load %arg3[%c0_37, %c0_38] : memref<36x512xf32, #tpu.memory_space<vmem>>, vector<1x512xf32>
    %92 = vector.broadcast %91 : vector<1x512xf32> to vector<48x512xf32>
    %93 = arith.addf %90, %92 : vector<48x512xf32>
    %c0_39 = arith.constant 0 : index
    %c0_40 = arith.constant 0 : index
    %94 = vector.load %arg8[%c0_39, %c0_40] : memref<48x512xf32, #tpu.memory_space<vmem>>, vector<48x512xf32>
    tpu.vector_store %arg8[%c0_39, %c0_40], %93 {strides = array<i32>} : memref<48x512xf32, #tpu.memory_space<vmem>>, vector<48x512xf32>,
    %cst_41 = arith.constant 0.000000e+00 : f32
    %95 = vector.broadcast %cst_41 : f32 to vector<8x128xf32>
    %cst_42 = arith.constant 0.000000e+00 : f32
    %96 = vector.broadcast %cst_42 : f32 to vector<8x128xf32>
    %c0_43 = arith.constant 0 : index
    %c0_44 = arith.constant 0 : index
    %97 = vector.load %arg8[%c0_43, %c0_44] : memref<48x512xf32, #tpu.memory_space<vmem>>, vector<8x512xf32>
    %98 = arith.truncf %95 : vector<8x128xf32> to vector<8x128xbf16>
    %cst_45 = arith.constant dense<0.000000e+00> : vector<8x512xf32>
    %99 = tpu.matmul %98, %87, %cst_45 {dimension_numbers = #tpu.dot_dimension_numbers<[1], [0], [0], [1], [0, 0, 1, 1], [], []>} : vector<8x128xbf16>, vector<128x512xbf16>, vector<8x512xf32> -> vector<8x512xf32>
    %100 = arith.addf %97, %99 : vector<8x512xf32>
    %101 = vector.extract_strided_slice %100 {offsets = [0, 0], sizes = [8, 128], strides = [1, 1]} : vector<8x512xf32> to vector<8x128xf32>
    %102 = arith.negf %101 : vector<8x128xf32>
    %103 = math.exp %102 : vector<8x128xf32>
    %cst_46 = arith.constant 1.000000e+00 : f32
    %104 = vector.broadcast %cst_46 : f32 to vector<8x128xf32>
    %105 = arith.addf %104, %103 : vector<8x128xf32>
    %106 = arith.divf %104, %105 : vector<8x128xf32>
    %107 = vector.extract_strided_slice %100 {offsets = [0, 128], sizes = [8, 128], strides = [1, 1]} : vector<8x512xf32> to vector<8x128xf32>
    %108 = arith.negf %107 : vector<8x128xf32>
    %109 = math.exp %108 : vector<8x128xf32>
    %cst_47 = arith.constant 1.000000e+00 : f32
    %110 = vector.broadcast %cst_47 : f32 to vector<8x128xf32>
    %111 = arith.addf %110, %109 : vector<8x128xf32>
    %112 = arith.divf %110, %111 : vector<8x128xf32>
    %113 = vector.extract_strided_slice %100 {offsets = [0, 256], sizes = [8, 128], strides = [1, 1]} : vector<8x512xf32> to vector<8x128xf32>
    %114 = math.tanh %113 : vector<8x128xf32>
    %115 = vector.extract_strided_slice %100 {offsets = [0, 384], sizes = [8, 128], strides = [1, 1]} : vector<8x512xf32> to vector<8x128xf32>
    %116 = arith.negf %115 : vector<8x128xf32>
    %117 = math.exp %116 : vector<8x128xf32>
    %cst_48 = arith.constant 1.000000e+00 : f32
    %118 = vector.broadcast %cst_48 : f32 to vector<8x128xf32>
    %119 = arith.addf %118, %117 : vector<8x128xf32>
    %120 = arith.divf %118, %119 : vector<8x128xf32>
    %121 = arith.mulf %112, %96 : vector<8x128xf32>
    %122 = arith.mulf %106, %114 : vector<8x128xf32>
    %123 = arith.addf %121, %122 : vector<8x128xf32>
    %124 = math.tanh %123 : vector<8x128xf32>
    %125 = arith.mulf %120, %124 : vector<8x128xf32>
    %c8_49 = arith.constant 8 : index
    %c0_50 = arith.constant 0 : index
    %126 = vector.load %arg8[%c8_49, %c0_50] : memref<48x512xf32, #tpu.memory_space<vmem>>, vector<8x512xf32>
    %127 = arith.truncf %125 : vector<8x128xf32> to vector<8x128xbf16>
    %cst_51 = arith.constant dense<0.000000e+00> : vector<8x512xf32>
    %128 = tpu.matmul %127, %87, %cst_51 {dimension_numbers = #tpu.dot_dimension_numbers<[1], [0], [0], [1], [0, 0, 1, 1], [], []>} : vector<8x128xbf16>, vector<128x512xbf16>, vector<8x512xf32> -> vector<8x512xf32>
    %129 = arith.addf %126, %128 : vector<8x512xf32>
    %130 = vector.extract_strided_slice %129 {offsets = [0, 0], sizes = [8, 128], strides = [1, 1]} : vector<8x512xf32> to vector<8x128xf32>
    %131 = arith.negf %130 : vector<8x128xf32>
    %132 = math.exp %131 : vector<8x128xf32>
    %cst_52 = arith.constant 1.000000e+00 : f32
    %133 = vector.broadcast %cst_52 : f32 to vector<8x128xf32>
    %134 = arith.addf %133, %132 : vector<8x128xf32>
    %135 = arith.divf %133, %134 : vector<8x128xf32>
    %136 = vector.extract_strided_slice %129 {offsets = [0, 128], sizes = [8, 128], strides = [1, 1]} : vector<8x512xf32> to vector<8x128xf32>
    %137 = arith.negf %136 : vector<8x128xf32>
    %138 = math.exp %137 : vector<8x128xf32>
    %cst_53 = arith.constant 1.000000e+00 : f32
    %139 = vector.broadcast %cst_53 : f32 to vector<8x128xf32>
    %140 = arith.addf %139, %138 : vector<8x128xf32>
    %141 = arith.divf %139, %140 : vector<8x128xf32>
    %142 = vector.extract_strided_slice %129 {offsets = [0, 256], sizes = [8, 128], strides = [1, 1]} : vector<8x512xf32> to vector<8x128xf32>
    %143 = math.tanh %142 : vector<8x128xf32>
    %144 = vector.extract_strided_slice %129 {offsets = [0, 384], sizes = [8, 128], strides = [1, 1]} : vector<8x512xf32> to vector<8x128xf32>
    %145 = arith.negf %144 : vector<8x128xf32>
    %146 = math.exp %145 : vector<8x128xf32>
    %cst_54 = arith.constant 1.000000e+00 : f32
    %147 = vector.broadcast %cst_54 : f32 to vector<8x128xf32>
    %148 = arith.addf %147, %146 : vector<8x128xf32>
    %149 = arith.divf %147, %148 : vector<8x128xf32>
    %150 = arith.mulf %141, %123 : vector<8x128xf32>
    %151 = arith.mulf %135, %143 : vector<8x128xf32>
    %152 = arith.addf %150, %151 : vector<8x128xf32>
    %153 = math.tanh %152 : vector<8x128xf32>
    %154 = arith.mulf %149, %153 : vector<8x128xf32>
    %c16 = arith.constant 16 : index
    %c0_55 = arith.constant 0 : index
    %155 = vector.load %arg8[%c16, %c0_55] : memref<48x512xf32, #tpu.memory_space<vmem>>, vector<8x512xf32>
    %156 = arith.truncf %154 : vector<8x128xf32> to vector<8x128xbf16>
    %cst_56 = arith.constant dense<0.000000e+00> : vector<8x512xf32>
    %157 = tpu.matmul %156, %87, %cst_56 {dimension_numbers = #tpu.dot_dimension_numbers<[1], [0], [0], [1], [0, 0, 1, 1], [], []>} : vector<8x128xbf16>, vector<128x512xbf16>, vector<8x512xf32> -> vector<8x512xf32>
    %158 = arith.addf %155, %157 : vector<8x512xf32>
    %159 = vector.extract_strided_slice %158 {offsets = [0, 0], sizes = [8, 128], strides = [1, 1]} : vector<8x512xf32> to vector<8x128xf32>
    %160 = arith.negf %159 : vector<8x128xf32>
    %161 = math.exp %160 : vector<8x128xf32>
    %cst_57 = arith.constant 1.000000e+00 : f32
    %162 = vector.broadcast %cst_57 : f32 to vector<8x128xf32>
    %163 = arith.addf %162, %161 : vector<8x128xf32>
    %164 = arith.divf %162, %163 : vector<8x128xf32>
    %165 = vector.extract_strided_slice %158 {offsets = [0, 128], sizes = [8, 128], strides = [1, 1]} : vector<8x512xf32> to vector<8x128xf32>
    %166 = arith.negf %165 : vector<8x128xf32>
    %167 = math.exp %166 : vector<8x128xf32>
    %cst_58 = arith.constant 1.000000e+00 : f32
    %168 = vector.broadcast %cst_58 : f32 to vector<8x128xf32>
    %169 = arith.addf %168, %167 : vector<8x128xf32>
    %170 = arith.divf %168, %169 : vector<8x128xf32>
    %171 = vector.extract_strided_slice %158 {offsets = [0, 256], sizes = [8, 128], strides = [1, 1]} : vector<8x512xf32> to vector<8x128xf32>
    %172 = math.tanh %171 : vector<8x128xf32>
    %173 = vector.extract_strided_slice %158 {offsets = [0, 384], sizes = [8, 128], strides = [1, 1]} : vector<8x512xf32> to vector<8x128xf32>
    %174 = arith.negf %173 : vector<8x128xf32>
    %175 = math.exp %174 : vector<8x128xf32>
    %cst_59 = arith.constant 1.000000e+00 : f32
    %176 = vector.broadcast %cst_59 : f32 to vector<8x128xf32>
    %177 = arith.addf %176, %175 : vector<8x128xf32>
    %178 = arith.divf %176, %177 : vector<8x128xf32>
    %179 = arith.mulf %170, %152 : vector<8x128xf32>
    %180 = arith.mulf %164, %172 : vector<8x128xf32>
    %181 = arith.addf %179, %180 : vector<8x128xf32>
    %182 = math.tanh %181 : vector<8x128xf32>
    %183 = arith.mulf %178, %182 : vector<8x128xf32>
    %c24 = arith.constant 24 : index
    %c0_60 = arith.constant 0 : index
    %184 = vector.load %arg8[%c24, %c0_60] : memref<48x512xf32, #tpu.memory_space<vmem>>, vector<8x512xf32>
    %185 = arith.truncf %183 : vector<8x128xf32> to vector<8x128xbf16>
    %cst_61 = arith.constant dense<0.000000e+00> : vector<8x512xf32>
    %186 = tpu.matmul %185, %87, %cst_61 {dimension_numbers = #tpu.dot_dimension_numbers<[1], [0], [0], [1], [0, 0, 1, 1], [], []>} : vector<8x128xbf16>, vector<128x512xbf16>, vector<8x512xf32> -> vector<8x512xf32>
    %187 = arith.addf %184, %186 : vector<8x512xf32>
    %188 = vector.extract_strided_slice %187 {offsets = [0, 0], sizes = [8, 128], strides = [1, 1]} : vector<8x512xf32> to vector<8x128xf32>
    %189 = arith.negf %188 : vector<8x128xf32>
    %190 = math.exp %189 : vector<8x128xf32>
    %cst_62 = arith.constant 1.000000e+00 : f32
    %191 = vector.broadcast %cst_62 : f32 to vector<8x128xf32>
    %192 = arith.addf %191, %190 : vector<8x128xf32>
    %193 = arith.divf %191, %192 : vector<8x128xf32>
    %194 = vector.extract_strided_slice %187 {offsets = [0, 128], sizes = [8, 128], strides = [1, 1]} : vector<8x512xf32> to vector<8x128xf32>
    %195 = arith.negf %194 : vector<8x128xf32>
    %196 = math.exp %195 : vector<8x128xf32>
    %cst_63 = arith.constant 1.000000e+00 : f32
    %197 = vector.broadcast %cst_63 : f32 to vector<8x128xf32>
    %198 = arith.addf %197, %196 : vector<8x128xf32>
    %199 = arith.divf %197, %198 : vector<8x128xf32>
    %200 = vector.extract_strided_slice %187 {offsets = [0, 256], sizes = [8, 128], strides = [1, 1]} : vector<8x512xf32> to vector<8x128xf32>
    %201 = math.tanh %200 : vector<8x128xf32>
    %202 = vector.extract_strided_slice %187 {offsets = [0, 384], sizes = [8, 128], strides = [1, 1]} : vector<8x512xf32> to vector<8x128xf32>
    %203 = arith.negf %202 : vector<8x128xf32>
    %204 = math.exp %203 : vector<8x128xf32>
    %cst_64 = arith.constant 1.000000e+00 : f32
    %205 = vector.broadcast %cst_64 : f32 to vector<8x128xf32>
    %206 = arith.addf %205, %204 : vector<8x128xf32>
    %207 = arith.divf %205, %206 : vector<8x128xf32>
    %208 = arith.mulf %199, %181 : vector<8x128xf32>
    %209 = arith.mulf %193, %201 : vector<8x128xf32>
    %210 = arith.addf %208, %209 : vector<8x128xf32>
    %211 = math.tanh %210 : vector<8x128xf32>
    %212 = arith.mulf %207, %211 : vector<8x128xf32>
    %c32 = arith.constant 32 : index
    %c0_65 = arith.constant 0 : index
    %213 = vector.load %arg8[%c32, %c0_65] : memref<48x512xf32, #tpu.memory_space<vmem>>, vector<8x512xf32>
    %214 = arith.truncf %212 : vector<8x128xf32> to vector<8x128xbf16>
    %cst_66 = arith.constant dense<0.000000e+00> : vector<8x512xf32>
    %215 = tpu.matmul %214, %87, %cst_66 {dimension_numbers = #tpu.dot_dimension_numbers<[1], [0], [0], [1], [0, 0, 1, 1], [], []>} : vector<8x128xbf16>, vector<128x512xbf16>, vector<8x512xf32> -> vector<8x512xf32>
    %216 = arith.addf %213, %215 : vector<8x512xf32>
    %217 = vector.extract_strided_slice %216 {offsets = [0, 0], sizes = [8, 128], strides = [1, 1]} : vector<8x512xf32> to vector<8x128xf32>
    %218 = arith.negf %217 : vector<8x128xf32>
    %219 = math.exp %218 : vector<8x128xf32>
    %cst_67 = arith.constant 1.000000e+00 : f32
    %220 = vector.broadcast %cst_67 : f32 to vector<8x128xf32>
    %221 = arith.addf %220, %219 : vector<8x128xf32>
    %222 = arith.divf %220, %221 : vector<8x128xf32>
    %223 = vector.extract_strided_slice %216 {offsets = [0, 128], sizes = [8, 128], strides = [1, 1]} : vector<8x512xf32> to vector<8x128xf32>
    %224 = arith.negf %223 : vector<8x128xf32>
    %225 = math.exp %224 : vector<8x128xf32>
    %cst_68 = arith.constant 1.000000e+00 : f32
    %226 = vector.broadcast %cst_68 : f32 to vector<8x128xf32>
    %227 = arith.addf %226, %225 : vector<8x128xf32>
    %228 = arith.divf %226, %227 : vector<8x128xf32>
    %229 = vector.extract_strided_slice %216 {offsets = [0, 256], sizes = [8, 128], strides = [1, 1]} : vector<8x512xf32> to vector<8x128xf32>
    %230 = math.tanh %229 : vector<8x128xf32>
    %231 = vector.extract_strided_slice %216 {offsets = [0, 384], sizes = [8, 128], strides = [1, 1]} : vector<8x512xf32> to vector<8x128xf32>
    %232 = arith.negf %231 : vector<8x128xf32>
    %233 = math.exp %232 : vector<8x128xf32>
    %cst_69 = arith.constant 1.000000e+00 : f32
    %234 = vector.broadcast %cst_69 : f32 to vector<8x128xf32>
    %235 = arith.addf %234, %233 : vector<8x128xf32>
    %236 = arith.divf %234, %235 : vector<8x128xf32>
    %237 = arith.mulf %228, %210 : vector<8x128xf32>
    %238 = arith.mulf %222, %230 : vector<8x128xf32>
    %239 = arith.addf %237, %238 : vector<8x128xf32>
    %240 = math.tanh %239 : vector<8x128xf32>
    %241 = arith.mulf %236, %240 : vector<8x128xf32>
    %c40 = arith.constant 40 : index
    %c0_70 = arith.constant 0 : index
    %242 = vector.load %arg8[%c40, %c0_70] : memref<48x512xf32, #tpu.memory_space<vmem>>, vector<8x512xf32>
    %243 = arith.truncf %241 : vector<8x128xf32> to vector<8x128xbf16>
    %cst_71 = arith.constant dense<0.000000e+00> : vector<8x512xf32>
    %244 = tpu.matmul %243, %87, %cst_71 {dimension_numbers = #tpu.dot_dimension_numbers<[1], [0], [0], [1], [0, 0, 1, 1], [], []>} : vector<8x128xbf16>, vector<128x512xbf16>, vector<8x512xf32> -> vector<8x512xf32>
    %245 = arith.addf %242, %244 : vector<8x512xf32>
    %246 = vector.extract_strided_slice %245 {offsets = [0, 0], sizes = [8, 128], strides = [1, 1]} : vector<8x512xf32> to vector<8x128xf32>
    %247 = arith.negf %246 : vector<8x128xf32>
    %248 = math.exp %247 : vector<8x128xf32>
    %cst_72 = arith.constant 1.000000e+00 : f32
    %249 = vector.broadcast %cst_72 : f32 to vector<8x128xf32>
    %250 = arith.addf %249, %248 : vector<8x128xf32>
    %251 = arith.divf %249, %250 : vector<8x128xf32>
    %252 = vector.extract_strided_slice %245 {offsets = [0, 128], sizes = [8, 128], strides = [1, 1]} : vector<8x512xf32> to vector<8x128xf32>
    %253 = arith.negf %252 : vector<8x128xf32>
    %254 = math.exp %253 : vector<8x128xf32>
    %cst_73 = arith.constant 1.000000e+00 : f32
    %255 = vector.broadcast %cst_73 : f32 to vector<8x128xf32>
    %256 = arith.addf %255, %254 : vector<8x128xf32>
    %257 = arith.divf %255, %256 : vector<8x128xf32>
    %258 = vector.extract_strided_slice %245 {offsets = [0, 256], sizes = [8, 128], strides = [1, 1]} : vector<8x512xf32> to vector<8x128xf32>
    %259 = math.tanh %258 : vector<8x128xf32>
    %260 = vector.extract_strided_slice %245 {offsets = [0, 384], sizes = [8, 128], strides = [1, 1]} : vector<8x512xf32> to vector<8x128xf32>
    %261 = arith.negf %260 : vector<8x128xf32>
    %262 = math.exp %261 : vector<8x128xf32>
    %cst_74 = arith.constant 1.000000e+00 : f32
    %263 = vector.broadcast %cst_74 : f32 to vector<8x128xf32>
    %264 = arith.addf %263, %262 : vector<8x128xf32>
    %265 = arith.divf %263, %264 : vector<8x128xf32>
    %266 = arith.mulf %257, %239 : vector<8x128xf32>
    %267 = arith.mulf %251, %259 : vector<8x128xf32>
    %268 = arith.addf %266, %267 : vector<8x128xf32>
    %269 = math.tanh %268 : vector<8x128xf32>
    %270 = arith.mulf %265, %269 : vector<8x128xf32>
    %c1024 = arith.constant 1024 : index
    %c0_75 = arith.constant 0 : index
    %271 = vector.load %arg4[%c1024, %c0_75] : memref<4992x256xbf16, #tpu.memory_space<vmem>>, vector<128x256xbf16>
    %c9 = arith.constant 9 : index
    %c0_76 = arith.constant 0 : index
    %272 = vector.load %arg3[%c9, %c0_76] : memref<36x512xf32, #tpu.memory_space<vmem>>, vector<1x256xf32>
    %c1152 = arith.constant 1152 : index
    %c0_77 = arith.constant 0 : index
    %273 = vector.load %arg4[%c1152, %c0_77] : memref<4992x256xbf16, #tpu.memory_space<vmem>>, vector<256x256xbf16>
    %c10 = arith.constant 10 : index
    %c0_78 = arith.constant 0 : index
    %274 = vector.load %arg3[%c10, %c0_78] : memref<36x512xf32, #tpu.memory_space<vmem>>, vector<1x256xf32>
    %275 = arith.truncf %270 : vector<8x128xf32> to vector<8x128xbf16>
    %cst_79 = arith.constant dense<0.000000e+00> : vector<8x256xf32>
    %276 = tpu.matmul %275, %271, %cst_79 {dimension_numbers = #tpu.dot_dimension_numbers<[1], [0], [0], [1], [0, 0, 1, 1], [], []>} : vector<8x128xbf16>, vector<128x256xbf16>, vector<8x256xf32> -> vector<8x256xf32>
    %277 = vector.broadcast %272 : vector<1x256xf32> to vector<8x256xf32>
    %278 = arith.addf %276, %277 : vector<8x256xf32>
    %279 = arith.truncf %278 : vector<8x256xf32> to vector<8x256xbf16>
    %cst_80 = arith.constant dense<0.000000e+00> : vector<8x256xf32>
    %280 = tpu.matmul %279, %273, %cst_80 {dimension_numbers = #tpu.dot_dimension_numbers<[1], [0], [0], [1], [0, 0, 1, 1], [], []>} : vector<8x256xbf16>, vector<256x256xbf16>, vector<8x256xf32> -> vector<8x256xf32>
    %281 = vector.broadcast %274 : vector<1x256xf32> to vector<8x256xf32>
    %282 = arith.addf %280, %281 : vector<8x256xf32>
    %283 = arith.negf %282 : vector<8x256xf32>
    %284 = math.exp %283 : vector<8x256xf32>
    %cst_81 = arith.constant 1.000000e+00 : f32
    %285 = vector.broadcast %cst_81 : f32 to vector<8x256xf32>
    %286 = arith.addf %285, %284 : vector<8x256xf32>
    %287 = arith.divf %285, %286 : vector<8x256xf32>
    %288 = arith.mulf %278, %287 : vector<8x256xf32>
    %c11 = arith.constant 11 : index
    %c0_82 = arith.constant 0 : index
    %289 = vector.load %arg3[%c11, %c0_82] : memref<36x512xf32, #tpu.memory_space<vmem>>, vector<1x256xf32>
    %c12 = arith.constant 12 : index
    %c0_83 = arith.constant 0 : index
    %290 = vector.load %arg3[%c12, %c0_83] : memref<36x512xf32, #tpu.memory_space<vmem>>, vector<1x256xf32>
    %cst_84 = arith.constant dense<0.000000e+00> : vector<8xf32>
    %291 = vector.multi_reduction <add>, %288, %cst_84 [1] : vector<8x256xf32> to vector<8xf32>
    %292 = vector.shape_cast %291 : vector<8xf32> to vector<8x1xf32>
    %cst_85 = arith.constant 2.560000e+02 : f32
    %293 = vector.broadcast %cst_85 : f32 to vector<8x1xf32>
    %294 = arith.divf %292, %293 : vector<8x1xf32>
    %295 = vector.broadcast %294 : vector<8x1xf32> to vector<8x256xf32>
    %296 = arith.subf %288, %295 : vector<8x256xf32>
    %297 = arith.mulf %296, %296 : vector<8x256xf32>
    %cst_86 = arith.constant dense<0.000000e+00> : vector<8xf32>
    %298 = vector.multi_reduction <add>, %297, %cst_86 [1] : vector<8x256xf32> to vector<8xf32>
    %299 = vector.shape_cast %298 : vector<8xf32> to vector<8x1xf32>
    %cst_87 = arith.constant 2.560000e+02 : f32
    %300 = vector.broadcast %cst_87 : f32 to vector<8x1xf32>
    %301 = arith.divf %299, %300 : vector<8x1xf32>
    %302 = vector.broadcast %294 : vector<8x1xf32> to vector<8x256xf32>
    %303 = arith.subf %288, %302 : vector<8x256xf32>
    %cst_88 = arith.constant 9.99999997E-7 : f32
    %304 = vector.broadcast %cst_88 : f32 to vector<8x1xf32>
    %305 = arith.addf %301, %304 : vector<8x1xf32>
    %306 = math.rsqrt %305 : vector<8x1xf32>
    %307 = vector.broadcast %306 : vector<8x1xf32> to vector<8x256xf32>
    %308 = arith.mulf %303, %307 : vector<8x256xf32>
    %309 = vector.broadcast %289 : vector<1x256xf32> to vector<8x256xf32>
    %310 = arith.mulf %308, %309 : vector<8x256xf32>
    %311 = vector.broadcast %290 : vector<1x256xf32> to vector<8x256xf32>
    %312 = arith.addf %310, %311 : vector<8x256xf32>
    %313 = tpu.concatenate %42, %85, %312 in 0 : vector<8x256xf32>, vector<8x256xf32>, vector<8x256xf32> -> vector<24x256xf32>
    %c35 = arith.constant 35 : index
    %c0_89 = arith.constant 0 : index
    %314 = vector.load %arg3[%c35, %c0_89] : memref<36x512xf32, #tpu.memory_space<vmem>>, vector<1x24xf32>
    %cst_90 = arith.constant 5.000000e-01 : f32
    %315 = vector.broadcast %cst_90 : f32 to vector<1x24xf32>
    %316 = arith.cmpf ogt, %314, %315 : vector<1x24xf32>
    %317 = tpu.iota {dimensions = array<i32: 0>} : vector<24x24xi32>
    %318 = tpu.iota {dimensions = array<i32: 1>} : vector<24x24xi32>
    %c0_i32 = arith.constant 0 : i32
    %319 = vector.broadcast %c0_i32 : i32 to vector<24x24xi32>
    %c0_i32_91 = arith.constant 0 : i32
    %320 = vector.broadcast %c0_i32_91 : i32 to vector<24x24xi32>
    %321 = arith.cmpi sge, %317, %320 : vector<24x24xi32>
    %c4_i32 = arith.constant 4 : i32
    %322 = vector.broadcast %c4_i32 : i32 to vector<24x24xi32>
    %323 = arith.cmpi slt, %317, %322 : vector<24x24xi32>
    %324 = arith.andi %321, %323 : vector<24x24xi1>
    %c0_i32_92 = arith.constant 0 : i32
    %325 = vector.broadcast %c0_i32_92 : i32 to vector<24x24xi32>
    %326 = arith.select %324, %325, %319 : vector<24x24xi1>, vector<24x24xi32>
    %c4_i32_93 = arith.constant 4 : i32
    %327 = vector.broadcast %c4_i32_93 : i32 to vector<24x24xi32>
    %328 = arith.cmpi sge, %317, %327 : vector<24x24xi32>
    %c8_i32 = arith.constant 8 : i32
    %329 = vector.broadcast %c8_i32 : i32 to vector<24x24xi32>
    %330 = arith.cmpi slt, %317, %329 : vector<24x24xi32>
    %331 = arith.andi %328, %330 : vector<24x24xi1>
    %c1_i32 = arith.constant 1 : i32
    %332 = vector.broadcast %c1_i32 : i32 to vector<24x24xi32>
    %333 = arith.select %331, %332, %326 : vector<24x24xi1>, vector<24x24xi32>
    %c8_i32_94 = arith.constant 8 : i32
    %334 = vector.broadcast %c8_i32_94 : i32 to vector<24x24xi32>
    %335 = arith.cmpi sge, %317, %334 : vector<24x24xi32>
    %c12_i32 = arith.constant 12 : i32
    %336 = vector.broadcast %c12_i32 : i32 to vector<24x24xi32>
    %337 = arith.cmpi slt, %317, %336 : vector<24x24xi32>
    %338 = arith.andi %335, %337 : vector<24x24xi1>
    %c0_i32_95 = arith.constant 0 : i32
    %339 = vector.broadcast %c0_i32_95 : i32 to vector<24x24xi32>
    %340 = arith.select %338, %339, %333 : vector<24x24xi1>, vector<24x24xi32>
    %c12_i32_96 = arith.constant 12 : i32
    %341 = vector.broadcast %c12_i32_96 : i32 to vector<24x24xi32>
    %342 = arith.cmpi sge, %317, %341 : vector<24x24xi32>
    %c16_i32 = arith.constant 16 : i32
    %343 = vector.broadcast %c16_i32 : i32 to vector<24x24xi32>
    %344 = arith.cmpi slt, %317, %343 : vector<24x24xi32>
    %345 = arith.andi %342, %344 : vector<24x24xi1>
    %c1_i32_97 = arith.constant 1 : i32
    %346 = vector.broadcast %c1_i32_97 : i32 to vector<24x24xi32>
    %347 = arith.select %345, %346, %340 : vector<24x24xi1>, vector<24x24xi32>
    %c16_i32_98 = arith.constant 16 : i32
    %348 = vector.broadcast %c16_i32_98 : i32 to vector<24x24xi32>
    %349 = arith.cmpi sge, %317, %348 : vector<24x24xi32>
    %c20_i32 = arith.constant 20 : i32
    %350 = vector.broadcast %c20_i32 : i32 to vector<24x24xi32>
    %351 = arith.cmpi slt, %317, %350 : vector<24x24xi32>
    %352 = arith.andi %349, %351 : vector<24x24xi1>
    %c0_i32_99 = arith.constant 0 : i32
    %353 = vector.broadcast %c0_i32_99 : i32 to vector<24x24xi32>
    %354 = arith.select %352, %353, %347 : vector<24x24xi1>, vector<24x24xi32>
    %c20_i32_100 = arith.constant 20 : i32
    %355 = vector.broadcast %c20_i32_100 : i32 to vector<24x24xi32>
    %356 = arith.cmpi sge, %317, %355 : vector<24x24xi32>
    %c24_i32 = arith.constant 24 : i32
    %357 = vector.broadcast %c24_i32 : i32 to vector<24x24xi32>
    %358 = arith.cmpi slt, %317, %357 : vector<24x24xi32>
    %359 = arith.andi %356, %358 : vector<24x24xi1>
    %c1_i32_101 = arith.constant 1 : i32
    %360 = vector.broadcast %c1_i32_101 : i32 to vector<24x24xi32>
    %361 = arith.select %359, %360, %354 : vector<24x24xi1>, vector<24x24xi32>
    %c0_i32_102 = arith.constant 0 : i32
    %362 = vector.broadcast %c0_i32_102 : i32 to vector<24x24xi32>
    %c0_i32_103 = arith.constant 0 : i32
    %363 = vector.broadcast %c0_i32_103 : i32 to vector<24x24xi32>
    %364 = arith.cmpi sge, %318, %363 : vector<24x24xi32>
    %c4_i32_104 = arith.constant 4 : i32
    %365 = vector.broadcast %c4_i32_104 : i32 to vector<24x24xi32>
    %366 = arith.cmpi slt, %318, %365 : vector<24x24xi32>
    %367 = arith.andi %364, %366 : vector<24x24xi1>
    %c0_i32_105 = arith.constant 0 : i32
    %368 = vector.broadcast %c0_i32_105 : i32 to vector<24x24xi32>
    %369 = arith.select %367, %368, %362 : vector<24x24xi1>, vector<24x24xi32>
    %c4_i32_106 = arith.constant 4 : i32
    %370 = vector.broadcast %c4_i32_106 : i32 to vector<24x24xi32>
    %371 = arith.cmpi sge, %318, %370 : vector<24x24xi32>
    %c8_i32_107 = arith.constant 8 : i32
    %372 = vector.broadcast %c8_i32_107 : i32 to vector<24x24xi32>
    %373 = arith.cmpi slt, %318, %372 : vector<24x24xi32>
    %374 = arith.andi %371, %373 : vector<24x24xi1>
    %c1_i32_108 = arith.constant 1 : i32
    %375 = vector.broadcast %c1_i32_108 : i32 to vector<24x24xi32>
    %376 = arith.select %374, %375, %369 : vector<24x24xi1>, vector<24x24xi32>
    %c8_i32_109 = arith.constant 8 : i32
    %377 = vector.broadcast %c8_i32_109 : i32 to vector<24x24xi32>
    %378 = arith.cmpi sge, %318, %377 : vector<24x24xi32>
    %c12_i32_110 = arith.constant 12 : i32
    %379 = vector.broadcast %c12_i32_110 : i32 to vector<24x24xi32>
    %380 = arith.cmpi slt, %318, %379 : vector<24x24xi32>
    %381 = arith.andi %378, %380 : vector<24x24xi1>
    %c0_i32_111 = arith.constant 0 : i32
    %382 = vector.broadcast %c0_i32_111 : i32 to vector<24x24xi32>
    %383 = arith.select %381, %382, %376 : vector<24x24xi1>, vector<24x24xi32>
    %c12_i32_112 = arith.constant 12 : i32
    %384 = vector.broadcast %c12_i32_112 : i32 to vector<24x24xi32>
    %385 = arith.cmpi sge, %318, %384 : vector<24x24xi32>
    %c16_i32_113 = arith.constant 16 : i32
    %386 = vector.broadcast %c16_i32_113 : i32 to vector<24x24xi32>
    %387 = arith.cmpi slt, %318, %386 : vector<24x24xi32>
    %388 = arith.andi %385, %387 : vector<24x24xi1>
    %c1_i32_114 = arith.constant 1 : i32
    %389 = vector.broadcast %c1_i32_114 : i32 to vector<24x24xi32>
    %390 = arith.select %388, %389, %383 : vector<24x24xi1>, vector<24x24xi32>
    %c16_i32_115 = arith.constant 16 : i32
    %391 = vector.broadcast %c16_i32_115 : i32 to vector<24x24xi32>
    %392 = arith.cmpi sge, %318, %391 : vector<24x24xi32>
    %c20_i32_116 = arith.constant 20 : i32
    %393 = vector.broadcast %c20_i32_116 : i32 to vector<24x24xi32>
    %394 = arith.cmpi slt, %318, %393 : vector<24x24xi32>
    %395 = arith.andi %392, %394 : vector<24x24xi1>
    %c0_i32_117 = arith.constant 0 : i32
    %396 = vector.broadcast %c0_i32_117 : i32 to vector<24x24xi32>
    %397 = arith.select %395, %396, %390 : vector<24x24xi1>, vector<24x24xi32>
    %c20_i32_118 = arith.constant 20 : i32
    %398 = vector.broadcast %c20_i32_118 : i32 to vector<24x24xi32>
    %399 = arith.cmpi sge, %318, %398 : vector<24x24xi32>
    %c24_i32_119 = arith.constant 24 : i32
    %400 = vector.broadcast %c24_i32_119 : i32 to vector<24x24xi32>
    %401 = arith.cmpi slt, %318, %400 : vector<24x24xi32>
    %402 = arith.andi %399, %401 : vector<24x24xi1>
    %c1_i32_120 = arith.constant 1 : i32
    %403 = vector.broadcast %c1_i32_120 : i32 to vector<24x24xi32>
    %404 = arith.select %402, %403, %397 : vector<24x24xi1>, vector<24x24xi32>
    %405 = arith.cmpi eq, %361, %404 : vector<24x24xi32>
    %406 = vector.broadcast %316 : vector<1x24xi1> to vector<24x24xi1>
    %407 = arith.andi %405, %406 : vector<24x24xi1>
    %408 = arith.extui %407 : vector<24x24xi1> to vector<24x24xi32>
    %409 = arith.sitofp %408 : vector<24x24xi32> to vector<24x24xf32>
    %cst_121 = arith.constant 0.000000e+00 : f32
    %cst_122 = arith.constant -1.000000e+09 : f32
    %410 = vector.broadcast %cst_121 : f32 to vector<24x24xf32>
    %411 = vector.broadcast %cst_122 : f32 to vector<24x24xf32>
    %412 = arith.select %407, %410, %411 : vector<24x24xi1>, vector<24x24xf32>
    %413 = tpu.iota {dimensions = array<i32: 0>} : vector<6x24xi32>
    %414 = tpu.iota {dimensions = array<i32: 1>} : vector<6x24xi32>
    %c0_i32_123 = arith.constant 0 : i32
    %415 = vector.broadcast %c0_i32_123 : i32 to vector<6x24xi32>
    %c0_i32_124 = arith.constant 0 : i32
    %416 = vector.broadcast %c0_i32_124 : i32 to vector<6x24xi32>
    %c0_i32_125 = arith.constant 0 : i32
    %417 = vector.broadcast %c0_i32_125 : i32 to vector<6x24xi32>
    %418 = arith.cmpi sge, %414, %417 : vector<6x24xi32>
    %c4_i32_126 = arith.constant 4 : i32
    %419 = vector.broadcast %c4_i32_126 : i32 to vector<6x24xi32>
    %420 = arith.cmpi slt, %414, %419 : vector<6x24xi32>
    %421 = arith.andi %418, %420 : vector<6x24xi1>
    %c0_i32_127 = arith.constant 0 : i32
    %422 = vector.broadcast %c0_i32_127 : i32 to vector<6x24xi32>
    %423 = arith.select %421, %422, %415 : vector<6x24xi1>, vector<6x24xi32>
    %c0_i32_128 = arith.constant 0 : i32
    %424 = vector.broadcast %c0_i32_128 : i32 to vector<6x24xi32>
    %425 = arith.select %421, %424, %416 : vector<6x24xi1>, vector<6x24xi32>
    %c4_i32_129 = arith.constant 4 : i32
    %426 = vector.broadcast %c4_i32_129 : i32 to vector<6x24xi32>
    %427 = arith.cmpi sge, %414, %426 : vector<6x24xi32>
    %c8_i32_130 = arith.constant 8 : i32
    %428 = vector.broadcast %c8_i32_130 : i32 to vector<6x24xi32>
    %429 = arith.cmpi slt, %414, %428 : vector<6x24xi32>
    %430 = arith.andi %427, %429 : vector<6x24xi1>
    %c1_i32_131 = arith.constant 1 : i32
    %431 = vector.broadcast %c1_i32_131 : i32 to vector<6x24xi32>
    %432 = arith.select %430, %431, %423 : vector<6x24xi1>, vector<6x24xi32>
    %c0_i32_132 = arith.constant 0 : i32
    %433 = vector.broadcast %c0_i32_132 : i32 to vector<6x24xi32>
    %434 = arith.select %430, %433, %425 : vector<6x24xi1>, vector<6x24xi32>
    %c8_i32_133 = arith.constant 8 : i32
    %435 = vector.broadcast %c8_i32_133 : i32 to vector<6x24xi32>
    %436 = arith.cmpi sge, %414, %435 : vector<6x24xi32>
    %c12_i32_134 = arith.constant 12 : i32
    %437 = vector.broadcast %c12_i32_134 : i32 to vector<6x24xi32>
    %438 = arith.cmpi slt, %414, %437 : vector<6x24xi32>
    %439 = arith.andi %436, %438 : vector<6x24xi1>
    %c0_i32_135 = arith.constant 0 : i32
    %440 = vector.broadcast %c0_i32_135 : i32 to vector<6x24xi32>
    %441 = arith.select %439, %440, %432 : vector<6x24xi1>, vector<6x24xi32>
    %c1_i32_136 = arith.constant 1 : i32
    %442 = vector.broadcast %c1_i32_136 : i32 to vector<6x24xi32>
    %443 = arith.select %439, %442, %434 : vector<6x24xi1>, vector<6x24xi32>
    %c12_i32_137 = arith.constant 12 : i32
    %444 = vector.broadcast %c12_i32_137 : i32 to vector<6x24xi32>
    %445 = arith.cmpi sge, %414, %444 : vector<6x24xi32>
    %c16_i32_138 = arith.constant 16 : i32
    %446 = vector.broadcast %c16_i32_138 : i32 to vector<6x24xi32>
    %447 = arith.cmpi slt, %414, %446 : vector<6x24xi32>
    %448 = arith.andi %445, %447 : vector<6x24xi1>
    %c1_i32_139 = arith.constant 1 : i32
    %449 = vector.broadcast %c1_i32_139 : i32 to vector<6x24xi32>
    %450 = arith.select %448, %449, %441 : vector<6x24xi1>, vector<6x24xi32>
    %c1_i32_140 = arith.constant 1 : i32
    %451 = vector.broadcast %c1_i32_140 : i32 to vector<6x24xi32>
    %452 = arith.select %448, %451, %443 : vector<6x24xi1>, vector<6x24xi32>
    %c16_i32_141 = arith.constant 16 : i32
    %453 = vector.broadcast %c16_i32_141 : i32 to vector<6x24xi32>
    %454 = arith.cmpi sge, %414, %453 : vector<6x24xi32>
    %c20_i32_142 = arith.constant 20 : i32
    %455 = vector.broadcast %c20_i32_142 : i32 to vector<6x24xi32>
    %456 = arith.cmpi slt, %414, %455 : vector<6x24xi32>
    %457 = arith.andi %454, %456 : vector<6x24xi1>
    %c0_i32_143 = arith.constant 0 : i32
    %458 = vector.broadcast %c0_i32_143 : i32 to vector<6x24xi32>
    %459 = arith.select %457, %458, %450 : vector<6x24xi1>, vector<6x24xi32>
    %c2_i32 = arith.constant 2 : i32
    %460 = vector.broadcast %c2_i32 : i32 to vector<6x24xi32>
    %461 = arith.select %457, %460, %452 : vector<6x24xi1>, vector<6x24xi32>
    %c20_i32_144 = arith.constant 20 : i32
    %462 = vector.broadcast %c20_i32_144 : i32 to vector<6x24xi32>
    %463 = arith.cmpi sge, %414, %462 : vector<6x24xi32>
    %c24_i32_145 = arith.constant 24 : i32
    %464 = vector.broadcast %c24_i32_145 : i32 to vector<6x24xi32>
    %465 = arith.cmpi slt, %414, %464 : vector<6x24xi32>
    %466 = arith.andi %463, %465 : vector<6x24xi1>
    %c1_i32_146 = arith.constant 1 : i32
    %467 = vector.broadcast %c1_i32_146 : i32 to vector<6x24xi32>
    %468 = arith.select %466, %467, %459 : vector<6x24xi1>, vector<6x24xi32>
    %c2_i32_147 = arith.constant 2 : i32
    %469 = vector.broadcast %c2_i32_147 : i32 to vector<6x24xi32>
    %470 = arith.select %466, %469, %461 : vector<6x24xi1>, vector<6x24xi32>
    %c0_i32_148 = arith.constant 0 : i32
    %471 = vector.broadcast %c0_i32_148 : i32 to vector<6x24xi32>
    %c0_i32_149 = arith.constant 0 : i32
    %472 = vector.broadcast %c0_i32_149 : i32 to vector<6x24xi32>
    %c0_i32_150 = arith.constant 0 : i32
    %473 = vector.broadcast %c0_i32_150 : i32 to vector<6x24xi32>
    %474 = arith.cmpi eq, %413, %473 : vector<6x24xi32>
    %c0_i32_151 = arith.constant 0 : i32
    %475 = vector.broadcast %c0_i32_151 : i32 to vector<6x24xi32>
    %476 = arith.select %474, %475, %471 : vector<6x24xi1>, vector<6x24xi32>
    %c0_i32_152 = arith.constant 0 : i32
    %477 = vector.broadcast %c0_i32_152 : i32 to vector<6x24xi32>
    %478 = arith.select %474, %477, %472 : vector<6x24xi1>, vector<6x24xi32>
    %c1_i32_153 = arith.constant 1 : i32
    %479 = vector.broadcast %c1_i32_153 : i32 to vector<6x24xi32>
    %480 = arith.cmpi eq, %413, %479 : vector<6x24xi32>
    %c0_i32_154 = arith.constant 0 : i32
    %481 = vector.broadcast %c0_i32_154 : i32 to vector<6x24xi32>
    %482 = arith.select %480, %481, %476 : vector<6x24xi1>, vector<6x24xi32>
    %c1_i32_155 = arith.constant 1 : i32
    %483 = vector.broadcast %c1_i32_155 : i32 to vector<6x24xi32>
    %484 = arith.select %480, %483, %478 : vector<6x24xi1>, vector<6x24xi32>
    %c2_i32_156 = arith.constant 2 : i32
    %485 = vector.broadcast %c2_i32_156 : i32 to vector<6x24xi32>
    %486 = arith.cmpi eq, %413, %485 : vector<6x24xi32>
    %c1_i32_157 = arith.constant 1 : i32
    %487 = vector.broadcast %c1_i32_157 : i32 to vector<6x24xi32>
    %488 = arith.select %486, %487, %482 : vector<6x24xi1>, vector<6x24xi32>
    %c0_i32_158 = arith.constant 0 : i32
    %489 = vector.broadcast %c0_i32_158 : i32 to vector<6x24xi32>
    %490 = arith.select %486, %489, %484 : vector<6x24xi1>, vector<6x24xi32>
    %c3_i32 = arith.constant 3 : i32
    %491 = vector.broadcast %c3_i32 : i32 to vector<6x24xi32>
    %492 = arith.cmpi eq, %413, %491 : vector<6x24xi32>
    %c1_i32_159 = arith.constant 1 : i32
    %493 = vector.broadcast %c1_i32_159 : i32 to vector<6x24xi32>
    %494 = arith.select %492, %493, %488 : vector<6x24xi1>, vector<6x24xi32>
    %c1_i32_160 = arith.constant 1 : i32
    %495 = vector.broadcast %c1_i32_160 : i32 to vector<6x24xi32>
    %496 = arith.select %492, %495, %490 : vector<6x24xi1>, vector<6x24xi32>
    %c4_i32_161 = arith.constant 4 : i32
    %497 = vector.broadcast %c4_i32_161 : i32 to vector<6x24xi32>
    %498 = arith.cmpi eq, %413, %497 : vector<6x24xi32>
    %c2_i32_162 = arith.constant 2 : i32
    %499 = vector.broadcast %c2_i32_162 : i32 to vector<6x24xi32>
    %500 = arith.select %498, %499, %494 : vector<6x24xi1>, vector<6x24xi32>
    %c0_i32_163 = arith.constant 0 : i32
    %501 = vector.broadcast %c0_i32_163 : i32 to vector<6x24xi32>
    %502 = arith.select %498, %501, %496 : vector<6x24xi1>, vector<6x24xi32>
    %c5_i32 = arith.constant 5 : i32
    %503 = vector.broadcast %c5_i32 : i32 to vector<6x24xi32>
    %504 = arith.cmpi eq, %413, %503 : vector<6x24xi32>
    %c2_i32_164 = arith.constant 2 : i32
    %505 = vector.broadcast %c2_i32_164 : i32 to vector<6x24xi32>
    %506 = arith.select %504, %505, %500 : vector<6x24xi1>, vector<6x24xi32>
    %c1_i32_165 = arith.constant 1 : i32
    %507 = vector.broadcast %c1_i32_165 : i32 to vector<6x24xi32>
    %508 = arith.select %504, %507, %502 : vector<6x24xi1>, vector<6x24xi32>
    %509 = arith.cmpi eq, %506, %470 : vector<6x24xi32>
    %510 = arith.cmpi eq, %508, %468 : vector<6x24xi32>
    %511 = arith.andi %509, %510 : vector<6x24xi1>
    %512 = vector.broadcast %316 : vector<1x24xi1> to vector<6x24xi1>
    %513 = arith.andi %511, %512 : vector<6x24xi1>
    %514 = arith.extui %513 : vector<6x24xi1> to vector<6x24xi32>
    %515 = arith.sitofp %514 : vector<6x24xi32> to vector<6x24xf32>
    %cst_166 = arith.constant dense<0.000000e+00> : vector<6xf32>
    %516 = vector.multi_reduction <add>, %515, %cst_166 [1] : vector<6x24xf32> to vector<6xf32>
    %517 = vector.shape_cast %516 : vector<6xf32> to vector<6x1xf32>
    %cst_167 = arith.constant 1.000000e+00 : f32
    %518 = vector.broadcast %cst_167 : f32 to vector<6x1xf32>
    %519 = arith.maximumf %517, %518 : vector<6x1xf32>
    %520 = vector.broadcast %519 : vector<6x1xf32> to vector<6x24xf32>
    %521 = arith.divf %515, %520 : vector<6x24xf32>
    %c13 = arith.constant 13 : index
    %c0_168 = arith.constant 0 : index
    %522 = vector.load %arg3[%c13, %c0_168] : memref<36x512xf32, #tpu.memory_space<vmem>>, vector<1x256xf32>
    %c14 = arith.constant 14 : index
    %c0_169 = arith.constant 0 : index
    %523 = vector.load %arg3[%c14, %c0_169] : memref<36x512xf32, #tpu.memory_space<vmem>>, vector<1x256xf32>
    %cst_170 = arith.constant dense<0.000000e+00> : vector<24xf32>
    %524 = vector.multi_reduction <add>, %313, %cst_170 [1] : vector<24x256xf32> to vector<24xf32>
    %525 = vector.shape_cast %524 : vector<24xf32> to vector<24x1xf32>
    %cst_171 = arith.constant 2.560000e+02 : f32
    %526 = vector.broadcast %cst_171 : f32 to vector<24x1xf32>
    %527 = arith.divf %525, %526 : vector<24x1xf32>
    %528 = vector.broadcast %527 : vector<24x1xf32> to vector<24x256xf32>
    %529 = arith.subf %313, %528 : vector<24x256xf32>
    %530 = arith.mulf %529, %529 : vector<24x256xf32>
    %cst_172 = arith.constant dense<0.000000e+00> : vector<24xf32>
    %531 = vector.multi_reduction <add>, %530, %cst_172 [1] : vector<24x256xf32> to vector<24xf32>
    %532 = vector.shape_cast %531 : vector<24xf32> to vector<24x1xf32>
    %cst_173 = arith.constant 2.560000e+02 : f32
    %533 = vector.broadcast %cst_173 : f32 to vector<24x1xf32>
    %534 = arith.divf %532, %533 : vector<24x1xf32>
    %535 = vector.broadcast %527 : vector<24x1xf32> to vector<24x256xf32>
    %536 = arith.subf %313, %535 : vector<24x256xf32>
    %cst_174 = arith.constant 9.99999997E-7 : f32
    %537 = vector.broadcast %cst_174 : f32 to vector<24x1xf32>
    %538 = arith.addf %534, %537 : vector<24x1xf32>
    %539 = math.rsqrt %538 : vector<24x1xf32>
    %540 = vector.broadcast %539 : vector<24x1xf32> to vector<24x256xf32>
    %541 = arith.mulf %536, %540 : vector<24x256xf32>
    %542 = vector.broadcast %522 : vector<1x256xf32> to vector<24x256xf32>
    %543 = arith.mulf %541, %542 : vector<24x256xf32>
    %544 = vector.broadcast %523 : vector<1x256xf32> to vector<24x256xf32>
    %545 = arith.addf %543, %544 : vector<24x256xf32>
    %546 = arith.truncf %545 : vector<24x256xf32> to vector<24x256xbf16>
    %c1408 = arith.constant 1408 : index
    %c0_175 = arith.constant 0 : index
    %547 = vector.load %arg4[%c1408, %c0_175] : memref<4992x256xbf16, #tpu.memory_space<vmem>>, vector<256x256xbf16>
    %cst_176 = arith.constant dense<0.000000e+00> : vector<24x256xf32>
    %548 = tpu.matmul %546, %547, %cst_176 {dimension_numbers = #tpu.dot_dimension_numbers<[1], [0], [0], [1], [0, 0, 1, 1], [], []>} : vector<24x256xbf16>, vector<256x256xbf16>, vector<24x256xf32> -> vector<24x256xf32>
    %c15 = arith.constant 15 : index
    %c0_177 = arith.constant 0 : index
    %549 = vector.load %arg3[%c15, %c0_177] : memref<36x512xf32, #tpu.memory_space<vmem>>, vector<1x256xf32>
    %550 = vector.broadcast %549 : vector<1x256xf32> to vector<24x256xf32>
    %551 = arith.addf %548, %550 : vector<24x256xf32>
    %c1664 = arith.constant 1664 : index
    %c0_178 = arith.constant 0 : index
    %552 = vector.load %arg4[%c1664, %c0_178] : memref<4992x256xbf16, #tpu.memory_space<vmem>>, vector<256x256xbf16>
    %cst_179 = arith.constant dense<0.000000e+00> : vector<24x256xf32>
    %553 = tpu.matmul %546, %552, %cst_179 {dimension_numbers = #tpu.dot_dimension_numbers<[1], [0], [0], [1], [0, 0, 1, 1], [], []>} : vector<24x256xbf16>, vector<256x256xbf16>, vector<24x256xf32> -> vector<24x256xf32>
    %c16_180 = arith.constant 16 : index
    %c0_181 = arith.constant 0 : index
    %554 = vector.load %arg3[%c16_180, %c0_181] : memref<36x512xf32, #tpu.memory_space<vmem>>, vector<1x256xf32>
    %555 = vector.broadcast %554 : vector<1x256xf32> to vector<24x256xf32>
    %556 = arith.addf %553, %555 : vector<24x256xf32>
    %c1920 = arith.constant 1920 : index
    %c0_182 = arith.constant 0 : index
    %557 = vector.load %arg4[%c1920, %c0_182] : memref<4992x256xbf16, #tpu.memory_space<vmem>>, vector<256x256xbf16>
    %cst_183 = arith.constant dense<0.000000e+00> : vector<24x256xf32>
    %558 = tpu.matmul %546, %557, %cst_183 {dimension_numbers = #tpu.dot_dimension_numbers<[1], [0], [0], [1], [0, 0, 1, 1], [], []>} : vector<24x256xbf16>, vector<256x256xbf16>, vector<24x256xf32> -> vector<24x256xf32>
    %c17 = arith.constant 17 : index
    %c0_184 = arith.constant 0 : index
    %559 = vector.load %arg3[%c17, %c0_184] : memref<36x512xf32, #tpu.memory_space<vmem>>, vector<1x256xf32>
    %560 = vector.broadcast %559 : vector<1x256xf32> to vector<24x256xf32>
    %561 = arith.addf %558, %560 : vector<24x256xf32>
    %562 = vector.extract_strided_slice %551 {offsets = [0, 0], sizes = [24, 64], strides = [1, 1]} : vector<24x256xf32> to vector<24x64xf32>
    %563 = arith.truncf %562 : vector<24x64xf32> to vector<24x64xbf16>
    %564 = vector.extract_strided_slice %556 {offsets = [0, 0], sizes = [24, 64], strides = [1, 1]} : vector<24x256xf32> to vector<24x64xf32>
    %565 = arith.truncf %564 : vector<24x64xf32> to vector<24x64xbf16>
    %566 = vector.extract_strided_slice %561 {offsets = [0, 0], sizes = [24, 64], strides = [1, 1]} : vector<24x256xf32> to vector<24x64xf32>
    %567 = arith.truncf %566 : vector<24x64xf32> to vector<24x64xbf16>
    %cst_185 = arith.constant dense<0.000000e+00> : vector<24x24xf32>
    %568 = tpu.matmul %563, %565, %cst_185 {dimension_numbers = #tpu.dot_dimension_numbers<[1], [1], [0], [0], [0, 0, 1, 0], [], []>} : vector<24x64xbf16>, vector<24x64xbf16>, vector<24x24xf32> -> vector<24x24xf32>
    %cst_186 = arith.constant 1.250000e-01 : f32
    %569 = vector.broadcast %cst_186 : f32 to vector<24x24xf32>
    %570 = arith.mulf %568, %569 : vector<24x24xf32>
    %571 = arith.addf %570, %412 : vector<24x24xf32>
    %cst_187 = arith.constant dense<0xFF800000> : vector<24xf32>
    %572 = vector.multi_reduction <maximumf>, %571, %cst_187 [1] : vector<24x24xf32> to vector<24xf32>
    %573 = vector.shape_cast %572 : vector<24xf32> to vector<24x1xf32>
    %574 = vector.broadcast %573 : vector<24x1xf32> to vector<24x24xf32>
    %575 = arith.subf %571, %574 : vector<24x24xf32>
    %576 = math.exp %575 : vector<24x24xf32>
    %577 = arith.mulf %576, %409 : vector<24x24xf32>
    %cst_188 = arith.constant dense<0.000000e+00> : vector<24xf32>
    %578 = vector.multi_reduction <add>, %577, %cst_188 [1] : vector<24x24xf32> to vector<24xf32>
    %579 = vector.shape_cast %578 : vector<24xf32> to vector<24x1xf32>
    %cst_189 = arith.constant 9.99999968E-21 : f32
    %580 = vector.broadcast %cst_189 : f32 to vector<24x1xf32>
    %581 = arith.maximumf %579, %580 : vector<24x1xf32>
    %582 = tpu.reciprocal %581 {approx = true} : vector<24x1xf32> -> vector<24x1xf32>
    %583 = vector.broadcast %582 : vector<24x1xf32> to vector<24x24xf32>
    %584 = arith.mulf %577, %583 : vector<24x24xf32>
    %585 = arith.truncf %584 : vector<24x24xf32> to vector<24x24xbf16>
    %cst_190 = arith.constant dense<0.000000e+00> : vector<24x64xf32>
    %586 = tpu.matmul %585, %567, %cst_190 {dimension_numbers = #tpu.dot_dimension_numbers<[1], [0], [0], [1], [0, 0, 1, 1], [], []>} : vector<24x24xbf16>, vector<24x64xbf16>, vector<24x64xf32> -> vector<24x64xf32>
    %587 = vector.extract_strided_slice %551 {offsets = [0, 64], sizes = [24, 64], strides = [1, 1]} : vector<24x256xf32> to vector<24x64xf32>
    %588 = arith.truncf %587 : vector<24x64xf32> to vector<24x64xbf16>
    %589 = vector.extract_strided_slice %556 {offsets = [0, 64], sizes = [24, 64], strides = [1, 1]} : vector<24x256xf32> to vector<24x64xf32>
    %590 = arith.truncf %589 : vector<24x64xf32> to vector<24x64xbf16>
    %591 = vector.extract_strided_slice %561 {offsets = [0, 64], sizes = [24, 64], strides = [1, 1]} : vector<24x256xf32> to vector<24x64xf32>
    %592 = arith.truncf %591 : vector<24x64xf32> to vector<24x64xbf16>
    %cst_191 = arith.constant dense<0.000000e+00> : vector<24x24xf32>
    %593 = tpu.matmul %588, %590, %cst_191 {dimension_numbers = #tpu.dot_dimension_numbers<[1], [1], [0], [0], [0, 0, 1, 0], [], []>} : vector<24x64xbf16>, vector<24x64xbf16>, vector<24x24xf32> -> vector<24x24xf32>
    %cst_192 = arith.constant 1.250000e-01 : f32
    %594 = vector.broadcast %cst_192 : f32 to vector<24x24xf32>
    %595 = arith.mulf %593, %594 : vector<24x24xf32>
    %596 = arith.addf %595, %412 : vector<24x24xf32>
    %cst_193 = arith.constant dense<0xFF800000> : vector<24xf32>
    %597 = vector.multi_reduction <maximumf>, %596, %cst_193 [1] : vector<24x24xf32> to vector<24xf32>
    %598 = vector.shape_cast %597 : vector<24xf32> to vector<24x1xf32>
    %599 = vector.broadcast %598 : vector<24x1xf32> to vector<24x24xf32>
    %600 = arith.subf %596, %599 : vector<24x24xf32>
    %601 = math.exp %600 : vector<24x24xf32>
    %602 = arith.mulf %601, %409 : vector<24x24xf32>
    %cst_194 = arith.constant dense<0.000000e+00> : vector<24xf32>
    %603 = vector.multi_reduction <add>, %602, %cst_194 [1] : vector<24x24xf32> to vector<24xf32>
    %604 = vector.shape_cast %603 : vector<24xf32> to vector<24x1xf32>
    %cst_195 = arith.constant 9.99999968E-21 : f32
    %605 = vector.broadcast %cst_195 : f32 to vector<24x1xf32>
    %606 = arith.maximumf %604, %605 : vector<24x1xf32>
    %607 = tpu.reciprocal %606 {approx = true} : vector<24x1xf32> -> vector<24x1xf32>
    %608 = vector.broadcast %607 : vector<24x1xf32> to vector<24x24xf32>
    %609 = arith.mulf %602, %608 : vector<24x24xf32>
    %610 = arith.truncf %609 : vector<24x24xf32> to vector<24x24xbf16>
    %cst_196 = arith.constant dense<0.000000e+00> : vector<24x64xf32>
    %611 = tpu.matmul %610, %592, %cst_196 {dimension_numbers = #tpu.dot_dimension_numbers<[1], [0], [0], [1], [0, 0, 1, 1], [], []>} : vector<24x24xbf16>, vector<24x64xbf16>, vector<24x64xf32> -> vector<24x64xf32>
    %612 = vector.extract_strided_slice %551 {offsets = [0, 128], sizes = [24, 64], strides = [1, 1]} : vector<24x256xf32> to vector<24x64xf32>
    %613 = arith.truncf %612 : vector<24x64xf32> to vector<24x64xbf16>
    %614 = vector.extract_strided_slice %556 {offsets = [0, 128], sizes = [24, 64], strides = [1, 1]} : vector<24x256xf32> to vector<24x64xf32>
    %615 = arith.truncf %614 : vector<24x64xf32> to vector<24x64xbf16>
    %616 = vector.extract_strided_slice %561 {offsets = [0, 128], sizes = [24, 64], strides = [1, 1]} : vector<24x256xf32> to vector<24x64xf32>
    %617 = arith.truncf %616 : vector<24x64xf32> to vector<24x64xbf16>
    %cst_197 = arith.constant dense<0.000000e+00> : vector<24x24xf32>
    %618 = tpu.matmul %613, %615, %cst_197 {dimension_numbers = #tpu.dot_dimension_numbers<[1], [1], [0], [0], [0, 0, 1, 0], [], []>} : vector<24x64xbf16>, vector<24x64xbf16>, vector<24x24xf32> -> vector<24x24xf32>
    %cst_198 = arith.constant 1.250000e-01 : f32
    %619 = vector.broadcast %cst_198 : f32 to vector<24x24xf32>
    %620 = arith.mulf %618, %619 : vector<24x24xf32>
    %621 = arith.addf %620, %412 : vector<24x24xf32>
    %cst_199 = arith.constant dense<0xFF800000> : vector<24xf32>
    %622 = vector.multi_reduction <maximumf>, %621, %cst_199 [1] : vector<24x24xf32> to vector<24xf32>
    %623 = vector.shape_cast %622 : vector<24xf32> to vector<24x1xf32>
    %624 = vector.broadcast %623 : vector<24x1xf32> to vector<24x24xf32>
    %625 = arith.subf %621, %624 : vector<24x24xf32>
    %626 = math.exp %625 : vector<24x24xf32>
    %627 = arith.mulf %626, %409 : vector<24x24xf32>
    %cst_200 = arith.constant dense<0.000000e+00> : vector<24xf32>
    %628 = vector.multi_reduction <add>, %627, %cst_200 [1] : vector<24x24xf32> to vector<24xf32>
    %629 = vector.shape_cast %628 : vector<24xf32> to vector<24x1xf32>
    %cst_201 = arith.constant 9.99999968E-21 : f32
    %630 = vector.broadcast %cst_201 : f32 to vector<24x1xf32>
    %631 = arith.maximumf %629, %630 : vector<24x1xf32>
    %632 = tpu.reciprocal %631 {approx = true} : vector<24x1xf32> -> vector<24x1xf32>
    %633 = vector.broadcast %632 : vector<24x1xf32> to vector<24x24xf32>
    %634 = arith.mulf %627, %633 : vector<24x24xf32>
    %635 = arith.truncf %634 : vector<24x24xf32> to vector<24x24xbf16>
    %cst_202 = arith.constant dense<0.000000e+00> : vector<24x64xf32>
    %636 = tpu.matmul %635, %617, %cst_202 {dimension_numbers = #tpu.dot_dimension_numbers<[1], [0], [0], [1], [0, 0, 1, 1], [], []>} : vector<24x24xbf16>, vector<24x64xbf16>, vector<24x64xf32> -> vector<24x64xf32>
    %637 = vector.extract_strided_slice %551 {offsets = [0, 192], sizes = [24, 64], strides = [1, 1]} : vector<24x256xf32> to vector<24x64xf32>
    %638 = arith.truncf %637 : vector<24x64xf32> to vector<24x64xbf16>
    %639 = vector.extract_strided_slice %556 {offsets = [0, 192], sizes = [24, 64], strides = [1, 1]} : vector<24x256xf32> to vector<24x64xf32>
    %640 = arith.truncf %639 : vector<24x64xf32> to vector<24x64xbf16>
    %641 = vector.extract_strided_slice %561 {offsets = [0, 192], sizes = [24, 64], strides = [1, 1]} : vector<24x256xf32> to vector<24x64xf32>
    %642 = arith.truncf %641 : vector<24x64xf32> to vector<24x64xbf16>
    %cst_203 = arith.constant dense<0.000000e+00> : vector<24x24xf32>
    %643 = tpu.matmul %638, %640, %cst_203 {dimension_numbers = #tpu.dot_dimension_numbers<[1], [1], [0], [0], [0, 0, 1, 0], [], []>} : vector<24x64xbf16>, vector<24x64xbf16>, vector<24x24xf32> -> vector<24x24xf32>
    %cst_204 = arith.constant 1.250000e-01 : f32
    %644 = vector.broadcast %cst_204 : f32 to vector<24x24xf32>
    %645 = arith.mulf %643, %644 : vector<24x24xf32>
    %646 = arith.addf %645, %412 : vector<24x24xf32>
    %cst_205 = arith.constant dense<0xFF800000> : vector<24xf32>
    %647 = vector.multi_reduction <maximumf>, %646, %cst_205 [1] : vector<24x24xf32> to vector<24xf32>
    %648 = vector.shape_cast %647 : vector<24xf32> to vector<24x1xf32>
    %649 = vector.broadcast %648 : vector<24x1xf32> to vector<24x24xf32>
    %650 = arith.subf %646, %649 : vector<24x24xf32>
    %651 = math.exp %650 : vector<24x24xf32>
    %652 = arith.mulf %651, %409 : vector<24x24xf32>
    %cst_206 = arith.constant dense<0.000000e+00> : vector<24xf32>
    %653 = vector.multi_reduction <add>, %652, %cst_206 [1] : vector<24x24xf32> to vector<24xf32>
    %654 = vector.shape_cast %653 : vector<24xf32> to vector<24x1xf32>
    %cst_207 = arith.constant 9.99999968E-21 : f32
    %655 = vector.broadcast %cst_207 : f32 to vector<24x1xf32>
    %656 = arith.maximumf %654, %655 : vector<24x1xf32>
    %657 = tpu.reciprocal %656 {approx = true} : vector<24x1xf32> -> vector<24x1xf32>
    %658 = vector.broadcast %657 : vector<24x1xf32> to vector<24x24xf32>
    %659 = arith.mulf %652, %658 : vector<24x24xf32>
    %660 = arith.truncf %659 : vector<24x24xf32> to vector<24x24xbf16>
    %cst_208 = arith.constant dense<0.000000e+00> : vector<24x64xf32>
    %661 = tpu.matmul %660, %642, %cst_208 {dimension_numbers = #tpu.dot_dimension_numbers<[1], [0], [0], [1], [0, 0, 1, 1], [], []>} : vector<24x24xbf16>, vector<24x64xbf16>, vector<24x64xf32> -> vector<24x64xf32>
    %662 = tpu.concatenate %586, %611, %636, %661 in 1 : vector<24x64xf32>, vector<24x64xf32>, vector<24x64xf32>, vector<24x64xf32> -> vector<24x256xf32>
    %c2176 = arith.constant 2176 : index
    %c0_209 = arith.constant 0 : index
    %663 = vector.load %arg4[%c2176, %c0_209] : memref<4992x256xbf16, #tpu.memory_space<vmem>>, vector<256x256xbf16>
    %664 = arith.truncf %662 : vector<24x256xf32> to vector<24x256xbf16>
    %cst_210 = arith.constant dense<0.000000e+00> : vector<24x256xf32>
    %665 = tpu.matmul %664, %663, %cst_210 {dimension_numbers = #tpu.dot_dimension_numbers<[1], [0], [0], [1], [0, 0, 1, 1], [], []>} : vector<24x256xbf16>, vector<256x256xbf16>, vector<24x256xf32> -> vector<24x256xf32>
    %666 = arith.addf %313, %665 : vector<24x256xf32>
    %c18 = arith.constant 18 : index
    %c0_211 = arith.constant 0 : index
    %667 = vector.load %arg3[%c18, %c0_211] : memref<36x512xf32, #tpu.memory_space<vmem>>, vector<1x256xf32>
    %668 = vector.broadcast %667 : vector<1x256xf32> to vector<24x256xf32>
    %669 = arith.addf %666, %668 : vector<24x256xf32>
    %c19 = arith.constant 19 : index
    %c0_212 = arith.constant 0 : index
    %670 = vector.load %arg3[%c19, %c0_212] : memref<36x512xf32, #tpu.memory_space<vmem>>, vector<1x256xf32>
    %c20 = arith.constant 20 : index
    %c0_213 = arith.constant 0 : index
    %671 = vector.load %arg3[%c20, %c0_213] : memref<36x512xf32, #tpu.memory_space<vmem>>, vector<1x256xf32>
    %cst_214 = arith.constant dense<0.000000e+00> : vector<24xf32>
    %672 = vector.multi_reduction <add>, %669, %cst_214 [1] : vector<24x256xf32> to vector<24xf32>
    %673 = vector.shape_cast %672 : vector<24xf32> to vector<24x1xf32>
    %cst_215 = arith.constant 2.560000e+02 : f32
    %674 = vector.broadcast %cst_215 : f32 to vector<24x1xf32>
    %675 = arith.divf %673, %674 : vector<24x1xf32>
    %676 = vector.broadcast %675 : vector<24x1xf32> to vector<24x256xf32>
    %677 = arith.subf %669, %676 : vector<24x256xf32>
    %678 = arith.mulf %677, %677 : vector<24x256xf32>
    %cst_216 = arith.constant dense<0.000000e+00> : vector<24xf32>
    %679 = vector.multi_reduction <add>, %678, %cst_216 [1] : vector<24x256xf32> to vector<24xf32>
    %680 = vector.shape_cast %679 : vector<24xf32> to vector<24x1xf32>
    %cst_217 = arith.constant 2.560000e+02 : f32
    %681 = vector.broadcast %cst_217 : f32 to vector<24x1xf32>
    %682 = arith.divf %680, %681 : vector<24x1xf32>
    %683 = vector.broadcast %675 : vector<24x1xf32> to vector<24x256xf32>
    %684 = arith.subf %669, %683 : vector<24x256xf32>
    %cst_218 = arith.constant 9.99999997E-7 : f32
    %685 = vector.broadcast %cst_218 : f32 to vector<24x1xf32>
    %686 = arith.addf %682, %685 : vector<24x1xf32>
    %687 = math.rsqrt %686 : vector<24x1xf32>
    %688 = vector.broadcast %687 : vector<24x1xf32> to vector<24x256xf32>
    %689 = arith.mulf %684, %688 : vector<24x256xf32>
    %690 = vector.broadcast %670 : vector<1x256xf32> to vector<24x256xf32>
    %691 = arith.mulf %689, %690 : vector<24x256xf32>
    %692 = vector.broadcast %671 : vector<1x256xf32> to vector<24x256xf32>
    %693 = arith.addf %691, %692 : vector<24x256xf32>
    %c2432 = arith.constant 2432 : index
    %c0_219 = arith.constant 0 : index
    %694 = vector.load %arg4[%c2432, %c0_219] : memref<4992x256xbf16, #tpu.memory_space<vmem>>, vector<256x256xbf16>
    %695 = arith.truncf %693 : vector<24x256xf32> to vector<24x256xbf16>
    %cst_220 = arith.constant dense<0.000000e+00> : vector<24x256xf32>
    %696 = tpu.matmul %695, %694, %cst_220 {dimension_numbers = #tpu.dot_dimension_numbers<[1], [0], [0], [1], [0, 0, 1, 1], [], []>} : vector<24x256xbf16>, vector<256x256xbf16>, vector<24x256xf32> -> vector<24x256xf32>
    %c21 = arith.constant 21 : index
    %c0_221 = arith.constant 0 : index
    %697 = vector.load %arg3[%c21, %c0_221] : memref<36x512xf32, #tpu.memory_space<vmem>>, vector<1x256xf32>
    %698 = vector.broadcast %697 : vector<1x256xf32> to vector<24x256xf32>
    %699 = arith.addf %696, %698 : vector<24x256xf32>
    %700 = arith.mulf %699, %699 : vector<24x256xf32>
    %701 = arith.mulf %699, %700 : vector<24x256xf32>
    %cst_222 = arith.constant 4.471500e-02 : f32
    %702 = vector.broadcast %cst_222 : f32 to vector<24x256xf32>
    %703 = arith.mulf %702, %701 : vector<24x256xf32>
    %704 = arith.addf %699, %703 : vector<24x256xf32>
    %cst_223 = arith.constant 0.797884583 : f32
    %705 = vector.broadcast %cst_223 : f32 to vector<24x256xf32>
    %706 = arith.mulf %705, %704 : vector<24x256xf32>
    %707 = math.tanh %706 : vector<24x256xf32>
    %cst_224 = arith.constant 1.000000e+00 : f32
    %708 = vector.broadcast %cst_224 : f32 to vector<24x256xf32>
    %709 = arith.addf %708, %707 : vector<24x256xf32>
    %cst_225 = arith.constant 5.000000e-01 : f32
    %710 = vector.broadcast %cst_225 : f32 to vector<24x256xf32>
    %711 = arith.mulf %710, %709 : vector<24x256xf32>
    %712 = arith.mulf %699, %711 : vector<24x256xf32>
    %c2688 = arith.constant 2688 : index
    %c0_226 = arith.constant 0 : index
    %713 = vector.load %arg4[%c2688, %c0_226] : memref<4992x256xbf16, #tpu.memory_space<vmem>>, vector<256x256xbf16>
    %714 = arith.truncf %712 : vector<24x256xf32> to vector<24x256xbf16>
    %cst_227 = arith.constant dense<0.000000e+00> : vector<24x256xf32>
    %715 = tpu.matmul %714, %713, %cst_227 {dimension_numbers = #tpu.dot_dimension_numbers<[1], [0], [0], [1], [0, 0, 1, 1], [], []>} : vector<24x256xbf16>, vector<256x256xbf16>, vector<24x256xf32> -> vector<24x256xf32>
    %716 = arith.addf %669, %715 : vector<24x256xf32>
    %c22 = arith.constant 22 : index
    %c0_228 = arith.constant 0 : index
    %717 = vector.load %arg3[%c22, %c0_228] : memref<36x512xf32, #tpu.memory_space<vmem>>, vector<1x256xf32>
    %718 = vector.broadcast %717 : vector<1x256xf32> to vector<24x256xf32>
    %719 = arith.addf %716, %718 : vector<24x256xf32>
    %c23 = arith.constant 23 : index
    %c0_229 = arith.constant 0 : index
    %720 = vector.load %arg3[%c23, %c0_229] : memref<36x512xf32, #tpu.memory_space<vmem>>, vector<1x256xf32>
    %c24_230 = arith.constant 24 : index
    %c0_231 = arith.constant 0 : index
    %721 = vector.load %arg3[%c24_230, %c0_231] : memref<36x512xf32, #tpu.memory_space<vmem>>, vector<1x256xf32>
    %cst_232 = arith.constant dense<0.000000e+00> : vector<24xf32>
    %722 = vector.multi_reduction <add>, %719, %cst_232 [1] : vector<24x256xf32> to vector<24xf32>
    %723 = vector.shape_cast %722 : vector<24xf32> to vector<24x1xf32>
    %cst_233 = arith.constant 2.560000e+02 : f32
    %724 = vector.broadcast %cst_233 : f32 to vector<24x1xf32>
    %725 = arith.divf %723, %724 : vector<24x1xf32>
    %726 = vector.broadcast %725 : vector<24x1xf32> to vector<24x256xf32>
    %727 = arith.subf %719, %726 : vector<24x256xf32>
    %728 = arith.mulf %727, %727 : vector<24x256xf32>
    %cst_234 = arith.constant dense<0.000000e+00> : vector<24xf32>
    %729 = vector.multi_reduction <add>, %728, %cst_234 [1] : vector<24x256xf32> to vector<24xf32>
    %730 = vector.shape_cast %729 : vector<24xf32> to vector<24x1xf32>
    %cst_235 = arith.constant 2.560000e+02 : f32
    %731 = vector.broadcast %cst_235 : f32 to vector<24x1xf32>
    %732 = arith.divf %730, %731 : vector<24x1xf32>
    %733 = vector.broadcast %725 : vector<24x1xf32> to vector<24x256xf32>
    %734 = arith.subf %719, %733 : vector<24x256xf32>
    %cst_236 = arith.constant 9.99999997E-7 : f32
    %735 = vector.broadcast %cst_236 : f32 to vector<24x1xf32>
    %736 = arith.addf %732, %735 : vector<24x1xf32>
    %737 = math.rsqrt %736 : vector<24x1xf32>
    %738 = vector.broadcast %737 : vector<24x1xf32> to vector<24x256xf32>
    %739 = arith.mulf %734, %738 : vector<24x256xf32>
    %740 = vector.broadcast %720 : vector<1x256xf32> to vector<24x256xf32>
    %741 = arith.mulf %739, %740 : vector<24x256xf32>
    %742 = vector.broadcast %721 : vector<1x256xf32> to vector<24x256xf32>
    %743 = arith.addf %741, %742 : vector<24x256xf32>
    %744 = arith.truncf %521 : vector<6x24xf32> to vector<6x24xbf16>
    %745 = arith.truncf %743 : vector<24x256xf32> to vector<24x256xbf16>
    %cst_237 = arith.constant dense<0.000000e+00> : vector<6x256xf32>
    %746 = tpu.matmul %744, %745, %cst_237 {dimension_numbers = #tpu.dot_dimension_numbers<[1], [0], [0], [1], [0, 0, 1, 1], [], []>} : vector<6x24xbf16>, vector<24x256xbf16>, vector<6x256xf32> -> vector<6x256xf32>
    %cst_238 = arith.constant 0.000000e+00 : f32
    %747 = vector.broadcast %cst_238 : f32 to vector<2x256xf32>
    %748 = vector.extract_strided_slice %746 {offsets = [0, 0], sizes = [2, 256], strides = [1, 1]} : vector<6x256xf32> to vector<2x256xf32>
    %c2944 = arith.constant 2944 : index
    %c0_239 = arith.constant 0 : index
    %749 = vector.load %arg4[%c2944, %c0_239] : memref<4992x256xbf16, #tpu.memory_space<vmem>>, vector<256x256xbf16>
    %c25 = arith.constant 25 : index
    %c0_240 = arith.constant 0 : index
    %750 = vector.load %arg3[%c25, %c0_240] : memref<36x512xf32, #tpu.memory_space<vmem>>, vector<1x256xf32>
    %c3200 = arith.constant 3200 : index
    %c0_241 = arith.constant 0 : index
    %751 = vector.load %arg4[%c3200, %c0_241] : memref<4992x256xbf16, #tpu.memory_space<vmem>>, vector<256x256xbf16>
    %c26 = arith.constant 26 : index
    %c0_242 = arith.constant 0 : index
    %752 = vector.load %arg3[%c26, %c0_242] : memref<36x512xf32, #tpu.memory_space<vmem>>, vector<1x256xf32>
    %753 = arith.truncf %748 : vector<2x256xf32> to vector<2x256xbf16>
    %cst_243 = arith.constant dense<0.000000e+00> : vector<2x256xf32>
    %754 = tpu.matmul %753, %749, %cst_243 {dimension_numbers = #tpu.dot_dimension_numbers<[1], [0], [0], [1], [0, 0, 1, 1], [], []>} : vector<2x256xbf16>, vector<256x256xbf16>, vector<2x256xf32> -> vector<2x256xf32>
    %755 = vector.broadcast %750 : vector<1x256xf32> to vector<2x256xf32>
    %756 = arith.addf %754, %755 : vector<2x256xf32>
    %757 = arith.truncf %756 : vector<2x256xf32> to vector<2x256xbf16>
    %cst_244 = arith.constant dense<0.000000e+00> : vector<2x256xf32>
    %758 = tpu.matmul %757, %751, %cst_244 {dimension_numbers = #tpu.dot_dimension_numbers<[1], [0], [0], [1], [0, 0, 1, 1], [], []>} : vector<2x256xbf16>, vector<256x256xbf16>, vector<2x256xf32> -> vector<2x256xf32>
    %759 = vector.broadcast %752 : vector<1x256xf32> to vector<2x256xf32>
    %760 = arith.addf %758, %759 : vector<2x256xf32>
    %761 = arith.negf %760 : vector<2x256xf32>
    %762 = math.exp %761 : vector<2x256xf32>
    %cst_245 = arith.constant 1.000000e+00 : f32
    %763 = vector.broadcast %cst_245 : f32 to vector<2x256xf32>
    %764 = arith.addf %763, %762 : vector<2x256xf32>
    %765 = arith.divf %763, %764 : vector<2x256xf32>
    %766 = arith.mulf %756, %765 : vector<2x256xf32>
    %767 = arith.mulf %766, %766 : vector<2x256xf32>
    %cst_246 = arith.constant dense<0.000000e+00> : vector<2xf32>
    %768 = vector.multi_reduction <add>, %767, %cst_246 [1] : vector<2x256xf32> to vector<2xf32>
    %769 = vector.shape_cast %768 : vector<2xf32> to vector<2x1xf32>
    %cst_247 = arith.constant 9.99999996E-13 : f32
    %770 = vector.broadcast %cst_247 : f32 to vector<2x1xf32>
    %771 = arith.addf %769, %770 : vector<2x1xf32>
    %772 = math.rsqrt %771 : vector<2x1xf32>
    %773 = vector.broadcast %772 : vector<2x1xf32> to vector<2x256xf32>
    %774 = arith.mulf %766, %773 : vector<2x256xf32>
    %775 = arith.addf %747, %774 : vector<2x256xf32>
    %776 = vector.extract_strided_slice %746 {offsets = [2, 0], sizes = [2, 256], strides = [1, 1]} : vector<6x256xf32> to vector<2x256xf32>
    %c3456 = arith.constant 3456 : index
    %c0_248 = arith.constant 0 : index
    %777 = vector.load %arg4[%c3456, %c0_248] : memref<4992x256xbf16, #tpu.memory_space<vmem>>, vector<256x256xbf16>
    %c27 = arith.constant 27 : index
    %c0_249 = arith.constant 0 : index
    %778 = vector.load %arg3[%c27, %c0_249] : memref<36x512xf32, #tpu.memory_space<vmem>>, vector<1x256xf32>
    %c3712 = arith.constant 3712 : index
    %c0_250 = arith.constant 0 : index
    %779 = vector.load %arg4[%c3712, %c0_250] : memref<4992x256xbf16, #tpu.memory_space<vmem>>, vector<256x256xbf16>
    %c28 = arith.constant 28 : index
    %c0_251 = arith.constant 0 : index
    %780 = vector.load %arg3[%c28, %c0_251] : memref<36x512xf32, #tpu.memory_space<vmem>>, vector<1x256xf32>
    %781 = arith.truncf %776 : vector<2x256xf32> to vector<2x256xbf16>
    %cst_252 = arith.constant dense<0.000000e+00> : vector<2x256xf32>
    %782 = tpu.matmul %781, %777, %cst_252 {dimension_numbers = #tpu.dot_dimension_numbers<[1], [0], [0], [1], [0, 0, 1, 1], [], []>} : vector<2x256xbf16>, vector<256x256xbf16>, vector<2x256xf32> -> vector<2x256xf32>
    %783 = vector.broadcast %778 : vector<1x256xf32> to vector<2x256xf32>
    %784 = arith.addf %782, %783 : vector<2x256xf32>
    %785 = arith.truncf %784 : vector<2x256xf32> to vector<2x256xbf16>
    %cst_253 = arith.constant dense<0.000000e+00> : vector<2x256xf32>
    %786 = tpu.matmul %785, %779, %cst_253 {dimension_numbers = #tpu.dot_dimension_numbers<[1], [0], [0], [1], [0, 0, 1, 1], [], []>} : vector<2x256xbf16>, vector<256x256xbf16>, vector<2x256xf32> -> vector<2x256xf32>
    %787 = vector.broadcast %780 : vector<1x256xf32> to vector<2x256xf32>
    %788 = arith.addf %786, %787 : vector<2x256xf32>
    %789 = arith.negf %788 : vector<2x256xf32>
    %790 = math.exp %789 : vector<2x256xf32>
    %cst_254 = arith.constant 1.000000e+00 : f32
    %791 = vector.broadcast %cst_254 : f32 to vector<2x256xf32>
    %792 = arith.addf %791, %790 : vector<2x256xf32>
    %793 = arith.divf %791, %792 : vector<2x256xf32>
    %794 = arith.mulf %784, %793 : vector<2x256xf32>
    %795 = arith.mulf %794, %794 : vector<2x256xf32>
    %cst_255 = arith.constant dense<0.000000e+00> : vector<2xf32>
    %796 = vector.multi_reduction <add>, %795, %cst_255 [1] : vector<2x256xf32> to vector<2xf32>
    %797 = vector.shape_cast %796 : vector<2xf32> to vector<2x1xf32>
    %cst_256 = arith.constant 9.99999996E-13 : f32
    %798 = vector.broadcast %cst_256 : f32 to vector<2x1xf32>
    %799 = arith.addf %797, %798 : vector<2x1xf32>
    %800 = math.rsqrt %799 : vector<2x1xf32>
    %801 = vector.broadcast %800 : vector<2x1xf32> to vector<2x256xf32>
    %802 = arith.mulf %794, %801 : vector<2x256xf32>
    %803 = arith.addf %775, %802 : vector<2x256xf32>
    %804 = vector.extract_strided_slice %746 {offsets = [4, 0], sizes = [2, 256], strides = [1, 1]} : vector<6x256xf32> to vector<2x256xf32>
    %c3968 = arith.constant 3968 : index
    %c0_257 = arith.constant 0 : index
    %805 = vector.load %arg4[%c3968, %c0_257] : memref<4992x256xbf16, #tpu.memory_space<vmem>>, vector<256x256xbf16>
    %c29 = arith.constant 29 : index
    %c0_258 = arith.constant 0 : index
    %806 = vector.load %arg3[%c29, %c0_258] : memref<36x512xf32, #tpu.memory_space<vmem>>, vector<1x256xf32>
    %c4224 = arith.constant 4224 : index
    %c0_259 = arith.constant 0 : index
    %807 = vector.load %arg4[%c4224, %c0_259] : memref<4992x256xbf16, #tpu.memory_space<vmem>>, vector<256x256xbf16>
    %c30 = arith.constant 30 : index
    %c0_260 = arith.constant 0 : index
    %808 = vector.load %arg3[%c30, %c0_260] : memref<36x512xf32, #tpu.memory_space<vmem>>, vector<1x256xf32>
    %809 = arith.truncf %804 : vector<2x256xf32> to vector<2x256xbf16>
    %cst_261 = arith.constant dense<0.000000e+00> : vector<2x256xf32>
    %810 = tpu.matmul %809, %805, %cst_261 {dimension_numbers = #tpu.dot_dimension_numbers<[1], [0], [0], [1], [0, 0, 1, 1], [], []>} : vector<2x256xbf16>, vector<256x256xbf16>, vector<2x256xf32> -> vector<2x256xf32>
    %811 = vector.broadcast %806 : vector<1x256xf32> to vector<2x256xf32>
    %812 = arith.addf %810, %811 : vector<2x256xf32>
    %813 = arith.truncf %812 : vector<2x256xf32> to vector<2x256xbf16>
    %cst_262 = arith.constant dense<0.000000e+00> : vector<2x256xf32>
    %814 = tpu.matmul %813, %807, %cst_262 {dimension_numbers = #tpu.dot_dimension_numbers<[1], [0], [0], [1], [0, 0, 1, 1], [], []>} : vector<2x256xbf16>, vector<256x256xbf16>, vector<2x256xf32> -> vector<2x256xf32>
    %815 = vector.broadcast %808 : vector<1x256xf32> to vector<2x256xf32>
    %816 = arith.addf %814, %815 : vector<2x256xf32>
    %817 = arith.negf %816 : vector<2x256xf32>
    %818 = math.exp %817 : vector<2x256xf32>
    %cst_263 = arith.constant 1.000000e+00 : f32
    %819 = vector.broadcast %cst_263 : f32 to vector<2x256xf32>
    %820 = arith.addf %819, %818 : vector<2x256xf32>
    %821 = arith.divf %819, %820 : vector<2x256xf32>
    %822 = arith.mulf %812, %821 : vector<2x256xf32>
    %823 = arith.mulf %822, %822 : vector<2x256xf32>
    %cst_264 = arith.constant dense<0.000000e+00> : vector<2xf32>
    %824 = vector.multi_reduction <add>, %823, %cst_264 [1] : vector<2x256xf32> to vector<2xf32>
    %825 = vector.shape_cast %824 : vector<2xf32> to vector<2x1xf32>
    %cst_265 = arith.constant 9.99999996E-13 : f32
    %826 = vector.broadcast %cst_265 : f32 to vector<2x1xf32>
    %827 = arith.addf %825, %826 : vector<2x1xf32>
    %828 = math.rsqrt %827 : vector<2x1xf32>
    %829 = vector.broadcast %828 : vector<2x1xf32> to vector<2x256xf32>
    %830 = arith.mulf %822, %829 : vector<2x256xf32>
    %831 = arith.addf %803, %830 : vector<2x256xf32>
    %cst_266 = arith.constant 0.333333343 : f32
    %832 = vector.broadcast %cst_266 : f32 to vector<2x256xf32>
    %833 = arith.mulf %831, %832 : vector<2x256xf32>
    %c0_267 = arith.constant 0 : index
    %c0_268 = arith.constant 0 : index
    %834 = vector.load %arg7[%c0_267, %c0_268] : memref<2x256xf32, #tpu.memory_space<vmem>>, vector<2x256xf32>
    tpu.vector_store %arg7[%c0_267, %c0_268], %833 {strides = array<i32>} : memref<2x256xf32, #tpu.memory_space<vmem>>, vector<2x256xf32>,
    %c4480 = arith.constant 4480 : index
    %c0_269 = arith.constant 0 : index
    %835 = vector.load %arg4[%c4480, %c0_269] : memref<4992x256xbf16, #tpu.memory_space<vmem>>, vector<256x256xbf16>
    %836 = arith.truncf %833 : vector<2x256xf32> to vector<2x256xbf16>
    %cst_270 = arith.constant dense<0.000000e+00> : vector<2x256xf32>
    %837 = tpu.matmul %836, %835, %cst_270 {dimension_numbers = #tpu.dot_dimension_numbers<[1], [0], [0], [1], [0, 0, 1, 1], [], []>} : vector<2x256xbf16>, vector<256x256xbf16>, vector<2x256xf32> -> vector<2x256xf32>
    %c31 = arith.constant 31 : index
    %c0_271 = arith.constant 0 : index
    %838 = vector.load %arg3[%c31, %c0_271] : memref<36x512xf32, #tpu.memory_space<vmem>>, vector<1x256xf32>
    %839 = vector.broadcast %838 : vector<1x256xf32> to vector<2x256xf32>
    %840 = arith.addf %837, %839 : vector<2x256xf32>
    %cst_272 = arith.constant 0.000000e+00 : f32
    %841 = vector.broadcast %cst_272 : f32 to vector<2x256xf32>
    %842 = arith.maximumf %840, %841 : vector<2x256xf32>
    %c4736 = arith.constant 4736 : index
    %c0_273 = arith.constant 0 : index
    %843 = vector.load %arg4[%c4736, %c0_273] : memref<4992x256xbf16, #tpu.memory_space<vmem>>, vector<256x256xbf16>
    %844 = arith.truncf %842 : vector<2x256xf32> to vector<2x256xbf16>
    %cst_274 = arith.constant dense<0.000000e+00> : vector<2x256xf32>
    %845 = tpu.matmul %844, %843, %cst_274 {dimension_numbers = #tpu.dot_dimension_numbers<[1], [0], [0], [1], [0, 0, 1, 1], [], []>} : vector<2x256xbf16>, vector<256x256xbf16>, vector<2x256xf32> -> vector<2x256xf32>
    %c32_275 = arith.constant 32 : index
    %c0_276 = arith.constant 0 : index
    %846 = vector.load %arg3[%c32_275, %c0_276] : memref<36x512xf32, #tpu.memory_space<vmem>>, vector<1x256xf32>
    %847 = vector.broadcast %846 : vector<1x256xf32> to vector<2x256xf32>
    %848 = arith.addf %845, %847 : vector<2x256xf32>
    %849 = arith.addf %848, %833 : vector<2x256xf32>
    %c33 = arith.constant 33 : index
    %c0_277 = arith.constant 0 : index
    %850 = vector.load %arg3[%c33, %c0_277] : memref<36x512xf32, #tpu.memory_space<vmem>>, vector<1x256xf32>
    %851 = vector.broadcast %850 : vector<1x256xf32> to vector<2x256xf32>
    %852 = arith.mulf %849, %851 : vector<2x256xf32>
    %cst_278 = arith.constant dense<0.000000e+00> : vector<2xf32>
    %853 = vector.multi_reduction <add>, %852, %cst_278 [1] : vector<2x256xf32> to vector<2xf32>
    %854 = vector.shape_cast %853 : vector<2xf32> to vector<2x1xf32>
    %c34 = arith.constant 34 : index
    %c0_279 = arith.constant 0 : index
    %855 = vector.load %arg3[%c34, %c0_279] : memref<36x512xf32, #tpu.memory_space<vmem>>, vector<1x1xf32>
    %856 = vector.broadcast %855 : vector<1x1xf32> to vector<2x1xf32>
    %857 = arith.addf %854, %856 : vector<2x1xf32>
    %c0_280 = arith.constant 0 : index
    %c0_281 = arith.constant 0 : index
    %858 = vector.load %arg6[%c0_280, %c0_281] : memref<2x1xf32, #tpu.memory_space<vmem>>, vector<2x1xf32>
    tpu.vector_store %arg6[%c0_280, %c0_281], %857 {strides = array<i32>} : memref<2x1xf32, #tpu.memory_space<vmem>>, vector<2x1xf32>,
    return
  }
}

</mosaic_0001>

<llo_original>
// kernel: mult_model_forward.1
$region0: #{mult_model_forward.1}
  #allocation0 [shape = 'u32[]', space=smem, size = 0x4, offset = 0x4, fixed_abs, tag = 'smem constant byte address 0x4 - core index']
  #allocation1 [shape = 'u32[144,128]{1,0:T(1,128)}', space=vmem, size = 0x12000, scoped, tag = 'internal scratch']
  #allocation2 [shape = 'f32[48,512]{1,0:T(8,128)}', space=vmem, size = 0x18000, scoped, tag = 'scratch operand']
  %s0 = inlined_call_operand.vmem [shape: f32[8,256], index: 0, kind: input, shape index: {}]
  %s1 = inlined_call_operand.vmem [shape: f32[8,256], index: 1, kind: input, shape index: {}]
  %s2 = inlined_call_operand.vmem [shape: f32[48,128], index: 2, kind: input, shape index: {}]
  %s3 = inlined_call_operand.vmem [shape: f32[36,512], index: 3, kind: input, shape index: {}]
  %s4 = inlined_call_operand.vmem [shape: bf16[4992,256], index: 4, kind: input, shape index: {}]
  %s5 = inlined_call_operand.vmem [shape: bf16[256,512], index: 5, kind: input, shape index: {}]
  %s6 = inlined_call_operand.vmem [shape: f32[2,1], index: 6, kind: output, shape index: {0}]
  %s7 = inlined_call_operand.hbm [shape: f32[2,256], index: 7, kind: output, shape index: {1}]
  %8 = xla_tuple %s6, %s7
  %s9 = sld [smem:[#allocation0]]
  $region42: #{mult_model_forward.1} parent=0
    _
  %s11 = ssub.s32 1, %s9
  %s12 = scalar_select 0, %s11, %s9
  $region1: #{mult_model_forward.1} parent=0
    #allocation3 [shape = 'u8[2048]{0}', space=vmem, size = 0x800, scoped, tag = 'output window, operand 1, single buffered']
    #allocation4 [shape = 's32[1]{0}', space=sflag, size = 0x4, scoped, tag = 'scoped memory for mult_model_forward.1']
    %13 = vsyncpa [#allocation4], 0
    // Predicated region
    $region2: #{mult_model_forward.1} parent=1 // pred_check
      _
    $region3: #{mult_model_forward.1} parent=1 // pred_check_branch
      %15 = sbr.rel (0) target = $region5
    $region4: #{mult_model_forward.1} parent=1 // pred_region
      _
    $region5: #{mult_model_forward.1} parent=1 // pred_fallthru
      _
    // Predicated region
    $region6: #{mult_model_forward.1} parent=1 // pred_check
      _
    $region7: #{mult_model_forward.1} parent=1 // pred_check_branch
      %17 = sbr.rel (0) target = $region9
    $region8: #{mult_model_forward.1} parent=1 // pred_region
      _
    $region9: #{mult_model_forward.1} parent=1 // pred_fallthru
      _
    // Predicated region
    $region10: #{mult_model_forward.1} parent=1 // pred_check
      _
    $region11: #{mult_model_forward.1} parent=1 // pred_check_branch
      %19 = sbr.rel (0) target = $region13
    $region12: #{mult_model_forward.1} parent=1 // pred_region
      _
    $region13: #{mult_model_forward.1} parent=1 // pred_fallthru
      _
    // Predicated region
    $region14: #{mult_model_forward.1} parent=1 // pred_check
      _
    $region15: #{mult_model_forward.1} parent=1 // pred_check_branch
      %21 = sbr.rel (0) target = $region17
    $region16: #{mult_model_forward.1} parent=1 // pred_region
      _
    $region17: #{mult_model_forward.1} parent=1 // pred_fallthru
      _
    // Predicated region
    $region18: #{mult_model_forward.1} parent=1 // pred_check
      _
    $region19: #{mult_model_forward.1} parent=1 // pred_check_branch
      %23 = sbr.rel (0) target = $region21
    $region20: #{mult_model_forward.1} parent=1 // pred_region
      _
    $region21: #{mult_model_forward.1} parent=1 // pred_fallthru
      _
    // Predicated region
    $region22: #{mult_model_forward.1} parent=1 // pred_check
      _
    $region23: #{mult_model_forward.1} parent=1 // pred_check_branch
      %25 = sbr.rel (0) target = $region25
    $region24: #{mult_model_forward.1} parent=1 // pred_region
      _
    $region25: #{mult_model_forward.1} parent=1 // pred_fallthru
      _
    %v27 = vld [vmem:[%s0] sm:$0xff]
    %v28 = vld [vmem:[%s0 + $0x8] sm:$0xff]
    %v29 = vld [vmem:[%s4] sm:$0xff]
    %v30 = vld [vmem:[%s4 + $0x8] sm:$0xff]
    %v31 = vld [vmem:[%s4 + $0x10] sm:$0xff]
    %v32 = vld [vmem:[%s4 + $0x18] sm:$0xff]
    %v33 = vld [vmem:[%s4 + $0x20] sm:$0xff]
    %v34 = vld [vmem:[%s4 + $0x28] sm:$0xff]
    %v35 = vld [vmem:[%s4 + $0x30] sm:$0xff]
    %v36 = vld [vmem:[%s4 + $0x38] sm:$0xff]
    %v37 = vld [vmem:[%s4 + $0x40] sm:$0xff]
    %v38 = vld [vmem:[%s4 + $0x48] sm:$0xff]
    %v39 = vld [vmem:[%s4 + $0x50] sm:$0xff]
    %v40 = vld [vmem:[%s4 + $0x58] sm:$0xff]
    %v41 = vld [vmem:[%s4 + $0x60] sm:$0xff]
    %v42 = vld [vmem:[%s4 + $0x68] sm:$0xff]
    %v43 = vld [vmem:[%s4 + $0x70] sm:$0xff]
    %v44 = vld [vmem:[%s4 + $0x78] sm:$0xff]
    %v45 = vld [vmem:[%s4 + $0x80] sm:$0xff]
    %v46 = vld [vmem:[%s4 + $0x88] sm:$0xff]
    %v47 = vld [vmem:[%s4 + $0x90] sm:$0xff]
    %v48 = vld [vmem:[%s4 + $0x98] sm:$0xff]
    %v49 = vld [vmem:[%s4 + $0xa0] sm:$0xff]
    %v50 = vld [vmem:[%s4 + $0xa8] sm:$0xff]
    %v51 = vld [vmem:[%s4 + $0xb0] sm:$0xff]
    %v52 = vld [vmem:[%s4 + $0xb8] sm:$0xff]
    %v53 = vld [vmem:[%s4 + $0xc0] sm:$0xff]
    %v54 = vld [vmem:[%s4 + $0xc8] sm:$0xff]
    %v55 = vld [vmem:[%s4 + $0xd0] sm:$0xff]
    %v56 = vld [vmem:[%s4 + $0xd8] sm:$0xff]
    %v57 = vld [vmem:[%s4 + $0xe0] sm:$0xff]
    %v58 = vld [vmem:[%s4 + $0xe8] sm:$0xff]
    %v59 = vld [vmem:[%s4 + $0xf0] sm:$0xff]
    %v60 = vld [vmem:[%s4 + $0xf8] sm:$0xff]
    %s61 = scalar_lea.vmem %s3, 1
    %v62 = vld [vmem:[%s61] ss:$8 sm:$0x3]
    %v63 = vld [vmem:[%s4 + $0x100] sm:$0xff]
    %v64 = vld [vmem:[%s4 + $0x108] sm:$0xff]
    %v65 = vld [vmem:[%s4 + $0x110] sm:$0xff]
    %v66 = vld [vmem:[%s4 + $0x118] sm:$0xff]
    %v67 = vld [vmem:[%s4 + $0x120] sm:$0xff]
    %v68 = vld [vmem:[%s4 + $0x128] sm:$0xff]
    %v69 = vld [vmem:[%s4 + $0x130] sm:$0xff]
    %v70 = vld [vmem:[%s4 + $0x138] sm:$0xff]
    %v71 = vld [vmem:[%s4 + $0x140] sm:$0xff]
    %v72 = vld [vmem:[%s4 + $0x148] sm:$0xff]
    %v73 = vld [vmem:[%s4 + $0x150] sm:$0xff]
    %v74 = vld [vmem:[%s4 + $0x158] sm:$0xff]
    %v75 = vld [vmem:[%s4 + $0x160] sm:$0xff]
    %v76 = vld [vmem:[%s4 + $0x168] sm:$0xff]
    %v77 = vld [vmem:[%s4 + $0x170] sm:$0xff]
    %v78 = vld [vmem:[%s4 + $0x178] sm:$0xff]
    %v79 = vld [vmem:[%s4 + $0x180] sm:$0xff]
    %v80 = vld [vmem:[%s4 + $0x188] sm:$0xff]
    %v81 = vld [vmem:[%s4 + $0x190] sm:$0xff]
    %v82 = vld [vmem:[%s4 + $0x198] sm:$0xff]
    %v83 = vld [vmem:[%s4 + $0x1a0] sm:$0xff]
    %v84 = vld [vmem:[%s4 + $0x1a8] sm:$0xff]
    %v85 = vld [vmem:[%s4 + $0x1b0] sm:$0xff]
    %v86 = vld [vmem:[%s4 + $0x1b8] sm:$0xff]
    %v87 = vld [vmem:[%s4 + $0x1c0] sm:$0xff]
    %v88 = vld [vmem:[%s4 + $0x1c8] sm:$0xff]
    %v89 = vld [vmem:[%s4 + $0x1d0] sm:$0xff]
    %v90 = vld [vmem:[%s4 + $0x1d8] sm:$0xff]
    %v91 = vld [vmem:[%s4 + $0x1e0] sm:$0xff]
    %v92 = vld [vmem:[%s4 + $0x1e8] sm:$0xff]
    %v93 = vld [vmem:[%s4 + $0x1f0] sm:$0xff]
    %v94 = vld [vmem:[%s4 + $0x1f8] sm:$0xff]
    %s95 = scalar_lea.vmem %s3, 2
    %v96 = vld [vmem:[%s95] ss:$8 sm:$0x3]
    %v97 = vpack.c.bf16 %v27, %v27
    %v98 = vpack.c.bf16 %v28, %v28
    %v100 = vlaneseq
    %v101 = vshrl.u32 %v100, 7
    %v102 = vsub.s32 0, %v101
    %v103 = vrot.slane %v62, %v102
    %v104 = vlaneseq
    %v105 = vshrl.u32 %v104, 7
    %v106 = vsub.s32 1, %v105
    %v107 = vrot.slane %v62, %v106
    %v142 = vunpack.c.l.b16 %v29
    %v143 = vunpack.c.h.b16 %v29
    %v144 = vunpack.c.l.b16 %v30
    %v145 = vunpack.c.h.b16 %v30
    %v146 = vunpack.c.l.b16 %v31
    %v147 = vunpack.c.h.b16 %v31
    %v148 = vunpack.c.l.b16 %v32
    %v149 = vunpack.c.h.b16 %v32
    %v150 = vunpack.c.l.b16 %v33
    %v151 = vunpack.c.h.b16 %v33
    %v152 = vunpack.c.l.b16 %v34
    %v153 = vunpack.c.h.b16 %v34
    %v154 = vunpack.c.l.b16 %v35
    %v155 = vunpack.c.h.b16 %v35
    %v156 = vunpack.c.l.b16 %v36
    %v157 = vunpack.c.h.b16 %v36
    %v158 = vunpack.c.l.b16 %v37
    %v159 = vunpack.c.h.b16 %v37
    %v160 = vunpack.c.l.b16 %v38
    %v161 = vunpack.c.h.b16 %v38
    %v162 = vunpack.c.l.b16 %v39
    %v163 = vunpack.c.h.b16 %v39
    %v164 = vunpack.c.l.b16 %v40
    %v165 = vunpack.c.h.b16 %v40
    %v166 = vunpack.c.l.b16 %v41
    %v167 = vunpack.c.h.b16 %v41
    %v168 = vunpack.c.l.b16 %v42
    %v169 = vunpack.c.h.b16 %v42
    %v170 = vunpack.c.l.b16 %v43
    %v171 = vunpack.c.h.b16 %v43
    %v172 = vunpack.c.l.b16 %v44
    %v173 = vunpack.c.h.b16 %v44
    %v174 = vunpack.c.l.b16 %v45
    %v175 = vunpack.c.h.b16 %v45
    %v176 = vunpack.c.l.b16 %v46
    %v177 = vunpack.c.h.b16 %v46
    %v178 = vunpack.c.l.b16 %v47
    %v179 = vunpack.c.h.b16 %v47
    %v180 = vunpack.c.l.b16 %v48
    %v181 = vunpack.c.h.b16 %v48
    %v182 = vunpack.c.l.b16 %v49
    %v183 = vunpack.c.h.b16 %v49
    %v184 = vunpack.c.l.b16 %v50
    %v185 = vunpack.c.h.b16 %v50
    %v186 = vunpack.c.l.b16 %v51
    %v187 = vunpack.c.h.b16 %v51
    %v188 = vunpack.c.l.b16 %v52
    %v189 = vunpack.c.h.b16 %v52
    %v190 = vunpack.c.l.b16 %v53
    %v191 = vunpack.c.h.b16 %v53
    %v192 = vunpack.c.l.b16 %v54
    %v193 = vunpack.c.h.b16 %v54
    %v194 = vunpack.c.l.b16 %v55
    %v195 = vunpack.c.h.b16 %v55
    %v196 = vunpack.c.l.b16 %v56
    %v197 = vunpack.c.h.b16 %v56
    %v198 = vunpack.c.l.b16 %v57
    %v199 = vunpack.c.h.b16 %v57
    %v200 = vunpack.c.l.b16 %v58
    %v201 = vunpack.c.h.b16 %v58
    %v202 = vunpack.c.l.b16 %v59
    %v203 = vunpack.c.h.b16 %v59
    %v204 = vunpack.c.l.b16 %v60
    %v205 = vunpack.c.h.b16 %v60
    %v206 = vpack.c.b16 %v144, %v142
    %v207 = vpack.c.b16 %v145, %v143
    %v208 = vpack.c.b16 %v148, %v146
    %v209 = vpack.c.b16 %v149, %v147
    %v210 = vpack.c.b16 %v152, %v150
    %v211 = vpack.c.b16 %v153, %v151
    %v212 = vpack.c.b16 %v156, %v154
    %v213 = vpack.c.b16 %v157, %v155
    %v214 = vpack.c.b16 %v160, %v158
    %v215 = vpack.c.b16 %v161, %v159
    %v216 = vpack.c.b16 %v164, %v162
    %v217 = vpack.c.b16 %v165, %v163
    %v218 = vpack.c.b16 %v168, %v166
    %v219 = vpack.c.b16 %v169, %v167
    %v220 = vpack.c.b16 %v172, %v170
    %v221 = vpack.c.b16 %v173, %v171
    %v222 = vpack.c.b16 %v176, %v174
    %v223 = vpack.c.b16 %v177, %v175
    %v224 = vpack.c.b16 %v180, %v178
    %v225 = vpack.c.b16 %v181, %v179
    %v226 = vpack.c.b16 %v184, %v182
    %v227 = vpack.c.b16 %v185, %v183
    %v228 = vpack.c.b16 %v188, %v186
    %v229 = vpack.c.b16 %v189, %v187
    %v230 = vpack.c.b16 %v192, %v190
    %v231 = vpack.c.b16 %v193, %v191
    %v232 = vpack.c.b16 %v196, %v194
    %v233 = vpack.c.b16 %v197, %v195
    %v234 = vpack.c.b16 %v200, %v198
    %v235 = vpack.c.b16 %v201, %v199
    %v236 = vpack.c.b16 %v204, %v202
    %v237 = vpack.c.b16 %v205, %v203
    %270 = vmatprep.subr.bf16.mxu0 %v207
    %271 = vmatpush1.bf16.msra.mxu0 %v206
    %272 = vmatprep.subr.bf16.mxu0 %v209
    %273 = vmatpush1.bf16.msra.mxu0 %v208
    %274 = vmatprep.subr.bf16.mxu0 %v211
    %275 = vmatpush1.bf16.msra.mxu0 %v210
    %276 = vmatprep.subr.bf16.mxu0 %v213
    %277 = vmatpush1.bf16.msra.mxu0 %v212
    %278 = vmatprep.subr.bf16.mxu0 %v215
    %279 = vmatpush1.bf16.msra.mxu0 %v214
    %280 = vmatprep.subr.bf16.mxu0 %v217
    %281 = vmatpush1.bf16.msra.mxu0 %v216
    %282 = vmatprep.subr.bf16.mxu0 %v219
    %283 = vmatpush1.bf16.msra.mxu0 %v218
    %284 = vmatprep.subr.bf16.mxu0 %v221
    %285 = vmatpush1.bf16.msra.mxu0 %v220
    %286 = vmatprep.subr.bf16.mxu0 %v223
    %287 = vmatpush1.bf16.msra.mxu0 %v222
    %288 = vmatprep.subr.bf16.mxu0 %v225
    %289 = vmatpush1.bf16.msra.mxu0 %v224
    %290 = vmatprep.subr.bf16.mxu0 %v227
    %291 = vmatpush1.bf16.msra.mxu0 %v226
    %292 = vmatprep.subr.bf16.mxu0 %v229
    %293 = vmatpush1.bf16.msra.mxu0 %v228
    %294 = vmatprep.subr.bf16.mxu0 %v231
    %295 = vmatpush1.bf16.msra.mxu0 %v230
    %296 = vmatprep.subr.bf16.mxu0 %v233
    %297 = vmatpush1.bf16.msra.mxu0 %v232
    %298 = vmatprep.subr.bf16.mxu0 %v235
    %299 = vmatpush1.bf16.msra.mxu0 %v234
    %300 = vmatprep.subr.bf16.mxu0 %v237
    %301 = vmatpush1.bf16.msra.mxu0 %v236
    %302 = vmatprep.mubr.bf16.mxu0 %v98
    %303 = vmatmul.mubr.bf16.gmra.mrb[0].mxu0 %v97
    %v304 = vpop.f32.mrb[0].mxu0
    %v305 = vadd.f32 %v103, %v304
    %v306 = vpop.f32.mrb[0].mxu0
    %v307 = vadd.f32 %v107, %v306
    %v308 = vpop.f32.mrb[0].mxu0
    %v309 = vpop.f32.mrb[0].mxu0
    %310 = vdwg.mxu0
    %v311 = vpack.c.bf16 %v305, %v305
    %v312 = vpack.c.bf16 %v307, %v307
    %v314 = vlaneseq
    %v315 = vshrl.u32 %v314, 7
    %v316 = vsub.s32 0, %v315
    %v317 = vrot.slane %v96, %v316
    %v318 = vlaneseq
    %v319 = vshrl.u32 %v318, 7
    %v320 = vsub.s32 1, %v319
    %v321 = vrot.slane %v96, %v320
    %v356 = vunpack.c.l.b16 %v63
    %v357 = vunpack.c.h.b16 %v63
    %v358 = vunpack.c.l.b16 %v64
    %v359 = vunpack.c.h.b16 %v64
    %v360 = vunpack.c.l.b16 %v65
    %v361 = vunpack.c.h.b16 %v65
    %v362 = vunpack.c.l.b16 %v66
    %v363 = vunpack.c.h.b16 %v66
    %v364 = vunpack.c.l.b16 %v67
    %v365 = vunpack.c.h.b16 %v67
    %v366 = vunpack.c.l.b16 %v68
    %v367 = vunpack.c.h.b16 %v68
    %v368 = vunpack.c.l.b16 %v69
    %v369 = vunpack.c.h.b16 %v69
    %v370 = vunpack.c.l.b16 %v70
    %v371 = vunpack.c.h.b16 %v70
    %v372 = vunpack.c.l.b16 %v71
    %v373 = vunpack.c.h.b16 %v71
    %v374 = vunpack.c.l.b16 %v72
    %v375 = vunpack.c.h.b16 %v72
    %v376 = vunpack.c.l.b16 %v73
    %v377 = vunpack.c.h.b16 %v73
    %v378 = vunpack.c.l.b16 %v74
    %v379 = vunpack.c.h.b16 %v74
    %v380 = vunpack.c.l.b16 %v75
    %v381 = vunpack.c.h.b16 %v75
    %v382 = vunpack.c.l.b16 %v76
    %v383 = vunpack.c.h.b16 %v76
    %v384 = vunpack.c.l.b16 %v77
    %v385 = vunpack.c.h.b16 %v77
    %v386 = vunpack.c.l.b16 %v78
    %v387 = vunpack.c.h.b16 %v78
    %v388 = vunpack.c.l.b16 %v79
    %v389 = vunpack.c.h.b16 %v79
    %v390 = vunpack.c.l.b16 %v80
    %v391 = vunpack.c.h.b16 %v80
    %v392 = vunpack.c.l.b16 %v81
    %v393 = vunpack.c.h.b16 %v81
    %v394 = vunpack.c.l.b16 %v82
    %v395 = vunpack.c.h.b16 %v82
    %v396 = vunpack.c.l.b16 %v83
    %v397 = vunpack.c.h.b16 %v83
    %v398 = vunpack.c.l.b16 %v84
    %v399 = vunpack.c.h.b16 %v84
    %v400 = vunpack.c.l.b16 %v85
    %v401 = vunpack.c.h.b16 %v85
    %v402 = vunpack.c.l.b16 %v86
    %v403 = vunpack.c.h.b16 %v86
    %v404 = vunpack.c.l.b16 %v87
    %v405 = vunpack.c.h.b16 %v87
    %v406 = vunpack.c.l.b16 %v88
    %v407 = vunpack.c.h.b16 %v88
    %v408 = vunpack.c.l.b16 %v89
    %v409 = vunpack.c.h.b16 %v89
    %v410 = vunpack.c.l.b16 %v90
    %v411 = vunpack.c.h.b16 %v90
    %v412 = vunpack.c.l.b16 %v91
    %v413 = vunpack.c.h.b16 %v91
    %v414 = vunpack.c.l.b16 %v92
    %v415 = vunpack.c.h.b16 %v92
    %v416 = vunpack.c.l.b16 %v93
    %v417 = vunpack.c.h.b16 %v93
    %v418 = vunpack.c.l.b16 %v94
    %v419 = vunpack.c.h.b16 %v94
    %v420 = vpack.c.b16 %v358, %v356
    %v421 = vpack.c.b16 %v359, %v357
    %v422 = vpack.c.b16 %v362, %v360
    %v423 = vpack.c.b16 %v363, %v361
    %v424 = vpack.c.b16 %v366, %v364
    %v425 = vpack.c.b16 %v367, %v365
    %v426 = vpack.c.b16 %v370, %v368
    %v427 = vpack.c.b16 %v371, %v369
    %v428 = vpack.c.b16 %v374, %v372
    %v429 = vpack.c.b16 %v375, %v373
    %v430 = vpack.c.b16 %v378, %v376
    %v431 = vpack.c.b16 %v379, %v377
    %v432 = vpack.c.b16 %v382, %v380
    %v433 = vpack.c.b16 %v383, %v381
    %v434 = vpack.c.b16 %v386, %v384
    %v435 = vpack.c.b16 %v387, %v385
    %v436 = vpack.c.b16 %v390, %v388
    %v437 = vpack.c.b16 %v391, %v389
    %v438 = vpack.c.b16 %v394, %v392
    %v439 = vpack.c.b16 %v395, %v393
    %v440 = vpack.c.b16 %v398, %v396
    %v441 = vpack.c.b16 %v399, %v397
    %v442 = vpack.c.b16 %v402, %v400
    %v443 = vpack.c.b16 %v403, %v401
    %v444 = vpack.c.b16 %v406, %v404
    %v445 = vpack.c.b16 %v407, %v405
    %v446 = vpack.c.b16 %v410, %v408
    %v447 = vpack.c.b16 %v411, %v409
    %v448 = vpack.c.b16 %v414, %v412
    %v449 = vpack.c.b16 %v415, %v413
    %v450 = vpack.c.b16 %v418, %v416
    %v451 = vpack.c.b16 %v419, %v417
    %484 = vmatprep.subr.bf16.mxu0 %v421
    %485 = vmatpush1.bf16.msra.mxu0 %v420
    %486 = vmatprep.subr.bf16.mxu0 %v423
    %487 = vmatpush1.bf16.msra.mxu0 %v422
    %488 = vmatprep.subr.bf16.mxu0 %v425
    %489 = vmatpush1.bf16.msra.mxu0 %v424
    %490 = vmatprep.subr.bf16.mxu0 %v427
    %491 = vmatpush1.bf16.msra.mxu0 %v426
    %492 = vmatprep.subr.bf16.mxu0 %v429
    %493 = vmatpush1.bf16.msra.mxu0 %v428
    %494 = vmatprep.subr.bf16.mxu0 %v431
    %495 = vmatpush1.bf16.msra.mxu0 %v430
    %496 = vmatprep.subr.bf16.mxu0 %v433
    %497 = vmatpush1.bf16.msra.mxu0 %v432
    %498 = vmatprep.subr.bf16.mxu0 %v435
    %499 = vmatpush1.bf16.msra.mxu0 %v434
    %500 = vmatprep.subr.bf16.mxu0 %v437
    %501 = vmatpush1.bf16.msra.mxu0 %v436
    %502 = vmatprep.subr.bf16.mxu0 %v439
    %503 = vmatpush1.bf16.msra.mxu0 %v438
    %504 = vmatprep.subr.bf16.mxu0 %v441
    %505 = vmatpush1.bf16.msra.mxu0 %v440
    %506 = vmatprep.subr.bf16.mxu0 %v443
    %507 = vmatpush1.bf16.msra.mxu0 %v442
    %508 = vmatprep.subr.bf16.mxu0 %v445
    %509 = vmatpush1.bf16.msra.mxu0 %v444
    %510 = vmatprep.subr.bf16.mxu0 %v447
    %511 = vmatpush1.bf16.msra.mxu0 %v446
    %512 = vmatprep.subr.bf16.mxu0 %v449
    %513 = vmatpush1.bf16.msra.mxu0 %v448
    %514 = vmatprep.subr.bf16.mxu0 %v451
    %515 = vmatpush1.bf16.msra.mxu0 %v450
    %516 = vmatprep.mubr.bf16.mxu0 %v312
    %517 = vmatmul.mubr.bf16.gmra.mrb[0].mxu0 %v311
    %v518 = vpop.f32.mrb[0].mxu0
    %v519 = vadd.f32 %v317, %v518
    %v520 = vpop.f32.mrb[0].mxu0
    %v521 = vadd.f32 %v321, %v520
    %v522 = vpop.f32.mrb[0].mxu0
    %v523 = vpop.f32.mrb[0].mxu0
    %524 = vdwg.mxu0
    %v525 = vxor.u32 %v519, 2147483648
    %v526 = vxor.u32 %v521, 2147483648
    %v527 = vmul.f32 %v525, 1.442695
    %v528 = vpow.pop %v527
    %v529 = vmul.f32 %v526, 1.442695
    %v530 = vpow.pop %v529
    %v531 = vadd.f32 %v528, 1.0
    %v532 = vadd.f32 %v530, 1.0
    %v533 = vrcp.pop %v531
    %v534 = vmul.f32 1.0, %v533
    %v535 = vrcp.pop %v532
    %v536 = vmul.f32 1.0, %v535
    %v537 = vmul.f32 %v305, %v534
    %v538 = vmul.f32 %v307, %v536
    %s539 = scalar_lea.vmem %s3, 3
    %v540 = vld [vmem:[%s539] ss:$8 sm:$0x3]
    %s541 = scalar_lea.vmem %s3, 4
    %v542 = vld [vmem:[%s541] ss:$8 sm:$0x3]
    %v543 = vadd.f32 %v537, %v538
    %544 = vadd.xlane.f32.xlu0 %v543
    %v545 = vpop.xlane.xlu0 %544
    %v546 = vrcp.pop 256.0
    %v547 = vmul.f32 %v545, %v546
    %v548 = vsub.f32 %v537, %v547
    %v549 = vsub.f32 %v538, %v547
    %v550 = vmul.f32 %v548, %v548
    %v551 = vmul.f32 %v549, %v549
    %v552 = vadd.f32 %v550, %v551
    %553 = vadd.xlane.f32.xlu0 %v552
    %v554 = vpop.xlane.xlu0 %553
    %v555 = vmul.f32 %v554, %v546
    %v556 = vadd.f32 %v555, 1e-06
    %v557 = vrsqrt.pop %v556
    %v558 = vmul.f32 %v548, %v557
    %v559 = vmul.f32 %v549, %v557
    %v561 = vlaneseq
    %v562 = vshrl.u32 %v561, 7
    %v563 = vsub.s32 0, %v562
    %v564 = vrot.slane %v540, %v563
    %v565 = vlaneseq
    %v566 = vshrl.u32 %v565, 7
    %v567 = vsub.s32 1, %v566
    %v568 = vrot.slane %v540, %v567
    %v571 = vmul.f32 %v558, %v564
    %v572 = vmul.f32 %v559, %v568
    %v574 = vlaneseq
    %v575 = vshrl.u32 %v574, 7
    %v576 = vsub.s32 0, %v575
    %v577 = vrot.slane %v542, %v576
    %v578 = vlaneseq
    %v579 = vshrl.u32 %v578, 7
    %v580 = vsub.s32 1, %v579
    %v581 = vrot.slane %v542, %v580
    %v584 = vadd.f32 %v571, %v577
    %v585 = vadd.f32 %v572, %v581
    %v586 = vld [vmem:[%s1] sm:$0xff]
    %v587 = vld [vmem:[%s1 + $0x8] sm:$0xff]
    %v588 = vld [vmem:[%s4 + $0x200] sm:$0xff]
    %v589 = vld [vmem:[%s4 + $0x208] sm:$0xff]
    %v590 = vld [vmem:[%s4 + $0x210] sm:$0xff]
    %v591 = vld [vmem:[%s4 + $0x218] sm:$0xff]
    %v592 = vld [vmem:[%s4 + $0x220] sm:$0xff]
    %v593 = vld [vmem:[%s4 + $0x228] sm:$0xff]
    %v594 = vld [vmem:[%s4 + $0x230] sm:$0xff]
    %v595 = vld [vmem:[%s4 + $0x238] sm:$0xff]
    %v596 = vld [vmem:[%s4 + $0x240] sm:$0xff]
    %v597 = vld [vmem:[%s4 + $0x248] sm:$0xff]
    %v598 = vld [vmem:[%s4 + $0x250] sm:$0xff]
    %v599 = vld [vmem:[%s4 + $0x258] sm:$0xff]
    %v600 = vld [vmem:[%s4 + $0x260] sm:$0xff]
    %v601 = vld [vmem:[%s4 + $0x268] sm:$0xff]
    %v602 = vld [vmem:[%s4 + $0x270] sm:$0xff]
    %v603 = vld [vmem:[%s4 + $0x278] sm:$0xff]
    %v604 = vld [vmem:[%s4 + $0x280] sm:$0xff]
    %v605 = vld [vmem:[%s4 + $0x288] sm:$0xff]
    %v606 = vld [vmem:[%s4 + $0x290] sm:$0xff]
    %v607 = vld [vmem:[%s4 + $0x298] sm:$0xff]
    %v608 = vld [vmem:[%s4 + $0x2a0] sm:$0xff]
    %v609 = vld [vmem:[%s4 + $0x2a8] sm:$0xff]
    %v610 = vld [vmem:[%s4 + $0x2b0] sm:$0xff]
    %v611 = vld [vmem:[%s4 + $0x2b8] sm:$0xff]
    %v612 = vld [vmem:[%s4 + $0x2c0] sm:$0xff]
    %v613 = vld [vmem:[%s4 + $0x2c8] sm:$0xff]
    %v614 = vld [vmem:[%s4 + $0x2d0] sm:$0xff]
    %v615 = vld [vmem:[%s4 + $0x2d8] sm:$0xff]
    %v616 = vld [vmem:[%s4 + $0x2e0] sm:$0xff]
    %v617 = vld [vmem:[%s4 + $0x2e8] sm:$0xff]
    %v618 = vld [vmem:[%s4 + $0x2f0] sm:$0xff]
    %v619 = vld [vmem:[%s4 + $0x2f8] sm:$0xff]
    %s620 = scalar_lea.vmem %s3, 5
    %v621 = vld [vmem:[%s620] ss:$8 sm:$0x3]
    %v622 = vld [vmem:[%s4 + $0x300] sm:$0xff]
    %v623 = vld [vmem:[%s4 + $0x308] sm:$0xff]
    %v624 = vld [vmem:[%s4 + $0x310] sm:$0xff]
    %v625 = vld [vmem:[%s4 + $0x318] sm:$0xff]
    %v626 = vld [vmem:[%s4 + $0x320] sm:$0xff]
    %v627 = vld [vmem:[%s4 + $0x328] sm:$0xff]
    %v628 = vld [vmem:[%s4 + $0x330] sm:$0xff]
    %v629 = vld [vmem:[%s4 + $0x338] sm:$0xff]
    %v630 = vld [vmem:[%s4 + $0x340] sm:$0xff]
    %v631 = vld [vmem:[%s4 + $0x348] sm:$0xff]
    %v632 = vld [vmem:[%s4 + $0x350] sm:$0xff]
    %v633 = vld [vmem:[%s4 + $0x358] sm:$0xff]
    %v634 = vld [vmem:[%s4 + $0x360] sm:$0xff]
    %v635 = vld [vmem:[%s4 + $0x368] sm:$0xff]
    %v636 = vld [vmem:[%s4 + $0x370] sm:$0xff]
    %v637 = vld [vmem:[%s4 + $0x378] sm:$0xff]
    %v638 = vld [vmem:[%s4 + $0x380] sm:$0xff]
    %v639 = vld [vmem:[%s4 + $0x388] sm:$0xff]
    %v640 = vld [vmem:[%s4 + $0x390] sm:$0xff]
    %v641 = vld [vmem:[%s4 + $0x398] sm:$0xff]
    %v642 = vld [vmem:[%s4 + $0x3a0] sm:$0xff]
    %v643 = vld [vmem:[%s4 + $0x3a8] sm:$0xff]
    %v644 = vld [vmem:[%s4 + $0x3b0] sm:$0xff]
    %v645 = vld [vmem:[%s4 + $0x3b8] sm:$0xff]
    %v646 = vld [vmem:[%s4 + $0x3c0] sm:$0xff]
    %v647 = vld [vmem:[%s4 + $0x3c8] sm:$0xff]
    %v648 = vld [vmem:[%s4 + $0x3d0] sm:$0xff]
    %v649 = vld [vmem:[%s4 + $0x3d8] sm:$0xff]
    %v650 = vld [vmem:[%s4 + $0x3e0] sm:$0xff]
    %v651 = vld [vmem:[%s4 + $0x3e8] sm:$0xff]
    %v652 = vld [vmem:[%s4 + $0x3f0] sm:$0xff]
    %v653 = vld [vmem:[%s4 + $0x3f8] sm:$0xff]
    %s654 = scalar_lea.vmem %s3, 6
    %v655 = vld [vmem:[%s654] ss:$8 sm:$0x3]
    %v656 = vpack.c.bf16 %v586, %v586
    %v657 = vpack.c.bf16 %v587, %v587
    %v659 = vlaneseq
    %v660 = vshrl.u32 %v659, 7
    %v661 = vsub.s32 0, %v660
    %v662 = vrot.slane %v621, %v661
    %v663 = vlaneseq
    %v664 = vshrl.u32 %v663, 7
    %v665 = vsub.s32 1, %v664
    %v666 = vrot.slane %v621, %v665
    %v701 = vunpack.c.l.b16 %v588
    %v702 = vunpack.c.h.b16 %v588
    %v703 = vunpack.c.l.b16 %v589
    %v704 = vunpack.c.h.b16 %v589
    %v705 = vunpack.c.l.b16 %v590
    %v706 = vunpack.c.h.b16 %v590
    %v707 = vunpack.c.l.b16 %v591
    %v708 = vunpack.c.h.b16 %v591
    %v709 = vunpack.c.l.b16 %v592
    %v710 = vunpack.c.h.b16 %v592
    %v711 = vunpack.c.l.b16 %v593
    %v712 = vunpack.c.h.b16 %v593
    %v713 = vunpack.c.l.b16 %v594
    %v714 = vunpack.c.h.b16 %v594
    %v715 = vunpack.c.l.b16 %v595
    %v716 = vunpack.c.h.b16 %v595
    %v717 = vunpack.c.l.b16 %v596
    %v718 = vunpack.c.h.b16 %v596
    %v719 = vunpack.c.l.b16 %v597
    %v720 = vunpack.c.h.b16 %v597
    %v721 = vunpack.c.l.b16 %v598
    %v722 = vunpack.c.h.b16 %v598
    %v723 = vunpack.c.l.b16 %v599
    %v724 = vunpack.c.h.b16 %v599
    %v725 = vunpack.c.l.b16 %v600
    %v726 = vunpack.c.h.b16 %v600
    %v727 = vunpack.c.l.b16 %v601
    %v728 = vunpack.c.h.b16 %v601
    %v729 = vunpack.c.l.b16 %v602
    %v730 = vunpack.c.h.b16 %v602
    %v731 = vunpack.c.l.b16 %v603
    %v732 = vunpack.c.h.b16 %v603
    %v733 = vunpack.c.l.b16 %v604
    %v734 = vunpack.c.h.b16 %v604
    %v735 = vunpack.c.l.b16 %v605
    %v736 = vunpack.c.h.b16 %v605
    %v737 = vunpack.c.l.b16 %v606
    %v738 = vunpack.c.h.b16 %v606
    %v739 = vunpack.c.l.b16 %v607
    %v740 = vunpack.c.h.b16 %v607
    %v741 = vunpack.c.l.b16 %v608
    %v742 = vunpack.c.h.b16 %v608
    %v743 = vunpack.c.l.b16 %v609
    %v744 = vunpack.c.h.b16 %v609
    %v745 = vunpack.c.l.b16 %v610
    %v746 = vunpack.c.h.b16 %v610
    %v747 = vunpack.c.l.b16 %v611
    %v748 = vunpack.c.h.b16 %v611
    %v749 = vunpack.c.l.b16 %v612
    %v750 = vunpack.c.h.b16 %v612
    %v751 = vunpack.c.l.b16 %v613
    %v752 = vunpack.c.h.b16 %v613
    %v753 = vunpack.c.l.b16 %v614
    %v754 = vunpack.c.h.b16 %v614
    %v755 = vunpack.c.l.b16 %v615
    %v756 = vunpack.c.h.b16 %v615
    %v757 = vunpack.c.l.b16 %v616
    %v758 = vunpack.c.h.b16 %v616
    %v759 = vunpack.c.l.b16 %v617
    %v760 = vunpack.c.h.b16 %v617
    %v761 = vunpack.c.l.b16 %v618
    %v762 = vunpack.c.h.b16 %v618
    %v763 = vunpack.c.l.b16 %v619
    %v764 = vunpack.c.h.b16 %v619
    %v765 = vpack.c.b16 %v703, %v701
    %v766 = vpack.c.b16 %v704, %v702
    %v767 = vpack.c.b16 %v707, %v705
    %v768 = vpack.c.b16 %v708, %v706
    %v769 = vpack.c.b16 %v711, %v709
    %v770 = vpack.c.b16 %v712, %v710
    %v771 = vpack.c.b16 %v715, %v713
    %v772 = vpack.c.b16 %v716, %v714
    %v773 = vpack.c.b16 %v719, %v717
    %v774 = vpack.c.b16 %v720, %v718
    %v775 = vpack.c.b16 %v723, %v721
    %v776 = vpack.c.b16 %v724, %v722
    %v777 = vpack.c.b16 %v727, %v725
    %v778 = vpack.c.b16 %v728, %v726
    %v779 = vpack.c.b16 %v731, %v729
    %v780 = vpack.c.b16 %v732, %v730
    %v781 = vpack.c.b16 %v735, %v733
    %v782 = vpack.c.b16 %v736, %v734
    %v783 = vpack.c.b16 %v739, %v737
    %v784 = vpack.c.b16 %v740, %v738
    %v785 = vpack.c.b16 %v743, %v741
    %v786 = vpack.c.b16 %v744, %v742
    %v787 = vpack.c.b16 %v747, %v745
    %v788 = vpack.c.b16 %v748, %v746
    %v789 = vpack.c.b16 %v751, %v749
    %v790 = vpack.c.b16 %v752, %v750
    %v791 = vpack.c.b16 %v755, %v753
    %v792 = vpack.c.b16 %v756, %v754
    %v793 = vpack.c.b16 %v759, %v757
    %v794 = vpack.c.b16 %v760, %v758
    %v795 = vpack.c.b16 %v763, %v761
    %v796 = vpack.c.b16 %v764, %v762
    %829 = vmatprep.subr.bf16.mxu0 %v766
    %830 = vmatpush1.bf16.msra.mxu0 %v765
    %831 = vmatprep.subr.bf16.mxu0 %v768
    %832 = vmatpush1.bf16.msra.mxu0 %v767
    %833 = vmatprep.subr.bf16.mxu0 %v770
    %834 = vmatpush1.bf16.msra.mxu0 %v769
    %835 = vmatprep.subr.bf16.mxu0 %v772
    %836 = vmatpush1.bf16.msra.mxu0 %v771
    %837 = vmatprep.subr.bf16.mxu0 %v774
    %838 = vmatpush1.bf16.msra.mxu0 %v773
    %839 = vmatprep.subr.bf16.mxu0 %v776
    %840 = vmatpush1.bf16.msra.mxu0 %v775
    %841 = vmatprep.subr.bf16.mxu0 %v778
    %842 = vmatpush1.bf16.msra.mxu0 %v777
    %843 = vmatprep.subr.bf16.mxu0 %v780
    %844 = vmatpush1.bf16.msra.mxu0 %v779
    %845 = vmatprep.subr.bf16.mxu0 %v782
    %846 = vmatpush1.bf16.msra.mxu0 %v781
    %847 = vmatprep.subr.bf16.mxu0 %v784
    %848 = vmatpush1.bf16.msra.mxu0 %v783
    %849 = vmatprep.subr.bf16.mxu0 %v786
    %850 = vmatpush1.bf16.msra.mxu0 %v785
    %851 = vmatprep.subr.bf16.mxu0 %v788
    %852 = vmatpush1.bf16.msra.mxu0 %v787
    %853 = vmatprep.subr.bf16.mxu0 %v790
    %854 = vmatpush1.bf16.msra.mxu0 %v789
    %855 = vmatprep.subr.bf16.mxu0 %v792
    %856 = vmatpush1.bf16.msra.mxu0 %v791
    %857 = vmatprep.subr.bf16.mxu0 %v794
    %858 = vmatpush1.bf16.msra.mxu0 %v793
    %859 = vmatprep.subr.bf16.mxu0 %v796
    %860 = vmatpush1.bf16.msra.mxu0 %v795
    %861 = vmatprep.mubr.bf16.mxu0 %v657
    %862 = vmatmul.mubr.bf16.gmra.mrb[0].mxu0 %v656
    %v863 = vpop.f32.mrb[0].mxu0
    %v864 = vadd.f32 %v662, %v863
    %v865 = vpop.f32.mrb[0].mxu0
    %v866 = vadd.f32 %v666, %v865
    %v867 = vpop.f32.mrb[0].mxu0
    %v868 = vpop.f32.mrb[0].mxu0
    %869 = vdwg.mxu0
    %v870 = vpack.c.bf16 %v864, %v864
    %v871 = vpack.c.bf16 %v866, %v866
    %v873 = vlaneseq
    %v874 = vshrl.u32 %v873, 7
    %v875 = vsub.s32 0, %v874
    %v876 = vrot.slane %v655, %v875
    %v877 = vlaneseq
    %v878 = vshrl.u32 %v877, 7
    %v879 = vsub.s32 1, %v878
    %v880 = vrot.slane %v655, %v879
    %v915 = vunpack.c.l.b16 %v622
    %v916 = vunpack.c.h.b16 %v622
    %v917 = vunpack.c.l.b16 %v623
    %v918 = vunpack.c.h.b16 %v623
    %v919 = vunpack.c.l.b16 %v624
    %v920 = vunpack.c.h.b16 %v624
    %v921 = vunpack.c.l.b16 %v625
    %v922 = vunpack.c.h.b16 %v625
    %v923 = vunpack.c.l.b16 %v626
    %v924 = vunpack.c.h.b16 %v626
    %v925 = vunpack.c.l.b16 %v627
    %v926 = vunpack.c.h.b16 %v627
    %v927 = vunpack.c.l.b16 %v628
    %v928 = vunpack.c.h.b16 %v628
    %v929 = vunpack.c.l.b16 %v629
    %v930 = vunpack.c.h.b16 %v629
    %v931 = vunpack.c.l.b16 %v630
    %v932 = vunpack.c.h.b16 %v630
    %v933 = vunpack.c.l.b16 %v631
    %v934 = vunpack.c.h.b16 %v631
    %v935 = vunpack.c.l.b16 %v632
    %v936 = vunpack.c.h.b16 %v632
    %v937 = vunpack.c.l.b16 %v633
    %v938 = vunpack.c.h.b16 %v633
    %v939 = vunpack.c.l.b16 %v634
    %v940 = vunpack.c.h.b16 %v634
    %v941 = vunpack.c.l.b16 %v635
    %v942 = vunpack.c.h.b16 %v635
    %v943 = vunpack.c.l.b16 %v636
    %v944 = vunpack.c.h.b16 %v636
    %v945 = vunpack.c.l.b16 %v637
    %v946 = vunpack.c.h.b16 %v637
    %v947 = vunpack.c.l.b16 %v638
    %v948 = vunpack.c.h.b16 %v638
    %v949 = vunpack.c.l.b16 %v639
    %v950 = vunpack.c.h.b16 %v639
    %v951 = vunpack.c.l.b16 %v640
    %v952 = vunpack.c.h.b16 %v640
    %v953 = vunpack.c.l.b16 %v641
    %v954 = vunpack.c.h.b16 %v641
    %v955 = vunpack.c.l.b16 %v642
    %v956 = vunpack.c.h.b16 %v642
    %v957 = vunpack.c.l.b16 %v643
    %v958 = vunpack.c.h.b16 %v643
    %v959 = vunpack.c.l.b16 %v644
    %v960 = vunpack.c.h.b16 %v644
    %v961 = vunpack.c.l.b16 %v645
    %v962 = vunpack.c.h.b16 %v645
    %v963 = vunpack.c.l.b16 %v646
    %v964 = vunpack.c.h.b16 %v646
    %v965 = vunpack.c.l.b16 %v647
    %v966 = vunpack.c.h.b16 %v647
    %v967 = vunpack.c.l.b16 %v648
    %v968 = vunpack.c.h.b16 %v648
    %v969 = vunpack.c.l.b16 %v649
    %v970 = vunpack.c.h.b16 %v649
    %v971 = vunpack.c.l.b16 %v650
    %v972 = vunpack.c.h.b16 %v650
    %v973 = vunpack.c.l.b16 %v651
    %v974 = vunpack.c.h.b16 %v651
    %v975 = vunpack.c.l.b16 %v652
    %v976 = vunpack.c.h.b16 %v652
    %v977 = vunpack.c.l.b16 %v653
    %v978 = vunpack.c.h.b16 %v653
    %v979 = vpack.c.b16 %v917, %v915
    %v980 = vpack.c.b16 %v918, %v916
    %v981 = vpack.c.b16 %v921, %v919
    %v982 = vpack.c.b16 %v922, %v920
    %v983 = vpack.c.b16 %v925, %v923
    %v984 = vpack.c.b16 %v926, %v924
    %v985 = vpack.c.b16 %v929, %v927
    %v986 = vpack.c.b16 %v930, %v928
    %v987 = vpack.c.b16 %v933, %v931
    %v988 = vpack.c.b16 %v934, %v932
    %v989 = vpack.c.b16 %v937, %v935
    %v990 = vpack.c.b16 %v938, %v936
    %v991 = vpack.c.b16 %v941, %v939
    %v992 = vpack.c.b16 %v942, %v940
    %v993 = vpack.c.b16 %v945, %v943
    %v994 = vpack.c.b16 %v946, %v944
    %v995 = vpack.c.b16 %v949, %v947
    %v996 = vpack.c.b16 %v950, %v948
    %v997 = vpack.c.b16 %v953, %v951
    %v998 = vpack.c.b16 %v954, %v952
    %v999 = vpack.c.b16 %v957, %v955
    %v1000 = vpack.c.b16 %v958, %v956
    %v1001 = vpack.c.b16 %v961, %v959
    %v1002 = vpack.c.b16 %v962, %v960
    %v1003 = vpack.c.b16 %v965, %v963
    %v1004 = vpack.c.b16 %v966, %v964
    %v1005 = vpack.c.b16 %v969, %v967
    %v1006 = vpack.c.b16 %v970, %v968
    %v1007 = vpack.c.b16 %v973, %v971
    %v1008 = vpack.c.b16 %v974, %v972
    %v1009 = vpack.c.b16 %v977, %v975
    %v1010 = vpack.c.b16 %v978, %v976
    %1043 = vmatprep.subr.bf16.mxu0 %v980
    %1044 = vmatpush1.bf16.msra.mxu0 %v979
    %1045 = vmatprep.subr.bf16.mxu0 %v982
    %1046 = vmatpush1.bf16.msra.mxu0 %v981
    %1047 = vmatprep.subr.bf16.mxu0 %v984
    %1048 = vmatpush1.bf16.msra.mxu0 %v983
    %1049 = vmatprep.subr.bf16.mxu0 %v986
    %1050 = vmatpush1.bf16.msra.mxu0 %v985
    %1051 = vmatprep.subr.bf16.mxu0 %v988
    %1052 = vmatpush1.bf16.msra.mxu0 %v987
    %1053 = vmatprep.subr.bf16.mxu0 %v990
    %1054 = vmatpush1.bf16.msra.mxu0 %v989
    %1055 = vmatprep.subr.bf16.mxu0 %v992
    %1056 = vmatpush1.bf16.msra.mxu0 %v991
    %1057 = vmatprep.subr.bf16.mxu0 %v994
    %1058 = vmatpush1.bf16.msra.mxu0 %v993
    %1059 = vmatprep.subr.bf16.mxu0 %v996
    %1060 = vmatpush1.bf16.msra.mxu0 %v995
    %1061 = vmatprep.subr.bf16.mxu0 %v998
    %1062 = vmatpush1.bf16.msra.mxu0 %v997
    %1063 = vmatprep.subr.bf16.mxu0 %v1000
    %1064 = vmatpush1.bf16.msra.mxu0 %v999
    %1065 = vmatprep.subr.bf16.mxu0 %v1002
    %1066 = vmatpush1.bf16.msra.mxu0 %v1001
    %1067 = vmatprep.subr.bf16.mxu0 %v1004
    %1068 = vmatpush1.bf16.msra.mxu0 %v1003
    %1069 = vmatprep.subr.bf16.mxu0 %v1006
    %1070 = vmatpush1.bf16.msra.mxu0 %v1005
    %1071 = vmatprep.subr.bf16.mxu0 %v1008
    %1072 = vmatpush1.bf16.msra.mxu0 %v1007
    %1073 = vmatprep.subr.bf16.mxu0 %v1010
    %1074 = vmatpush1.bf16.msra.mxu0 %v1009
    %1075 = vmatprep.mubr.bf16.mxu0 %v871
    %1076 = vmatmul.mubr.bf16.gmra.mrb[0].mxu0 %v870
    %v1077 = vpop.f32.mrb[0].mxu0
    %v1078 = vadd.f32 %v876, %v1077
    %v1079 = vpop.f32.mrb[0].mxu0
    %v1080 = vadd.f32 %v880, %v1079
    %v1081 = vpop.f32.mrb[0].mxu0
    %v1082 = vpop.f32.mrb[0].mxu0
    %1083 = vdwg.mxu0
    %v1084 = vxor.u32 %v1078, 2147483648
    %v1085 = vxor.u32 %v1080, 2147483648
    %v1086 = vmul.f32 %v1084, 1.442695
    %v1087 = vpow.pop %v1086
    %v1088 = vmul.f32 %v1085, 1.442695
    %v1089 = vpow.pop %v1088
    %v1090 = vadd.f32 %v1087, 1.0
    %v1091 = vadd.f32 %v1089, 1.0
    %v1092 = vrcp.pop %v1090
    %v1093 = vmul.f32 1.0, %v1092
    %v1094 = vrcp.pop %v1091
    %v1095 = vmul.f32 1.0, %v1094
    %v1096 = vmul.f32 %v864, %v1093
    %v1097 = vmul.f32 %v866, %v1095
    %s1098 = scalar_lea.vmem %s3, 7
    %v1099 = vld [vmem:[%s1098] ss:$8 sm:$0x3]
    %s1100 = scalar_lea.vmem %s3, 32
    %v1101 = vld [vmem:[%s1100] ss:$8 sm:$0x3]
    %v1102 = vadd.f32 %v1096, %v1097
    %1103 = vadd.xlane.f32.xlu0 %v1102
    %v1104 = vpop.xlane.xlu0 %1103
    %v1105 = vmul.f32 %v1104, %v546
    %v1106 = vsub.f32 %v1096, %v1105
    %v1107 = vsub.f32 %v1097, %v1105
    %v1108 = vmul.f32 %v1106, %v1106
    %v1109 = vmul.f32 %v1107, %v1107
    %v1110 = vadd.f32 %v1108, %v1109
    %1111 = vadd.xlane.f32.xlu0 %v1110
    %v1112 = vpop.xlane.xlu0 %1111
    %v1113 = vmul.f32 %v1112, %v546
    %v1114 = vadd.f32 %v1113, 1e-06
    %v1115 = vrsqrt.pop %v1114
    %v1116 = vmul.f32 %v1106, %v1115
    %v1117 = vmul.f32 %v1107, %v1115
    %v1119 = vlaneseq
    %v1120 = vshrl.u32 %v1119, 7
    %v1121 = vsub.s32 0, %v1120
    %v1122 = vrot.slane %v1099, %v1121
    %v1123 = vlaneseq
    %v1124 = vshrl.u32 %v1123, 7
    %v1125 = vsub.s32 1, %v1124
    %v1126 = vrot.slane %v1099, %v1125
    %v1129 = vmul.f32 %v1116, %v1122
    %v1130 = vmul.f32 %v1117, %v1126
    %v1132 = vlaneseq
    %v1133 = vshrl.u32 %v1132, 7
    %v1134 = vsub.s32 0, %v1133
    %v1135 = vrot.slane %v1101, %v1134
    %v1136 = vlaneseq
    %v1137 = vshrl.u32 %v1136, 7
    %v1138 = vsub.s32 1, %v1137
    %v1139 = vrot.slane %v1101, %v1138
    %v1142 = vadd.f32 %v1129, %v1135
    %v1143 = vadd.f32 %v1130, %v1139
    %v1144 = vld [vmem:[%s5] sm:$0xff]
    %v1145 = vld [vmem:[%s5 + $0x8] sm:$0xff]
    %v1146 = vld [vmem:[%s5 + $0x10] sm:$0xff]
    %v1147 = vld [vmem:[%s5 + $0x18] sm:$0xff]
    %v1148 = vld [vmem:[%s5 + $0x20] sm:$0xff]
    %v1149 = vld [vmem:[%s5 + $0x28] sm:$0xff]
    %v1150 = vld [vmem:[%s5 + $0x30] sm:$0xff]
    %v1151 = vld [vmem:[%s5 + $0x38] sm:$0xff]
    %v1152 = vld [vmem:[%s5 + $0x40] sm:$0xff]
    %v1153 = vld [vmem:[%s5 + $0x48] sm:$0xff]
    %v1154 = vld [vmem:[%s5 + $0x50] sm:$0xff]
    %v1155 = vld [vmem:[%s5 + $0x58] sm:$0xff]
    %v1156 = vld [vmem:[%s5 + $0x60] sm:$0xff]
    %v1157 = vld [vmem:[%s5 + $0x68] sm:$0xff]
    %v1158 = vld [vmem:[%s5 + $0x70] sm:$0xff]
    %v1159 = vld [vmem:[%s5 + $0x78] sm:$0xff]
    %v1160 = vld [vmem:[%s5 + $0x80] sm:$0xff]
    %v1161 = vld [vmem:[%s5 + $0x88] sm:$0xff]
    %v1162 = vld [vmem:[%s5 + $0x90] sm:$0xff]
    %v1163 = vld [vmem:[%s5 + $0x98] sm:$0xff]
    %v1164 = vld [vmem:[%s5 + $0xa0] sm:$0xff]
    %v1165 = vld [vmem:[%s5 + $0xa8] sm:$0xff]
    %v1166 = vld [vmem:[%s5 + $0xb0] sm:$0xff]
    %v1167 = vld [vmem:[%s5 + $0xb8] sm:$0xff]
    %v1168 = vld [vmem:[%s5 + $0xc0] sm:$0xff]
    %v1169 = vld [vmem:[%s5 + $0xc8] sm:$0xff]
    %v1170 = vld [vmem:[%s5 + $0xd0] sm:$0xff]
    %v1171 = vld [vmem:[%s5 + $0xd8] sm:$0xff]
    %v1172 = vld [vmem:[%s5 + $0xe0] sm:$0xff]
    %v1173 = vld [vmem:[%s5 + $0xe8] sm:$0xff]
    %v1174 = vld [vmem:[%s5 + $0xf0] sm:$0xff]
    %v1175 = vld [vmem:[%s5 + $0xf8] sm:$0xff]
    %v1176 = vld [vmem:[%s5 + $0x100] sm:$0xff]
    %v1177 = vld [vmem:[%s5 + $0x108] sm:$0xff]
    %v1178 = vld [vmem:[%s5 + $0x110] sm:$0xff]
    %v1179 = vld [vmem:[%s5 + $0x118] sm:$0xff]
    %v1180 = vld [vmem:[%s5 + $0x120] sm:$0xff]
    %v1181 = vld [vmem:[%s5 + $0x128] sm:$0xff]
    %v1182 = vld [vmem:[%s5 + $0x130] sm:$0xff]
    %v1183 = vld [vmem:[%s5 + $0x138] sm:$0xff]
    %v1184 = vld [vmem:[%s5 + $0x140] sm:$0xff]
    %v1185 = vld [vmem:[%s5 + $0x148] sm:$0xff]
    %v1186 = vld [vmem:[%s5 + $0x150] sm:$0xff]
    %v1187 = vld [vmem:[%s5 + $0x158] sm:$0xff]
    %v1188 = vld [vmem:[%s5 + $0x160] sm:$0xff]
    %v1189 = vld [vmem:[%s5 + $0x168] sm:$0xff]
    %v1190 = vld [vmem:[%s5 + $0x170] sm:$0xff]
    %v1191 = vld [vmem:[%s5 + $0x178] sm:$0xff]
    %v1192 = vld [vmem:[%s5 + $0x180] sm:$0xff]
    %v1193 = vld [vmem:[%s5 + $0x188] sm:$0xff]
    %v1194 = vld [vmem:[%s5 + $0x190] sm:$0xff]
    %v1195 = vld [vmem:[%s5 + $0x198] sm:$0xff]
    %v1196 = vld [vmem:[%s5 + $0x1a0] sm:$0xff]
    %v1197 = vld [vmem:[%s5 + $0x1a8] sm:$0xff]
    %v1198 = vld [vmem:[%s5 + $0x1b0] sm:$0xff]
    %v1199 = vld [vmem:[%s5 + $0x1b8] sm:$0xff]
    %v1200 = vld [vmem:[%s5 + $0x1c0] sm:$0xff]
    %v1201 = vld [vmem:[%s5 + $0x1c8] sm:$0xff]
    %v1202 = vld [vmem:[%s5 + $0x1d0] sm:$0xff]
    %v1203 = vld [vmem:[%s5 + $0x1d8] sm:$0xff]
    %v1204 = vld [vmem:[%s5 + $0x1e0] sm:$0xff]
    %v1205 = vld [vmem:[%s5 + $0x1e8] sm:$0xff]
    %v1206 = vld [vmem:[%s5 + $0x1f0] sm:$0xff]
    %v1207 = vld [vmem:[%s5 + $0x1f8] sm:$0xff]
    %v1208 = vld [vmem:[%s2] sm:$0xff]
    %v1209 = vld [vmem:[%s2 + $0x8] sm:$0xff]
    %v1210 = vld [vmem:[%s2 + $0x10] sm:$0xff]
    %v1211 = vld [vmem:[%s2 + $0x18] sm:$0xff]
    %v1212 = vld [vmem:[%s2 + $0x20] sm:$0xff]
    %v1213 = vld [vmem:[%s2 + $0x28] sm:$0xff]
    %v1214 = vpack.c.bf16 %v1209, %v1208
    %v1215 = vpack.c.bf16 %v1211, %v1210
    %v1216 = vpack.c.bf16 %v1213, %v1212
    %v1217 = vld [vmem:[%s3] ss:$8 sm:$0xf]
    %v1219 = vlaneseq
    %v1220 = vshrl.u32 %v1219, 7
    %v1221 = vsub.s32 0, %v1220
    %v1222 = vrot.slane %v1217, %v1221
    %v1223 = vlaneseq
    %v1224 = vshrl.u32 %v1223, 7
    %v1225 = vsub.s32 1, %v1224
    %v1226 = vrot.slane %v1217, %v1225
    %v1227 = vlaneseq
    %v1228 = vshrl.u32 %v1227, 7
    %v1229 = vsub.s32 2, %v1228
    %v1230 = vrot.slane %v1217, %v1229
    %v1231 = vlaneseq
    %v1232 = vshrl.u32 %v1231, 7
    %v1233 = vsub.s32 3, %v1232
    %v1234 = vrot.slane %v1217, %v1233
    %v1271 = vunpack.c.l.b16 %v1144
    %v1272 = vunpack.c.h.b16 %v1144
    %v1273 = vunpack.c.l.b16 %v1145
    %v1274 = vunpack.c.h.b16 %v1145
    %v1275 = vunpack.c.l.b16 %v1146
    %v1276 = vunpack.c.h.b16 %v1146
    %v1277 = vunpack.c.l.b16 %v1147
    %v1278 = vunpack.c.h.b16 %v1147
    %v1279 = vunpack.c.l.b16 %v1148
    %v1280 = vunpack.c.h.b16 %v1148
    %v1281 = vunpack.c.l.b16 %v1149
    %v1282 = vunpack.c.h.b16 %v1149
    %v1283 = vunpack.c.l.b16 %v1150
    %v1284 = vunpack.c.h.b16 %v1150
    %v1285 = vunpack.c.l.b16 %v1151
    %v1286 = vunpack.c.h.b16 %v1151
    %v1287 = vunpack.c.l.b16 %v1152
    %v1288 = vunpack.c.h.b16 %v1152
    %v1289 = vunpack.c.l.b16 %v1153
    %v1290 = vunpack.c.h.b16 %v1153
    %v1291 = vunpack.c.l.b16 %v1154
    %v1292 = vunpack.c.h.b16 %v1154
    %v1293 = vunpack.c.l.b16 %v1155
    %v1294 = vunpack.c.h.b16 %v1155
    %v1295 = vunpack.c.l.b16 %v1156
    %v1296 = vunpack.c.h.b16 %v1156
    %v1297 = vunpack.c.l.b16 %v1157
    %v1298 = vunpack.c.h.b16 %v1157
    %v1299 = vunpack.c.l.b16 %v1158
    %v1300 = vunpack.c.h.b16 %v1158
    %v1301 = vunpack.c.l.b16 %v1159
    %v1302 = vunpack.c.h.b16 %v1159
    %v1303 = vunpack.c.l.b16 %v1160
    %v1304 = vunpack.c.h.b16 %v1160
    %v1305 = vunpack.c.l.b16 %v1161
    %v1306 = vunpack.c.h.b16 %v1161
    %v1307 = vunpack.c.l.b16 %v1162
    %v1308 = vunpack.c.h.b16 %v1162
    %v1309 = vunpack.c.l.b16 %v1163
    %v1310 = vunpack.c.h.b16 %v1163
    %v1311 = vunpack.c.l.b16 %v1164
    %v1312 = vunpack.c.h.b16 %v1164
    %v1313 = vunpack.c.l.b16 %v1165
    %v1314 = vunpack.c.h.b16 %v1165
    %v1315 = vunpack.c.l.b16 %v1166
    %v1316 = vunpack.c.h.b16 %v1166
    %v1317 = vunpack.c.l.b16 %v1167
    %v1318 = vunpack.c.h.b16 %v1167
    %v1319 = vunpack.c.l.b16 %v1168
    %v1320 = vunpack.c.h.b16 %v1168
    %v1321 = vunpack.c.l.b16 %v1169
    %v1322 = vunpack.c.h.b16 %v1169
    %v1323 = vunpack.c.l.b16 %v1170
    %v1324 = vunpack.c.h.b16 %v1170
    %v1325 = vunpack.c.l.b16 %v1171
    %v1326 = vunpack.c.h.b16 %v1171
    %v1327 = vunpack.c.l.b16 %v1172
    %v1328 = vunpack.c.h.b16 %v1172
    %v1329 = vunpack.c.l.b16 %v1173
    %v1330 = vunpack.c.h.b16 %v1173
    %v1331 = vunpack.c.l.b16 %v1174
    %v1332 = vunpack.c.h.b16 %v1174
    %v1333 = vunpack.c.l.b16 %v1175
    %v1334 = vunpack.c.h.b16 %v1175
    %v1335 = vpack.c.b16 %v1275, %v1271
    %v1336 = vpack.c.b16 %v1276, %v1272
    %v1337 = vpack.c.b16 %v1277, %v1273
    %v1338 = vpack.c.b16 %v1278, %v1274
    %v1339 = vpack.c.b16 %v1283, %v1279
    %v1340 = vpack.c.b16 %v1284, %v1280
    %v1341 = vpack.c.b16 %v1285, %v1281
    %v1342 = vpack.c.b16 %v1286, %v1282
    %v1343 = vpack.c.b16 %v1291, %v1287
    %v1344 = vpack.c.b16 %v1292, %v1288
    %v1345 = vpack.c.b16 %v1293, %v1289
    %v1346 = vpack.c.b16 %v1294, %v1290
    %v1347 = vpack.c.b16 %v1299, %v1295
    %v1348 = vpack.c.b16 %v1300, %v1296
    %v1349 = vpack.c.b16 %v1301, %v1297
    %v1350 = vpack.c.b16 %v1302, %v1298
    %v1351 = vpack.c.b16 %v1307, %v1303
    %v1352 = vpack.c.b16 %v1308, %v1304
    %v1353 = vpack.c.b16 %v1309, %v1305
    %v1354 = vpack.c.b16 %v1310, %v1306
    %v1355 = vpack.c.b16 %v1315, %v1311
    %v1356 = vpack.c.b16 %v1316, %v1312
    %v1357 = vpack.c.b16 %v1317, %v1313
    %v1358 = vpack.c.b16 %v1318, %v1314
    %v1359 = vpack.c.b16 %v1323, %v1319
    %v1360 = vpack.c.b16 %v1324, %v1320
    %v1361 = vpack.c.b16 %v1325, %v1321
    %v1362 = vpack.c.b16 %v1326, %v1322
    %v1363 = vpack.c.b16 %v1331, %v1327
    %v1364 = vpack.c.b16 %v1332, %v1328
    %v1365 = vpack.c.b16 %v1333, %v1329
    %v1366 = vpack.c.b16 %v1334, %v1330
    %1399 = vmatprep.subr.bf16.mxu0 %v1336
    %1400 = vmatpush1.bf16.msra.mxu0 %v1335
    %1401 = vmatprep.subr.bf16.mxu0 %v1340
    %1402 = vmatpush1.bf16.msra.mxu0 %v1339
    %1403 = vmatprep.subr.bf16.mxu0 %v1344
    %1404 = vmatpush1.bf16.msra.mxu0 %v1343
    %1405 = vmatprep.subr.bf16.mxu0 %v1348
    %1406 = vmatpush1.bf16.msra.mxu0 %v1347
    %1407 = vmatprep.subr.bf16.mxu0 %v1352
    %1408 = vmatpush1.bf16.msra.mxu0 %v1351
    %1409 = vmatprep.subr.bf16.mxu0 %v1356
    %1410 = vmatpush1.bf16.msra.mxu0 %v1355
    %1411 = vmatprep.subr.bf16.mxu0 %v1360
    %1412 = vmatpush1.bf16.msra.mxu0 %v1359
    %1413 = vmatprep.subr.bf16.mxu0 %v1364
    %1414 = vmatpush1.bf16.msra.mxu0 %v1363
    %1415 = vmatprep.subr.bf16.mxu0 0
    %1416 = vmatpush1.bf16.msra.mxu0 0
    %1417 = vmatprep.subr.bf16.mxu0 0
    %1418 = vmatpush1.bf16.msra.mxu0 0
    %1419 = vmatprep.subr.bf16.mxu0 0
    %1420 = vmatpush1.bf16.msra.mxu0 0
    %1421 = vmatprep.subr.bf16.mxu0 0
    %1422 = vmatpush1.bf16.msra.mxu0 0
    %1423 = vmatprep.subr.bf16.mxu0 0
    %1424 = vmatpush1.bf16.msra.mxu0 0
    %1425 = vmatprep.subr.bf16.mxu0 0
    %1426 = vmatpush1.bf16.msra.mxu0 0
    %1427 = vmatprep.subr.bf16.mxu0 0
    %1428 = vmatpush1.bf16.msra.mxu0 0
    %1429 = vmatprep.subr.bf16.mxu0 0
    %1430 = vmatpush1.bf16.msra.mxu0 0
    %1431 = vmatprep.mubr.bf16.mxu0 0
    %1432 = vmatmul.mubr.bf16.gmra.mrb[0].mxu0 %v1214
    %v1433 = vpop.f32.mrb[0].mxu0
    %v1434 = vadd.f32 %v1222, %v1433
    %v1435 = vpop.f32.mrb[0].mxu0
    %v1436 = vadd.f32 %v1226, %v1435
    %v1437 = vpop.f32.mrb[0].mxu0
    %v1438 = vadd.f32 %v1222, %v1437
    %v1439 = vpop.f32.mrb[0].mxu0
    %v1440 = vadd.f32 %v1226, %v1439
    %1441 = vmatprep.mubr.bf16.mxu0 0
    %1442 = vmatmul.mubr.bf16.gmra.mrb[0].mxu0 %v1215
    %v1443 = vpop.f32.mrb[0].mxu0
    %v1444 = vadd.f32 %v1222, %v1443
    %v1445 = vpop.f32.mrb[0].mxu0
    %v1446 = vadd.f32 %v1226, %v1445
    %v1447 = vpop.f32.mrb[0].mxu0
    %v1448 = vadd.f32 %v1222, %v1447
    %v1449 = vpop.f32.mrb[0].mxu0
    %v1450 = vadd.f32 %v1226, %v1449
    %1451 = vmatprep.mubr.bf16.mxu0 0
    %1452 = vmatmul.mubr.bf16.gmra.mrb[0].mxu0 %v1216
    %v1453 = vpop.f32.mrb[0].mxu0
    %v1454 = vadd.f32 %v1222, %v1453
    %v1455 = vpop.f32.mrb[0].mxu0
    %v1456 = vadd.f32 %v1226, %v1455
    %v1457 = vpop.f32.mrb[0].mxu0
    %v1458 = vadd.f32 %v1222, %v1457
    %v1459 = vpop.f32.mrb[0].mxu0
    %v1460 = vadd.f32 %v1226, %v1459
    %1461 = vdwg.mxu0
    %1462 = vmatprep.subr.bf16.mxu0 %v1338
    %1463 = vmatpush1.bf16.msra.mxu0 %v1337
    %1464 = vmatprep.subr.bf16.mxu0 %v1342
    %1465 = vmatpush1.bf16.msra.mxu0 %v1341
    %1466 = vmatprep.subr.bf16.mxu0 %v1346
    %1467 = vmatpush1.bf16.msra.mxu0 %v1345
    %1468 = vmatprep.subr.bf16.mxu0 %v1350
    %1469 = vmatpush1.bf16.msra.mxu0 %v1349
    %1470 = vmatprep.subr.bf16.mxu0 %v1354
    %1471 = vmatpush1.bf16.msra.mxu0 %v1353
    %1472 = vmatprep.subr.bf16.mxu0 %v1358
    %1473 = vmatpush1.bf16.msra.mxu0 %v1357
    %1474 = vmatprep.subr.bf16.mxu0 %v1362
    %1475 = vmatpush1.bf16.msra.mxu0 %v1361
    %1476 = vmatprep.subr.bf16.mxu0 %v1366
    %1477 = vmatpush1.bf16.msra.mxu0 %v1365
    %1478 = vmatprep.subr.bf16.mxu0 0
    %1479 = vmatpush1.bf16.msra.mxu0 0
    %1480 = vmatprep.subr.bf16.mxu0 0
    %1481 = vmatpush1.bf16.msra.mxu0 0
    %1482 = vmatprep.subr.bf16.mxu0 0
    %1483 = vmatpush1.bf16.msra.mxu0 0
    %1484 = vmatprep.subr.bf16.mxu0 0
    %1485 = vmatpush1.bf16.msra.mxu0 0
    %1486 = vmatprep.subr.bf16.mxu0 0
    %1487 = vmatpush1.bf16.msra.mxu0 0
    %1488 = vmatprep.subr.bf16.mxu0 0
    %1489 = vmatpush1.bf16.msra.mxu0 0
    %1490 = vmatprep.subr.bf16.mxu0 0
    %1491 = vmatpush1.bf16.msra.mxu0 0
    %1492 = vmatprep.subr.bf16.mxu0 0
    %1493 = vmatpush1.bf16.msra.mxu0 0
    %1494 = vmatprep.mubr.bf16.mxu0 0
    %1495 = vmatmul.mubr.bf16.gmra.mrb[0].mxu0 %v1214
    %v1496 = vpop.f32.mrb[0].mxu0
    %v1497 = vadd.f32 %v1230, %v1496
    %v1498 = vpop.f32.mrb[0].mxu0
    %v1499 = vadd.f32 %v1234, %v1498
    %v1500 = vpop.f32.mrb[0].mxu0
    %v1501 = vadd.f32 %v1230, %v1500
    %v1502 = vpop.f32.mrb[0].mxu0
    %v1503 = vadd.f32 %v1234, %v1502
    %1504 = vmatprep.mubr.bf16.mxu0 0
    %1505 = vmatmul.mubr.bf16.gmra.mrb[0].mxu0 %v1215
    %v1506 = vpop.f32.mrb[0].mxu0
    %v1507 = vadd.f32 %v1230, %v1506
    %v1508 = vpop.f32.mrb[0].mxu0
    %v1509 = vadd.f32 %v1234, %v1508
    %v1510 = vpop.f32.mrb[0].mxu0
    %v1511 = vadd.f32 %v1230, %v1510
    %v1512 = vpop.f32.mrb[0].mxu0
    %v1513 = vadd.f32 %v1234, %v1512
    %1514 = vmatprep.mubr.bf16.mxu0 0
    %1515 = vmatmul.mubr.bf16.gmra.mrb[0].mxu0 %v1216
    %v1516 = vpop.f32.mrb[0].mxu0
    %v1517 = vadd.f32 %v1230, %v1516
    %v1518 = vpop.f32.mrb[0].mxu0
    %v1519 = vadd.f32 %v1234, %v1518
    %v1520 = vpop.f32.mrb[0].mxu0
    %v1521 = vadd.f32 %v1230, %v1520
    %v1522 = vpop.f32.mrb[0].mxu0
    %v1523 = vadd.f32 %v1234, %v1522
    %1524 = vdwg.mxu0
    %1525 = vst [vmem:[#allocation2] sm:$0xff] %v1434
    %1526 = vst [vmem:[#allocation2 + $0x8] sm:$0xff] %v1436
    %1527 = vst [vmem:[#allocation2 + $0x10] sm:$0xff] %v1497
    %1528 = vst [vmem:[#allocation2 + $0x18] sm:$0xff] %v1499
    %1529 = vst [vmem:[#allocation2 + $0x20] sm:$0xff] %v1438
    %1530 = vst [vmem:[#allocation2 + $0x28] sm:$0xff] %v1440
    %1531 = vst [vmem:[#allocation2 + $0x30] sm:$0xff] %v1501
    %1532 = vst [vmem:[#allocation2 + $0x38] sm:$0xff] %v1503
    %1533 = vst [vmem:[#allocation2 + $0x40] sm:$0xff] %v1444
    %1534 = vst [vmem:[#allocation2 + $0x48] sm:$0xff] %v1446
    %1535 = vst [vmem:[#allocation2 + $0x50] sm:$0xff] %v1507
    %1536 = vst [vmem:[#allocation2 + $0x58] sm:$0xff] %v1509
    %1537 = vst [vmem:[#allocation2 + $0x60] sm:$0xff] %v1448
    %1538 = vst [vmem:[#allocation2 + $0x68] sm:$0xff] %v1450
    %1539 = vst [vmem:[#allocation2 + $0x70] sm:$0xff] %v1511
    %1540 = vst [vmem:[#allocation2 + $0x78] sm:$0xff] %v1513
    %1541 = vst [vmem:[#allocation2 + $0x80] sm:$0xff] %v1454
    %1542 = vst [vmem:[#allocation2 + $0x88] sm:$0xff] %v1456
    %1543 = vst [vmem:[#allocation2 + $0x90] sm:$0xff] %v1517
    %1544 = vst [vmem:[#allocation2 + $0x98] sm:$0xff] %v1519
    %1545 = vst [vmem:[#allocation2 + $0xa0] sm:$0xff] %v1458
    %1546 = vst [vmem:[#allocation2 + $0xa8] sm:$0xff] %v1460
    %1547 = vst [vmem:[#allocation2 + $0xb0] sm:$0xff] %v1521
    %1548 = vst [vmem:[#allocation2 + $0xb8] sm:$0xff] %v1523
    %v1549 = vld [vmem:[#allocation2] sm:$0xff]
    %v1550 = vld [vmem:[#allocation2 + $0x8] sm:$0xff]
    %v1551 = vld [vmem:[#allocation2 + $0x10] sm:$0xff]
    %v1552 = vld [vmem:[#allocation2 + $0x18] sm:$0xff]
    %v1585 = vunpack.c.l.b16 %v1176
    %v1586 = vunpack.c.h.b16 %v1176
    %v1587 = vunpack.c.l.b16 %v1177
    %v1588 = vunpack.c.h.b16 %v1177
    %v1589 = vunpack.c.l.b16 %v1178
    %v1590 = vunpack.c.h.b16 %v1178
    %v1591 = vunpack.c.l.b16 %v1179
    %v1592 = vunpack.c.h.b16 %v1179
    %v1593 = vunpack.c.l.b16 %v1180
    %v1594 = vunpack.c.h.b16 %v1180
    %v1595 = vunpack.c.l.b16 %v1181
    %v1596 = vunpack.c.h.b16 %v1181
    %v1597 = vunpack.c.l.b16 %v1182
    %v1598 = vunpack.c.h.b16 %v1182
    %v1599 = vunpack.c.l.b16 %v1183
    %v1600 = vunpack.c.h.b16 %v1183
    %v1601 = vunpack.c.l.b16 %v1184
    %v1602 = vunpack.c.h.b16 %v1184
    %v1603 = vunpack.c.l.b16 %v1185
    %v1604 = vunpack.c.h.b16 %v1185
    %v1605 = vunpack.c.l.b16 %v1186
    %v1606 = vunpack.c.h.b16 %v1186
    %v1607 = vunpack.c.l.b16 %v1187
    %v1608 = vunpack.c.h.b16 %v1187
    %v1609 = vunpack.c.l.b16 %v1188
    %v1610 = vunpack.c.h.b16 %v1188
    %v1611 = vunpack.c.l.b16 %v1189
    %v1612 = vunpack.c.h.b16 %v1189
    %v1613 = vunpack.c.l.b16 %v1190
    %v1614 = vunpack.c.h.b16 %v1190
    %v1615 = vunpack.c.l.b16 %v1191
    %v1616 = vunpack.c.h.b16 %v1191
    %v1617 = vunpack.c.l.b16 %v1192
    %v1618 = vunpack.c.h.b16 %v1192
    %v1619 = vunpack.c.l.b16 %v1193
    %v1620 = vunpack.c.h.b16 %v1193
    %v1621 = vunpack.c.l.b16 %v1194
    %v1622 = vunpack.c.h.b16 %v1194
    %v1623 = vunpack.c.l.b16 %v1195
    %v1624 = vunpack.c.h.b16 %v1195
    %v1625 = vunpack.c.l.b16 %v1196
    %v1626 = vunpack.c.h.b16 %v1196
    %v1627 = vunpack.c.l.b16 %v1197
    %v1628 = vunpack.c.h.b16 %v1197
    %v1629 = vunpack.c.l.b16 %v1198
    %v1630 = vunpack.c.h.b16 %v1198
    %v1631 = vunpack.c.l.b16 %v1199
    %v1632 = vunpack.c.h.b16 %v1199
    %v1633 = vunpack.c.l.b16 %v1200
    %v1634 = vunpack.c.h.b16 %v1200
    %v1635 = vunpack.c.l.b16 %v1201
    %v1636 = vunpack.c.h.b16 %v1201
    %v1637 = vunpack.c.l.b16 %v1202
    %v1638 = vunpack.c.h.b16 %v1202
    %v1639 = vunpack.c.l.b16 %v1203
    %v1640 = vunpack.c.h.b16 %v1203
    %v1641 = vunpack.c.l.b16 %v1204
    %v1642 = vunpack.c.h.b16 %v1204
    %v1643 = vunpack.c.l.b16 %v1205
    %v1644 = vunpack.c.h.b16 %v1205
    %v1645 = vunpack.c.l.b16 %v1206
    %v1646 = vunpack.c.h.b16 %v1206
    %v1647 = vunpack.c.l.b16 %v1207
    %v1648 = vunpack.c.h.b16 %v1207
    %v1649 = vpack.c.b16 %v1589, %v1585
    %v1650 = vpack.c.b16 %v1590, %v1586
    %v1651 = vpack.c.b16 %v1591, %v1587
    %v1652 = vpack.c.b16 %v1592, %v1588
    %v1653 = vpack.c.b16 %v1597, %v1593
    %v1654 = vpack.c.b16 %v1598, %v1594
    %v1655 = vpack.c.b16 %v1599, %v1595
    %v1656 = vpack.c.b16 %v1600, %v1596
    %v1657 = vpack.c.b16 %v1605, %v1601
    %v1658 = vpack.c.b16 %v1606, %v1602
    %v1659 = vpack.c.b16 %v1607, %v1603
    %v1660 = vpack.c.b16 %v1608, %v1604
    %v1661 = vpack.c.b16 %v1613, %v1609
    %v1662 = vpack.c.b16 %v1614, %v1610
    %v1663 = vpack.c.b16 %v1615, %v1611
    %v1664 = vpack.c.b16 %v1616, %v1612
    %v1665 = vpack.c.b16 %v1621, %v1617
    %v1666 = vpack.c.b16 %v1622, %v1618
    %v1667 = vpack.c.b16 %v1623, %v1619
    %v1668 = vpack.c.b16 %v1624, %v1620
    %v1669 = vpack.c.b16 %v1629, %v1625
    %v1670 = vpack.c.b16 %v1630, %v1626
    %v1671 = vpack.c.b16 %v1631, %v1627
    %v1672 = vpack.c.b16 %v1632, %v1628
    %v1673 = vpack.c.b16 %v1637, %v1633
    %v1674 = vpack.c.b16 %v1638, %v1634
    %v1675 = vpack.c.b16 %v1639, %v1635
    %v1676 = vpack.c.b16 %v1640, %v1636
    %v1677 = vpack.c.b16 %v1645, %v1641
    %v1678 = vpack.c.b16 %v1646, %v1642
    %v1679 = vpack.c.b16 %v1647, %v1643
    %v1680 = vpack.c.b16 %v1648, %v1644
    %1713 = vmatprep.subr.bf16.mxu0 %v1650
    %1714 = vmatpush1.bf16.msra.mxu0 %v1649
    %1715 = vmatprep.subr.bf16.mxu0 %v1654
    %1716 = vmatpush1.bf16.msra.mxu0 %v1653
    %1717 = vmatprep.subr.bf16.mxu0 %v1658
    %1718 = vmatpush1.bf16.msra.mxu0 %v1657
    %1719 = vmatprep.subr.bf16.mxu0 %v1662
    %1720 = vmatpush1.bf16.msra.mxu0 %v1661
    %1721 = vmatprep.subr.bf16.mxu0 %v1666
    %1722 = vmatpush1.bf16.msra.mxu0 %v1665
    %1723 = vmatprep.subr.bf16.mxu0 %v1670
    %1724 = vmatpush1.bf16.msra.mxu0 %v1669
    %1725 = vmatprep.subr.bf16.mxu0 %v1674
    %1726 = vmatpush1.bf16.msra.mxu0 %v1673
    %1727 = vmatprep.subr.bf16.mxu0 %v1678
    %1728 = vmatpush1.bf16.msra.mxu0 %v1677
    %1729 = vmatprep.subr.bf16.mxu0 0
    %1730 = vmatpush1.bf16.msra.mxu0 0
    %1731 = vmatprep.subr.bf16.mxu0 0
    %1732 = vmatpush1.bf16.msra.mxu0 0
    %1733 = vmatprep.subr.bf16.mxu0 0
    %1734 = vmatpush1.bf16.msra.mxu0 0
    %1735 = vmatprep.subr.bf16.mxu0 0
    %1736 = vmatpush1.bf16.msra.mxu0 0
    %1737 = vmatprep.subr.bf16.mxu0 0
    %1738 = vmatpush1.bf16.msra.mxu0 0
    %1739 = vmatprep.subr.bf16.mxu0 0
    %1740 = vmatpush1.bf16.msra.mxu0 0
    %1741 = vmatprep.subr.bf16.mxu0 0
    %1742 = vmatpush1.bf16.msra.mxu0 0
    %1743 = vmatprep.subr.bf16.mxu0 0
    %1744 = vmatpush1.bf16.msra.mxu0 0
    %1745 = vmatprep.mubr.bf16.mxu0 0
    %1746 = vmatmul.mubr.bf16.gmra.mrb[0].mxu0 0
    %v1747 = vpop.f32.mrb[0].mxu0
    %v1748 = vadd.f32 0.0, %v1747
    %v1749 = vpop.f32.mrb[0].mxu0
    %v1750 = vadd.f32 0.0, %v1749
    %v1751 = vpop.f32.mrb[0].mxu0
    %v1752 = vpop.f32.mrb[0].mxu0
    %1753 = vdwg.mxu0
    %1754 = vmatprep.subr.bf16.mxu0 %v1652
    %1755 = vmatpush1.bf16.msra.mxu0 %v1651
    %1756 = vmatprep.subr.bf16.mxu0 %v1656
    %1757 = vmatpush1.bf16.msra.mxu0 %v1655
    %1758 = vmatprep.subr.bf16.mxu0 %v1660
    %1759 = vmatpush1.bf16.msra.mxu0 %v1659
    %1760 = vmatprep.subr.bf16.mxu0 %v1664
    %1761 = vmatpush1.bf16.msra.mxu0 %v1663
    %1762 = vmatprep.subr.bf16.mxu0 %v1668
    %1763 = vmatpush1.bf16.msra.mxu0 %v1667
    %1764 = vmatprep.subr.bf16.mxu0 %v1672
    %1765 = vmatpush1.bf16.msra.mxu0 %v1671
    %1766 = vmatprep.subr.bf16.mxu0 %v1676
    %1767 = vmatpush1.bf16.msra.mxu0 %v1675
    %1768 = vmatprep.subr.bf16.mxu0 %v1680
    %1769 = vmatpush1.bf16.msra.mxu0 %v1679
    %1770 = vmatprep.subr.bf16.mxu0 0
    %1771 = vmatpush1.bf16.msra.mxu0 0
    %1772 = vmatprep.subr.bf16.mxu0 0
    %1773 = vmatpush1.bf16.msra.mxu0 0
    %1774 = vmatprep.subr.bf16.mxu0 0
    %1775 = vmatpush1.bf16.msra.mxu0 0
    %1776 = vmatprep.subr.bf16.mxu0 0
    %1777 = vmatpush1.bf16.msra.mxu0 0
    %1778 = vmatprep.subr.bf16.mxu0 0
    %1779 = vmatpush1.bf16.msra.mxu0 0
    %1780 = vmatprep.subr.bf16.mxu0 0
    %1781 = vmatpush1.bf16.msra.mxu0 0
    %1782 = vmatprep.subr.bf16.mxu0 0
    %1783 = vmatpush1.bf16.msra.mxu0 0
    %1784 = vmatprep.subr.bf16.mxu0 0
    %1785 = vmatpush1.bf16.msra.mxu0 0
    %1786 = vmatprep.mubr.bf16.mxu0 0
    %1787 = vmatmul.mubr.bf16.gmra.mrb[0].mxu0 0
    %v1788 = vpop.f32.mrb[0].mxu0
    %v1789 = vadd.f32 0.0, %v1788
    %v1790 = vpop.f32.mrb[0].mxu0
    %v1791 = vadd.f32 0.0, %v1790
    %v1792 = vpop.f32.mrb[0].mxu0
    %v1793 = vpop.f32.mrb[0].mxu0
    %1794 = vdwg.mxu0
    %v1795 = vadd.f32 %v1549, %v1748
    %v1796 = vadd.f32 %v1550, %v1750
    %v1797 = vadd.f32 %v1551, %v1789
    %v1798 = vadd.f32 %v1552, %v1791
    %v1799 = vxor.u32 %v1795, 2147483648
    %v1800 = vmul.f32 %v1799, 1.442695
    %v1801 = vpow.pop %v1800
    %v1802 = vadd.f32 %v1801, 1.0
    %v1803 = vrcp.pop %v1802
    %v1804 = vmul.f32 1.0, %v1803
    %v1805 = vxor.u32 %v1796, 2147483648
    %v1806 = vmul.f32 %v1805, 1.442695
    %v1807 = vpow.pop %v1806
    %v1808 = vadd.f32 %v1807, 1.0
    %v1809 = vrcp.pop %v1808
    %v1810 = vmul.f32 1.0, %v1809
    %v1811 = vtanh.pop %v1797
    %v1812 = vxor.u32 %v1798, 2147483648
    %v1813 = vmul.f32 %v1812, 1.442695
    %v1814 = vpow.pop %v1813
    %v1815 = vadd.f32 %v1814, 1.0
    %v1816 = vrcp.pop %v1815
    %v1817 = vmul.f32 1.0, %v1816
    %v1818 = vmul.f32 %v1810, 0.0
    %v1819 = vmul.f32 %v1804, %v1811
    %v1820 = vadd.f32 %v1818, %v1819
    %v1821 = vtanh.pop %v1820
    %v1822 = vmul.f32 %v1817, %v1821
    %v1823 = vld [vmem:[#allocation2 + $0x20] sm:$0xff]
    %v1824 = vld [vmem:[#allocation2 + $0x28] sm:$0xff]
    %v1825 = vld [vmem:[#allocation2 + $0x30] sm:$0xff]
    %v1826 = vld [vmem:[#allocation2 + $0x38] sm:$0xff]
    %v1827 = vpack.c.bf16 %v1822, %v1822
    %1828 = vmatprep.subr.bf16.mxu0 %v1650
    %1829 = vmatpush1.bf16.msra.mxu0 %v1649
    %1830 = vmatprep.subr.bf16.mxu0 %v1654
    %1831 = vmatpush1.bf16.msra.mxu0 %v1653
    %1832 = vmatprep.subr.bf16.mxu0 %v1658
    %1833 = vmatpush1.bf16.msra.mxu0 %v1657
    %1834 = vmatprep.subr.bf16.mxu0 %v1662
    %1835 = vmatpush1.bf16.msra.mxu0 %v1661
    %1836 = vmatprep.subr.bf16.mxu0 %v1666
    %1837 = vmatpush1.bf16.msra.mxu0 %v1665
    %1838 = vmatprep.subr.bf16.mxu0 %v1670
    %1839 = vmatpush1.bf16.msra.mxu0 %v1669
    %1840 = vmatprep.subr.bf16.mxu0 %v1674
    %1841 = vmatpush1.bf16.msra.mxu0 %v1673
    %1842 = vmatprep.subr.bf16.mxu0 %v1678
    %1843 = vmatpush1.bf16.msra.mxu0 %v1677
    %1844 = vmatprep.subr.bf16.mxu0 0
    %1845 = vmatpush1.bf16.msra.mxu0 0
    %1846 = vmatprep.subr.bf16.mxu0 0
    %1847 = vmatpush1.bf16.msra.mxu0 0
    %1848 = vmatprep.subr.bf16.mxu0 0
    %1849 = vmatpush1.bf16.msra.mxu0 0
    %1850 = vmatprep.subr.bf16.mxu0 0
    %1851 = vmatpush1.bf16.msra.mxu0 0
    %1852 = vmatprep.subr.bf16.mxu0 0
    %1853 = vmatpush1.bf16.msra.mxu0 0
    %1854 = vmatprep.subr.bf16.mxu0 0
    %1855 = vmatpush1.bf16.msra.mxu0 0
    %1856 = vmatprep.subr.bf16.mxu0 0
    %1857 = vmatpush1.bf16.msra.mxu0 0
    %1858 = vmatprep.subr.bf16.mxu0 0
    %1859 = vmatpush1.bf16.msra.mxu0 0
    %1860 = vmatprep.mubr.bf16.mxu0 0
    %1861 = vmatmul.mubr.bf16.gmra.mrb[0].mxu0 %v1827
    %v1862 = vpop.f32.mrb[0].mxu0
    %v1863 = vadd.f32 0.0, %v1862
    %v1864 = vpop.f32.mrb[0].mxu0
    %v1865 = vadd.f32 0.0, %v1864
    %v1866 = vpop.f32.mrb[0].mxu0
    %v1867 = vpop.f32.mrb[0].mxu0
    %1868 = vdwg.mxu0
    %1869 = vmatprep.subr.bf16.mxu0 %v1652
    %1870 = vmatpush1.bf16.msra.mxu0 %v1651
    %1871 = vmatprep.subr.bf16.mxu0 %v1656
    %1872 = vmatpush1.bf16.msra.mxu0 %v1655
    %1873 = vmatprep.subr.bf16.mxu0 %v1660
    %1874 = vmatpush1.bf16.msra.mxu0 %v1659
    %1875 = vmatprep.subr.bf16.mxu0 %v1664
    %1876 = vmatpush1.bf16.msra.mxu0 %v1663
    %1877 = vmatprep.subr.bf16.mxu0 %v1668
    %1878 = vmatpush1.bf16.msra.mxu0 %v1667
    %1879 = vmatprep.subr.bf16.mxu0 %v1672
    %1880 = vmatpush1.bf16.msra.mxu0 %v1671
    %1881 = vmatprep.subr.bf16.mxu0 %v1676
    %1882 = vmatpush1.bf16.msra.mxu0 %v1675
    %1883 = vmatprep.subr.bf16.mxu0 %v1680
    %1884 = vmatpush1.bf16.msra.mxu0 %v1679
    %1885 = vmatprep.subr.bf16.mxu0 0
    %1886 = vmatpush1.bf16.msra.mxu0 0
    %1887 = vmatprep.subr.bf16.mxu0 0
    %1888 = vmatpush1.bf16.msra.mxu0 0
    %1889 = vmatprep.subr.bf16.mxu0 0
    %1890 = vmatpush1.bf16.msra.mxu0 0
    %1891 = vmatprep.subr.bf16.mxu0 0
    %1892 = vmatpush1.bf16.msra.mxu0 0
    %1893 = vmatprep.subr.bf16.mxu0 0
    %1894 = vmatpush1.bf16.msra.mxu0 0
    %1895 = vmatprep.subr.bf16.mxu0 0
    %1896 = vmatpush1.bf16.msra.mxu0 0
    %1897 = vmatprep.subr.bf16.mxu0 0
    %1898 = vmatpush1.bf16.msra.mxu0 0
    %1899 = vmatprep.subr.bf16.mxu0 0
    %1900 = vmatpush1.bf16.msra.mxu0 0
    %1901 = vmatprep.mubr.bf16.mxu0 0
    %1902 = vmatmul.mubr.bf16.gmra.mrb[0].mxu0 %v1827
    %v1903 = vpop.f32.mrb[0].mxu0
    %v1904 = vadd.f32 0.0, %v1903
    %v1905 = vpop.f32.mrb[0].mxu0
    %v1906 = vadd.f32 0.0, %v1905
    %v1907 = vpop.f32.mrb[0].mxu0
    %v1908 = vpop.f32.mrb[0].mxu0
    %1909 = vdwg.mxu0
    %v1910 = vadd.f32 %v1823, %v1863
    %v1911 = vadd.f32 %v1824, %v1865
    %v1912 = vadd.f32 %v1825, %v1904
    %v1913 = vadd.f32 %v1826, %v1906
    %v1914 = vxor.u32 %v1910, 2147483648
    %v1915 = vmul.f32 %v1914, 1.442695
    %v1916 = vpow.pop %v1915
    %v1917 = vadd.f32 %v1916, 1.0
    %v1918 = vrcp.pop %v1917
    %v1919 = vmul.f32 1.0, %v1918
    %v1920 = vxor.u32 %v1911, 2147483648
    %v1921 = vmul.f32 %v1920, 1.442695
    %v1922 = vpow.pop %v1921
    %v1923 = vadd.f32 %v1922, 1.0
    %v1924 = vrcp.pop %v1923
    %v1925 = vmul.f32 1.0, %v1924
    %v1926 = vtanh.pop %v1912
    %v1927 = vxor.u32 %v1913, 2147483648
    %v1928 = vmul.f32 %v1927, 1.442695
    %v1929 = vpow.pop %v1928
    %v1930 = vadd.f32 %v1929, 1.0
    %v1931 = vrcp.pop %v1930
    %v1932 = vmul.f32 1.0, %v1931
    %v1933 = vmul.f32 %v1925, %v1820
    %v1934 = vmul.f32 %v1919, %v1926
    %v1935 = vadd.f32 %v1933, %v1934
    %v1936 = vtanh.pop %v1935
    %v1937 = vmul.f32 %v1932, %v1936
    %v1938 = vld [vmem:[#allocation2 + $0x40] sm:$0xff]
    %v1939 = vld [vmem:[#allocation2 + $0x48] sm:$0xff]
    %v1940 = vld [vmem:[#allocation2 + $0x50] sm:$0xff]
    %v1941 = vld [vmem:[#allocation2 + $0x58] sm:$0xff]
    %v1942 = vpack.c.bf16 %v1937, %v1937
    %1943 = vmatprep.subr.bf16.mxu0 %v1650
    %1944 = vmatpush1.bf16.msra.mxu0 %v1649
    %1945 = vmatprep.subr.bf16.mxu0 %v1654
    %1946 = vmatpush1.bf16.msra.mxu0 %v1653
    %1947 = vmatprep.subr.bf16.mxu0 %v1658
    %1948 = vmatpush1.bf16.msra.mxu0 %v1657
    %1949 = vmatprep.subr.bf16.mxu0 %v1662
    %1950 = vmatpush1.bf16.msra.mxu0 %v1661
    %1951 = vmatprep.subr.bf16.mxu0 %v1666
    %1952 = vmatpush1.bf16.msra.mxu0 %v1665
    %1953 = vmatprep.subr.bf16.mxu0 %v1670
    %1954 = vmatpush1.bf16.msra.mxu0 %v1669
    %1955 = vmatprep.subr.bf16.mxu0 %v1674
    %1956 = vmatpush1.bf16.msra.mxu0 %v1673
    %1957 = vmatprep.subr.bf16.mxu0 %v1678
    %1958 = vmatpush1.bf16.msra.mxu0 %v1677
    %1959 = vmatprep.subr.bf16.mxu0 0
    %1960 = vmatpush1.bf16.msra.mxu0 0
    %1961 = vmatprep.subr.bf16.mxu0 0
    %1962 = vmatpush1.bf16.msra.mxu0 0
    %1963 = vmatprep.subr.bf16.mxu0 0
    %1964 = vmatpush1.bf16.msra.mxu0 0
    %1965 = vmatprep.subr.bf16.mxu0 0
    %1966 = vmatpush1.bf16.msra.mxu0 0
    %1967 = vmatprep.subr.bf16.mxu0 0
    %1968 = vmatpush1.bf16.msra.mxu0 0
    %1969 = vmatprep.subr.bf16.mxu0 0
    %1970 = vmatpush1.bf16.msra.mxu0 0
    %1971 = vmatprep.subr.bf16.mxu0 0
    %1972 = vmatpush1.bf16.msra.mxu0 0
    %1973 = vmatprep.subr.bf16.mxu0 0
    %1974 = vmatpush1.bf16.msra.mxu0 0
    %1975 = vmatprep.mubr.bf16.mxu0 0
    %1976 = vmatmul.mubr.bf16.gmra.mrb[0].mxu0 %v1942
    %v1977 = vpop.f32.mrb[0].mxu0
    %v1978 = vadd.f32 0.0, %v1977
    %v1979 = vpop.f32.mrb[0].mxu0
    %v1980 = vadd.f32 0.0, %v1979
    %v1981 = vpop.f32.mrb[0].mxu0
    %v1982 = vpop.f32.mrb[0].mxu0
    %1983 = vdwg.mxu0
    %1984 = vmatprep.subr.bf16.mxu0 %v1652
    %1985 = vmatpush1.bf16.msra.mxu0 %v1651
    %1986 = vmatprep.subr.bf16.mxu0 %v1656
    %1987 = vmatpush1.bf16.msra.mxu0 %v1655
    %1988 = vmatprep.subr.bf16.mxu0 %v1660
    %1989 = vmatpush1.bf16.msra.mxu0 %v1659
    %1990 = vmatprep.subr.bf16.mxu0 %v1664
    %1991 = vmatpush1.bf16.msra.mxu0 %v1663
    %1992 = vmatprep.subr.bf16.mxu0 %v1668
    %1993 = vmatpush1.bf16.msra.mxu0 %v1667
    %1994 = vmatprep.subr.bf16.mxu0 %v1672
    %1995 = vmatpush1.bf16.msra.mxu0 %v1671
    %1996 = vmatprep.subr.bf16.mxu0 %v1676
    %1997 = vmatpush1.bf16.msra.mxu0 %v1675
    %1998 = vmatprep.subr.bf16.mxu0 %v1680
    %1999 = vmatpush1.bf16.msra.mxu0 %v1679
    %2000 = vmatprep.subr.bf16.mxu0 0
    %2001 = vmatpush1.bf16.msra.mxu0 0
    %2002 = vmatprep.subr.bf16.mxu0 0
    %2003 = vmatpush1.bf16.msra.mxu0 0
    %2004 = vmatprep.subr.bf16.mxu0 0
    %2005 = vmatpush1.bf16.msra.mxu0 0
    %2006 = vmatprep.subr.bf16.mxu0 0
    %2007 = vmatpush1.bf16.msra.mxu0 0
    %2008 = vmatprep.subr.bf16.mxu0 0
    %2009 = vmatpush1.bf16.msra.mxu0 0
    %2010 = vmatprep.subr.bf16.mxu0 0
    %2011 = vmatpush1.bf16.msra.mxu0 0
    %2012 = vmatprep.subr.bf16.mxu0 0
    %2013 = vmatpush1.bf16.msra.mxu0 0
    %2014 = vmatprep.subr.bf16.mxu0 0
    %2015 = vmatpush1.bf16.msra.mxu0 0
    %2016 = vmatprep.mubr.bf16.mxu0 0
    %2017 = vmatmul.mubr.bf16.gmra.mrb[0].mxu0 %v1942
    %v2018 = vpop.f32.mrb[0].mxu0
    %v2019 = vadd.f32 0.0, %v2018
    %v2020 = vpop.f32.mrb[0].mxu0
    %v2021 = vadd.f32 0.0, %v2020
    %v2022 = vpop.f32.mrb[0].mxu0
    %v2023 = vpop.f32.mrb[0].mxu0
    %2024 = vdwg.mxu0
    %v2025 = vadd.f32 %v1938, %v1978
    %v2026 = vadd.f32 %v1939, %v1980
    %v2027 = vadd.f32 %v1940, %v2019
    %v2028 = vadd.f32 %v1941, %v2021
    %v2029 = vxor.u32 %v2025, 2147483648
    %v2030 = vmul.f32 %v2029, 1.442695
    %v2031 = vpow.pop %v2030
    %v2032 = vadd.f32 %v2031, 1.0
    %v2033 = vrcp.pop %v2032
    %v2034 = vmul.f32 1.0, %v2033
    %v2035 = vxor.u32 %v2026, 2147483648
    %v2036 = vmul.f32 %v2035, 1.442695
    %v2037 = vpow.pop %v2036
    %v2038 = vadd.f32 %v2037, 1.0
    %v2039 = vrcp.pop %v2038
    %v2040 = vmul.f32 1.0, %v2039
    %v2041 = vtanh.pop %v2027
    %v2042 = vxor.u32 %v2028, 2147483648
    %v2043 = vmul.f32 %v2042, 1.442695
    %v2044 = vpow.pop %v2043
    %v2045 = vadd.f32 %v2044, 1.0
    %v2046 = vrcp.pop %v2045
    %v2047 = vmul.f32 1.0, %v2046
    %v2048 = vmul.f32 %v2040, %v1935
    %v2049 = vmul.f32 %v2034, %v2041
    %v2050 = vadd.f32 %v2048, %v2049
    %v2051 = vtanh.pop %v2050
    %v2052 = vmul.f32 %v2047, %v2051
    %v2053 = vld [vmem:[#allocation2 + $0x60] sm:$0xff]
    %v2054 = vld [vmem:[#allocation2 + $0x68] sm:$0xff]
    %v2055 = vld [vmem:[#allocation2 + $0x70] sm:$0xff]
    %v2056 = vld [vmem:[#allocation2 + $0x78] sm:$0xff]
    %v2057 = vpack.c.bf16 %v2052, %v2052
    %2058 = vmatprep.subr.bf16.mxu0 %v1650
    %2059 = vmatpush1.bf16.msra.mxu0 %v1649
    %2060 = vmatprep.subr.bf16.mxu0 %v1654
    %2061 = vmatpush1.bf16.msra.mxu0 %v1653
    %2062 = vmatprep.subr.bf16.mxu0 %v1658
    %2063 = vmatpush1.bf16.msra.mxu0 %v1657
    %2064 = vmatprep.subr.bf16.mxu0 %v1662
    %2065 = vmatpush1.bf16.msra.mxu0 %v1661
    %2066 = vmatprep.subr.bf16.mxu0 %v1666
    %2067 = vmatpush1.bf16.msra.mxu0 %v1665
    %2068 = vmatprep.subr.bf16.mxu0 %v1670
    %2069 = vmatpush1.bf16.msra.mxu0 %v1669
    %2070 = vmatprep.subr.bf16.mxu0 %v1674
    %2071 = vmatpush1.bf16.msra.mxu0 %v1673
    %2072 = vmatprep.subr.bf16.mxu0 %v1678
    %2073 = vmatpush1.bf16.msra.mxu0 %v1677
    %2074 = vmatprep.subr.bf16.mxu0 0
    %2075 = vmatpush1.bf16.msra.mxu0 0
    %2076 = vmatprep.subr.bf16.mxu0 0
    %2077 = vmatpush1.bf16.msra.mxu0 0
    %2078 = vmatprep.subr.bf16.mxu0 0
    %2079 = vmatpush1.bf16.msra.mxu0 0
    %2080 = vmatprep.subr.bf16.mxu0 0
    %2081 = vmatpush1.bf16.msra.mxu0 0
    %2082 = vmatprep.subr.bf16.mxu0 0
    %2083 = vmatpush1.bf16.msra.mxu0 0
    %2084 = vmatprep.subr.bf16.mxu0 0
    %2085 = vmatpush1.bf16.msra.mxu0 0
    %2086 = vmatprep.subr.bf16.mxu0 0
    %2087 = vmatpush1.bf16.msra.mxu0 0
    %2088 = vmatprep.subr.bf16.mxu0 0
    %2089 = vmatpush1.bf16.msra.mxu0 0
    %2090 = vmatprep.mubr.bf16.mxu0 0
    %2091 = vmatmul.mubr.bf16.gmra.mrb[0].mxu0 %v2057
    %v2092 = vpop.f32.mrb[0].mxu0
    %v2093 = vadd.f32 0.0, %v2092
    %v2094 = vpop.f32.mrb[0].mxu0
    %v2095 = vadd.f32 0.0, %v2094
    %v2096 = vpop.f32.mrb[0].mxu0
    %v2097 = vpop.f32.mrb[0].mxu0
    %2098 = vdwg.mxu0
    %2099 = vmatprep.subr.bf16.mxu0 %v1652
    %2100 = vmatpush1.bf16.msra.mxu0 %v1651
    %2101 = vmatprep.subr.bf16.mxu0 %v1656
    %2102 = vmatpush1.bf16.msra.mxu0 %v1655
    %2103 = vmatprep.subr.bf16.mxu0 %v1660
    %2104 = vmatpush1.bf16.msra.mxu0 %v1659
    %2105 = vmatprep.subr.bf16.mxu0 %v1664
    %2106 = vmatpush1.bf16.msra.mxu0 %v1663
    %2107 = vmatprep.subr.bf16.mxu0 %v1668
    %2108 = vmatpush1.bf16.msra.mxu0 %v1667
    %2109 = vmatprep.subr.bf16.mxu0 %v1672
    %2110 = vmatpush1.bf16.msra.mxu0 %v1671
    %2111 = vmatprep.subr.bf16.mxu0 %v1676
    %2112 = vmatpush1.bf16.msra.mxu0 %v1675
    %2113 = vmatprep.subr.bf16.mxu0 %v1680
    %2114 = vmatpush1.bf16.msra.mxu0 %v1679
    %2115 = vmatprep.subr.bf16.mxu0 0
    %2116 = vmatpush1.bf16.msra.mxu0 0
    %2117 = vmatprep.subr.bf16.mxu0 0
    %2118 = vmatpush1.bf16.msra.mxu0 0
    %2119 = vmatprep.subr.bf16.mxu0 0
    %2120 = vmatpush1.bf16.msra.mxu0 0
    %2121 = vmatprep.subr.bf16.mxu0 0
    %2122 = vmatpush1.bf16.msra.mxu0 0
    %2123 = vmatprep.subr.bf16.mxu0 0
    %2124 = vmatpush1.bf16.msra.mxu0 0
    %2125 = vmatprep.subr.bf16.mxu0 0
    %2126 = vmatpush1.bf16.msra.mxu0 0
    %2127 = vmatprep.subr.bf16.mxu0 0
    %2128 = vmatpush1.bf16.msra.mxu0 0
    %2129 = vmatprep.subr.bf16.mxu0 0
    %2130 = vmatpush1.bf16.msra.mxu0 0
    %2131 = vmatprep.mubr.bf16.mxu0 0
    %2132 = vmatmul.mubr.bf16.gmra.mrb[0].mxu0 %v2057
    %v2133 = vpop.f32.mrb[0].mxu0
    %v2134 = vadd.f32 0.0, %v2133
    %v2135 = vpop.f32.mrb[0].mxu0
    %v2136 = vadd.f32 0.0, %v2135
    %v2137 = vpop.f32.mrb[0].mxu0
    %v2138 = vpop.f32.mrb[0].mxu0
    %2139 = vdwg.mxu0
    %v2140 = vadd.f32 %v2053, %v2093
    %v2141 = vadd.f32 %v2054, %v2095
    %v2142 = vadd.f32 %v2055, %v2134
    %v2143 = vadd.f32 %v2056, %v2136
    %v2144 = vxor.u32 %v2140, 2147483648
    %v2145 = vmul.f32 %v2144, 1.442695
    %v2146 = vpow.pop %v2145
    %v2147 = vadd.f32 %v2146, 1.0
    %v2148 = vrcp.pop %v2147
    %v2149 = vmul.f32 1.0, %v2148
    %v2150 = vxor.u32 %v2141, 2147483648
    %v2151 = vmul.f32 %v2150, 1.442695
    %v2152 = vpow.pop %v2151
    %v2153 = vadd.f32 %v2152, 1.0
    %v2154 = vrcp.pop %v2153
    %v2155 = vmul.f32 1.0, %v2154
    %v2156 = vtanh.pop %v2142
    %v2157 = vxor.u32 %v2143, 2147483648
    %v2158 = vmul.f32 %v2157, 1.442695
    %v2159 = vpow.pop %v2158
    %v2160 = vadd.f32 %v2159, 1.0
    %v2161 = vrcp.pop %v2160
    %v2162 = vmul.f32 1.0, %v2161
    %v2163 = vmul.f32 %v2155, %v2050
    %v2164 = vmul.f32 %v2149, %v2156
    %v2165 = vadd.f32 %v2163, %v2164
    %v2166 = vtanh.pop %v2165
    %v2167 = vmul.f32 %v2162, %v2166
    %v2168 = vld [vmem:[#allocation2 + $0x80] sm:$0xff]
    %v2169 = vld [vmem:[#allocation2 + $0x88] sm:$0xff]
    %v2170 = vld [vmem:[#allocation2 + $0x90] sm:$0xff]
    %v2171 = vld [vmem:[#allocation2 + $0x98] sm:$0xff]
    %v2172 = vpack.c.bf16 %v2167, %v2167
    %2173 = vmatprep.subr.bf16.mxu0 %v1650
    %2174 = vmatpush1.bf16.msra.mxu0 %v1649
    %2175 = vmatprep.subr.bf16.mxu0 %v1654
    %2176 = vmatpush1.bf16.msra.mxu0 %v1653
    %2177 = vmatprep.subr.bf16.mxu0 %v1658
    %2178 = vmatpush1.bf16.msra.mxu0 %v1657
    %2179 = vmatprep.subr.bf16.mxu0 %v1662
    %2180 = vmatpush1.bf16.msra.mxu0 %v1661
    %2181 = vmatprep.subr.bf16.mxu0 %v1666
    %2182 = vmatpush1.bf16.msra.mxu0 %v1665
    %2183 = vmatprep.subr.bf16.mxu0 %v1670
    %2184 = vmatpush1.bf16.msra.mxu0 %v1669
    %2185 = vmatprep.subr.bf16.mxu0 %v1674
    %2186 = vmatpush1.bf16.msra.mxu0 %v1673
    %2187 = vmatprep.subr.bf16.mxu0 %v1678
    %2188 = vmatpush1.bf16.msra.mxu0 %v1677
    %2189 = vmatprep.subr.bf16.mxu0 0
    %2190 = vmatpush1.bf16.msra.mxu0 0
    %2191 = vmatprep.subr.bf16.mxu0 0
    %2192 = vmatpush1.bf16.msra.mxu0 0
    %2193 = vmatprep.subr.bf16.mxu0 0
    %2194 = vmatpush1.bf16.msra.mxu0 0
    %2195 = vmatprep.subr.bf16.mxu0 0
    %2196 = vmatpush1.bf16.msra.mxu0 0
    %2197 = vmatprep.subr.bf16.mxu0 0
    %2198 = vmatpush1.bf16.msra.mxu0 0
    %2199 = vmatprep.subr.bf16.mxu0 0
    %2200 = vmatpush1.bf16.msra.mxu0 0
    %2201 = vmatprep.subr.bf16.mxu0 0
    %2202 = vmatpush1.bf16.msra.mxu0 0
    %2203 = vmatprep.subr.bf16.mxu0 0
    %2204 = vmatpush1.bf16.msra.mxu0 0
    %2205 = vmatprep.mubr.bf16.mxu0 0
    %2206 = vmatmul.mubr.bf16.gmra.mrb[0].mxu0 %v2172
    %v2207 = vpop.f32.mrb[0].mxu0
    %v2208 = vadd.f32 0.0, %v2207
    %v2209 = vpop.f32.mrb[0].mxu0
    %v2210 = vadd.f32 0.0, %v2209
    %v2211 = vpop.f32.mrb[0].mxu0
    %v2212 = vpop.f32.mrb[0].mxu0
    %2213 = vdwg.mxu0
    %2214 = vmatprep.subr.bf16.mxu0 %v1652
    %2215 = vmatpush1.bf16.msra.mxu0 %v1651
    %2216 = vmatprep.subr.bf16.mxu0 %v1656
    %2217 = vmatpush1.bf16.msra.mxu0 %v1655
    %2218 = vmatprep.subr.bf16.mxu0 %v1660
    %2219 = vmatpush1.bf16.msra.mxu0 %v1659
    %2220 = vmatprep.subr.bf16.mxu0 %v1664
    %2221 = vmatpush1.bf16.msra.mxu0 %v1663
    %2222 = vmatprep.subr.bf16.mxu0 %v1668
    %2223 = vmatpush1.bf16.msra.mxu0 %v1667
    %2224 = vmatprep.subr.bf16.mxu0 %v1672
    %2225 = vmatpush1.bf16.msra.mxu0 %v1671
    %2226 = vmatprep.subr.bf16.mxu0 %v1676
    %2227 = vmatpush1.bf16.msra.mxu0 %v1675
    %2228 = vmatprep.subr.bf16.mxu0 %v1680
    %2229 = vmatpush1.bf16.msra.mxu0 %v1679
    %2230 = vmatprep.subr.bf16.mxu0 0
    %2231 = vmatpush1.bf16.msra.mxu0 0
    %2232 = vmatprep.subr.bf16.mxu0 0
    %2233 = vmatpush1.bf16.msra.mxu0 0
    %2234 = vmatprep.subr.bf16.mxu0 0
    %2235 = vmatpush1.bf16.msra.mxu0 0
    %2236 = vmatprep.subr.bf16.mxu0 0
    %2237 = vmatpush1.bf16.msra.mxu0 0
    %2238 = vmatprep.subr.bf16.mxu0 0
    %2239 = vmatpush1.bf16.msra.mxu0 0
    %2240 = vmatprep.subr.bf16.mxu0 0
    %2241 = vmatpush1.bf16.msra.mxu0 0
    %2242 = vmatprep.subr.bf16.mxu0 0
    %2243 = vmatpush1.bf16.msra.mxu0 0
    %2244 = vmatprep.subr.bf16.mxu0 0
    %2245 = vmatpush1.bf16.msra.mxu0 0
    %2246 = vmatprep.mubr.bf16.mxu0 0
    %2247 = vmatmul.mubr.bf16.gmra.mrb[0].mxu0 %v2172
    %v2248 = vpop.f32.mrb[0].mxu0
    %v2249 = vadd.f32 0.0, %v2248
    %v2250 = vpop.f32.mrb[0].mxu0
    %v2251 = vadd.f32 0.0, %v2250
    %v2252 = vpop.f32.mrb[0].mxu0
    %v2253 = vpop.f32.mrb[0].mxu0
    %2254 = vdwg.mxu0
    %v2255 = vadd.f32 %v2168, %v2208
    %v2256 = vadd.f32 %v2169, %v2210
    %v2257 = vadd.f32 %v2170, %v2249
    %v2258 = vadd.f32 %v2171, %v2251
    %v2259 = vxor.u32 %v2255, 2147483648
    %v2260 = vmul.f32 %v2259, 1.442695
    %v2261 = vpow.pop %v2260
    %v2262 = vadd.f32 %v2261, 1.0
    %v2263 = vrcp.pop %v2262
    %v2264 = vmul.f32 1.0, %v2263
    %v2265 = vxor.u32 %v2256, 2147483648
    %v2266 = vmul.f32 %v2265, 1.442695
    %v2267 = vpow.pop %v2266
    %v2268 = vadd.f32 %v2267, 1.0
    %v2269 = vrcp.pop %v2268
    %v2270 = vmul.f32 1.0, %v2269
    %v2271 = vtanh.pop %v2257
    %v2272 = vxor.u32 %v2258, 2147483648
    %v2273 = vmul.f32 %v2272, 1.442695
    %v2274 = vpow.pop %v2273
    %v2275 = vadd.f32 %v2274, 1.0
    %v2276 = vrcp.pop %v2275
    %v2277 = vmul.f32 1.0, %v2276
    %v2278 = vmul.f32 %v2270, %v2165
    %v2279 = vmul.f32 %v2264, %v2271
    %v2280 = vadd.f32 %v2278, %v2279
    %v2281 = vtanh.pop %v2280
    %v2282 = vmul.f32 %v2277, %v2281
    %v2283 = vld [vmem:[#allocation2 + $0xa0] sm:$0xff]
    %v2284 = vld [vmem:[#allocation2 + $0xa8] sm:$0xff]
    %v2285 = vld [vmem:[#allocation2 + $0xb0] sm:$0xff]
    %v2286 = vld [vmem:[#allocation2 + $0xb8] sm:$0xff]
    %v2287 = vpack.c.bf16 %v2282, %v2282
    %2288 = vmatprep.subr.bf16.mxu0 %v1650
    %2289 = vmatpush1.bf16.msra.mxu0 %v1649
    %2290 = vmatprep.subr.bf16.mxu0 %v1654
    %2291 = vmatpush1.bf16.msra.mxu0 %v1653
    %2292 = vmatprep.subr.bf16.mxu0 %v1658
    %2293 = vmatpush1.bf16.msra.mxu0 %v1657
    %2294 = vmatprep.subr.bf16.mxu0 %v1662
    %2295 = vmatpush1.bf16.msra.mxu0 %v1661
    %2296 = vmatprep.subr.bf16.mxu0 %v1666
    %2297 = vmatpush1.bf16.msra.mxu0 %v1665
    %2298 = vmatprep.subr.bf16.mxu0 %v1670
    %2299 = vmatpush1.bf16.msra.mxu0 %v1669
    %2300 = vmatprep.subr.bf16.mxu0 %v1674
    %2301 = vmatpush1.bf16.msra.mxu0 %v1673
    %2302 = vmatprep.subr.bf16.mxu0 %v1678
    %2303 = vmatpush1.bf16.msra.mxu0 %v1677
    %2304 = vmatprep.subr.bf16.mxu0 0
    %2305 = vmatpush1.bf16.msra.mxu0 0
    %2306 = vmatprep.subr.bf16.mxu0 0
    %2307 = vmatpush1.bf16.msra.mxu0 0
    %2308 = vmatprep.subr.bf16.mxu0 0
    %2309 = vmatpush1.bf16.msra.mxu0 0
    %2310 = vmatprep.subr.bf16.mxu0 0
    %2311 = vmatpush1.bf16.msra.mxu0 0
    %2312 = vmatprep.subr.bf16.mxu0 0
    %2313 = vmatpush1.bf16.msra.mxu0 0
    %2314 = vmatprep.subr.bf16.mxu0 0
    %2315 = vmatpush1.bf16.msra.mxu0 0
    %2316 = vmatprep.subr.bf16.mxu0 0
    %2317 = vmatpush1.bf16.msra.mxu0 0
    %2318 = vmatprep.subr.bf16.mxu0 0
    %2319 = vmatpush1.bf16.msra.mxu0 0
    %2320 = vmatprep.mubr.bf16.mxu0 0
    %2321 = vmatmul.mubr.bf16.gmra.mrb[0].mxu0 %v2287
    %v2322 = vpop.f32.mrb[0].mxu0
    %v2323 = vadd.f32 0.0, %v2322
    %v2324 = vpop.f32.mrb[0].mxu0
    %v2325 = vadd.f32 0.0, %v2324
    %v2326 = vpop.f32.mrb[0].mxu0
    %v2327 = vpop.f32.mrb[0].mxu0
    %2328 = vdwg.mxu0
    %2329 = vmatprep.subr.bf16.mxu0 %v1652
    %2330 = vmatpush1.bf16.msra.mxu0 %v1651
    %2331 = vmatprep.subr.bf16.mxu0 %v1656
    %2332 = vmatpush1.bf16.msra.mxu0 %v1655
    %2333 = vmatprep.subr.bf16.mxu0 %v1660
    %2334 = vmatpush1.bf16.msra.mxu0 %v1659
    %2335 = vmatprep.subr.bf16.mxu0 %v1664
    %2336 = vmatpush1.bf16.msra.mxu0 %v1663
    %2337 = vmatprep.subr.bf16.mxu0 %v1668
    %2338 = vmatpush1.bf16.msra.mxu0 %v1667
    %2339 = vmatprep.subr.bf16.mxu0 %v1672
    %2340 = vmatpush1.bf16.msra.mxu0 %v1671
    %2341 = vmatprep.subr.bf16.mxu0 %v1676
    %2342 = vmatpush1.bf16.msra.mxu0 %v1675
    %2343 = vmatprep.subr.bf16.mxu0 %v1680
    %2344 = vmatpush1.bf16.msra.mxu0 %v1679
    %2345 = vmatprep.subr.bf16.mxu0 0
    %2346 = vmatpush1.bf16.msra.mxu0 0
    %2347 = vmatprep.subr.bf16.mxu0 0
    %2348 = vmatpush1.bf16.msra.mxu0 0
    %2349 = vmatprep.subr.bf16.mxu0 0
    %2350 = vmatpush1.bf16.msra.mxu0 0
    %2351 = vmatprep.subr.bf16.mxu0 0
    %2352 = vmatpush1.bf16.msra.mxu0 0
    %2353 = vmatprep.subr.bf16.mxu0 0
    %2354 = vmatpush1.bf16.msra.mxu0 0
    %2355 = vmatprep.subr.bf16.mxu0 0
    %2356 = vmatpush1.bf16.msra.mxu0 0
    %2357 = vmatprep.subr.bf16.mxu0 0
    %2358 = vmatpush1.bf16.msra.mxu0 0
    %2359 = vmatprep.subr.bf16.mxu0 0
    %2360 = vmatpush1.bf16.msra.mxu0 0
    %2361 = vmatprep.mubr.bf16.mxu0 0
    %2362 = vmatmul.mubr.bf16.gmra.mrb[0].mxu0 %v2287
    %v2363 = vpop.f32.mrb[0].mxu0
    %v2364 = vadd.f32 0.0, %v2363
    %v2365 = vpop.f32.mrb[0].mxu0
    %v2366 = vadd.f32 0.0, %v2365
    %v2367 = vpop.f32.mrb[0].mxu0
    %v2368 = vpop.f32.mrb[0].mxu0
    %2369 = vdwg.mxu0
    %v2370 = vadd.f32 %v2283, %v2323
    %v2371 = vadd.f32 %v2284, %v2325
    %v2372 = vadd.f32 %v2285, %v2364
    %v2373 = vadd.f32 %v2286, %v2366
    %v2374 = vxor.u32 %v2370, 2147483648
    %v2375 = vmul.f32 %v2374, 1.442695
    %v2376 = vpow.pop %v2375
    %v2377 = vadd.f32 %v2376, 1.0
    %v2378 = vrcp.pop %v2377
    %v2379 = vmul.f32 1.0, %v2378
    %v2380 = vxor.u32 %v2371, 2147483648
    %v2381 = vmul.f32 %v2380, 1.442695
    %v2382 = vpow.pop %v2381
    %v2383 = vadd.f32 %v2382, 1.0
    %v2384 = vrcp.pop %v2383
    %v2385 = vmul.f32 1.0, %v2384
    %v2386 = vtanh.pop %v2372
    %v2387 = vxor.u32 %v2373, 2147483648
    %v2388 = vmul.f32 %v2387, 1.442695
    %v2389 = vpow.pop %v2388
    %v2390 = vadd.f32 %v2389, 1.0
    %v2391 = vrcp.pop %v2390
    %v2392 = vmul.f32 1.0, %v2391
    %v2393 = vmul.f32 %v2385, %v2280
    %v2394 = vmul.f32 %v2379, %v2386
    %v2395 = vadd.f32 %v2393, %v2394
    %v2396 = vtanh.pop %v2395
    %v2397 = vmul.f32 %v2392, %v2396
    %v2398 = vld [vmem:[%s4 + $0x400] sm:$0xff]
    %v2399 = vld [vmem:[%s4 + $0x408] sm:$0xff]
    %v2400 = vld [vmem:[%s4 + $0x410] sm:$0xff]
    %v2401 = vld [vmem:[%s4 + $0x418] sm:$0xff]
    %v2402 = vld [vmem:[%s4 + $0x420] sm:$0xff]
    %v2403 = vld [vmem:[%s4 + $0x428] sm:$0xff]
    %v2404 = vld [vmem:[%s4 + $0x430] sm:$0xff]
    %v2405 = vld [vmem:[%s4 + $0x438] sm:$0xff]
    %v2406 = vld [vmem:[%s4 + $0x440] sm:$0xff]
    %v2407 = vld [vmem:[%s4 + $0x448] sm:$0xff]
    %v2408 = vld [vmem:[%s4 + $0x450] sm:$0xff]
    %v2409 = vld [vmem:[%s4 + $0x458] sm:$0xff]
    %v2410 = vld [vmem:[%s4 + $0x460] sm:$0xff]
    %v2411 = vld [vmem:[%s4 + $0x468] sm:$0xff]
    %v2412 = vld [vmem:[%s4 + $0x470] sm:$0xff]
    %v2413 = vld [vmem:[%s4 + $0x478] sm:$0xff]
    %s2414 = scalar_lea.vmem %s3, 33
    %v2415 = vld [vmem:[%s2414] ss:$8 sm:$0x3]
    %v2416 = vld [vmem:[%s4 + $0x480] sm:$0xff]
    %v2417 = vld [vmem:[%s4 + $0x488] sm:$0xff]
    %v2418 = vld [vmem:[%s4 + $0x490] sm:$0xff]
    %v2419 = vld [vmem:[%s4 + $0x498] sm:$0xff]
    %v2420 = vld [vmem:[%s4 + $0x4a0] sm:$0xff]
    %v2421 = vld [vmem:[%s4 + $0x4a8] sm:$0xff]
    %v2422 = vld [vmem:[%s4 + $0x4b0] sm:$0xff]
    %v2423 = vld [vmem:[%s4 + $0x4b8] sm:$0xff]
    %v2424 = vld [vmem:[%s4 + $0x4c0] sm:$0xff]
    %v2425 = vld [vmem:[%s4 + $0x4c8] sm:$0xff]
    %v2426 = vld [vmem:[%s4 + $0x4d0] sm:$0xff]
    %v2427 = vld [vmem:[%s4 + $0x4d8] sm:$0xff]
    %v2428 = vld [vmem:[%s4 + $0x4e0] sm:$0xff]
    %v2429 = vld [vmem:[%s4 + $0x4e8] sm:$0xff]
    %v2430 = vld [vmem:[%s4 + $0x4f0] sm:$0xff]
    %v2431 = vld [vmem:[%s4 + $0x4f8] sm:$0xff]
    %v2432 = vld [vmem:[%s4 + $0x500] sm:$0xff]
    %v2433 = vld [vmem:[%s4 + $0x508] sm:$0xff]
    %v2434 = vld [vmem:[%s4 + $0x510] sm:$0xff]
    %v2435 = vld [vmem:[%s4 + $0x518] sm:$0xff]
    %v2436 = vld [vmem:[%s4 + $0x520] sm:$0xff]
    %v2437 = vld [vmem:[%s4 + $0x528] sm:$0xff]
    %v2438 = vld [vmem:[%s4 + $0x530] sm:$0xff]
    %v2439 = vld [vmem:[%s4 + $0x538] sm:$0xff]
    %v2440 = vld [vmem:[%s4 + $0x540] sm:$0xff]
    %v2441 = vld [vmem:[%s4 + $0x548] sm:$0xff]
    %v2442 = vld [vmem:[%s4 + $0x550] sm:$0xff]
    %v2443 = vld [vmem:[%s4 + $0x558] sm:$0xff]
    %v2444 = vld [vmem:[%s4 + $0x560] sm:$0xff]
    %v2445 = vld [vmem:[%s4 + $0x568] sm:$0xff]
    %v2446 = vld [vmem:[%s4 + $0x570] sm:$0xff]
    %v2447 = vld [vmem:[%s4 + $0x578] sm:$0xff]
    %s2448 = scalar_lea.vmem %s3, 34
    %v2449 = vld [vmem:[%s2448] ss:$8 sm:$0x3]
    %v2450 = vpack.c.bf16 %v2397, %v2397
    %v2452 = vlaneseq
    %v2453 = vshrl.u32 %v2452, 7
    %v2454 = vsub.s32 0, %v2453
    %v2455 = vrot.slane %v2415, %v2454
    %v2456 = vlaneseq
    %v2457 = vshrl.u32 %v2456, 7
    %v2458 = vsub.s32 1, %v2457
    %v2459 = vrot.slane %v2415, %v2458
    %v2478 = vunpack.c.l.b16 %v2398
    %v2479 = vunpack.c.h.b16 %v2398
    %v2480 = vunpack.c.l.b16 %v2399
    %v2481 = vunpack.c.h.b16 %v2399
    %v2482 = vunpack.c.l.b16 %v2400
    %v2483 = vunpack.c.h.b16 %v2400
    %v2484 = vunpack.c.l.b16 %v2401
    %v2485 = vunpack.c.h.b16 %v2401
    %v2486 = vunpack.c.l.b16 %v2402
    %v2487 = vunpack.c.h.b16 %v2402
    %v2488 = vunpack.c.l.b16 %v2403
    %v2489 = vunpack.c.h.b16 %v2403
    %v2490 = vunpack.c.l.b16 %v2404
    %v2491 = vunpack.c.h.b16 %v2404
    %v2492 = vunpack.c.l.b16 %v2405
    %v2493 = vunpack.c.h.b16 %v2405
    %v2494 = vunpack.c.l.b16 %v2406
    %v2495 = vunpack.c.h.b16 %v2406
    %v2496 = vunpack.c.l.b16 %v2407
    %v2497 = vunpack.c.h.b16 %v2407
    %v2498 = vunpack.c.l.b16 %v2408
    %v2499 = vunpack.c.h.b16 %v2408
    %v2500 = vunpack.c.l.b16 %v2409
    %v2501 = vunpack.c.h.b16 %v2409
    %v2502 = vunpack.c.l.b16 %v2410
    %v2503 = vunpack.c.h.b16 %v2410
    %v2504 = vunpack.c.l.b16 %v2411
    %v2505 = vunpack.c.h.b16 %v2411
    %v2506 = vunpack.c.l.b16 %v2412
    %v2507 = vunpack.c.h.b16 %v2412
    %v2508 = vunpack.c.l.b16 %v2413
    %v2509 = vunpack.c.h.b16 %v2413
    %v2510 = vpack.c.b16 %v2480, %v2478
    %v2511 = vpack.c.b16 %v2481, %v2479
    %v2512 = vpack.c.b16 %v2484, %v2482
    %v2513 = vpack.c.b16 %v2485, %v2483
    %v2514 = vpack.c.b16 %v2488, %v2486
    %v2515 = vpack.c.b16 %v2489, %v2487
    %v2516 = vpack.c.b16 %v2492, %v2490
    %v2517 = vpack.c.b16 %v2493, %v2491
    %v2518 = vpack.c.b16 %v2496, %v2494
    %v2519 = vpack.c.b16 %v2497, %v2495
    %v2520 = vpack.c.b16 %v2500, %v2498
    %v2521 = vpack.c.b16 %v2501, %v2499
    %v2522 = vpack.c.b16 %v2504, %v2502
    %v2523 = vpack.c.b16 %v2505, %v2503
    %v2524 = vpack.c.b16 %v2508, %v2506
    %v2525 = vpack.c.b16 %v2509, %v2507
    %2542 = vmatprep.subr.bf16.mxu0 %v2511
    %2543 = vmatpush1.bf16.msra.mxu0 %v2510
    %2544 = vmatprep.subr.bf16.mxu0 %v2513
    %2545 = vmatpush1.bf16.msra.mxu0 %v2512
    %2546 = vmatprep.subr.bf16.mxu0 %v2515
    %2547 = vmatpush1.bf16.msra.mxu0 %v2514
    %2548 = vmatprep.subr.bf16.mxu0 %v2517
    %2549 = vmatpush1.bf16.msra.mxu0 %v2516
    %2550 = vmatprep.subr.bf16.mxu0 %v2519
    %2551 = vmatpush1.bf16.msra.mxu0 %v2518
    %2552 = vmatprep.subr.bf16.mxu0 %v2521
    %2553 = vmatpush1.bf16.msra.mxu0 %v2520
    %2554 = vmatprep.subr.bf16.mxu0 %v2523
    %2555 = vmatpush1.bf16.msra.mxu0 %v2522
    %2556 = vmatprep.subr.bf16.mxu0 %v2525
    %2557 = vmatpush1.bf16.msra.mxu0 %v2524
    %2558 = vmatprep.subr.bf16.mxu0 0
    %2559 = vmatpush1.bf16.msra.mxu0 0
    %2560 = vmatprep.subr.bf16.mxu0 0
    %2561 = vmatpush1.bf16.msra.mxu0 0
    %2562 = vmatprep.subr.bf16.mxu0 0
    %2563 = vmatpush1.bf16.msra.mxu0 0
    %2564 = vmatprep.subr.bf16.mxu0 0
    %2565 = vmatpush1.bf16.msra.mxu0 0
    %2566 = vmatprep.subr.bf16.mxu0 0
    %2567 = vmatpush1.bf16.msra.mxu0 0
    %2568 = vmatprep.subr.bf16.mxu0 0
    %2569 = vmatpush1.bf16.msra.mxu0 0
    %2570 = vmatprep.subr.bf16.mxu0 0
    %2571 = vmatpush1.bf16.msra.mxu0 0
    %2572 = vmatprep.subr.bf16.mxu0 0
    %2573 = vmatpush1.bf16.msra.mxu0 0
    %2574 = vmatprep.mubr.bf16.mxu0 0
    %2575 = vmatmul.mubr.bf16.gmra.mrb[0].mxu0 %v2450
    %v2576 = vpop.f32.mrb[0].mxu0
    %v2577 = vadd.f32 %v2455, %v2576
    %v2578 = vpop.f32.mrb[0].mxu0
    %v2579 = vadd.f32 %v2459, %v2578
    %v2580 = vpop.f32.mrb[0].mxu0
    %v2581 = vpop.f32.mrb[0].mxu0
    %2582 = vdwg.mxu0
    %v2583 = vpack.c.bf16 %v2577, %v2577
    %v2584 = vpack.c.bf16 %v2579, %v2579
    %v2586 = vlaneseq
    %v2587 = vshrl.u32 %v2586, 7
    %v2588 = vsub.s32 0, %v2587
    %v2589 = vrot.slane %v2449, %v2588
    %v2590 = vlaneseq
    %v2591 = vshrl.u32 %v2590, 7
    %v2592 = vsub.s32 1, %v2591
    %v2593 = vrot.slane %v2449, %v2592
    %v2628 = vunpack.c.l.b16 %v2416
    %v2629 = vunpack.c.h.b16 %v2416
    %v2630 = vunpack.c.l.b16 %v2417
    %v2631 = vunpack.c.h.b16 %v2417
    %v2632 = vunpack.c.l.b16 %v2418
    %v2633 = vunpack.c.h.b16 %v2418
    %v2634 = vunpack.c.l.b16 %v2419
    %v2635 = vunpack.c.h.b16 %v2419
    %v2636 = vunpack.c.l.b16 %v2420
    %v2637 = vunpack.c.h.b16 %v2420
    %v2638 = vunpack.c.l.b16 %v2421
    %v2639 = vunpack.c.h.b16 %v2421
    %v2640 = vunpack.c.l.b16 %v2422
    %v2641 = vunpack.c.h.b16 %v2422
    %v2642 = vunpack.c.l.b16 %v2423
    %v2643 = vunpack.c.h.b16 %v2423
    %v2644 = vunpack.c.l.b16 %v2424
    %v2645 = vunpack.c.h.b16 %v2424
    %v2646 = vunpack.c.l.b16 %v2425
    %v2647 = vunpack.c.h.b16 %v2425
    %v2648 = vunpack.c.l.b16 %v2426
    %v2649 = vunpack.c.h.b16 %v2426
    %v2650 = vunpack.c.l.b16 %v2427
    %v2651 = vunpack.c.h.b16 %v2427
    %v2652 = vunpack.c.l.b16 %v2428
    %v2653 = vunpack.c.h.b16 %v2428
    %v2654 = vunpack.c.l.b16 %v2429
    %v2655 = vunpack.c.h.b16 %v2429
    %v2656 = vunpack.c.l.b16 %v2430
    %v2657 = vunpack.c.h.b16 %v2430
    %v2658 = vunpack.c.l.b16 %v2431
    %v2659 = vunpack.c.h.b16 %v2431
    %v2660 = vunpack.c.l.b16 %v2432
    %v2661 = vunpack.c.h.b16 %v2432
    %v2662 = vunpack.c.l.b16 %v2433
    %v2663 = vunpack.c.h.b16 %v2433
    %v2664 = vunpack.c.l.b16 %v2434
    %v2665 = vunpack.c.h.b16 %v2434
    %v2666 = vunpack.c.l.b16 %v2435
    %v2667 = vunpack.c.h.b16 %v2435
    %v2668 = vunpack.c.l.b16 %v2436
    %v2669 = vunpack.c.h.b16 %v2436
    %v2670 = vunpack.c.l.b16 %v2437
    %v2671 = vunpack.c.h.b16 %v2437
    %v2672 = vunpack.c.l.b16 %v2438
    %v2673 = vunpack.c.h.b16 %v2438
    %v2674 = vunpack.c.l.b16 %v2439
    %v2675 = vunpack.c.h.b16 %v2439
    %v2676 = vunpack.c.l.b16 %v2440
    %v2677 = vunpack.c.h.b16 %v2440
    %v2678 = vunpack.c.l.b16 %v2441
    %v2679 = vunpack.c.h.b16 %v2441
    %v2680 = vunpack.c.l.b16 %v2442
    %v2681 = vunpack.c.h.b16 %v2442
    %v2682 = vunpack.c.l.b16 %v2443
    %v2683 = vunpack.c.h.b16 %v2443
    %v2684 = vunpack.c.l.b16 %v2444
    %v2685 = vunpack.c.h.b16 %v2444
    %v2686 = vunpack.c.l.b16 %v2445
    %v2687 = vunpack.c.h.b16 %v2445
    %v2688 = vunpack.c.l.b16 %v2446
    %v2689 = vunpack.c.h.b16 %v2446
    %v2690 = vunpack.c.l.b16 %v2447
    %v2691 = vunpack.c.h.b16 %v2447
    %v2692 = vpack.c.b16 %v2630, %v2628
    %v2693 = vpack.c.b16 %v2631, %v2629
    %v2694 = vpack.c.b16 %v2634, %v2632
    %v2695 = vpack.c.b16 %v2635, %v2633
    %v2696 = vpack.c.b16 %v2638, %v2636
    %v2697 = vpack.c.b16 %v2639, %v2637
    %v2698 = vpack.c.b16 %v2642, %v2640
    %v2699 = vpack.c.b16 %v2643, %v2641
    %v2700 = vpack.c.b16 %v2646, %v2644
    %v2701 = vpack.c.b16 %v2647, %v2645
    %v2702 = vpack.c.b16 %v2650, %v2648
    %v2703 = vpack.c.b16 %v2651, %v2649
    %v2704 = vpack.c.b16 %v2654, %v2652
    %v2705 = vpack.c.b16 %v2655, %v2653
    %v2706 = vpack.c.b16 %v2658, %v2656
    %v2707 = vpack.c.b16 %v2659, %v2657
    %v2708 = vpack.c.b16 %v2662, %v2660
    %v2709 = vpack.c.b16 %v2663, %v2661
    %v2710 = vpack.c.b16 %v2666, %v2664
    %v2711 = vpack.c.b16 %v2667, %v2665
    %v2712 = vpack.c.b16 %v2670, %v2668
    %v2713 = vpack.c.b16 %v2671, %v2669
    %v2714 = vpack.c.b16 %v2674, %v2672
    %v2715 = vpack.c.b16 %v2675, %v2673
    %v2716 = vpack.c.b16 %v2678, %v2676
    %v2717 = vpack.c.b16 %v2679, %v2677
    %v2718 = vpack.c.b16 %v2682, %v2680
    %v2719 = vpack.c.b16 %v2683, %v2681
    %v2720 = vpack.c.b16 %v2686, %v2684
    %v2721 = vpack.c.b16 %v2687, %v2685
    %v2722 = vpack.c.b16 %v2690, %v2688
    %v2723 = vpack.c.b16 %v2691, %v2689
    %2756 = vmatprep.subr.bf16.mxu0 %v2693
    %2757 = vmatpush1.bf16.msra.mxu0 %v2692
    %2758 = vmatprep.subr.bf16.mxu0 %v2695
    %2759 = vmatpush1.bf16.msra.mxu0 %v2694
    %2760 = vmatprep.subr.bf16.mxu0 %v2697
    %2761 = vmatpush1.bf16.msra.mxu0 %v2696
    %2762 = vmatprep.subr.bf16.mxu0 %v2699
    %2763 = vmatpush1.bf16.msra.mxu0 %v2698
    %2764 = vmatprep.subr.bf16.mxu0 %v2701
    %2765 = vmatpush1.bf16.msra.mxu0 %v2700
    %2766 = vmatprep.subr.bf16.mxu0 %v2703
    %2767 = vmatpush1.bf16.msra.mxu0 %v2702
    %2768 = vmatprep.subr.bf16.mxu0 %v2705
    %2769 = vmatpush1.bf16.msra.mxu0 %v2704
    %2770 = vmatprep.subr.bf16.mxu0 %v2707
    %2771 = vmatpush1.bf16.msra.mxu0 %v2706
    %2772 = vmatprep.subr.bf16.mxu0 %v2709
    %2773 = vmatpush1.bf16.msra.mxu0 %v2708
    %2774 = vmatprep.subr.bf16.mxu0 %v2711
    %2775 = vmatpush1.bf16.msra.mxu0 %v2710
    %2776 = vmatprep.subr.bf16.mxu0 %v2713
    %2777 = vmatpush1.bf16.msra.mxu0 %v2712
    %2778 = vmatprep.subr.bf16.mxu0 %v2715
    %2779 = vmatpush1.bf16.msra.mxu0 %v2714
    %2780 = vmatprep.subr.bf16.mxu0 %v2717
    %2781 = vmatpush1.bf16.msra.mxu0 %v2716
    %2782 = vmatprep.subr.bf16.mxu0 %v2719
    %2783 = vmatpush1.bf16.msra.mxu0 %v2718
    %2784 = vmatprep.subr.bf16.mxu0 %v2721
    %2785 = vmatpush1.bf16.msra.mxu0 %v2720
    %2786 = vmatprep.subr.bf16.mxu0 %v2723
    %2787 = vmatpush1.bf16.msra.mxu0 %v2722
    %2788 = vmatprep.mubr.bf16.mxu0 %v2584
    %2789 = vmatmul.mubr.bf16.gmra.mrb[0].mxu0 %v2583
    %v2790 = vpop.f32.mrb[0].mxu0
    %v2791 = vadd.f32 %v2589, %v2790
    %v2792 = vpop.f32.mrb[0].mxu0
    %v2793 = vadd.f32 %v2593, %v2792
    %v2794 = vpop.f32.mrb[0].mxu0
    %v2795 = vpop.f32.mrb[0].mxu0
    %2796 = vdwg.mxu0
    %v2797 = vxor.u32 %v2791, 2147483648
    %v2798 = vxor.u32 %v2793, 2147483648
    %v2799 = vmul.f32 %v2797, 1.442695
    %v2800 = vpow.pop %v2799
    %v2801 = vmul.f32 %v2798, 1.442695
    %v2802 = vpow.pop %v2801
    %v2803 = vadd.f32 %v2800, 1.0
    %v2804 = vadd.f32 %v2802, 1.0
    %v2805 = vrcp.pop %v2803
    %v2806 = vmul.f32 1.0, %v2805
    %v2807 = vrcp.pop %v2804
    %v2808 = vmul.f32 1.0, %v2807
    %v2809 = vmul.f32 %v2577, %v2806
    %v2810 = vmul.f32 %v2579, %v2808
    %s2811 = scalar_lea.vmem %s3, 35
    %v2812 = vld [vmem:[%s2811] ss:$8 sm:$0x3]
    %s2813 = scalar_lea.vmem %s3, 36
    %v2814 = vld [vmem:[%s2813] ss:$8 sm:$0x3]
    %v2815 = vadd.f32 %v2809, %v2810
    %2816 = vadd.xlane.f32.xlu0 %v2815
    %v2817 = vpop.xlane.xlu0 %2816
    %v2818 = vmul.f32 %v2817, %v546
    %v2819 = vsub.f32 %v2809, %v2818
    %v2820 = vsub.f32 %v2810, %v2818
    %v2821 = vmul.f32 %v2819, %v2819
    %v2822 = vmul.f32 %v2820, %v2820
    %v2823 = vadd.f32 %v2821, %v2822
    %2824 = vadd.xlane.f32.xlu0 %v2823
    %v2825 = vpop.xlane.xlu0 %2824
    %v2826 = vmul.f32 %v2825, %v546
    %v2827 = vadd.f32 %v2826, 1e-06
    %v2828 = vrsqrt.pop %v2827
    %v2829 = vmul.f32 %v2819, %v2828
    %v2830 = vmul.f32 %v2820, %v2828
    %v2832 = vlaneseq
    %v2833 = vshrl.u32 %v2832, 7
    %v2834 = vsub.s32 0, %v2833
    %v2835 = vrot.slane %v2812, %v2834
    %v2836 = vlaneseq
    %v2837 = vshrl.u32 %v2836, 7
    %v2838 = vsub.s32 1, %v2837
    %v2839 = vrot.slane %v2812, %v2838
    %v2842 = vmul.f32 %v2829, %v2835
    %v2843 = vmul.f32 %v2830, %v2839
    %v2845 = vlaneseq
    %v2846 = vshrl.u32 %v2845, 7
    %v2847 = vsub.s32 0, %v2846
    %v2848 = vrot.slane %v2814, %v2847
    %v2849 = vlaneseq
    %v2850 = vshrl.u32 %v2849, 7
    %v2851 = vsub.s32 1, %v2850
    %v2852 = vrot.slane %v2814, %v2851
    %v2855 = vadd.f32 %v2842, %v2848
    %v2856 = vadd.f32 %v2843, %v2852
    %v2857 = vld [vmem:[%s3 + $0x83] ss:$0 sm:$0xff]
    %vm2858 = vcmp.gt.f32.partialorder %v2857, 0.5
    %v2859 = vlaneseq
    %v2860 = vshrl.u32 %v2859, 7
    %v2861 = vadd.s32 %v2860, 8
    %v2862 = vadd.s32 %v2860, 16
    %v2863 = vlaneseq
    %v2864 = vand.u32 %v2863, 127
    %vm2865 = vcmp.ge.s32.totalorder %v2860, 4
    %vm2866 = vcmp.ge.s32.totalorder %v2861, 4
    %vm2867 = vcmp.ge.s32.totalorder %v2862, 4
    %vm2868 = vcmp.lt.s32.totalorder %v2860, 8
    %vm2869 = vcmp.lt.s32.totalorder %v2861, 8
    %vm2870 = vcmp.lt.s32.totalorder %v2862, 8
    %vm2871 = vmand %vm2865, %vm2868
    %vm2872 = vmand %vm2866, %vm2869
    %vm2873 = vmand %vm2867, %vm2870
    %v2874 = vsel %vm2871, 1, 0
    %v2875 = vsel %vm2872, 1, 0
    %v2876 = vsel %vm2873, 1, 0
    %vm2877 = vcmp.ge.s32.totalorder %v2860, 8
    %vm2878 = vcmp.ge.s32.totalorder %v2861, 8
    %vm2879 = vcmp.ge.s32.totalorder %v2862, 8
    %vm2880 = vcmp.lt.s32.totalorder %v2860, 12
    %vm2881 = vcmp.lt.s32.totalorder %v2861, 12
    %vm2882 = vcmp.lt.s32.totalorder %v2862, 12
    %vm2883 = vmand %vm2877, %vm2880
    %vm2884 = vmand %vm2878, %vm2881
    %vm2885 = vmand %vm2879, %vm2882
    %v2886 = vsel %vm2883, 0, %v2874
    %v2887 = vsel %vm2884, 0, %v2875
    %v2888 = vsel %vm2885, 0, %v2876
    %vm2889 = vcmp.ge.s32.totalorder %v2860, 12
    %vm2890 = vcmp.ge.s32.totalorder %v2861, 12
    %vm2891 = vcmp.ge.s32.totalorder %v2862, 12
    %vm2892 = vcmp.lt.s32.totalorder %v2860, 16
    %vm2893 = vcmp.lt.s32.totalorder %v2861, 16
    %vm2894 = vcmp.lt.s32.totalorder %v2862, 16
    %vm2895 = vmand %vm2889, %vm2892
    %vm2896 = vmand %vm2890, %vm2893
    %vm2897 = vmand %vm2891, %vm2894
    %v2898 = vsel %vm2895, 1, %v2886
    %v2899 = vsel %vm2896, 1, %v2887
    %v2900 = vsel %vm2897, 1, %v2888
    %vm2901 = vcmp.ge.s32.totalorder %v2860, 16
    %vm2902 = vcmp.ge.s32.totalorder %v2861, 16
    %vm2903 = vcmp.ge.s32.totalorder %v2862, 16
    %vm2904 = vcmp.lt.s32.totalorder %v2860, 20
    %vm2905 = vcmp.lt.s32.totalorder %v2861, 20
    %vm2906 = vcmp.lt.s32.totalorder %v2862, 20
    %vm2907 = vmand %vm2901, %vm2904
    %vm2908 = vmand %vm2902, %vm2905
    %vm2909 = vmand %vm2903, %vm2906
    %v2910 = vsel %vm2907, 0, %v2898
    %v2911 = vsel %vm2908, 0, %v2899
    %v2912 = vsel %vm2909, 0, %v2900
    %vm2913 = vcmp.ge.s32.totalorder %v2860, 20
    %vm2914 = vcmp.ge.s32.totalorder %v2861, 20
    %vm2915 = vcmp.ge.s32.totalorder %v2862, 20
    %vm2916 = vcmp.lt.s32.totalorder %v2860, 24
    %vm2917 = vcmp.lt.s32.totalorder %v2861, 24
    %vm2918 = vcmp.lt.s32.totalorder %v2862, 24
    %vm2919 = vmand %vm2913, %vm2916
    %vm2920 = vmand %vm2914, %vm2917
    %vm2921 = vmand %vm2915, %vm2918
    %v2922 = vsel %vm2919, 1, %v2910
    %v2923 = vsel %vm2920, 1, %v2911
    %v2924 = vsel %vm2921, 1, %v2912
    %vm2925 = vcmp.ge.s32.totalorder %v2864, 4
    %vm2926 = vcmp.lt.s32.totalorder %v2864, 8
    %vm2927 = vmand %vm2925, %vm2926
    %v2928 = vsel %vm2927, 1, 0
    %vm2929 = vcmp.ge.s32.totalorder %v2864, 8
    %vm2930 = vcmp.lt.s32.totalorder %v2864, 12
    %vm2931 = vmand %vm2929, %vm2930
    %v2932 = vsel %vm2931, 0, %v2928
    %vm2933 = vcmp.ge.s32.totalorder %v2864, 12
    %vm2934 = vcmp.lt.s32.totalorder %v2864, 16
    %vm2935 = vmand %vm2933, %vm2934
    %v2936 = vsel %vm2935, 1, %v2932
    %vm2937 = vcmp.ge.s32.totalorder %v2864, 16
    %vm2938 = vcmp.lt.s32.totalorder %v2864, 20
    %vm2939 = vmand %vm2937, %vm2938
    %v2940 = vsel %vm2939, 0, %v2936
    %vm2941 = vcmp.ge.s32.totalorder %v2864, 20
    %vm2942 = vcmp.lt.s32.totalorder %v2864, 24
    %vm2943 = vmand %vm2941, %vm2942
    %v2944 = vsel %vm2943, 1, %v2940
    %vm2945 = vcmp.eq.s32.totalorder %v2922, %v2944
    %vm2946 = vcmp.eq.s32.totalorder %v2923, %v2944
    %vm2947 = vcmp.eq.s32.totalorder %v2924, %v2944
    %v2948 = vsel %vm2858, 1, 0
    %vm2949 = vcmp.eq.s32.totalorder %v2948, 1
    %vm2950 = vmand %vm2945, %vm2949
    %vm2951 = vmand %vm2946, %vm2949
    %vm2952 = vmand %vm2947, %vm2949
    %v2953 = vsel %vm2950, 1, 0
    %v2954 = vsel %vm2951, 1, 0
    %v2955 = vsel %vm2952, 1, 0
    %v2956 = vcvt.s32.f32 %v2953
    %v2957 = vcvt.s32.f32 %v2954
    %v2958 = vcvt.s32.f32 %v2955
    %v2959 = vsel %vm2950, 0.0, -1e+09
    %v2960 = vsel %vm2951, 0.0, -1e+09
    %v2961 = vsel %vm2952, 0.0, -1e+09
    %v2962 = vsel %vm2931, 1, 0
    %v2963 = vsel %vm2935, 1, %v2962
    %v2964 = vsel %vm2939, 2, %v2963
    %v2965 = vsel %vm2943, 2, %v2964
    %vm2966 = vcmp.eq.s32.totalorder %v2860, 1
    %v2967 = vsel %vm2966, 1, 0
    %vm2968 = vcmp.eq.s32.totalorder %v2860, 2
    %v2969 = vsel %vm2968, 1, 0
    %v2970 = vsel %vm2968, 0, %v2967
    %vm2971 = vcmp.eq.s32.totalorder %v2860, 3
    %v2972 = vsel %vm2971, 1, %v2969
    %v2973 = vsel %vm2971, 1, %v2970
    %vm2974 = vcmp.eq.s32.totalorder %v2860, 4
    %v2975 = vsel %vm2974, 2, %v2972
    %v2976 = vsel %vm2974, 0, %v2973
    %vm2977 = vcmp.eq.s32.totalorder %v2860, 5
    %v2978 = vsel %vm2977, 2, %v2975
    %v2979 = vsel %vm2977, 1, %v2976
    %vm2980 = vcmp.eq.s32.totalorder %v2978, %v2965
    %vm2981 = vcmp.eq.s32.totalorder %v2979, %v2944
    %vm2982 = vmand %vm2980, %vm2981
    %vm2983 = vmand %vm2982, %vm2949
    %v2984 = vsel %vm2983, 1, 0
    %v2985 = vcvt.s32.f32 %v2984
    %vm2986 = vcmask 193536
    %v2987 = vsel %vm2986, %v2985, 0.0
    %2988 = vadd.xlane.f32.xlu0 %v2987
    %v2989 = vpop.xlane.xlu0 %2988
    %v2990 = vmax.f32 %v2989, 1.0
    %v2991 = vrcp.pop %v2990
    %v2992 = vmul.f32 %v2985, %v2991
    %s2993 = scalar_lea.vmem %s3, 37
    %v2994 = vld [vmem:[%s2993] ss:$8 sm:$0x3]
    %s2995 = scalar_lea.vmem %s3, 38
    %v2996 = vld [vmem:[%s2995] ss:$8 sm:$0x3]
    %v2997 = vadd.f32 %v584, %v585
    %2998 = vadd.xlane.f32.xlu0 %v2997
    %v2999 = vpop.xlane.xlu0 %2998
    %v3000 = vadd.f32 %v1142, %v1143
    %3001 = vadd.xlane.f32.xlu0 %v3000
    %v3002 = vpop.xlane.xlu0 %3001
    %v3003 = vadd.f32 %v2855, %v2856
    %3004 = vadd.xlane.f32.xlu0 %v3003
    %v3005 = vpop.xlane.xlu0 %3004
    %v3006 = vmul.f32 %v2999, %v546
    %v3007 = vmul.f32 %v3002, %v546
    %v3008 = vmul.f32 %v3005, %v546
    %v3009 = vsub.f32 %v584, %v3006
    %v3010 = vsub.f32 %v585, %v3006
    %v3011 = vsub.f32 %v1142, %v3007
    %v3012 = vsub.f32 %v1143, %v3007
    %v3013 = vsub.f32 %v2855, %v3008
    %v3014 = vsub.f32 %v2856, %v3008
    %v3015 = vmul.f32 %v3009, %v3009
    %v3016 = vmul.f32 %v3010, %v3010
    %v3017 = vmul.f32 %v3011, %v3011
    %v3018 = vmul.f32 %v3012, %v3012
    %v3019 = vmul.f32 %v3013, %v3013
    %v3020 = vmul.f32 %v3014, %v3014
    %v3021 = vadd.f32 %v3015, %v3016
    %3022 = vadd.xlane.f32.xlu0 %v3021
    %v3023 = vpop.xlane.xlu0 %3022
    %v3024 = vadd.f32 %v3017, %v3018
    %3025 = vadd.xlane.f32.xlu0 %v3024
    %v3026 = vpop.xlane.xlu0 %3025
    %v3027 = vadd.f32 %v3019, %v3020
    %3028 = vadd.xlane.f32.xlu0 %v3027
    %v3029 = vpop.xlane.xlu0 %3028
    %v3030 = vmul.f32 %v3023, %v546
    %v3031 = vmul.f32 %v3026, %v546
    %v3032 = vmul.f32 %v3029, %v546
    %v3033 = vadd.f32 %v3030, 1e-06
    %v3034 = vadd.f32 %v3031, 1e-06
    %v3035 = vadd.f32 %v3032, 1e-06
    %v3036 = vrsqrt.pop %v3033
    %v3037 = vrsqrt.pop %v3034
    %v3038 = vrsqrt.pop %v3035
    %v3039 = vmul.f32 %v3009, %v3036
    %v3040 = vmul.f32 %v3010, %v3036
    %v3041 = vmul.f32 %v3011, %v3037
    %v3042 = vmul.f32 %v3012, %v3037
    %v3043 = vmul.f32 %v3013, %v3038
    %v3044 = vmul.f32 %v3014, %v3038
    %v3046 = vlaneseq
    %v3047 = vshrl.u32 %v3046, 7
    %v3048 = vsub.s32 0, %v3047
    %v3049 = vrot.slane %v2994, %v3048
    %v3050 = vlaneseq
    %v3051 = vshrl.u32 %v3050, 7
    %v3052 = vsub.s32 1, %v3051
    %v3053 = vrot.slane %v2994, %v3052
    %v3056 = vmul.f32 %v3039, %v3049
    %v3057 = vmul.f32 %v3040, %v3053
    %v3058 = vmul.f32 %v3041, %v3049
    %v3059 = vmul.f32 %v3042, %v3053
    %v3060 = vmul.f32 %v3043, %v3049
    %v3061 = vmul.f32 %v3044, %v3053
    %v3063 = vlaneseq
    %v3064 = vshrl.u32 %v3063, 7
    %v3065 = vsub.s32 0, %v3064
    %v3066 = vrot.slane %v2996, %v3065
    %v3067 = vlaneseq
    %v3068 = vshrl.u32 %v3067, 7
    %v3069 = vsub.s32 1, %v3068
    %v3070 = vrot.slane %v2996, %v3069
    %v3073 = vadd.f32 %v3056, %v3066
    %v3074 = vadd.f32 %v3057, %v3070
    %v3075 = vadd.f32 %v3058, %v3066
    %v3076 = vadd.f32 %v3059, %v3070
    %v3077 = vadd.f32 %v3060, %v3066
    %v3078 = vadd.f32 %v3061, %v3070
    %v3079 = vpack.c.bf16 %v3075, %v3073
    %v3080 = vpack.c.bf16 %v3076, %v3074
    %v3081 = vpack.c.bf16 %v3077, %v3077
    %v3082 = vpack.c.bf16 %v3078, %v3078
    %v3083 = vld [vmem:[%s4 + $0x580] sm:$0xff]
    %v3084 = vld [vmem:[%s4 + $0x588] sm:$0xff]
    %v3085 = vld [vmem:[%s4 + $0x590] sm:$0xff]
    %v3086 = vld [vmem:[%s4 + $0x598] sm:$0xff]
    %v3087 = vld [vmem:[%s4 + $0x5a0] sm:$0xff]
    %v3088 = vld [vmem:[%s4 + $0x5a8] sm:$0xff]
    %v3089 = vld [vmem:[%s4 + $0x5b0] sm:$0xff]
    %v3090 = vld [vmem:[%s4 + $0x5b8] sm:$0xff]
    %v3091 = vld [vmem:[%s4 + $0x5c0] sm:$0xff]
    %v3092 = vld [vmem:[%s4 + $0x5c8] sm:$0xff]
    %v3093 = vld [vmem:[%s4 + $0x5d0] sm:$0xff]
    %v3094 = vld [vmem:[%s4 + $0x5d8] sm:$0xff]
    %v3095 = vld [vmem:[%s4 + $0x5e0] sm:$0xff]
    %v3096 = vld [vmem:[%s4 + $0x5e8] sm:$0xff]
    %v3097 = vld [vmem:[%s4 + $0x5f0] sm:$0xff]
    %v3098 = vld [vmem:[%s4 + $0x5f8] sm:$0xff]
    %v3099 = vld [vmem:[%s4 + $0x600] sm:$0xff]
    %v3100 = vld [vmem:[%s4 + $0x608] sm:$0xff]
    %v3101 = vld [vmem:[%s4 + $0x610] sm:$0xff]
    %v3102 = vld [vmem:[%s4 + $0x618] sm:$0xff]
    %v3103 = vld [vmem:[%s4 + $0x620] sm:$0xff]
    %v3104 = vld [vmem:[%s4 + $0x628] sm:$0xff]
    %v3105 = vld [vmem:[%s4 + $0x630] sm:$0xff]
    %v3106 = vld [vmem:[%s4 + $0x638] sm:$0xff]
    %v3107 = vld [vmem:[%s4 + $0x640] sm:$0xff]
    %v3108 = vld [vmem:[%s4 + $0x648] sm:$0xff]
    %v3109 = vld [vmem:[%s4 + $0x650] sm:$0xff]
    %v3110 = vld [vmem:[%s4 + $0x658] sm:$0xff]
    %v3111 = vld [vmem:[%s4 + $0x660] sm:$0xff]
    %v3112 = vld [vmem:[%s4 + $0x668] sm:$0xff]
    %v3113 = vld [vmem:[%s4 + $0x670] sm:$0xff]
    %v3114 = vld [vmem:[%s4 + $0x678] sm:$0xff]
    %s3115 = scalar_lea.vmem %s3, 39
    %v3116 = vld [vmem:[%s3115] ss:$8 sm:$0x3]
    %v3118 = vlaneseq
    %v3119 = vshrl.u32 %v3118, 7
    %v3120 = vsub.s32 0, %v3119
    %v3121 = vrot.slane %v3116, %v3120
    %v3122 = vlaneseq
    %v3123 = vshrl.u32 %v3122, 7
    %v3124 = vsub.s32 1, %v3123
    %v3125 = vrot.slane %v3116, %v3124
    %v3160 = vunpack.c.l.b16 %v3083
    %v3161 = vunpack.c.h.b16 %v3083
    %v3162 = vunpack.c.l.b16 %v3084
    %v3163 = vunpack.c.h.b16 %v3084
    %v3164 = vunpack.c.l.b16 %v3085
    %v3165 = vunpack.c.h.b16 %v3085
    %v3166 = vunpack.c.l.b16 %v3086
    %v3167 = vunpack.c.h.b16 %v3086
    %v3168 = vunpack.c.l.b16 %v3087
    %v3169 = vunpack.c.h.b16 %v3087
    %v3170 = vunpack.c.l.b16 %v3088
    %v3171 = vunpack.c.h.b16 %v3088
    %v3172 = vunpack.c.l.b16 %v3089
    %v3173 = vunpack.c.h.b16 %v3089
    %v3174 = vunpack.c.l.b16 %v3090
    %v3175 = vunpack.c.h.b16 %v3090
    %v3176 = vunpack.c.l.b16 %v3091
    %v3177 = vunpack.c.h.b16 %v3091
    %v3178 = vunpack.c.l.b16 %v3092
    %v3179 = vunpack.c.h.b16 %v3092
    %v3180 = vunpack.c.l.b16 %v3093
    %v3181 = vunpack.c.h.b16 %v3093
    %v3182 = vunpack.c.l.b16 %v3094
    %v3183 = vunpack.c.h.b16 %v3094
    %v3184 = vunpack.c.l.b16 %v3095
    %v3185 = vunpack.c.h.b16 %v3095
    %v3186 = vunpack.c.l.b16 %v3096
    %v3187 = vunpack.c.h.b16 %v3096
    %v3188 = vunpack.c.l.b16 %v3097
    %v3189 = vunpack.c.h.b16 %v3097
    %v3190 = vunpack.c.l.b16 %v3098
    %v3191 = vunpack.c.h.b16 %v3098
    %v3192 = vunpack.c.l.b16 %v3099
    %v3193 = vunpack.c.h.b16 %v3099
    %v3194 = vunpack.c.l.b16 %v3100
    %v3195 = vunpack.c.h.b16 %v3100
    %v3196 = vunpack.c.l.b16 %v3101
    %v3197 = vunpack.c.h.b16 %v3101
    %v3198 = vunpack.c.l.b16 %v3102
    %v3199 = vunpack.c.h.b16 %v3102
    %v3200 = vunpack.c.l.b16 %v3103
    %v3201 = vunpack.c.h.b16 %v3103
    %v3202 = vunpack.c.l.b16 %v3104
    %v3203 = vunpack.c.h.b16 %v3104
    %v3204 = vunpack.c.l.b16 %v3105
    %v3205 = vunpack.c.h.b16 %v3105
    %v3206 = vunpack.c.l.b16 %v3106
    %v3207 = vunpack.c.h.b16 %v3106
    %v3208 = vunpack.c.l.b16 %v3107
    %v3209 = vunpack.c.h.b16 %v3107
    %v3210 = vunpack.c.l.b16 %v3108
    %v3211 = vunpack.c.h.b16 %v3108
    %v3212 = vunpack.c.l.b16 %v3109
    %v3213 = vunpack.c.h.b16 %v3109
    %v3214 = vunpack.c.l.b16 %v3110
    %v3215 = vunpack.c.h.b16 %v3110
    %v3216 = vunpack.c.l.b16 %v3111
    %v3217 = vunpack.c.h.b16 %v3111
    %v3218 = vunpack.c.l.b16 %v3112
    %v3219 = vunpack.c.h.b16 %v3112
    %v3220 = vunpack.c.l.b16 %v3113
    %v3221 = vunpack.c.h.b16 %v3113
    %v3222 = vunpack.c.l.b16 %v3114
    %v3223 = vunpack.c.h.b16 %v3114
    %v3224 = vpack.c.b16 %v3162, %v3160
    %v3225 = vpack.c.b16 %v3163, %v3161
    %v3226 = vpack.c.b16 %v3166, %v3164
    %v3227 = vpack.c.b16 %v3167, %v3165
    %v3228 = vpack.c.b16 %v3170, %v3168
    %v3229 = vpack.c.b16 %v3171, %v3169
    %v3230 = vpack.c.b16 %v3174, %v3172
    %v3231 = vpack.c.b16 %v3175, %v3173
    %v3232 = vpack.c.b16 %v3178, %v3176
    %v3233 = vpack.c.b16 %v3179, %v3177
    %v3234 = vpack.c.b16 %v3182, %v3180
    %v3235 = vpack.c.b16 %v3183, %v3181
    %v3236 = vpack.c.b16 %v3186, %v3184
    %v3237 = vpack.c.b16 %v3187, %v3185
    %v3238 = vpack.c.b16 %v3190, %v3188
    %v3239 = vpack.c.b16 %v3191, %v3189
    %v3240 = vpack.c.b16 %v3194, %v3192
    %v3241 = vpack.c.b16 %v3195, %v3193
    %v3242 = vpack.c.b16 %v3198, %v3196
    %v3243 = vpack.c.b16 %v3199, %v3197
    %v3244 = vpack.c.b16 %v3202, %v3200
    %v3245 = vpack.c.b16 %v3203, %v3201
    %v3246 = vpack.c.b16 %v3206, %v3204
    %v3247 = vpack.c.b16 %v3207, %v3205
    %v3248 = vpack.c.b16 %v3210, %v3208
    %v3249 = vpack.c.b16 %v3211, %v3209
    %v3250 = vpack.c.b16 %v3214, %v3212
    %v3251 = vpack.c.b16 %v3215, %v3213
    %v3252 = vpack.c.b16 %v3218, %v3216
    %v3253 = vpack.c.b16 %v3219, %v3217
    %v3254 = vpack.c.b16 %v3222, %v3220
    %v3255 = vpack.c.b16 %v3223, %v3221
    %3288 = vmatprep.subr.bf16.mxu0 %v3225
    %3289 = vmatpush1.bf16.msra.mxu0 %v3224
    %3290 = vmatprep.subr.bf16.mxu0 %v3227
    %3291 = vmatpush1.bf16.msra.mxu0 %v3226
    %3292 = vmatprep.subr.bf16.mxu0 %v3229
    %3293 = vmatpush1.bf16.msra.mxu0 %v3228
    %3294 = vmatprep.subr.bf16.mxu0 %v3231
    %3295 = vmatpush1.bf16.msra.mxu0 %v3230
    %3296 = vmatprep.subr.bf16.mxu0 %v3233
    %3297 = vmatpush1.bf16.msra.mxu0 %v3232
    %3298 = vmatprep.subr.bf16.mxu0 %v3235
    %3299 = vmatpush1.bf16.msra.mxu0 %v3234
    %3300 = vmatprep.subr.bf16.mxu0 %v3237
    %3301 = vmatpush1.bf16.msra.mxu0 %v3236
    %3302 = vmatprep.subr.bf16.mxu0 %v3239
    %3303 = vmatpush1.bf16.msra.mxu0 %v3238
    %3304 = vmatprep.subr.bf16.mxu0 %v3241
    %3305 = vmatpush1.bf16.msra.mxu0 %v3240
    %3306 = vmatprep.subr.bf16.mxu0 %v3243
    %3307 = vmatpush1.bf16.msra.mxu0 %v3242
    %3308 = vmatprep.subr.bf16.mxu0 %v3245
    %3309 = vmatpush1.bf16.msra.mxu0 %v3244
    %3310 = vmatprep.subr.bf16.mxu0 %v3247
    %3311 = vmatpush1.bf16.msra.mxu0 %v3246
    %3312 = vmatprep.subr.bf16.mxu0 %v3249
    %3313 = vmatpush1.bf16.msra.mxu0 %v3248
    %3314 = vmatprep.subr.bf16.mxu0 %v3251
    %3315 = vmatpush1.bf16.msra.mxu0 %v3250
    %3316 = vmatprep.subr.bf16.mxu0 %v3253
    %3317 = vmatpush1.bf16.msra.mxu0 %v3252
    %3318 = vmatprep.subr.bf16.mxu0 %v3255
    %3319 = vmatpush1.bf16.msra.mxu0 %v3254
    %3320 = vmatprep.mubr.bf16.mxu0 %v3080
    %3321 = vmatmul.mubr.bf16.gmra.mrb[0].mxu0 %v3079
    %v3322 = vpop.f32.mrb[0].mxu0
    %v3323 = vadd.f32 %v3121, %v3322
    %v3324 = vpop.f32.mrb[0].mxu0
    %v3325 = vadd.f32 %v3125, %v3324
    %v3326 = vpop.f32.mrb[0].mxu0
    %v3327 = vadd.f32 %v3121, %v3326
    %v3328 = vpop.f32.mrb[0].mxu0
    %v3329 = vadd.f32 %v3125, %v3328
    %3330 = vmatprep.mubr.bf16.mxu0 %v3082
    %3331 = vmatmul.mubr.bf16.gmra.mrb[0].mxu0 %v3081
    %v3332 = vpop.f32.mrb[0].mxu0
    %v3333 = vadd.f32 %v3121, %v3332
    %v3334 = vpop.f32.mrb[0].mxu0
    %v3335 = vadd.f32 %v3125, %v3334
    %v3336 = vpop.f32.mrb[0].mxu0
    %v3337 = vpop.f32.mrb[0].mxu0
    %3338 = vdwg.mxu0
    %v3339 = vld [vmem:[%s4 + $0x680] sm:$0xff]
    %v3340 = vld [vmem:[%s4 + $0x688] sm:$0xff]
    %v3341 = vld [vmem:[%s4 + $0x690] sm:$0xff]
    %v3342 = vld [vmem:[%s4 + $0x698] sm:$0xff]
    %v3343 = vld [vmem:[%s4 + $0x6a0] sm:$0xff]
    %v3344 = vld [vmem:[%s4 + $0x6a8] sm:$0xff]
    %v3345 = vld [vmem:[%s4 + $0x6b0] sm:$0xff]
    %v3346 = vld [vmem:[%s4 + $0x6b8] sm:$0xff]
    %v3347 = vld [vmem:[%s4 + $0x6c0] sm:$0xff]
    %v3348 = vld [vmem:[%s4 + $0x6c8] sm:$0xff]
    %v3349 = vld [vmem:[%s4 + $0x6d0] sm:$0xff]
    %v3350 = vld [vmem:[%s4 + $0x6d8] sm:$0xff]
    %v3351 = vld [vmem:[%s4 + $0x6e0] sm:$0xff]
    %v3352 = vld [vmem:[%s4 + $0x6e8] sm:$0xff]
    %v3353 = vld [vmem:[%s4 + $0x6f0] sm:$0xff]
    %v3354 = vld [vmem:[%s4 + $0x6f8] sm:$0xff]
    %v3355 = vld [vmem:[%s4 + $0x700] sm:$0xff]
    %v3356 = vld [vmem:[%s4 + $0x708] sm:$0xff]
    %v3357 = vld [vmem:[%s4 + $0x710] sm:$0xff]
    %v3358 = vld [vmem:[%s4 + $0x718] sm:$0xff]
    %v3359 = vld [vmem:[%s4 + $0x720] sm:$0xff]
    %v3360 = vld [vmem:[%s4 + $0x728] sm:$0xff]
    %v3361 = vld [vmem:[%s4 + $0x730] sm:$0xff]
    %v3362 = vld [vmem:[%s4 + $0x738] sm:$0xff]
    %v3363 = vld [vmem:[%s4 + $0x740] sm:$0xff]
    %v3364 = vld [vmem:[%s4 + $0x748] sm:$0xff]
    %v3365 = vld [vmem:[%s4 + $0x750] sm:$0xff]
    %v3366 = vld [vmem:[%s4 + $0x758] sm:$0xff]
    %v3367 = vld [vmem:[%s4 + $0x760] sm:$0xff]
    %v3368 = vld [vmem:[%s4 + $0x768] sm:$0xff]
    %v3369 = vld [vmem:[%s4 + $0x770] sm:$0xff]
    %v3370 = vld [vmem:[%s4 + $0x778] sm:$0xff]
    %s3371 = scalar_lea.vmem %s3, 64
    %v3372 = vld [vmem:[%s3371] ss:$8 sm:$0x3]
    %v3374 = vlaneseq
    %v3375 = vshrl.u32 %v3374, 7
    %v3376 = vsub.s32 0, %v3375
    %v3377 = vrot.slane %v3372, %v3376
    %v3378 = vlaneseq
    %v3379 = vshrl.u32 %v3378, 7
    %v3380 = vsub.s32 1, %v3379
    %v3381 = vrot.slane %v3372, %v3380
    %v3416 = vunpack.c.l.b16 %v3339
    %v3417 = vunpack.c.h.b16 %v3339
    %v3418 = vunpack.c.l.b16 %v3340
    %v3419 = vunpack.c.h.b16 %v3340
    %v3420 = vunpack.c.l.b16 %v3341
    %v3421 = vunpack.c.h.b16 %v3341
    %v3422 = vunpack.c.l.b16 %v3342
    %v3423 = vunpack.c.h.b16 %v3342
    %v3424 = vunpack.c.l.b16 %v3343
    %v3425 = vunpack.c.h.b16 %v3343
    %v3426 = vunpack.c.l.b16 %v3344
    %v3427 = vunpack.c.h.b16 %v3344
    %v3428 = vunpack.c.l.b16 %v3345
    %v3429 = vunpack.c.h.b16 %v3345
    %v3430 = vunpack.c.l.b16 %v3346
    %v3431 = vunpack.c.h.b16 %v3346
    %v3432 = vunpack.c.l.b16 %v3347
    %v3433 = vunpack.c.h.b16 %v3347
    %v3434 = vunpack.c.l.b16 %v3348
    %v3435 = vunpack.c.h.b16 %v3348
    %v3436 = vunpack.c.l.b16 %v3349
    %v3437 = vunpack.c.h.b16 %v3349
    %v3438 = vunpack.c.l.b16 %v3350
    %v3439 = vunpack.c.h.b16 %v3350
    %v3440 = vunpack.c.l.b16 %v3351
    %v3441 = vunpack.c.h.b16 %v3351
    %v3442 = vunpack.c.l.b16 %v3352
    %v3443 = vunpack.c.h.b16 %v3352
    %v3444 = vunpack.c.l.b16 %v3353
    %v3445 = vunpack.c.h.b16 %v3353
    %v3446 = vunpack.c.l.b16 %v3354
    %v3447 = vunpack.c.h.b16 %v3354
    %v3448 = vunpack.c.l.b16 %v3355
    %v3449 = vunpack.c.h.b16 %v3355
    %v3450 = vunpack.c.l.b16 %v3356
    %v3451 = vunpack.c.h.b16 %v3356
    %v3452 = vunpack.c.l.b16 %v3357
    %v3453 = vunpack.c.h.b16 %v3357
    %v3454 = vunpack.c.l.b16 %v3358
    %v3455 = vunpack.c.h.b16 %v3358
    %v3456 = vunpack.c.l.b16 %v3359
    %v3457 = vunpack.c.h.b16 %v3359
    %v3458 = vunpack.c.l.b16 %v3360
    %v3459 = vunpack.c.h.b16 %v3360
    %v3460 = vunpack.c.l.b16 %v3361
    %v3461 = vunpack.c.h.b16 %v3361
    %v3462 = vunpack.c.l.b16 %v3362
    %v3463 = vunpack.c.h.b16 %v3362
    %v3464 = vunpack.c.l.b16 %v3363
    %v3465 = vunpack.c.h.b16 %v3363
    %v3466 = vunpack.c.l.b16 %v3364
    %v3467 = vunpack.c.h.b16 %v3364
    %v3468 = vunpack.c.l.b16 %v3365
    %v3469 = vunpack.c.h.b16 %v3365
    %v3470 = vunpack.c.l.b16 %v3366
    %v3471 = vunpack.c.h.b16 %v3366
    %v3472 = vunpack.c.l.b16 %v3367
    %v3473 = vunpack.c.h.b16 %v3367
    %v3474 = vunpack.c.l.b16 %v3368
    %v3475 = vunpack.c.h.b16 %v3368
    %v3476 = vunpack.c.l.b16 %v3369
    %v3477 = vunpack.c.h.b16 %v3369
    %v3478 = vunpack.c.l.b16 %v3370
    %v3479 = vunpack.c.h.b16 %v3370
    %v3480 = vpack.c.b16 %v3418, %v3416
    %v3481 = vpack.c.b16 %v3419, %v3417
    %v3482 = vpack.c.b16 %v3422, %v3420
    %v3483 = vpack.c.b16 %v3423, %v3421
    %v3484 = vpack.c.b16 %v3426, %v3424
    %v3485 = vpack.c.b16 %v3427, %v3425
    %v3486 = vpack.c.b16 %v3430, %v3428
    %v3487 = vpack.c.b16 %v3431, %v3429
    %v3488 = vpack.c.b16 %v3434, %v3432
    %v3489 = vpack.c.b16 %v3435, %v3433
    %v3490 = vpack.c.b16 %v3438, %v3436
    %v3491 = vpack.c.b16 %v3439, %v3437
    %v3492 = vpack.c.b16 %v3442, %v3440
    %v3493 = vpack.c.b16 %v3443, %v3441
    %v3494 = vpack.c.b16 %v3446, %v3444
    %v3495 = vpack.c.b16 %v3447, %v3445
    %v3496 = vpack.c.b16 %v3450, %v3448
    %v3497 = vpack.c.b16 %v3451, %v3449
    %v3498 = vpack.c.b16 %v3454, %v3452
    %v3499 = vpack.c.b16 %v3455, %v3453
    %v3500 = vpack.c.b16 %v3458, %v3456
    %v3501 = vpack.c.b16 %v3459, %v3457
    %v3502 = vpack.c.b16 %v3462, %v3460
    %v3503 = vpack.c.b16 %v3463, %v3461
    %v3504 = vpack.c.b16 %v3466, %v3464
    %v3505 = vpack.c.b16 %v3467, %v3465
    %v3506 = vpack.c.b16 %v3470, %v3468
    %v3507 = vpack.c.b16 %v3471, %v3469
    %v3508 = vpack.c.b16 %v3474, %v3472
    %v3509 = vpack.c.b16 %v3475, %v3473
    %v3510 = vpack.c.b16 %v3478, %v3476
    %v3511 = vpack.c.b16 %v3479, %v3477
    %3544 = vmatprep.subr.bf16.mxu0 %v3481
    %3545 = vmatpush1.bf16.msra.mxu0 %v3480
    %3546 = vmatprep.subr.bf16.mxu0 %v3483
    %3547 = vmatpush1.bf16.msra.mxu0 %v3482
    %3548 = vmatprep.subr.bf16.mxu0 %v3485
    %3549 = vmatpush1.bf16.msra.mxu0 %v3484
    %3550 = vmatprep.subr.bf16.mxu0 %v3487
    %3551 = vmatpush1.bf16.msra.mxu0 %v3486
    %3552 = vmatprep.subr.bf16.mxu0 %v3489
    %3553 = vmatpush1.bf16.msra.mxu0 %v3488
    %3554 = vmatprep.subr.bf16.mxu0 %v3491
    %3555 = vmatpush1.bf16.msra.mxu0 %v3490
    %3556 = vmatprep.subr.bf16.mxu0 %v3493
    %3557 = vmatpush1.bf16.msra.mxu0 %v3492
    %3558 = vmatprep.subr.bf16.mxu0 %v3495
    %3559 = vmatpush1.bf16.msra.mxu0 %v3494
    %3560 = vmatprep.subr.bf16.mxu0 %v3497
    %3561 = vmatpush1.bf16.msra.mxu0 %v3496
    %3562 = vmatprep.subr.bf16.mxu0 %v3499
    %3563 = vmatpush1.bf16.msra.mxu0 %v3498
    %3564 = vmatprep.subr.bf16.mxu0 %v3501
    %3565 = vmatpush1.bf16.msra.mxu0 %v3500
    %3566 = vmatprep.subr.bf16.mxu0 %v3503
    %3567 = vmatpush1.bf16.msra.mxu0 %v3502
    %3568 = vmatprep.subr.bf16.mxu0 %v3505
    %3569 = vmatpush1.bf16.msra.mxu0 %v3504
    %3570 = vmatprep.subr.bf16.mxu0 %v3507
    %3571 = vmatpush1.bf16.msra.mxu0 %v3506
    %3572 = vmatprep.subr.bf16.mxu0 %v3509
    %3573 = vmatpush1.bf16.msra.mxu0 %v3508
    %3574 = vmatprep.subr.bf16.mxu0 %v3511
    %3575 = vmatpush1.bf16.msra.mxu0 %v3510
    %3576 = vmatprep.mubr.bf16.mxu0 %v3080
    %3577 = vmatmul.mubr.bf16.gmra.mrb[0].mxu0 %v3079
    %v3578 = vpop.f32.mrb[0].mxu0
    %v3579 = vadd.f32 %v3377, %v3578
    %v3580 = vpop.f32.mrb[0].mxu0
    %v3581 = vadd.f32 %v3381, %v3580
    %v3582 = vpop.f32.mrb[0].mxu0
    %v3583 = vadd.f32 %v3377, %v3582
    %v3584 = vpop.f32.mrb[0].mxu0
    %v3585 = vadd.f32 %v3381, %v3584
    %3586 = vmatprep.mubr.bf16.mxu0 %v3082
    %3587 = vmatmul.mubr.bf16.gmra.mrb[0].mxu0 %v3081
    %v3588 = vpop.f32.mrb[0].mxu0
    %v3589 = vadd.f32 %v3377, %v3588
    %v3590 = vpop.f32.mrb[0].mxu0
    %v3591 = vadd.f32 %v3381, %v3590
    %v3592 = vpop.f32.mrb[0].mxu0
    %v3593 = vpop.f32.mrb[0].mxu0
    %3594 = vdwg.mxu0
    %v3595 = vld [vmem:[%s4 + $0x780] sm:$0xff]
    %v3596 = vld [vmem:[%s4 + $0x788] sm:$0xff]
    %v3597 = vld [vmem:[%s4 + $0x790] sm:$0xff]
    %v3598 = vld [vmem:[%s4 + $0x798] sm:$0xff]
    %v3599 = vld [vmem:[%s4 + $0x7a0] sm:$0xff]
    %v3600 = vld [vmem:[%s4 + $0x7a8] sm:$0xff]
    %v3601 = vld [vmem:[%s4 + $0x7b0] sm:$0xff]
    %v3602 = vld [vmem:[%s4 + $0x7b8] sm:$0xff]
    %v3603 = vld [vmem:[%s4 + $0x7c0] sm:$0xff]
    %v3604 = vld [vmem:[%s4 + $0x7c8] sm:$0xff]
    %v3605 = vld [vmem:[%s4 + $0x7d0] sm:$0xff]
    %v3606 = vld [vmem:[%s4 + $0x7d8] sm:$0xff]
    %v3607 = vld [vmem:[%s4 + $0x7e0] sm:$0xff]
    %v3608 = vld [vmem:[%s4 + $0x7e8] sm:$0xff]
    %v3609 = vld [vmem:[%s4 + $0x7f0] sm:$0xff]
    %v3610 = vld [vmem:[%s4 + $0x7f8] sm:$0xff]
    %v3611 = vld [vmem:[%s4 + $0x800] sm:$0xff]
    %v3612 = vld [vmem:[%s4 + $0x808] sm:$0xff]
    %v3613 = vld [vmem:[%s4 + $0x810] sm:$0xff]
    %v3614 = vld [vmem:[%s4 + $0x818] sm:$0xff]
    %v3615 = vld [vmem:[%s4 + $0x820] sm:$0xff]
    %v3616 = vld [vmem:[%s4 + $0x828] sm:$0xff]
    %v3617 = vld [vmem:[%s4 + $0x830] sm:$0xff]
    %v3618 = vld [vmem:[%s4 + $0x838] sm:$0xff]
    %v3619 = vld [vmem:[%s4 + $0x840] sm:$0xff]
    %v3620 = vld [vmem:[%s4 + $0x848] sm:$0xff]
    %v3621 = vld [vmem:[%s4 + $0x850] sm:$0xff]
    %v3622 = vld [vmem:[%s4 + $0x858] sm:$0xff]
    %v3623 = vld [vmem:[%s4 + $0x860] sm:$0xff]
    %v3624 = vld [vmem:[%s4 + $0x868] sm:$0xff]
    %v3625 = vld [vmem:[%s4 + $0x870] sm:$0xff]
    %v3626 = vld [vmem:[%s4 + $0x878] sm:$0xff]
    %s3627 = scalar_lea.vmem %s3, 65
    %v3628 = vld [vmem:[%s3627] ss:$8 sm:$0x3]
    %v3630 = vlaneseq
    %v3631 = vshrl.u32 %v3630, 7
    %v3632 = vsub.s32 0, %v3631
    %v3633 = vrot.slane %v3628, %v3632
    %v3634 = vlaneseq
    %v3635 = vshrl.u32 %v3634, 7
    %v3636 = vsub.s32 1, %v3635
    %v3637 = vrot.slane %v3628, %v3636
    %v3672 = vunpack.c.l.b16 %v3595
    %v3673 = vunpack.c.h.b16 %v3595
    %v3674 = vunpack.c.l.b16 %v3596
    %v3675 = vunpack.c.h.b16 %v3596
    %v3676 = vunpack.c.l.b16 %v3597
    %v3677 = vunpack.c.h.b16 %v3597
    %v3678 = vunpack.c.l.b16 %v3598
    %v3679 = vunpack.c.h.b16 %v3598
    %v3680 = vunpack.c.l.b16 %v3599
    %v3681 = vunpack.c.h.b16 %v3599
    %v3682 = vunpack.c.l.b16 %v3600
    %v3683 = vunpack.c.h.b16 %v3600
    %v3684 = vunpack.c.l.b16 %v3601
    %v3685 = vunpack.c.h.b16 %v3601
    %v3686 = vunpack.c.l.b16 %v3602
    %v3687 = vunpack.c.h.b16 %v3602
    %v3688 = vunpack.c.l.b16 %v3603
    %v3689 = vunpack.c.h.b16 %v3603
    %v3690 = vunpack.c.l.b16 %v3604
    %v3691 = vunpack.c.h.b16 %v3604
    %v3692 = vunpack.c.l.b16 %v3605
    %v3693 = vunpack.c.h.b16 %v3605
    %v3694 = vunpack.c.l.b16 %v3606
    %v3695 = vunpack.c.h.b16 %v3606
    %v3696 = vunpack.c.l.b16 %v3607
    %v3697 = vunpack.c.h.b16 %v3607
    %v3698 = vunpack.c.l.b16 %v3608
    %v3699 = vunpack.c.h.b16 %v3608
    %v3700 = vunpack.c.l.b16 %v3609
    %v3701 = vunpack.c.h.b16 %v3609
    %v3702 = vunpack.c.l.b16 %v3610
    %v3703 = vunpack.c.h.b16 %v3610
    %v3704 = vunpack.c.l.b16 %v3611
    %v3705 = vunpack.c.h.b16 %v3611
    %v3706 = vunpack.c.l.b16 %v3612
    %v3707 = vunpack.c.h.b16 %v3612
    %v3708 = vunpack.c.l.b16 %v3613
    %v3709 = vunpack.c.h.b16 %v3613
    %v3710 = vunpack.c.l.b16 %v3614
    %v3711 = vunpack.c.h.b16 %v3614
    %v3712 = vunpack.c.l.b16 %v3615
    %v3713 = vunpack.c.h.b16 %v3615
    %v3714 = vunpack.c.l.b16 %v3616
    %v3715 = vunpack.c.h.b16 %v3616
    %v3716 = vunpack.c.l.b16 %v3617
    %v3717 = vunpack.c.h.b16 %v3617
    %v3718 = vunpack.c.l.b16 %v3618
    %v3719 = vunpack.c.h.b16 %v3618
    %v3720 = vunpack.c.l.b16 %v3619
    %v3721 = vunpack.c.h.b16 %v3619
    %v3722 = vunpack.c.l.b16 %v3620
    %v3723 = vunpack.c.h.b16 %v3620
    %v3724 = vunpack.c.l.b16 %v3621
    %v3725 = vunpack.c.h.b16 %v3621
    %v3726 = vunpack.c.l.b16 %v3622
    %v3727 = vunpack.c.h.b16 %v3622
    %v3728 = vunpack.c.l.b16 %v3623
    %v3729 = vunpack.c.h.b16 %v3623
    %v3730 = vunpack.c.l.b16 %v3624
    %v3731 = vunpack.c.h.b16 %v3624
    %v3732 = vunpack.c.l.b16 %v3625
    %v3733 = vunpack.c.h.b16 %v3625
    %v3734 = vunpack.c.l.b16 %v3626
    %v3735 = vunpack.c.h.b16 %v3626
    %v3736 = vpack.c.b16 %v3674, %v3672
    %v3737 = vpack.c.b16 %v3675, %v3673
    %v3738 = vpack.c.b16 %v3678, %v3676
    %v3739 = vpack.c.b16 %v3679, %v3677
    %v3740 = vpack.c.b16 %v3682, %v3680
    %v3741 = vpack.c.b16 %v3683, %v3681
    %v3742 = vpack.c.b16 %v3686, %v3684
    %v3743 = vpack.c.b16 %v3687, %v3685
    %v3744 = vpack.c.b16 %v3690, %v3688
    %v3745 = vpack.c.b16 %v3691, %v3689
    %v3746 = vpack.c.b16 %v3694, %v3692
    %v3747 = vpack.c.b16 %v3695, %v3693
    %v3748 = vpack.c.b16 %v3698, %v3696
    %v3749 = vpack.c.b16 %v3699, %v3697
    %v3750 = vpack.c.b16 %v3702, %v3700
    %v3751 = vpack.c.b16 %v3703, %v3701
    %v3752 = vpack.c.b16 %v3706, %v3704
    %v3753 = vpack.c.b16 %v3707, %v3705
    %v3754 = vpack.c.b16 %v3710, %v3708
    %v3755 = vpack.c.b16 %v3711, %v3709
    %v3756 = vpack.c.b16 %v3714, %v3712
    %v3757 = vpack.c.b16 %v3715, %v3713
    %v3758 = vpack.c.b16 %v3718, %v3716
    %v3759 = vpack.c.b16 %v3719, %v3717
    %v3760 = vpack.c.b16 %v3722, %v3720
    %v3761 = vpack.c.b16 %v3723, %v3721
    %v3762 = vpack.c.b16 %v3726, %v3724
    %v3763 = vpack.c.b16 %v3727, %v3725
    %v3764 = vpack.c.b16 %v3730, %v3728
    %v3765 = vpack.c.b16 %v3731, %v3729
    %v3766 = vpack.c.b16 %v3734, %v3732
    %v3767 = vpack.c.b16 %v3735, %v3733
    %3800 = vmatprep.subr.bf16.mxu0 %v3737
    %3801 = vmatpush1.bf16.msra.mxu0 %v3736
    %3802 = vmatprep.subr.bf16.mxu0 %v3739
    %3803 = vmatpush1.bf16.msra.mxu0 %v3738
    %3804 = vmatprep.subr.bf16.mxu0 %v3741
    %3805 = vmatpush1.bf16.msra.mxu0 %v3740
    %3806 = vmatprep.subr.bf16.mxu0 %v3743
    %3807 = vmatpush1.bf16.msra.mxu0 %v3742
    %3808 = vmatprep.subr.bf16.mxu0 %v3745
    %3809 = vmatpush1.bf16.msra.mxu0 %v3744
    %3810 = vmatprep.subr.bf16.mxu0 %v3747
    %3811 = vmatpush1.bf16.msra.mxu0 %v3746
    %3812 = vmatprep.subr.bf16.mxu0 %v3749
    %3813 = vmatpush1.bf16.msra.mxu0 %v3748
    %3814 = vmatprep.subr.bf16.mxu0 %v3751
    %3815 = vmatpush1.bf16.msra.mxu0 %v3750
    %3816 = vmatprep.subr.bf16.mxu0 %v3753
    %3817 = vmatpush1.bf16.msra.mxu0 %v3752
    %3818 = vmatprep.subr.bf16.mxu0 %v3755
    %3819 = vmatpush1.bf16.msra.mxu0 %v3754
    %3820 = vmatprep.subr.bf16.mxu0 %v3757
    %3821 = vmatpush1.bf16.msra.mxu0 %v3756
    %3822 = vmatprep.subr.bf16.mxu0 %v3759
    %3823 = vmatpush1.bf16.msra.mxu0 %v3758
    %3824 = vmatprep.subr.bf16.mxu0 %v3761
    %3825 = vmatpush1.bf16.msra.mxu0 %v3760
    %3826 = vmatprep.subr.bf16.mxu0 %v3763
    %3827 = vmatpush1.bf16.msra.mxu0 %v3762
    %3828 = vmatprep.subr.bf16.mxu0 %v3765
    %3829 = vmatpush1.bf16.msra.mxu0 %v3764
    %3830 = vmatprep.subr.bf16.mxu0 %v3767
    %3831 = vmatpush1.bf16.msra.mxu0 %v3766
    %3832 = vmatprep.mubr.bf16.mxu0 %v3080
    %3833 = vmatmul.mubr.bf16.gmra.mrb[0].mxu0 %v3079
    %v3834 = vpop.f32.mrb[0].mxu0
    %v3835 = vadd.f32 %v3633, %v3834
    %v3836 = vpop.f32.mrb[0].mxu0
    %v3837 = vadd.f32 %v3637, %v3836
    %v3838 = vpop.f32.mrb[0].mxu0
    %v3839 = vadd.f32 %v3633, %v3838
    %v3840 = vpop.f32.mrb[0].mxu0
    %v3841 = vadd.f32 %v3637, %v3840
    %3842 = vmatprep.mubr.bf16.mxu0 %v3082
    %3843 = vmatmul.mubr.bf16.gmra.mrb[0].mxu0 %v3081
    %v3844 = vpop.f32.mrb[0].mxu0
    %v3845 = vadd.f32 %v3633, %v3844
    %v3846 = vpop.f32.mrb[0].mxu0
    %v3847 = vadd.f32 %v3637, %v3846
    %v3848 = vpop.f32.mrb[0].mxu0
    %v3849 = vpop.f32.mrb[0].mxu0
    %3850 = vdwg.mxu0
    %v3851 = vpack.c.bf16 %v3327, %v3323
    %v3852 = vpack.c.bf16 %v3333, %v3333
    %v3853 = vpack.c.bf16 %v3583, %v3579
    %v3854 = vpack.c.bf16 %v3589, %v3589
    %v3855 = vpack.c.bf16 %v3839, %v3835
    %v3856 = vpack.c.bf16 %v3845, %v3845
    %vm3857 = vcmask 523264
    %v3859 = vsel %vm3857, %v3851, 0
    %v3862 = vsel %vm3857, %v3852, 0
    %v3865 = vsel %vm3857, %v3853, 0
    %v3868 = vsel %vm3857, %v3854, 0
    %3870 = vmatprep.subr.bf16.mxu0 0
    %3871 = vmatpush1.bf16.xpose.msra.mxu0 %v3865
    %3872 = vmatprep.subr.bf16.mxu0 0
    %3873 = vmatpush1.bf16.xpose.msra.mxu0 %v3868
    %3874 = vmatprep.subr.bf16.mxu0 0
    %3875 = vmatpush1.bf16.xpose.msra.mxu0 0
    %3876 = vmatprep.subr.bf16.mxu0 0
    %3877 = vmatpush1.bf16.xpose.msra.mxu0 0
    %3878 = vmatprep.subr.bf16.mxu0 0
    %3879 = vmatpush1.bf16.xpose.msra.mxu0 0
    %3880 = vmatprep.subr.bf16.mxu0 0
    %3881 = vmatpush1.bf16.xpose.msra.mxu0 0
    %3882 = vmatprep.subr.bf16.mxu0 0
    %3883 = vmatpush1.bf16.xpose.msra.mxu0 0
    %3884 = vmatprep.subr.bf16.mxu0 0
    %3885 = vmatpush1.bf16.xpose.msra.mxu0 0
    %3886 = vmatprep.subr.bf16.mxu0 0
    %3887 = vmatpush1.bf16.xpose.msra.mxu0 0
    %3888 = vmatprep.subr.bf16.mxu0 0
    %3889 = vmatpush1.bf16.xpose.msra.mxu0 0
    %3890 = vmatprep.subr.bf16.mxu0 0
    %3891 = vmatpush1.bf16.xpose.msra.mxu0 0
    %3892 = vmatprep.subr.bf16.mxu0 0
    %3893 = vmatpush1.bf16.xpose.msra.mxu0 0
    %3894 = vmatprep.subr.bf16.mxu0 0
    %3895 = vmatpush1.bf16.xpose.msra.mxu0 0
    %3896 = vmatprep.subr.bf16.mxu0 0
    %3897 = vmatpush1.bf16.xpose.msra.mxu0 0
    %3898 = vmatprep.subr.bf16.mxu0 0
    %3899 = vmatpush1.bf16.xpose.msra.mxu0 0
    %3900 = vmatprep.subr.bf16.mxu0 0
    %3901 = vmatpush1.bf16.xpose.msra.mxu0 0
    %3902 = vmatprep.mubr.bf16.mxu0 0
    %3903 = vmatmul.mubr.bf16.gmra.mrb[0].mxu0 %v3859
    %v3904 = vpop.f32.mrb[0].mxu0
    %v3905 = vadd.f32 0.0, %v3904
    %v3906 = vpop.f32.mrb[0].mxu0
    %v3907 = vpop.f32.mrb[0].mxu0
    %v3908 = vadd.f32 0.0, %v3907
    %v3909 = vpop.f32.mrb[0].mxu0
    %3910 = vmatprep.mubr.bf16.mxu0 0
    %3911 = vmatmul.mubr.bf16.gmra.mrb[0].mxu0 %v3862
    %v3912 = vpop.f32.mrb[0].mxu0
    %v3913 = vadd.f32 0.0, %v3912
    %v3914 = vpop.f32.mrb[0].mxu0
    %v3915 = vpop.f32.mrb[0].mxu0
    %v3916 = vpop.f32.mrb[0].mxu0
    %3917 = vdwg.mxu0
    %v3918 = vmul.f32 %v3905, 0.125
    %v3919 = vmul.f32 %v3908, 0.125
    %v3920 = vmul.f32 %v3913, 0.125
    %v3921 = vadd.f32 %v3918, %v2959
    %v3922 = vadd.f32 %v3919, %v2960
    %v3923 = vadd.f32 %v3920, %v2961
    %vm3924 = vcmask 195584
    %v3925 = vsel %vm3924, %v3921, -inf
    %3926 = vmax.xlane.f32.xlu0 %v3925
    %v3927 = vpop.xlane.xlu0 %3926
    %v3928 = vsel %vm3924, %v3922, -inf
    %3929 = vmax.xlane.f32.xlu0 %v3928
    %v3930 = vpop.xlane.xlu0 %3929
    %v3931 = vsel %vm3924, %v3923, -inf
    %3932 = vmax.xlane.f32.xlu0 %v3931
    %v3933 = vpop.xlane.xlu0 %3932
    %v3934 = vsub.f32 %v3921, %v3927
    %v3935 = vsub.f32 %v3922, %v3930
    %v3936 = vsub.f32 %v3923, %v3933
    %v3937 = vmul.f32 %v3934, 1.442695
    %v3938 = vpow.pop %v3937
    %v3939 = vmul.f32 %v3935, 1.442695
    %v3940 = vpow.pop %v3939
    %v3941 = vmul.f32 %v3936, 1.442695
    %v3942 = vpow.pop %v3941
    %v3943 = vmul.f32 %v3938, %v2956
    %v3944 = vmul.f32 %v3940, %v2957
    %v3945 = vmul.f32 %v3942, %v2958
    %v3946 = vsel %vm3924, %v3943, 0.0
    %3947 = vadd.xlane.f32.xlu0 %v3946
    %v3948 = vpop.xlane.xlu0 %3947
    %v3949 = vsel %vm3924, %v3944, 0.0
    %3950 = vadd.xlane.f32.xlu0 %v3949
    %v3951 = vpop.xlane.xlu0 %3950
    %v3952 = vsel %vm3924, %v3945, 0.0
    %3953 = vadd.xlane.f32.xlu0 %v3952
    %v3954 = vpop.xlane.xlu0 %3953
    %v3955 = vmax.f32 %v3948, 1e-20
    %v3956 = vmax.f32 %v3951, 1e-20
    %v3957 = vmax.f32 %v3954, 1e-20
    %v3958 = vrcp.pop %v3955
    %v3959 = vrcp.pop %v3956
    %v3960 = vrcp.pop %v3957
    %v3961 = vmul.f32 %v3943, %v3958
    %v3962 = vmul.f32 %v3944, %v3959
    %v3963 = vmul.f32 %v3945, %v3960
    %v3964 = vpack.c.bf16 %v3962, %v3961
    %v3965 = vpack.c.bf16 %v3963, %v3963
    %v3967 = vsel %vm3924, %v3964, 0
    %v3970 = vsel %vm3924, %v3965, 0
    %vm3972 = vcmask 1043456
    %v3974 = vsel %vm3972, %v3856, 0
    %3976 = vmatprep.subr.bf16.mxu0 0
    %3977 = vmatpush1.bf16.msra.mxu0 %v3855
    %3978 = vmatprep.subr.bf16.mxu0 0
    %3979 = vmatpush1.bf16.msra.mxu0 %v3974
    %3980 = vmatprep.subr.bf16.mxu0 0
    %3981 = vmatpush1.bf16.msra.mxu0 0
    %3982 = vmatprep.subr.bf16.mxu0 0
    %3983 = vmatpush1.bf16.msra.mxu0 0
    %3984 = vmatprep.subr.bf16.mxu0 0
    %3985 = vmatpush1.bf16.msra.mxu0 0
    %3986 = vmatprep.subr.bf16.mxu0 0
    %3987 = vmatpush1.bf16.msra.mxu0 0
    %3988 = vmatprep.subr.bf16.mxu0 0
    %3989 = vmatpush1.bf16.msra.mxu0 0
    %3990 = vmatprep.subr.bf16.mxu0 0
    %3991 = vmatpush1.bf16.msra.mxu0 0
    %3992 = vmatprep.subr.bf16.mxu0 0
    %3993 = vmatpush1.bf16.msra.mxu0 0
    %3994 = vmatprep.subr.bf16.mxu0 0
    %3995 = vmatpush1.bf16.msra.mxu0 0
    %3996 = vmatprep.subr.bf16.mxu0 0
    %3997 = vmatpush1.bf16.msra.mxu0 0
    %3998 = vmatprep.subr.bf16.mxu0 0
    %3999 = vmatpush1.bf16.msra.mxu0 0
    %4000 = vmatprep.subr.bf16.mxu0 0
    %4001 = vmatpush1.bf16.msra.mxu0 0
    %4002 = vmatprep.subr.bf16.mxu0 0
    %4003 = vmatpush1.bf16.msra.mxu0 0
    %4004 = vmatprep.subr.bf16.mxu0 0
    %4005 = vmatpush1.bf16.msra.mxu0 0
    %4006 = vmatprep.subr.bf16.mxu0 0
    %4007 = vmatpush1.bf16.msra.mxu0 0
    %4008 = vmatprep.mubr.bf16.mxu0 0
    %4009 = vmatmul.mubr.bf16.gmra.mrb[0].mxu0 %v3967
    %v4010 = vpop.f32.mrb[0].mxu0
    %v4011 = vadd.f32 0.0, %v4010
    %v4012 = vpop.f32.mrb[0].mxu0
    %v4013 = vpop.f32.mrb[0].mxu0
    %v4014 = vadd.f32 0.0, %v4013
    %v4015 = vpop.f32.mrb[0].mxu0
    %4016 = vmatprep.mubr.bf16.mxu0 0
    %4017 = vmatmul.mubr.bf16.gmra.mrb[0].mxu0 %v3970
    %v4018 = vpop.f32.mrb[0].mxu0
    %v4019 = vadd.f32 0.0, %v4018
    %v4020 = vpop.f32.mrb[0].mxu0
    %v4021 = vpop.f32.mrb[0].mxu0
    %v4022 = vpop.f32.mrb[0].mxu0
    %4023 = vdwg.mxu0
    %4026 = vrot.lane.b32.xlu0 %v3851, 64
    %v4027 = vpop.permute.xlu0 %4026
    %4028 = vrot.lane.b32.xlu0 %v3852, 64
    %v4029 = vpop.permute.xlu0 %4028
    %4032 = vrot.lane.b32.xlu0 %v3853, 64
    %v4033 = vpop.permute.xlu0 %4032
    %4034 = vrot.lane.b32.xlu0 %v3854, 64
    %v4035 = vpop.permute.xlu0 %4034
    %v4037 = vsel %vm3857, %v4027, 0
    %v4040 = vsel %vm3857, %v4029, 0
    %v4043 = vsel %vm3857, %v4033, 0
    %v4046 = vsel %vm3857, %v4035, 0
    %4048 = vmatprep.subr.bf16.mxu0 0
    %4049 = vmatpush1.bf16.xpose.msra.mxu0 %v4043
    %4050 = vmatprep.subr.bf16.mxu0 0
    %4051 = vmatpush1.bf16.xpose.msra.mxu0 %v4046
    %4052 = vmatprep.subr.bf16.mxu0 0
    %4053 = vmatpush1.bf16.xpose.msra.mxu0 0
    %4054 = vmatprep.subr.bf16.mxu0 0
    %4055 = vmatpush1.bf16.xpose.msra.mxu0 0
    %4056 = vmatprep.subr.bf16.mxu0 0
    %4057 = vmatpush1.bf16.xpose.msra.mxu0 0
    %4058 = vmatprep.subr.bf16.mxu0 0
    %4059 = vmatpush1.bf16.xpose.msra.mxu0 0
    %4060 = vmatprep.subr.bf16.mxu0 0
    %4061 = vmatpush1.bf16.xpose.msra.mxu0 0
    %4062 = vmatprep.subr.bf16.mxu0 0
    %4063 = vmatpush1.bf16.xpose.msra.mxu0 0
    %4064 = vmatprep.subr.bf16.mxu0 0
    %4065 = vmatpush1.bf16.xpose.msra.mxu0 0
    %4066 = vmatprep.subr.bf16.mxu0 0
    %4067 = vmatpush1.bf16.xpose.msra.mxu0 0
    %4068 = vmatprep.subr.bf16.mxu0 0
    %4069 = vmatpush1.bf16.xpose.msra.mxu0 0
    %4070 = vmatprep.subr.bf16.mxu0 0
    %4071 = vmatpush1.bf16.xpose.msra.mxu0 0
    %4072 = vmatprep.subr.bf16.mxu0 0
    %4073 = vmatpush1.bf16.xpose.msra.mxu0 0
    %4074 = vmatprep.subr.bf16.mxu0 0
    %4075 = vmatpush1.bf16.xpose.msra.mxu0 0
    %4076 = vmatprep.subr.bf16.mxu0 0
    %4077 = vmatpush1.bf16.xpose.msra.mxu0 0
    %4078 = vmatprep.subr.bf16.mxu0 0
    %4079 = vmatpush1.bf16.xpose.msra.mxu0 0
    %4080 = vmatprep.mubr.bf16.mxu0 0
    %4081 = vmatmul.mubr.bf16.gmra.mrb[0].mxu0 %v4037
    %v4082 = vpop.f32.mrb[0].mxu0
    %v4083 = vadd.f32 0.0, %v4082
    %v4084 = vpop.f32.mrb[0].mxu0
    %v4085 = vpop.f32.mrb[0].mxu0
    %v4086 = vadd.f32 0.0, %v4085
    %v4087 = vpop.f32.mrb[0].mxu0
    %4088 = vmatprep.mubr.bf16.mxu0 0
    %4089 = vmatmul.mubr.bf16.gmra.mrb[0].mxu0 %v4040
    %v4090 = vpop.f32.mrb[0].mxu0
    %v4091 = vadd.f32 0.0, %v4090
    %v4092 = vpop.f32.mrb[0].mxu0
    %v4093 = vpop.f32.mrb[0].mxu0
    %v4094 = vpop.f32.mrb[0].mxu0
    %4095 = vdwg.mxu0
    %v4096 = vmul.f32 %v4083, 0.125
    %v4097 = vmul.f32 %v4086, 0.125
    %v4098 = vmul.f32 %v4091, 0.125
    %v4099 = vadd.f32 %v4096, %v2959
    %v4100 = vadd.f32 %v4097, %v2960
    %v4101 = vadd.f32 %v4098, %v2961
    %v4102 = vsel %vm3924, %v4099, -inf
    %4103 = vmax.xlane.f32.xlu0 %v4102
    %v4104 = vpop.xlane.xlu0 %4103
    %v4105 = vsel %vm3924, %v4100, -inf
    %4106 = vmax.xlane.f32.xlu0 %v4105
    %v4107 = vpop.xlane.xlu0 %4106
    %v4108 = vsel %vm3924, %v4101, -inf
    %4109 = vmax.xlane.f32.xlu0 %v4108
    %v4110 = vpop.xlane.xlu0 %4109
    %v4111 = vsub.f32 %v4099, %v4104
    %v4112 = vsub.f32 %v4100, %v4107
    %v4113 = vsub.f32 %v4101, %v4110
    %v4114 = vmul.f32 %v4111, 1.442695
    %v4115 = vpow.pop %v4114
    %v4116 = vmul.f32 %v4112, 1.442695
    %v4117 = vpow.pop %v4116
    %v4118 = vmul.f32 %v4113, 1.442695
    %v4119 = vpow.pop %v4118
    %v4120 = vmul.f32 %v4115, %v2956
    %v4121 = vmul.f32 %v4117, %v2957
    %v4122 = vmul.f32 %v4119, %v2958
    %v4123 = vsel %vm3924, %v4120, 0.0
    %4124 = vadd.xlane.f32.xlu0 %v4123
    %v4125 = vpop.xlane.xlu0 %4124
    %v4126 = vsel %vm3924, %v4121, 0.0
    %4127 = vadd.xlane.f32.xlu0 %v4126
    %v4128 = vpop.xlane.xlu0 %4127
    %v4129 = vsel %vm3924, %v4122, 0.0
    %4130 = vadd.xlane.f32.xlu0 %v4129
    %v4131 = vpop.xlane.xlu0 %4130
    %v4132 = vmax.f32 %v4125, 1e-20
    %v4133 = vmax.f32 %v4128, 1e-20
    %v4134 = vmax.f32 %v4131, 1e-20
    %v4135 = vrcp.pop %v4132
    %v4136 = vrcp.pop %v4133
    %v4137 = vrcp.pop %v4134
    %v4138 = vmul.f32 %v4120, %v4135
    %v4139 = vmul.f32 %v4121, %v4136
    %v4140 = vmul.f32 %v4122, %v4137
    %v4141 = vpack.c.bf16 %v4139, %v4138
    %v4142 = vpack.c.bf16 %v4140, %v4140
    %4145 = vrot.lane.b32.xlu0 %v3855, 64
    %v4146 = vpop.permute.xlu0 %4145
    %4147 = vrot.lane.b32.xlu0 %v3856, 64
    %v4148 = vpop.permute.xlu0 %4147
    %v4151 = vsel %vm3924, %v4141, 0
    %v4154 = vsel %vm3924, %v4142, 0
    %v4157 = vsel %vm3972, %v4148, 0
    %4159 = vmatprep.subr.bf16.mxu0 0
    %4160 = vmatpush1.bf16.msra.mxu0 %v4146
    %4161 = vmatprep.subr.bf16.mxu0 0
    %4162 = vmatpush1.bf16.msra.mxu0 %v4157
    %4163 = vmatprep.subr.bf16.mxu0 0
    %4164 = vmatpush1.bf16.msra.mxu0 0
    %4165 = vmatprep.subr.bf16.mxu0 0
    %4166 = vmatpush1.bf16.msra.mxu0 0
    %4167 = vmatprep.subr.bf16.mxu0 0
    %4168 = vmatpush1.bf16.msra.mxu0 0
    %4169 = vmatprep.subr.bf16.mxu0 0
    %4170 = vmatpush1.bf16.msra.mxu0 0
    %4171 = vmatprep.subr.bf16.mxu0 0
    %4172 = vmatpush1.bf16.msra.mxu0 0
    %4173 = vmatprep.subr.bf16.mxu0 0
    %4174 = vmatpush1.bf16.msra.mxu0 0
    %4175 = vmatprep.subr.bf16.mxu0 0
    %4176 = vmatpush1.bf16.msra.mxu0 0
    %4177 = vmatprep.subr.bf16.mxu0 0
    %4178 = vmatpush1.bf16.msra.mxu0 0
    %4179 = vmatprep.subr.bf16.mxu0 0
    %4180 = vmatpush1.bf16.msra.mxu0 0
    %4181 = vmatprep.subr.bf16.mxu0 0
    %4182 = vmatpush1.bf16.msra.mxu0 0
    %4183 = vmatprep.subr.bf16.mxu0 0
    %4184 = vmatpush1.bf16.msra.mxu0 0
    %4185 = vmatprep.subr.bf16.mxu0 0
    %4186 = vmatpush1.bf16.msra.mxu0 0
    %4187 = vmatprep.subr.bf16.mxu0 0
    %4188 = vmatpush1.bf16.msra.mxu0 0
    %4189 = vmatprep.subr.bf16.mxu0 0
    %4190 = vmatpush1.bf16.msra.mxu0 0
    %4191 = vmatprep.mubr.bf16.mxu0 0
    %4192 = vmatmul.mubr.bf16.gmra.mrb[0].mxu0 %v4151
    %v4193 = vpop.f32.mrb[0].mxu0
    %v4194 = vadd.f32 0.0, %v4193
    %v4195 = vpop.f32.mrb[0].mxu0
    %v4196 = vpop.f32.mrb[0].mxu0
    %v4197 = vadd.f32 0.0, %v4196
    %v4198 = vpop.f32.mrb[0].mxu0
    %4199 = vmatprep.mubr.bf16.mxu0 0
    %4200 = vmatmul.mubr.bf16.gmra.mrb[0].mxu0 %v4154
    %v4201 = vpop.f32.mrb[0].mxu0
    %v4202 = vadd.f32 0.0, %v4201
    %v4203 = vpop.f32.mrb[0].mxu0
    %v4204 = vpop.f32.mrb[0].mxu0
    %v4205 = vpop.f32.mrb[0].mxu0
    %4206 = vdwg.mxu0
    %v4207 = vpack.c.bf16 %v3329, %v3325
    %v4208 = vpack.c.bf16 %v3335, %v3335
    %v4209 = vpack.c.bf16 %v3585, %v3581
    %v4210 = vpack.c.bf16 %v3591, %v3591
    %v4211 = vpack.c.bf16 %v3841, %v3837
    %v4212 = vpack.c.bf16 %v3847, %v3847
    %v4214 = vsel %vm3857, %v4207, 0
    %v4217 = vsel %vm3857, %v4208, 0
    %v4220 = vsel %vm3857, %v4209, 0
    %v4223 = vsel %vm3857, %v4210, 0
    %4225 = vmatprep.subr.bf16.mxu0 0
    %4226 = vmatpush1.bf16.xpose.msra.mxu0 %v4220
    %4227 = vmatprep.subr.bf16.mxu0 0
    %4228 = vmatpush1.bf16.xpose.msra.mxu0 %v4223
    %4229 = vmatprep.subr.bf16.mxu0 0
    %4230 = vmatpush1.bf16.xpose.msra.mxu0 0
    %4231 = vmatprep.subr.bf16.mxu0 0
    %4232 = vmatpush1.bf16.xpose.msra.mxu0 0
    %4233 = vmatprep.subr.bf16.mxu0 0
    %4234 = vmatpush1.bf16.xpose.msra.mxu0 0
    %4235 = vmatprep.subr.bf16.mxu0 0
    %4236 = vmatpush1.bf16.xpose.msra.mxu0 0
    %4237 = vmatprep.subr.bf16.mxu0 0
    %4238 = vmatpush1.bf16.xpose.msra.mxu0 0
    %4239 = vmatprep.subr.bf16.mxu0 0
    %4240 = vmatpush1.bf16.xpose.msra.mxu0 0
    %4241 = vmatprep.subr.bf16.mxu0 0
    %4242 = vmatpush1.bf16.xpose.msra.mxu0 0
    %4243 = vmatprep.subr.bf16.mxu0 0
    %4244 = vmatpush1.bf16.xpose.msra.mxu0 0
    %4245 = vmatprep.subr.bf16.mxu0 0
    %4246 = vmatpush1.bf16.xpose.msra.mxu0 0
    %4247 = vmatprep.subr.bf16.mxu0 0
    %4248 = vmatpush1.bf16.xpose.msra.mxu0 0
    %4249 = vmatprep.subr.bf16.mxu0 0
    %4250 = vmatpush1.bf16.xpose.msra.mxu0 0
    %4251 = vmatprep.subr.bf16.mxu0 0
    %4252 = vmatpush1.bf16.xpose.msra.mxu0 0
    %4253 = vmatprep.subr.bf16.mxu0 0
    %4254 = vmatpush1.bf16.xpose.msra.mxu0 0
    %4255 = vmatprep.subr.bf16.mxu0 0
    %4256 = vmatpush1.bf16.xpose.msra.mxu0 0
    %4257 = vmatprep.mubr.bf16.mxu0 0
    %4258 = vmatmul.mubr.bf16.gmra.mrb[0].mxu0 %v4214
    %v4259 = vpop.f32.mrb[0].mxu0
    %v4260 = vadd.f32 0.0, %v4259
    %v4261 = vpop.f32.mrb[0].mxu0
    %v4262 = vpop.f32.mrb[0].mxu0
    %v4263 = vadd.f32 0.0, %v4262
    %v4264 = vpop.f32.mrb[0].mxu0
    %4265 = vmatprep.mubr.bf16.mxu0 0
    %4266 = vmatmul.mubr.bf16.gmra.mrb[0].mxu0 %v4217
    %v4267 = vpop.f32.mrb[0].mxu0
    %v4268 = vadd.f32 0.0, %v4267
    %v4269 = vpop.f32.mrb[0].mxu0
    %v4270 = vpop.f32.mrb[0].mxu0
    %v4271 = vpop.f32.mrb[0].mxu0
    %4272 = vdwg.mxu0
    %v4273 = vmul.f32 %v4260, 0.125
    %v4274 = vmul.f32 %v4263, 0.125
    %v4275 = vmul.f32 %v4268, 0.125
    %v4276 = vadd.f32 %v4273, %v2959
    %v4277 = vadd.f32 %v4274, %v2960
    %v4278 = vadd.f32 %v4275, %v2961
    %v4279 = vsel %vm3924, %v4276, -inf
    %4280 = vmax.xlane.f32.xlu0 %v4279
    %v4281 = vpop.xlane.xlu0 %4280
    %v4282 = vsel %vm3924, %v4277, -inf
    %4283 = vmax.xlane.f32.xlu0 %v4282
    %v4284 = vpop.xlane.xlu0 %4283
    %v4285 = vsel %vm3924, %v4278, -inf
    %4286 = vmax.xlane.f32.xlu0 %v4285
    %v4287 = vpop.xlane.xlu0 %4286
    %v4288 = vsub.f32 %v4276, %v4281
    %v4289 = vsub.f32 %v4277, %v4284
    %v4290 = vsub.f32 %v4278, %v4287
    %v4291 = vmul.f32 %v4288, 1.442695
    %v4292 = vpow.pop %v4291
    %v4293 = vmul.f32 %v4289, 1.442695
    %v4294 = vpow.pop %v4293
    %v4295 = vmul.f32 %v4290, 1.442695
    %v4296 = vpow.pop %v4295
    %v4297 = vmul.f32 %v4292, %v2956
    %v4298 = vmul.f32 %v4294, %v2957
    %v4299 = vmul.f32 %v4296, %v2958
    %v4300 = vsel %vm3924, %v4297, 0.0
    %4301 = vadd.xlane.f32.xlu0 %v4300
    %v4302 = vpop.xlane.xlu0 %4301
    %v4303 = vsel %vm3924, %v4298, 0.0
    %4304 = vadd.xlane.f32.xlu0 %v4303
    %v4305 = vpop.xlane.xlu0 %4304
    %v4306 = vsel %vm3924, %v4299, 0.0
    %4307 = vadd.xlane.f32.xlu0 %v4306
    %v4308 = vpop.xlane.xlu0 %4307
    %v4309 = vmax.f32 %v4302, 1e-20
    %v4310 = vmax.f32 %v4305, 1e-20
    %v4311 = vmax.f32 %v4308, 1e-20
    %v4312 = vrcp.pop %v4309
    %v4313 = vrcp.pop %v4310
    %v4314 = vrcp.pop %v4311
    %v4315 = vmul.f32 %v4297, %v4312
    %v4316 = vmul.f32 %v4298, %v4313
    %v4317 = vmul.f32 %v4299, %v4314
    %v4318 = vpack.c.bf16 %v4316, %v4315
    %v4319 = vpack.c.bf16 %v4317, %v4317
    %v4321 = vsel %vm3924, %v4318, 0
    %v4324 = vsel %vm3924, %v4319, 0
    %v4327 = vsel %vm3972, %v4212, 0
    %4329 = vmatprep.subr.bf16.mxu0 0
    %4330 = vmatpush1.bf16.msra.mxu0 %v4211
    %4331 = vmatprep.subr.bf16.mxu0 0
    %4332 = vmatpush1.bf16.msra.mxu0 %v4327
    %4333 = vmatprep.subr.bf16.mxu0 0
    %4334 = vmatpush1.bf16.msra.mxu0 0
    %4335 = vmatprep.subr.bf16.mxu0 0
    %4336 = vmatpush1.bf16.msra.mxu0 0
    %4337 = vmatprep.subr.bf16.mxu0 0
    %4338 = vmatpush1.bf16.msra.mxu0 0
    %4339 = vmatprep.subr.bf16.mxu0 0
    %4340 = vmatpush1.bf16.msra.mxu0 0
    %4341 = vmatprep.subr.bf16.mxu0 0
    %4342 = vmatpush1.bf16.msra.mxu0 0
    %4343 = vmatprep.subr.bf16.mxu0 0
    %4344 = vmatpush1.bf16.msra.mxu0 0
    %4345 = vmatprep.subr.bf16.mxu0 0
    %4346 = vmatpush1.bf16.msra.mxu0 0
    %4347 = vmatprep.subr.bf16.mxu0 0
    %4348 = vmatpush1.bf16.msra.mxu0 0
    %4349 = vmatprep.subr.bf16.mxu0 0
    %4350 = vmatpush1.bf16.msra.mxu0 0
    %4351 = vmatprep.subr.bf16.mxu0 0
    %4352 = vmatpush1.bf16.msra.mxu0 0
    %4353 = vmatprep.subr.bf16.mxu0 0
    %4354 = vmatpush1.bf16.msra.mxu0 0
    %4355 = vmatprep.subr.bf16.mxu0 0
    %4356 = vmatpush1.bf16.msra.mxu0 0
    %4357 = vmatprep.subr.bf16.mxu0 0
    %4358 = vmatpush1.bf16.msra.mxu0 0
    %4359 = vmatprep.subr.bf16.mxu0 0
    %4360 = vmatpush1.bf16.msra.mxu0 0
    %4361 = vmatprep.mubr.bf16.mxu0 0
    %4362 = vmatmul.mubr.bf16.gmra.mrb[0].mxu0 %v4321
    %v4363 = vpop.f32.mrb[0].mxu0
    %v4364 = vadd.f32 0.0, %v4363
    %v4365 = vpop.f32.mrb[0].mxu0
    %v4366 = vpop.f32.mrb[0].mxu0
    %v4367 = vadd.f32 0.0, %v4366
    %v4368 = vpop.f32.mrb[0].mxu0
    %4369 = vmatprep.mubr.bf16.mxu0 0
    %4370 = vmatmul.mubr.bf16.gmra.mrb[0].mxu0 %v4324
    %v4371 = vpop.f32.mrb[0].mxu0
    %v4372 = vadd.f32 0.0, %v4371
    %v4373 = vpop.f32.mrb[0].mxu0
    %v4374 = vpop.f32.mrb[0].mxu0
    %v4375 = vpop.f32.mrb[0].mxu0
    %4376 = vdwg.mxu0
    %4379 = vrot.lane.b32.xlu0 %v4207, 64
    %v4380 = vpop.permute.xlu0 %4379
    %4381 = vrot.lane.b32.xlu0 %v4208, 64
    %v4382 = vpop.permute.xlu0 %4381
    %4385 = vrot.lane.b32.xlu0 %v4209, 64
    %v4386 = vpop.permute.xlu0 %4385
    %4387 = vrot.lane.b32.xlu0 %v4210, 64
    %v4388 = vpop.permute.xlu0 %4387
    %v4390 = vsel %vm3857, %v4380, 0
    %v4393 = vsel %vm3857, %v4382, 0
    %v4396 = vsel %vm3857, %v4386, 0
    %v4399 = vsel %vm3857, %v4388, 0
    %4401 = vmatprep.subr.bf16.mxu0 0
    %4402 = vmatpush1.bf16.xpose.msra.mxu0 %v4396
    %4403 = vmatprep.subr.bf16.mxu0 0
    %4404 = vmatpush1.bf16.xpose.msra.mxu0 %v4399
    %4405 = vmatprep.subr.bf16.mxu0 0
    %4406 = vmatpush1.bf16.xpose.msra.mxu0 0
    %4407 = vmatprep.subr.bf16.mxu0 0
    %4408 = vmatpush1.bf16.xpose.msra.mxu0 0
    %4409 = vmatprep.subr.bf16.mxu0 0
    %4410 = vmatpush1.bf16.xpose.msra.mxu0 0
    %4411 = vmatprep.subr.bf16.mxu0 0
    %4412 = vmatpush1.bf16.xpose.msra.mxu0 0
    %4413 = vmatprep.subr.bf16.mxu0 0
    %4414 = vmatpush1.bf16.xpose.msra.mxu0 0
    %4415 = vmatprep.subr.bf16.mxu0 0
    %4416 = vmatpush1.bf16.xpose.msra.mxu0 0
    %4417 = vmatprep.subr.bf16.mxu0 0
    %4418 = vmatpush1.bf16.xpose.msra.mxu0 0
    %4419 = vmatprep.subr.bf16.mxu0 0
    %4420 = vmatpush1.bf16.xpose.msra.mxu0 0
    %4421 = vmatprep.subr.bf16.mxu0 0
    %4422 = vmatpush1.bf16.xpose.msra.mxu0 0
    %4423 = vmatprep.subr.bf16.mxu0 0
    %4424 = vmatpush1.bf16.xpose.msra.mxu0 0
    %4425 = vmatprep.subr.bf16.mxu0 0
    %4426 = vmatpush1.bf16.xpose.msra.mxu0 0
    %4427 = vmatprep.subr.bf16.mxu0 0
    %4428 = vmatpush1.bf16.xpose.msra.mxu0 0
    %4429 = vmatprep.subr.bf16.mxu0 0
    %4430 = vmatpush1.bf16.xpose.msra.mxu0 0
    %4431 = vmatprep.subr.bf16.mxu0 0
    %4432 = vmatpush1.bf16.xpose.msra.mxu0 0
    %4433 = vmatprep.mubr.bf16.mxu0 0
    %4434 = vmatmul.mubr.bf16.gmra.mrb[0].mxu0 %v4390
    %v4435 = vpop.f32.mrb[0].mxu0
    %v4436 = vadd.f32 0.0, %v4435
    %v4437 = vpop.f32.mrb[0].mxu0
    %v4438 = vpop.f32.mrb[0].mxu0
    %v4439 = vadd.f32 0.0, %v4438
    %v4440 = vpop.f32.mrb[0].mxu0
    %4441 = vmatprep.mubr.bf16.mxu0 0
    %4442 = vmatmul.mubr.bf16.gmra.mrb[0].mxu0 %v4393
    %v4443 = vpop.f32.mrb[0].mxu0
    %v4444 = vadd.f32 0.0, %v4443
    %v4445 = vpop.f32.mrb[0].mxu0
    %v4446 = vpop.f32.mrb[0].mxu0
    %v4447 = vpop.f32.mrb[0].mxu0
    %4448 = vdwg.mxu0
    %v4449 = vmul.f32 %v4436, 0.125
    %v4450 = vmul.f32 %v4439, 0.125
    %v4451 = vmul.f32 %v4444, 0.125
    %v4452 = vadd.f32 %v4449, %v2959
    %v4453 = vadd.f32 %v4450, %v2960
    %v4454 = vadd.f32 %v4451, %v2961
    %v4455 = vsel %vm3924, %v4452, -inf
    %4456 = vmax.xlane.f32.xlu0 %v4455
    %v4457 = vpop.xlane.xlu0 %4456
    %v4458 = vsel %vm3924, %v4453, -inf
    %4459 = vmax.xlane.f32.xlu0 %v4458
    %v4460 = vpop.xlane.xlu0 %4459
    %v4461 = vsel %vm3924, %v4454, -inf
    %4462 = vmax.xlane.f32.xlu0 %v4461
    %v4463 = vpop.xlane.xlu0 %4462
    %v4464 = vsub.f32 %v4452, %v4457
    %v4465 = vsub.f32 %v4453, %v4460
    %v4466 = vsub.f32 %v4454, %v4463
    %v4467 = vmul.f32 %v4464, 1.442695
    %v4468 = vpow.pop %v4467
    %v4469 = vmul.f32 %v4465, 1.442695
    %v4470 = vpow.pop %v4469
    %v4471 = vmul.f32 %v4466, 1.442695
    %v4472 = vpow.pop %v4471
    %v4473 = vmul.f32 %v4468, %v2956
    %v4474 = vmul.f32 %v4470, %v2957
    %v4475 = vmul.f32 %v4472, %v2958
    %v4476 = vsel %vm3924, %v4473, 0.0
    %4477 = vadd.xlane.f32.xlu0 %v4476
    %v4478 = vpop.xlane.xlu0 %4477
    %v4479 = vsel %vm3924, %v4474, 0.0
    %4480 = vadd.xlane.f32.xlu0 %v4479
    %v4481 = vpop.xlane.xlu0 %4480
    %v4482 = vsel %vm3924, %v4475, 0.0
    %4483 = vadd.xlane.f32.xlu0 %v4482
    %v4484 = vpop.xlane.xlu0 %4483
    %v4485 = vmax.f32 %v4478, 1e-20
    %v4486 = vmax.f32 %v4481, 1e-20
    %v4487 = vmax.f32 %v4484, 1e-20
    %v4488 = vrcp.pop %v4485
    %v4489 = vrcp.pop %v4486
    %v4490 = vrcp.pop %v4487
    %v4491 = vmul.f32 %v4473, %v4488
    %v4492 = vmul.f32 %v4474, %v4489
    %v4493 = vmul.f32 %v4475, %v4490
    %v4494 = vpack.c.bf16 %v4492, %v4491
    %v4495 = vpack.c.bf16 %v4493, %v4493
    %4498 = vrot.lane.b32.xlu0 %v4211, 64
    %v4499 = vpop.permute.xlu0 %4498
    %4500 = vrot.lane.b32.xlu0 %v4212, 64
    %v4501 = vpop.permute.xlu0 %4500
    %v4504 = vsel %vm3924, %v4494, 0
    %v4507 = vsel %vm3924, %v4495, 0
    %v4510 = vsel %vm3972, %v4501, 0
    %4512 = vmatprep.subr.bf16.mxu0 0
    %4513 = vmatpush1.bf16.msra.mxu0 %v4499
    %4514 = vmatprep.subr.bf16.mxu0 0
    %4515 = vmatpush1.bf16.msra.mxu0 %v4510
    %4516 = vmatprep.subr.bf16.mxu0 0
    %4517 = vmatpush1.bf16.msra.mxu0 0
    %4518 = vmatprep.subr.bf16.mxu0 0
    %4519 = vmatpush1.bf16.msra.mxu0 0
    %4520 = vmatprep.subr.bf16.mxu0 0
    %4521 = vmatpush1.bf16.msra.mxu0 0
    %4522 = vmatprep.subr.bf16.mxu0 0
    %4523 = vmatpush1.bf16.msra.mxu0 0
    %4524 = vmatprep.subr.bf16.mxu0 0
    %4525 = vmatpush1.bf16.msra.mxu0 0
    %4526 = vmatprep.subr.bf16.mxu0 0
    %4527 = vmatpush1.bf16.msra.mxu0 0
    %4528 = vmatprep.subr.bf16.mxu0 0
    %4529 = vmatpush1.bf16.msra.mxu0 0
    %4530 = vmatprep.subr.bf16.mxu0 0
    %4531 = vmatpush1.bf16.msra.mxu0 0
    %4532 = vmatprep.subr.bf16.mxu0 0
    %4533 = vmatpush1.bf16.msra.mxu0 0
    %4534 = vmatprep.subr.bf16.mxu0 0
    %4535 = vmatpush1.bf16.msra.mxu0 0
    %4536 = vmatprep.subr.bf16.mxu0 0
    %4537 = vmatpush1.bf16.msra.mxu0 0
    %4538 = vmatprep.subr.bf16.mxu0 0
    %4539 = vmatpush1.bf16.msra.mxu0 0
    %4540 = vmatprep.subr.bf16.mxu0 0
    %4541 = vmatpush1.bf16.msra.mxu0 0
    %4542 = vmatprep.subr.bf16.mxu0 0
    %4543 = vmatpush1.bf16.msra.mxu0 0
    %4544 = vmatprep.mubr.bf16.mxu0 0
    %4545 = vmatmul.mubr.bf16.gmra.mrb[0].mxu0 %v4504
    %v4546 = vpop.f32.mrb[0].mxu0
    %v4547 = vadd.f32 0.0, %v4546
    %v4548 = vpop.f32.mrb[0].mxu0
    %v4549 = vpop.f32.mrb[0].mxu0
    %v4550 = vadd.f32 0.0, %v4549
    %v4551 = vpop.f32.mrb[0].mxu0
    %4552 = vmatprep.mubr.bf16.mxu0 0
    %4553 = vmatmul.mubr.bf16.gmra.mrb[0].mxu0 %v4507
    %v4554 = vpop.f32.mrb[0].mxu0
    %v4555 = vadd.f32 0.0, %v4554
    %v4556 = vpop.f32.mrb[0].mxu0
    %v4557 = vpop.f32.mrb[0].mxu0
    %v4558 = vpop.f32.mrb[0].mxu0
    %4559 = vdwg.mxu0
    %4563 = vrot.lane.b32.xlu0 %v4194, 64
    %v4564 = vpop.permute.xlu0 %4563
    %4565 = vrot.lane.b32.xlu0 %v4197, 64
    %v4566 = vpop.permute.xlu0 %4565
    %4567 = vrot.lane.b32.xlu0 %v4202, 64
    %v4568 = vpop.permute.xlu0 %4567
    %4575 = vrot.lane.b32.xlu0 %v4547, 64
    %v4576 = vpop.permute.xlu0 %4575
    %4577 = vrot.lane.b32.xlu0 %v4550, 64
    %v4578 = vpop.permute.xlu0 %4577
    %4579 = vrot.lane.b32.xlu0 %v4555, 64
    %v4580 = vpop.permute.xlu0 %4579
    %v4584 = vsel %vm3857, %v4011, %v4564
    %v4585 = vsel %vm3857, %v4014, %v4566
    %v4586 = vsel %vm3857, %v4019, %v4568
    %v4587 = vsel %vm3857, %v4364, %v4576
    %v4588 = vsel %vm3857, %v4367, %v4578
    %v4589 = vsel %vm3857, %v4372, %v4580
    %v4590 = vld [vmem:[%s4 + $0x880] sm:$0xff]
    %v4591 = vld [vmem:[%s4 + $0x888] sm:$0xff]
    %v4592 = vld [vmem:[%s4 + $0x890] sm:$0xff]
    %v4593 = vld [vmem:[%s4 + $0x898] sm:$0xff]
    %v4594 = vld [vmem:[%s4 + $0x8a0] sm:$0xff]
    %v4595 = vld [vmem:[%s4 + $0x8a8] sm:$0xff]
    %v4596 = vld [vmem:[%s4 + $0x8b0] sm:$0xff]
    %v4597 = vld [vmem:[%s4 + $0x8b8] sm:$0xff]
    %v4598 = vld [vmem:[%s4 + $0x8c0] sm:$0xff]
    %v4599 = vld [vmem:[%s4 + $0x8c8] sm:$0xff]
    %v4600 = vld [vmem:[%s4 + $0x8d0] sm:$0xff]
    %v4601 = vld [vmem:[%s4 + $0x8d8] sm:$0xff]
    %v4602 = vld [vmem:[%s4 + $0x8e0] sm:$0xff]
    %v4603 = vld [vmem:[%s4 + $0x8e8] sm:$0xff]
    %v4604 = vld [vmem:[%s4 + $0x8f0] sm:$0xff]
    %v4605 = vld [vmem:[%s4 + $0x8f8] sm:$0xff]
    %v4606 = vld [vmem:[%s4 + $0x900] sm:$0xff]
    %v4607 = vld [vmem:[%s4 + $0x908] sm:$0xff]
    %v4608 = vld [vmem:[%s4 + $0x910] sm:$0xff]
    %v4609 = vld [vmem:[%s4 + $0x918] sm:$0xff]
    %v4610 = vld [vmem:[%s4 + $0x920] sm:$0xff]
    %v4611 = vld [vmem:[%s4 + $0x928] sm:$0xff]
    %v4612 = vld [vmem:[%s4 + $0x930] sm:$0xff]
    %v4613 = vld [vmem:[%s4 + $0x938] sm:$0xff]
    %v4614 = vld [vmem:[%s4 + $0x940] sm:$0xff]
    %v4615 = vld [vmem:[%s4 + $0x948] sm:$0xff]
    %v4616 = vld [vmem:[%s4 + $0x950] sm:$0xff]
    %v4617 = vld [vmem:[%s4 + $0x958] sm:$0xff]
    %v4618 = vld [vmem:[%s4 + $0x960] sm:$0xff]
    %v4619 = vld [vmem:[%s4 + $0x968] sm:$0xff]
    %v4620 = vld [vmem:[%s4 + $0x970] sm:$0xff]
    %v4621 = vld [vmem:[%s4 + $0x978] sm:$0xff]
    %v4622 = vpack.c.bf16 %v4585, %v4584
    %v4623 = vpack.c.bf16 %v4588, %v4587
    %v4624 = vpack.c.bf16 %v4586, %v4586
    %v4625 = vpack.c.bf16 %v4589, %v4589
    %v4658 = vunpack.c.l.b16 %v4590
    %v4659 = vunpack.c.h.b16 %v4590
    %v4660 = vunpack.c.l.b16 %v4591
    %v4661 = vunpack.c.h.b16 %v4591
    %v4662 = vunpack.c.l.b16 %v4592
    %v4663 = vunpack.c.h.b16 %v4592
    %v4664 = vunpack.c.l.b16 %v4593
    %v4665 = vunpack.c.h.b16 %v4593
    %v4666 = vunpack.c.l.b16 %v4594
    %v4667 = vunpack.c.h.b16 %v4594
    %v4668 = vunpack.c.l.b16 %v4595
    %v4669 = vunpack.c.h.b16 %v4595
    %v4670 = vunpack.c.l.b16 %v4596
    %v4671 = vunpack.c.h.b16 %v4596
    %v4672 = vunpack.c.l.b16 %v4597
    %v4673 = vunpack.c.h.b16 %v4597
    %v4674 = vunpack.c.l.b16 %v4598
    %v4675 = vunpack.c.h.b16 %v4598
    %v4676 = vunpack.c.l.b16 %v4599
    %v4677 = vunpack.c.h.b16 %v4599
    %v4678 = vunpack.c.l.b16 %v4600
    %v4679 = vunpack.c.h.b16 %v4600
    %v4680 = vunpack.c.l.b16 %v4601
    %v4681 = vunpack.c.h.b16 %v4601
    %v4682 = vunpack.c.l.b16 %v4602
    %v4683 = vunpack.c.h.b16 %v4602
    %v4684 = vunpack.c.l.b16 %v4603
    %v4685 = vunpack.c.h.b16 %v4603
    %v4686 = vunpack.c.l.b16 %v4604
    %v4687 = vunpack.c.h.b16 %v4604
    %v4688 = vunpack.c.l.b16 %v4605
    %v4689 = vunpack.c.h.b16 %v4605
    %v4690 = vunpack.c.l.b16 %v4606
    %v4691 = vunpack.c.h.b16 %v4606
    %v4692 = vunpack.c.l.b16 %v4607
    %v4693 = vunpack.c.h.b16 %v4607
    %v4694 = vunpack.c.l.b16 %v4608
    %v4695 = vunpack.c.h.b16 %v4608
    %v4696 = vunpack.c.l.b16 %v4609
    %v4697 = vunpack.c.h.b16 %v4609
    %v4698 = vunpack.c.l.b16 %v4610
    %v4699 = vunpack.c.h.b16 %v4610
    %v4700 = vunpack.c.l.b16 %v4611
    %v4701 = vunpack.c.h.b16 %v4611
    %v4702 = vunpack.c.l.b16 %v4612
    %v4703 = vunpack.c.h.b16 %v4612
    %v4704 = vunpack.c.l.b16 %v4613
    %v4705 = vunpack.c.h.b16 %v4613
    %v4706 = vunpack.c.l.b16 %v4614
    %v4707 = vunpack.c.h.b16 %v4614
    %v4708 = vunpack.c.l.b16 %v4615
    %v4709 = vunpack.c.h.b16 %v4615
    %v4710 = vunpack.c.l.b16 %v4616
    %v4711 = vunpack.c.h.b16 %v4616
    %v4712 = vunpack.c.l.b16 %v4617
    %v4713 = vunpack.c.h.b16 %v4617
    %v4714 = vunpack.c.l.b16 %v4618
    %v4715 = vunpack.c.h.b16 %v4618
    %v4716 = vunpack.c.l.b16 %v4619
    %v4717 = vunpack.c.h.b16 %v4619
    %v4718 = vunpack.c.l.b16 %v4620
    %v4719 = vunpack.c.h.b16 %v4620
    %v4720 = vunpack.c.l.b16 %v4621
    %v4721 = vunpack.c.h.b16 %v4621
    %v4722 = vpack.c.b16 %v4660, %v4658
    %v4723 = vpack.c.b16 %v4661, %v4659
    %v4724 = vpack.c.b16 %v4664, %v4662
    %v4725 = vpack.c.b16 %v4665, %v4663
    %v4726 = vpack.c.b16 %v4668, %v4666
    %v4727 = vpack.c.b16 %v4669, %v4667
    %v4728 = vpack.c.b16 %v4672, %v4670
    %v4729 = vpack.c.b16 %v4673, %v4671
    %v4730 = vpack.c.b16 %v4676, %v4674
    %v4731 = vpack.c.b16 %v4677, %v4675
    %v4732 = vpack.c.b16 %v4680, %v4678
    %v4733 = vpack.c.b16 %v4681, %v4679
    %v4734 = vpack.c.b16 %v4684, %v4682
    %v4735 = vpack.c.b16 %v4685, %v4683
    %v4736 = vpack.c.b16 %v4688, %v4686
    %v4737 = vpack.c.b16 %v4689, %v4687
    %v4738 = vpack.c.b16 %v4692, %v4690
    %v4739 = vpack.c.b16 %v4693, %v4691
    %v4740 = vpack.c.b16 %v4696, %v4694
    %v4741 = vpack.c.b16 %v4697, %v4695
    %v4742 = vpack.c.b16 %v4700, %v4698
    %v4743 = vpack.c.b16 %v4701, %v4699
    %v4744 = vpack.c.b16 %v4704, %v4702
    %v4745 = vpack.c.b16 %v4705, %v4703
    %v4746 = vpack.c.b16 %v4708, %v4706
    %v4747 = vpack.c.b16 %v4709, %v4707
    %v4748 = vpack.c.b16 %v4712, %v4710
    %v4749 = vpack.c.b16 %v4713, %v4711
    %v4750 = vpack.c.b16 %v4716, %v4714
    %v4751 = vpack.c.b16 %v4717, %v4715
    %v4752 = vpack.c.b16 %v4720, %v4718
    %v4753 = vpack.c.b16 %v4721, %v4719
    %4786 = vmatprep.subr.bf16.mxu0 %v4723
    %4787 = vmatpush1.bf16.msra.mxu0 %v4722
    %4788 = vmatprep.subr.bf16.mxu0 %v4725
    %4789 = vmatpush1.bf16.msra.mxu0 %v4724
    %4790 = vmatprep.subr.bf16.mxu0 %v4727
    %4791 = vmatpush1.bf16.msra.mxu0 %v4726
    %4792 = vmatprep.subr.bf16.mxu0 %v4729
    %4793 = vmatpush1.bf16.msra.mxu0 %v4728
    %4794 = vmatprep.subr.bf16.mxu0 %v4731
    %4795 = vmatpush1.bf16.msra.mxu0 %v4730
    %4796 = vmatprep.subr.bf16.mxu0 %v4733
    %4797 = vmatpush1.bf16.msra.mxu0 %v4732
    %4798 = vmatprep.subr.bf16.mxu0 %v4735
    %4799 = vmatpush1.bf16.msra.mxu0 %v4734
    %4800 = vmatprep.subr.bf16.mxu0 %v4737
    %4801 = vmatpush1.bf16.msra.mxu0 %v4736
    %4802 = vmatprep.subr.bf16.mxu0 %v4739
    %4803 = vmatpush1.bf16.msra.mxu0 %v4738
    %4804 = vmatprep.subr.bf16.mxu0 %v4741
    %4805 = vmatpush1.bf16.msra.mxu0 %v4740
    %4806 = vmatprep.subr.bf16.mxu0 %v4743
    %4807 = vmatpush1.bf16.msra.mxu0 %v4742
    %4808 = vmatprep.subr.bf16.mxu0 %v4745
    %4809 = vmatpush1.bf16.msra.mxu0 %v4744
    %4810 = vmatprep.subr.bf16.mxu0 %v4747
    %4811 = vmatpush1.bf16.msra.mxu0 %v4746
    %4812 = vmatprep.subr.bf16.mxu0 %v4749
    %4813 = vmatpush1.bf16.msra.mxu0 %v4748
    %4814 = vmatprep.subr.bf16.mxu0 %v4751
    %4815 = vmatpush1.bf16.msra.mxu0 %v4750
    %4816 = vmatprep.subr.bf16.mxu0 %v4753
    %4817 = vmatpush1.bf16.msra.mxu0 %v4752
    %4818 = vmatprep.mubr.bf16.mxu0 %v4623
    %4819 = vmatmul.mubr.bf16.gmra.mrb[0].mxu0 %v4622
    %v4820 = vpop.f32.mrb[0].mxu0
    %v4821 = vadd.f32 0.0, %v4820
    %v4822 = vpop.f32.mrb[0].mxu0
    %v4823 = vadd.f32 0.0, %v4822
    %v4824 = vpop.f32.mrb[0].mxu0
    %v4825 = vadd.f32 0.0, %v4824
    %v4826 = vpop.f32.mrb[0].mxu0
    %v4827 = vadd.f32 0.0, %v4826
    %4828 = vmatprep.mubr.bf16.mxu0 %v4625
    %4829 = vmatmul.mubr.bf16.gmra.mrb[0].mxu0 %v4624
    %v4830 = vpop.f32.mrb[0].mxu0
    %v4831 = vadd.f32 0.0, %v4830
    %v4832 = vpop.f32.mrb[0].mxu0
    %v4833 = vadd.f32 0.0, %v4832
    %v4834 = vpop.f32.mrb[0].mxu0
    %v4835 = vpop.f32.mrb[0].mxu0
    %4836 = vdwg.mxu0
    %v4837 = vadd.f32 %v584, %v4821
    %v4838 = vadd.f32 %v585, %v4823
    %v4839 = vadd.f32 %v1142, %v4825
    %v4840 = vadd.f32 %v1143, %v4827
    %v4841 = vadd.f32 %v2855, %v4831
    %v4842 = vadd.f32 %v2856, %v4833
    %s4843 = scalar_lea.vmem %s3, 66
    %v4844 = vld [vmem:[%s4843] ss:$8 sm:$0x3]
    %v4846 = vlaneseq
    %v4847 = vshrl.u32 %v4846, 7
    %v4848 = vsub.s32 0, %v4847
    %v4849 = vrot.slane %v4844, %v4848
    %v4850 = vlaneseq
    %v4851 = vshrl.u32 %v4850, 7
    %v4852 = vsub.s32 1, %v4851
    %v4853 = vrot.slane %v4844, %v4852
    %v4856 = vadd.f32 %v4837, %v4849
    %v4857 = vadd.f32 %v4838, %v4853
    %v4858 = vadd.f32 %v4839, %v4849
    %v4859 = vadd.f32 %v4840, %v4853
    %v4860 = vadd.f32 %v4841, %v4849
    %v4861 = vadd.f32 %v4842, %v4853
    %s4862 = scalar_lea.vmem %s3, 67
    %v4863 = vld [vmem:[%s4862] ss:$8 sm:$0x3]
    %s4864 = scalar_lea.vmem %s3, 68
    %v4865 = vld [vmem:[%s4864] ss:$8 sm:$0x3]
    %v4866 = vadd.f32 %v4856, %v4857
    %4867 = vadd.xlane.f32.xlu0 %v4866
    %v4868 = vpop.xlane.xlu0 %4867
    %v4869 = vadd.f32 %v4858, %v4859
    %4870 = vadd.xlane.f32.xlu0 %v4869
    %v4871 = vpop.xlane.xlu0 %4870
    %v4872 = vadd.f32 %v4860, %v4861
    %4873 = vadd.xlane.f32.xlu0 %v4872
    %v4874 = vpop.xlane.xlu0 %4873
    %v4875 = vmul.f32 %v4868, %v546
    %v4876 = vmul.f32 %v4871, %v546
    %v4877 = vmul.f32 %v4874, %v546
    %v4878 = vsub.f32 %v4856, %v4875
    %v4879 = vsub.f32 %v4857, %v4875
    %v4880 = vsub.f32 %v4858, %v4876
    %v4881 = vsub.f32 %v4859, %v4876
    %v4882 = vsub.f32 %v4860, %v4877
    %v4883 = vsub.f32 %v4861, %v4877
    %v4884 = vmul.f32 %v4878, %v4878
    %v4885 = vmul.f32 %v4879, %v4879
    %v4886 = vmul.f32 %v4880, %v4880
    %v4887 = vmul.f32 %v4881, %v4881
    %v4888 = vmul.f32 %v4882, %v4882
    %v4889 = vmul.f32 %v4883, %v4883
    %v4890 = vadd.f32 %v4884, %v4885
    %4891 = vadd.xlane.f32.xlu0 %v4890
    %v4892 = vpop.xlane.xlu0 %4891
    %v4893 = vadd.f32 %v4886, %v4887
    %4894 = vadd.xlane.f32.xlu0 %v4893
    %v4895 = vpop.xlane.xlu0 %4894
    %v4896 = vadd.f32 %v4888, %v4889
    %4897 = vadd.xlane.f32.xlu0 %v4896
    %v4898 = vpop.xlane.xlu0 %4897
    %v4899 = vmul.f32 %v4892, %v546
    %v4900 = vmul.f32 %v4895, %v546
    %v4901 = vmul.f32 %v4898, %v546
    %v4902 = vadd.f32 %v4899, 1e-06
    %v4903 = vadd.f32 %v4900, 1e-06
    %v4904 = vadd.f32 %v4901, 1e-06
    %v4905 = vrsqrt.pop %v4902
    %v4906 = vrsqrt.pop %v4903
    %v4907 = vrsqrt.pop %v4904
    %v4908 = vmul.f32 %v4878, %v4905
    %v4909 = vmul.f32 %v4879, %v4905
    %v4910 = vmul.f32 %v4880, %v4906
    %v4911 = vmul.f32 %v4881, %v4906
    %v4912 = vmul.f32 %v4882, %v4907
    %v4913 = vmul.f32 %v4883, %v4907
    %v4915 = vlaneseq
    %v4916 = vshrl.u32 %v4915, 7
    %v4917 = vsub.s32 0, %v4916
    %v4918 = vrot.slane %v4863, %v4917
    %v4919 = vlaneseq
    %v4920 = vshrl.u32 %v4919, 7
    %v4921 = vsub.s32 1, %v4920
    %v4922 = vrot.slane %v4863, %v4921
    %v4925 = vmul.f32 %v4908, %v4918
    %v4926 = vmul.f32 %v4909, %v4922
    %v4927 = vmul.f32 %v4910, %v4918
    %v4928 = vmul.f32 %v4911, %v4922
    %v4929 = vmul.f32 %v4912, %v4918
    %v4930 = vmul.f32 %v4913, %v4922
    %v4932 = vlaneseq
    %v4933 = vshrl.u32 %v4932, 7
    %v4934 = vsub.s32 0, %v4933
    %v4935 = vrot.slane %v4865, %v4934
    %v4936 = vlaneseq
    %v4937 = vshrl.u32 %v4936, 7
    %v4938 = vsub.s32 1, %v4937
    %v4939 = vrot.slane %v4865, %v4938
    %v4942 = vadd.f32 %v4925, %v4935
    %v4943 = vadd.f32 %v4926, %v4939
    %v4944 = vadd.f32 %v4927, %v4935
    %v4945 = vadd.f32 %v4928, %v4939
    %v4946 = vadd.f32 %v4929, %v4935
    %v4947 = vadd.f32 %v4930, %v4939
    %v4948 = vld [vmem:[%s4 + $0x980] sm:$0xff]
    %v4949 = vld [vmem:[%s4 + $0x988] sm:$0xff]
    %v4950 = vld [vmem:[%s4 + $0x990] sm:$0xff]
    %v4951 = vld [vmem:[%s4 + $0x998] sm:$0xff]
    %v4952 = vld [vmem:[%s4 + $0x9a0] sm:$0xff]
    %v4953 = vld [vmem:[%s4 + $0x9a8] sm:$0xff]
    %v4954 = vld [vmem:[%s4 + $0x9b0] sm:$0xff]
    %v4955 = vld [vmem:[%s4 + $0x9b8] sm:$0xff]
    %v4956 = vld [vmem:[%s4 + $0x9c0] sm:$0xff]
    %v4957 = vld [vmem:[%s4 + $0x9c8] sm:$0xff]
    %v4958 = vld [vmem:[%s4 + $0x9d0] sm:$0xff]
    %v4959 = vld [vmem:[%s4 + $0x9d8] sm:$0xff]
    %v4960 = vld [vmem:[%s4 + $0x9e0] sm:$0xff]
    %v4961 = vld [vmem:[%s4 + $0x9e8] sm:$0xff]
    %v4962 = vld [vmem:[%s4 + $0x9f0] sm:$0xff]
    %v4963 = vld [vmem:[%s4 + $0x9f8] sm:$0xff]
    %v4964 = vld [vmem:[%s4 + $0xa00] sm:$0xff]
    %v4965 = vld [vmem:[%s4 + $0xa08] sm:$0xff]
    %v4966 = vld [vmem:[%s4 + $0xa10] sm:$0xff]
    %v4967 = vld [vmem:[%s4 + $0xa18] sm:$0xff]
    %v4968 = vld [vmem:[%s4 + $0xa20] sm:$0xff]
    %v4969 = vld [vmem:[%s4 + $0xa28] sm:$0xff]
    %v4970 = vld [vmem:[%s4 + $0xa30] sm:$0xff]
    %v4971 = vld [vmem:[%s4 + $0xa38] sm:$0xff]
    %v4972 = vld [vmem:[%s4 + $0xa40] sm:$0xff]
    %v4973 = vld [vmem:[%s4 + $0xa48] sm:$0xff]
    %v4974 = vld [vmem:[%s4 + $0xa50] sm:$0xff]
    %v4975 = vld [vmem:[%s4 + $0xa58] sm:$0xff]
    %v4976 = vld [vmem:[%s4 + $0xa60] sm:$0xff]
    %v4977 = vld [vmem:[%s4 + $0xa68] sm:$0xff]
    %v4978 = vld [vmem:[%s4 + $0xa70] sm:$0xff]
    %v4979 = vld [vmem:[%s4 + $0xa78] sm:$0xff]
    %v4980 = vpack.c.bf16 %v4944, %v4942
    %v4981 = vpack.c.bf16 %v4945, %v4943
    %v4982 = vpack.c.bf16 %v4946, %v4946
    %v4983 = vpack.c.bf16 %v4947, %v4947
    %s4984 = scalar_lea.vmem %s3, 69
    %v4985 = vld [vmem:[%s4984] ss:$8 sm:$0x3]
    %v4987 = vlaneseq
    %v4988 = vshrl.u32 %v4987, 7
    %v4989 = vsub.s32 0, %v4988
    %v4990 = vrot.slane %v4985, %v4989
    %v4991 = vlaneseq
    %v4992 = vshrl.u32 %v4991, 7
    %v4993 = vsub.s32 1, %v4992
    %v4994 = vrot.slane %v4985, %v4993
    %v5029 = vunpack.c.l.b16 %v4948
    %v5030 = vunpack.c.h.b16 %v4948
    %v5031 = vunpack.c.l.b16 %v4949
    %v5032 = vunpack.c.h.b16 %v4949
    %v5033 = vunpack.c.l.b16 %v4950
    %v5034 = vunpack.c.h.b16 %v4950
    %v5035 = vunpack.c.l.b16 %v4951
    %v5036 = vunpack.c.h.b16 %v4951
    %v5037 = vunpack.c.l.b16 %v4952
    %v5038 = vunpack.c.h.b16 %v4952
    %v5039 = vunpack.c.l.b16 %v4953
    %v5040 = vunpack.c.h.b16 %v4953
    %v5041 = vunpack.c.l.b16 %v4954
    %v5042 = vunpack.c.h.b16 %v4954
    %v5043 = vunpack.c.l.b16 %v4955
    %v5044 = vunpack.c.h.b16 %v4955
    %v5045 = vunpack.c.l.b16 %v4956
    %v5046 = vunpack.c.h.b16 %v4956
    %v5047 = vunpack.c.l.b16 %v4957
    %v5048 = vunpack.c.h.b16 %v4957
    %v5049 = vunpack.c.l.b16 %v4958
    %v5050 = vunpack.c.h.b16 %v4958
    %v5051 = vunpack.c.l.b16 %v4959
    %v5052 = vunpack.c.h.b16 %v4959
    %v5053 = vunpack.c.l.b16 %v4960
    %v5054 = vunpack.c.h.b16 %v4960
    %v5055 = vunpack.c.l.b16 %v4961
    %v5056 = vunpack.c.h.b16 %v4961
    %v5057 = vunpack.c.l.b16 %v4962
    %v5058 = vunpack.c.h.b16 %v4962
    %v5059 = vunpack.c.l.b16 %v4963
    %v5060 = vunpack.c.h.b16 %v4963
    %v5061 = vunpack.c.l.b16 %v4964
    %v5062 = vunpack.c.h.b16 %v4964
    %v5063 = vunpack.c.l.b16 %v4965
    %v5064 = vunpack.c.h.b16 %v4965
    %v5065 = vunpack.c.l.b16 %v4966
    %v5066 = vunpack.c.h.b16 %v4966
    %v5067 = vunpack.c.l.b16 %v4967
    %v5068 = vunpack.c.h.b16 %v4967
    %v5069 = vunpack.c.l.b16 %v4968
    %v5070 = vunpack.c.h.b16 %v4968
    %v5071 = vunpack.c.l.b16 %v4969
    %v5072 = vunpack.c.h.b16 %v4969
    %v5073 = vunpack.c.l.b16 %v4970
    %v5074 = vunpack.c.h.b16 %v4970
    %v5075 = vunpack.c.l.b16 %v4971
    %v5076 = vunpack.c.h.b16 %v4971
    %v5077 = vunpack.c.l.b16 %v4972
    %v5078 = vunpack.c.h.b16 %v4972
    %v5079 = vunpack.c.l.b16 %v4973
    %v5080 = vunpack.c.h.b16 %v4973
    %v5081 = vunpack.c.l.b16 %v4974
    %v5082 = vunpack.c.h.b16 %v4974
    %v5083 = vunpack.c.l.b16 %v4975
    %v5084 = vunpack.c.h.b16 %v4975
    %v5085 = vunpack.c.l.b16 %v4976
    %v5086 = vunpack.c.h.b16 %v4976
    %v5087 = vunpack.c.l.b16 %v4977
    %v5088 = vunpack.c.h.b16 %v4977
    %v5089 = vunpack.c.l.b16 %v4978
    %v5090 = vunpack.c.h.b16 %v4978
    %v5091 = vunpack.c.l.b16 %v4979
    %v5092 = vunpack.c.h.b16 %v4979
    %v5093 = vpack.c.b16 %v5031, %v5029
    %v5094 = vpack.c.b16 %v5032, %v5030
    %v5095 = vpack.c.b16 %v5035, %v5033
    %v5096 = vpack.c.b16 %v5036, %v5034
    %v5097 = vpack.c.b16 %v5039, %v5037
    %v5098 = vpack.c.b16 %v5040, %v5038
    %v5099 = vpack.c.b16 %v5043, %v5041
    %v5100 = vpack.c.b16 %v5044, %v5042
    %v5101 = vpack.c.b16 %v5047, %v5045
    %v5102 = vpack.c.b16 %v5048, %v5046
    %v5103 = vpack.c.b16 %v5051, %v5049
    %v5104 = vpack.c.b16 %v5052, %v5050
    %v5105 = vpack.c.b16 %v5055, %v5053
    %v5106 = vpack.c.b16 %v5056, %v5054
    %v5107 = vpack.c.b16 %v5059, %v5057
    %v5108 = vpack.c.b16 %v5060, %v5058
    %v5109 = vpack.c.b16 %v5063, %v5061
    %v5110 = vpack.c.b16 %v5064, %v5062
    %v5111 = vpack.c.b16 %v5067, %v5065
    %v5112 = vpack.c.b16 %v5068, %v5066
    %v5113 = vpack.c.b16 %v5071, %v5069
    %v5114 = vpack.c.b16 %v5072, %v5070
    %v5115 = vpack.c.b16 %v5075, %v5073
    %v5116 = vpack.c.b16 %v5076, %v5074
    %v5117 = vpack.c.b16 %v5079, %v5077
    %v5118 = vpack.c.b16 %v5080, %v5078
    %v5119 = vpack.c.b16 %v5083, %v5081
    %v5120 = vpack.c.b16 %v5084, %v5082
    %v5121 = vpack.c.b16 %v5087, %v5085
    %v5122 = vpack.c.b16 %v5088, %v5086
    %v5123 = vpack.c.b16 %v5091, %v5089
    %v5124 = vpack.c.b16 %v5092, %v5090
    %5157 = vmatprep.subr.bf16.mxu0 %v5094
    %5158 = vmatpush1.bf16.msra.mxu0 %v5093
    %5159 = vmatprep.subr.bf16.mxu0 %v5096
    %5160 = vmatpush1.bf16.msra.mxu0 %v5095
    %5161 = vmatprep.subr.bf16.mxu0 %v5098
    %5162 = vmatpush1.bf16.msra.mxu0 %v5097
    %5163 = vmatprep.subr.bf16.mxu0 %v5100
    %5164 = vmatpush1.bf16.msra.mxu0 %v5099
    %5165 = vmatprep.subr.bf16.mxu0 %v5102
    %5166 = vmatpush1.bf16.msra.mxu0 %v5101
    %5167 = vmatprep.subr.bf16.mxu0 %v5104
    %5168 = vmatpush1.bf16.msra.mxu0 %v5103
    %5169 = vmatprep.subr.bf16.mxu0 %v5106
    %5170 = vmatpush1.bf16.msra.mxu0 %v5105
    %5171 = vmatprep.subr.bf16.mxu0 %v5108
    %5172 = vmatpush1.bf16.msra.mxu0 %v5107
    %5173 = vmatprep.subr.bf16.mxu0 %v5110
    %5174 = vmatpush1.bf16.msra.mxu0 %v5109
    %5175 = vmatprep.subr.bf16.mxu0 %v5112
    %5176 = vmatpush1.bf16.msra.mxu0 %v5111
    %5177 = vmatprep.subr.bf16.mxu0 %v5114
    %5178 = vmatpush1.bf16.msra.mxu0 %v5113
    %5179 = vmatprep.subr.bf16.mxu0 %v5116
    %5180 = vmatpush1.bf16.msra.mxu0 %v5115
    %5181 = vmatprep.subr.bf16.mxu0 %v5118
    %5182 = vmatpush1.bf16.msra.mxu0 %v5117
    %5183 = vmatprep.subr.bf16.mxu0 %v5120
    %5184 = vmatpush1.bf16.msra.mxu0 %v5119
    %5185 = vmatprep.subr.bf16.mxu0 %v5122
    %5186 = vmatpush1.bf16.msra.mxu0 %v5121
    %5187 = vmatprep.subr.bf16.mxu0 %v5124
    %5188 = vmatpush1.bf16.msra.mxu0 %v5123
    %5189 = vmatprep.mubr.bf16.mxu0 %v4981
    %5190 = vmatmul.mubr.bf16.gmra.mrb[0].mxu0 %v4980
    %v5191 = vpop.f32.mrb[0].mxu0
    %v5192 = vadd.f32 %v4990, %v5191
    %v5193 = vpop.f32.mrb[0].mxu0
    %v5194 = vadd.f32 %v4994, %v5193
    %v5195 = vpop.f32.mrb[0].mxu0
    %v5196 = vadd.f32 %v4990, %v5195
    %v5197 = vpop.f32.mrb[0].mxu0
    %v5198 = vadd.f32 %v4994, %v5197
    %5199 = vmatprep.mubr.bf16.mxu0 %v4983
    %5200 = vmatmul.mubr.bf16.gmra.mrb[0].mxu0 %v4982
    %v5201 = vpop.f32.mrb[0].mxu0
    %v5202 = vadd.f32 %v4990, %v5201
    %v5203 = vpop.f32.mrb[0].mxu0
    %v5204 = vadd.f32 %v4994, %v5203
    %v5205 = vpop.f32.mrb[0].mxu0
    %v5206 = vpop.f32.mrb[0].mxu0
    %5207 = vdwg.mxu0
    %v5208 = vmul.f32 %v5192, %v5192
    %v5209 = vmul.f32 %v5194, %v5194
    %v5210 = vmul.f32 %v5196, %v5196
    %v5211 = vmul.f32 %v5198, %v5198
    %v5212 = vmul.f32 %v5202, %v5202
    %v5213 = vmul.f32 %v5204, %v5204
    %v5214 = vmul.f32 %v5192, %v5208
    %v5215 = vmul.f32 %v5194, %v5209
    %v5216 = vmul.f32 %v5196, %v5210
    %v5217 = vmul.f32 %v5198, %v5211
    %v5218 = vmul.f32 %v5202, %v5212
    %v5219 = vmul.f32 %v5204, %v5213
    %v5220 = vmul.f32 %v5214, 0.044715
    %v5221 = vmul.f32 %v5215, 0.044715
    %v5222 = vmul.f32 %v5216, 0.044715
    %v5223 = vmul.f32 %v5217, 0.044715
    %v5224 = vmul.f32 %v5218, 0.044715
    %v5225 = vmul.f32 %v5219, 0.044715
    %v5226 = vadd.f32 %v5192, %v5220
    %v5227 = vadd.f32 %v5194, %v5221
    %v5228 = vadd.f32 %v5196, %v5222
    %v5229 = vadd.f32 %v5198, %v5223
    %v5230 = vadd.f32 %v5202, %v5224
    %v5231 = vadd.f32 %v5204, %v5225
    %v5232 = vmul.f32 %v5226, 0.7978846
    %v5233 = vmul.f32 %v5227, 0.7978846
    %v5234 = vmul.f32 %v5228, 0.7978846
    %v5235 = vmul.f32 %v5229, 0.7978846
    %v5236 = vmul.f32 %v5230, 0.7978846
    %v5237 = vmul.f32 %v5231, 0.7978846
    %v5238 = vtanh.pop %v5232
    %v5239 = vtanh.pop %v5233
    %v5240 = vtanh.pop %v5234
    %v5241 = vtanh.pop %v5235
    %v5242 = vtanh.pop %v5236
    %v5243 = vtanh.pop %v5237
    %v5244 = vadd.f32 %v5238, 1.0
    %v5245 = vadd.f32 %v5239, 1.0
    %v5246 = vadd.f32 %v5240, 1.0
    %v5247 = vadd.f32 %v5241, 1.0
    %v5248 = vadd.f32 %v5242, 1.0
    %v5249 = vadd.f32 %v5243, 1.0
    %v5250 = vmul.f32 %v5244, 0.5
    %v5251 = vmul.f32 %v5245, 0.5
    %v5252 = vmul.f32 %v5246, 0.5
    %v5253 = vmul.f32 %v5247, 0.5
    %v5254 = vmul.f32 %v5248, 0.5
    %v5255 = vmul.f32 %v5249, 0.5
    %v5256 = vmul.f32 %v5192, %v5250
    %v5257 = vmul.f32 %v5194, %v5251
    %v5258 = vmul.f32 %v5196, %v5252
    %v5259 = vmul.f32 %v5198, %v5253
    %v5260 = vmul.f32 %v5202, %v5254
    %v5261 = vmul.f32 %v5204, %v5255
    %v5262 = vld [vmem:[%s4 + $0xa80] sm:$0xff]
    %v5263 = vld [vmem:[%s4 + $0xa88] sm:$0xff]
    %v5264 = vld [vmem:[%s4 + $0xa90] sm:$0xff]
    %v5265 = vld [vmem:[%s4 + $0xa98] sm:$0xff]
    %v5266 = vld [vmem:[%s4 + $0xaa0] sm:$0xff]
    %v5267 = vld [vmem:[%s4 + $0xaa8] sm:$0xff]
    %v5268 = vld [vmem:[%s4 + $0xab0] sm:$0xff]
    %v5269 = vld [vmem:[%s4 + $0xab8] sm:$0xff]
    %v5270 = vld [vmem:[%s4 + $0xac0] sm:$0xff]
    %v5271 = vld [vmem:[%s4 + $0xac8] sm:$0xff]
    %v5272 = vld [vmem:[%s4 + $0xad0] sm:$0xff]
    %v5273 = vld [vmem:[%s4 + $0xad8] sm:$0xff]
    %v5274 = vld [vmem:[%s4 + $0xae0] sm:$0xff]
    %v5275 = vld [vmem:[%s4 + $0xae8] sm:$0xff]
    %v5276 = vld [vmem:[%s4 + $0xaf0] sm:$0xff]
    %v5277 = vld [vmem:[%s4 + $0xaf8] sm:$0xff]
    %v5278 = vld [vmem:[%s4 + $0xb00] sm:$0xff]
    %v5279 = vld [vmem:[%s4 + $0xb08] sm:$0xff]
    %v5280 = vld [vmem:[%s4 + $0xb10] sm:$0xff]
    %v5281 = vld [vmem:[%s4 + $0xb18] sm:$0xff]
    %v5282 = vld [vmem:[%s4 + $0xb20] sm:$0xff]
    %v5283 = vld [vmem:[%s4 + $0xb28] sm:$0xff]
    %v5284 = vld [vmem:[%s4 + $0xb30] sm:$0xff]
    %v5285 = vld [vmem:[%s4 + $0xb38] sm:$0xff]
    %v5286 = vld [vmem:[%s4 + $0xb40] sm:$0xff]
    %v5287 = vld [vmem:[%s4 + $0xb48] sm:$0xff]
    %v5288 = vld [vmem:[%s4 + $0xb50] sm:$0xff]
    %v5289 = vld [vmem:[%s4 + $0xb58] sm:$0xff]
    %v5290 = vld [vmem:[%s4 + $0xb60] sm:$0xff]
    %v5291 = vld [vmem:[%s4 + $0xb68] sm:$0xff]
    %v5292 = vld [vmem:[%s4 + $0xb70] sm:$0xff]
    %v5293 = vld [vmem:[%s4 + $0xb78] sm:$0xff]
    %v5294 = vpack.c.bf16 %v5258, %v5256
    %v5295 = vpack.c.bf16 %v5259, %v5257
    %v5296 = vpack.c.bf16 %v5260, %v5260
    %v5297 = vpack.c.bf16 %v5261, %v5261
    %v5330 = vunpack.c.l.b16 %v5262
    %v5331 = vunpack.c.h.b16 %v5262
    %v5332 = vunpack.c.l.b16 %v5263
    %v5333 = vunpack.c.h.b16 %v5263
    %v5334 = vunpack.c.l.b16 %v5264
    %v5335 = vunpack.c.h.b16 %v5264
    %v5336 = vunpack.c.l.b16 %v5265
    %v5337 = vunpack.c.h.b16 %v5265
    %v5338 = vunpack.c.l.b16 %v5266
    %v5339 = vunpack.c.h.b16 %v5266
    %v5340 = vunpack.c.l.b16 %v5267
    %v5341 = vunpack.c.h.b16 %v5267
    %v5342 = vunpack.c.l.b16 %v5268
    %v5343 = vunpack.c.h.b16 %v5268
    %v5344 = vunpack.c.l.b16 %v5269
    %v5345 = vunpack.c.h.b16 %v5269
    %v5346 = vunpack.c.l.b16 %v5270
    %v5347 = vunpack.c.h.b16 %v5270
    %v5348 = vunpack.c.l.b16 %v5271
    %v5349 = vunpack.c.h.b16 %v5271
    %v5350 = vunpack.c.l.b16 %v5272
    %v5351 = vunpack.c.h.b16 %v5272
    %v5352 = vunpack.c.l.b16 %v5273
    %v5353 = vunpack.c.h.b16 %v5273
    %v5354 = vunpack.c.l.b16 %v5274
    %v5355 = vunpack.c.h.b16 %v5274
    %v5356 = vunpack.c.l.b16 %v5275
    %v5357 = vunpack.c.h.b16 %v5275
    %v5358 = vunpack.c.l.b16 %v5276
    %v5359 = vunpack.c.h.b16 %v5276
    %v5360 = vunpack.c.l.b16 %v5277
    %v5361 = vunpack.c.h.b16 %v5277
    %v5362 = vunpack.c.l.b16 %v5278
    %v5363 = vunpack.c.h.b16 %v5278
    %v5364 = vunpack.c.l.b16 %v5279
    %v5365 = vunpack.c.h.b16 %v5279
    %v5366 = vunpack.c.l.b16 %v5280
    %v5367 = vunpack.c.h.b16 %v5280
    %v5368 = vunpack.c.l.b16 %v5281
    %v5369 = vunpack.c.h.b16 %v5281
    %v5370 = vunpack.c.l.b16 %v5282
    %v5371 = vunpack.c.h.b16 %v5282
    %v5372 = vunpack.c.l.b16 %v5283
    %v5373 = vunpack.c.h.b16 %v5283
    %v5374 = vunpack.c.l.b16 %v5284
    %v5375 = vunpack.c.h.b16 %v5284
    %v5376 = vunpack.c.l.b16 %v5285
    %v5377 = vunpack.c.h.b16 %v5285
    %v5378 = vunpack.c.l.b16 %v5286
    %v5379 = vunpack.c.h.b16 %v5286
    %v5380 = vunpack.c.l.b16 %v5287
    %v5381 = vunpack.c.h.b16 %v5287
    %v5382 = vunpack.c.l.b16 %v5288
    %v5383 = vunpack.c.h.b16 %v5288
    %v5384 = vunpack.c.l.b16 %v5289
    %v5385 = vunpack.c.h.b16 %v5289
    %v5386 = vunpack.c.l.b16 %v5290
    %v5387 = vunpack.c.h.b16 %v5290
    %v5388 = vunpack.c.l.b16 %v5291
    %v5389 = vunpack.c.h.b16 %v5291
    %v5390 = vunpack.c.l.b16 %v5292
    %v5391 = vunpack.c.h.b16 %v5292
    %v5392 = vunpack.c.l.b16 %v5293
    %v5393 = vunpack.c.h.b16 %v5293
    %v5394 = vpack.c.b16 %v5332, %v5330
    %v5395 = vpack.c.b16 %v5333, %v5331
    %v5396 = vpack.c.b16 %v5336, %v5334
    %v5397 = vpack.c.b16 %v5337, %v5335
    %v5398 = vpack.c.b16 %v5340, %v5338
    %v5399 = vpack.c.b16 %v5341, %v5339
    %v5400 = vpack.c.b16 %v5344, %v5342
    %v5401 = vpack.c.b16 %v5345, %v5343
    %v5402 = vpack.c.b16 %v5348, %v5346
    %v5403 = vpack.c.b16 %v5349, %v5347
    %v5404 = vpack.c.b16 %v5352, %v5350
    %v5405 = vpack.c.b16 %v5353, %v5351
    %v5406 = vpack.c.b16 %v5356, %v5354
    %v5407 = vpack.c.b16 %v5357, %v5355
    %v5408 = vpack.c.b16 %v5360, %v5358
    %v5409 = vpack.c.b16 %v5361, %v5359
    %v5410 = vpack.c.b16 %v5364, %v5362
    %v5411 = vpack.c.b16 %v5365, %v5363
    %v5412 = vpack.c.b16 %v5368, %v5366
    %v5413 = vpack.c.b16 %v5369, %v5367
    %v5414 = vpack.c.b16 %v5372, %v5370
    %v5415 = vpack.c.b16 %v5373, %v5371
    %v5416 = vpack.c.b16 %v5376, %v5374
    %v5417 = vpack.c.b16 %v5377, %v5375
    %v5418 = vpack.c.b16 %v5380, %v5378
    %v5419 = vpack.c.b16 %v5381, %v5379
    %v5420 = vpack.c.b16 %v5384, %v5382
    %v5421 = vpack.c.b16 %v5385, %v5383
    %v5422 = vpack.c.b16 %v5388, %v5386
    %v5423 = vpack.c.b16 %v5389, %v5387
    %v5424 = vpack.c.b16 %v5392, %v5390
    %v5425 = vpack.c.b16 %v5393, %v5391
    %5458 = vmatprep.subr.bf16.mxu0 %v5395
    %5459 = vmatpush1.bf16.msra.mxu0 %v5394
    %5460 = vmatprep.subr.bf16.mxu0 %v5397
    %5461 = vmatpush1.bf16.msra.mxu0 %v5396
    %5462 = vmatprep.subr.bf16.mxu0 %v5399
    %5463 = vmatpush1.bf16.msra.mxu0 %v5398
    %5464 = vmatprep.subr.bf16.mxu0 %v5401
    %5465 = vmatpush1.bf16.msra.mxu0 %v5400
    %5466 = vmatprep.subr.bf16.mxu0 %v5403
    %5467 = vmatpush1.bf16.msra.mxu0 %v5402
    %5468 = vmatprep.subr.bf16.mxu0 %v5405
    %5469 = vmatpush1.bf16.msra.mxu0 %v5404
    %5470 = vmatprep.subr.bf16.mxu0 %v5407
    %5471 = vmatpush1.bf16.msra.mxu0 %v5406
    %5472 = vmatprep.subr.bf16.mxu0 %v5409
    %5473 = vmatpush1.bf16.msra.mxu0 %v5408
    %5474 = vmatprep.subr.bf16.mxu0 %v5411
    %5475 = vmatpush1.bf16.msra.mxu0 %v5410
    %5476 = vmatprep.subr.bf16.mxu0 %v5413
    %5477 = vmatpush1.bf16.msra.mxu0 %v5412
    %5478 = vmatprep.subr.bf16.mxu0 %v5415
    %5479 = vmatpush1.bf16.msra.mxu0 %v5414
    %5480 = vmatprep.subr.bf16.mxu0 %v5417
    %5481 = vmatpush1.bf16.msra.mxu0 %v5416
    %5482 = vmatprep.subr.bf16.mxu0 %v5419
    %5483 = vmatpush1.bf16.msra.mxu0 %v5418
    %5484 = vmatprep.subr.bf16.mxu0 %v5421
    %5485 = vmatpush1.bf16.msra.mxu0 %v5420
    %5486 = vmatprep.subr.bf16.mxu0 %v5423
    %5487 = vmatpush1.bf16.msra.mxu0 %v5422
    %5488 = vmatprep.subr.bf16.mxu0 %v5425
    %5489 = vmatpush1.bf16.msra.mxu0 %v5424
    %5490 = vmatprep.mubr.bf16.mxu0 %v5295
    %5491 = vmatmul.mubr.bf16.gmra.mrb[0].mxu0 %v5294
    %v5492 = vpop.f32.mrb[0].mxu0
    %v5493 = vadd.f32 0.0, %v5492
    %v5494 = vpop.f32.mrb[0].mxu0
    %v5495 = vadd.f32 0.0, %v5494
    %v5496 = vpop.f32.mrb[0].mxu0
    %v5497 = vadd.f32 0.0, %v5496
    %v5498 = vpop.f32.mrb[0].mxu0
    %v5499 = vadd.f32 0.0, %v5498
    %5500 = vmatprep.mubr.bf16.mxu0 %v5297
    %5501 = vmatmul.mubr.bf16.gmra.mrb[0].mxu0 %v5296
    %v5502 = vpop.f32.mrb[0].mxu0
    %v5503 = vadd.f32 0.0, %v5502
    %v5504 = vpop.f32.mrb[0].mxu0
    %v5505 = vadd.f32 0.0, %v5504
    %v5506 = vpop.f32.mrb[0].mxu0
    %v5507 = vpop.f32.mrb[0].mxu0
    %5508 = vdwg.mxu0
    %v5509 = vadd.f32 %v4856, %v5493
    %v5510 = vadd.f32 %v4857, %v5495
    %v5511 = vadd.f32 %v4858, %v5497
    %v5512 = vadd.f32 %v4859, %v5499
    %v5513 = vadd.f32 %v4860, %v5503
    %v5514 = vadd.f32 %v4861, %v5505
    %s5515 = scalar_lea.vmem %s3, 70
    %v5516 = vld [vmem:[%s5515] ss:$8 sm:$0x3]
    %v5518 = vlaneseq
    %v5519 = vshrl.u32 %v5518, 7
    %v5520 = vsub.s32 0, %v5519
    %v5521 = vrot.slane %v5516, %v5520
    %v5522 = vlaneseq
    %v5523 = vshrl.u32 %v5522, 7
    %v5524 = vsub.s32 1, %v5523
    %v5525 = vrot.slane %v5516, %v5524
    %v5528 = vadd.f32 %v5509, %v5521
    %v5529 = vadd.f32 %v5510, %v5525
    %v5530 = vadd.f32 %v5511, %v5521
    %v5531 = vadd.f32 %v5512, %v5525
    %v5532 = vadd.f32 %v5513, %v5521
    %v5533 = vadd.f32 %v5514, %v5525
    %s5534 = scalar_lea.vmem %s3, 71
    %v5535 = vld [vmem:[%s5534] ss:$8 sm:$0x3]
    %s5536 = scalar_lea.vmem %s3, 96
    %v5537 = vld [vmem:[%s5536] ss:$8 sm:$0x3]
    %v5538 = vadd.f32 %v5528, %v5529
    %5539 = vadd.xlane.f32.xlu0 %v5538
    %v5540 = vpop.xlane.xlu0 %5539
    %v5541 = vadd.f32 %v5530, %v5531
    %5542 = vadd.xlane.f32.xlu0 %v5541
    %v5543 = vpop.xlane.xlu0 %5542
    %v5544 = vadd.f32 %v5532, %v5533
    %5545 = vadd.xlane.f32.xlu0 %v5544
    %v5546 = vpop.xlane.xlu0 %5545
    %v5547 = vmul.f32 %v5540, %v546
    %v5548 = vmul.f32 %v5543, %v546
    %v5549 = vmul.f32 %v5546, %v546
    %v5550 = vsub.f32 %v5528, %v5547
    %v5551 = vsub.f32 %v5529, %v5547
    %v5552 = vsub.f32 %v5530, %v5548
    %v5553 = vsub.f32 %v5531, %v5548
    %v5554 = vsub.f32 %v5532, %v5549
    %v5555 = vsub.f32 %v5533, %v5549
    %v5556 = vmul.f32 %v5550, %v5550
    %v5557 = vmul.f32 %v5551, %v5551
    %v5558 = vmul.f32 %v5552, %v5552
    %v5559 = vmul.f32 %v5553, %v5553
    %v5560 = vmul.f32 %v5554, %v5554
    %v5561 = vmul.f32 %v5555, %v5555
    %v5562 = vadd.f32 %v5556, %v5557
    %5563 = vadd.xlane.f32.xlu0 %v5562
    %v5564 = vpop.xlane.xlu0 %5563
    %v5565 = vadd.f32 %v5558, %v5559
    %5566 = vadd.xlane.f32.xlu0 %v5565
    %v5567 = vpop.xlane.xlu0 %5566
    %v5568 = vadd.f32 %v5560, %v5561
    %5569 = vadd.xlane.f32.xlu0 %v5568
    %v5570 = vpop.xlane.xlu0 %5569
    %v5571 = vmul.f32 %v5564, %v546
    %v5572 = vmul.f32 %v5567, %v546
    %v5573 = vmul.f32 %v5570, %v546
    %v5574 = vadd.f32 %v5571, 1e-06
    %v5575 = vadd.f32 %v5572, 1e-06
    %v5576 = vadd.f32 %v5573, 1e-06
    %v5577 = vrsqrt.pop %v5574
    %v5578 = vrsqrt.pop %v5575
    %v5579 = vrsqrt.pop %v5576
    %v5580 = vmul.f32 %v5550, %v5577
    %v5581 = vmul.f32 %v5551, %v5577
    %v5582 = vmul.f32 %v5552, %v5578
    %v5583 = vmul.f32 %v5553, %v5578
    %v5584 = vmul.f32 %v5554, %v5579
    %v5585 = vmul.f32 %v5555, %v5579
    %v5587 = vlaneseq
    %v5588 = vshrl.u32 %v5587, 7
    %v5589 = vsub.s32 0, %v5588
    %v5590 = vrot.slane %v5535, %v5589
    %v5591 = vlaneseq
    %v5592 = vshrl.u32 %v5591, 7
    %v5593 = vsub.s32 1, %v5592
    %v5594 = vrot.slane %v5535, %v5593
    %v5597 = vmul.f32 %v5580, %v5590
    %v5598 = vmul.f32 %v5581, %v5594
    %v5599 = vmul.f32 %v5582, %v5590
    %v5600 = vmul.f32 %v5583, %v5594
    %v5601 = vmul.f32 %v5584, %v5590
    %v5602 = vmul.f32 %v5585, %v5594
    %v5604 = vlaneseq
    %v5605 = vshrl.u32 %v5604, 7
    %v5606 = vsub.s32 0, %v5605
    %v5607 = vrot.slane %v5537, %v5606
    %v5608 = vlaneseq
    %v5609 = vshrl.u32 %v5608, 7
    %v5610 = vsub.s32 1, %v5609
    %v5611 = vrot.slane %v5537, %v5610
    %v5614 = vadd.f32 %v5597, %v5607
    %v5615 = vadd.f32 %v5598, %v5611
    %v5616 = vadd.f32 %v5599, %v5607
    %v5617 = vadd.f32 %v5600, %v5611
    %v5618 = vadd.f32 %v5601, %v5607
    %v5619 = vadd.f32 %v5602, %v5611
    %v5620 = vpack.c.bf16 %v2992, %v2992
    %v5621 = vpack.c.bf16 %v5616, %v5614
    %v5622 = vpack.c.bf16 %v5617, %v5615
    %v5623 = vpack.c.bf16 %v5618, %v5618
    %v5624 = vpack.c.bf16 %v5619, %v5619
    %v5626 = vsel %vm3924, %v5620, 0
    %v5629 = vsel %vm3972, %v5623, 0
    %v5632 = vsel %vm3972, %v5624, 0
    %5634 = vmatprep.subr.bf16.mxu0 %v5622
    %5635 = vmatpush1.bf16.msra.mxu0 %v5621
    %5636 = vmatprep.subr.bf16.mxu0 %v5632
    %5637 = vmatpush1.bf16.msra.mxu0 %v5629
    %5638 = vmatprep.subr.bf16.mxu0 0
    %5639 = vmatpush1.bf16.msra.mxu0 0
    %5640 = vmatprep.subr.bf16.mxu0 0
    %5641 = vmatpush1.bf16.msra.mxu0 0
    %5642 = vmatprep.subr.bf16.mxu0 0
    %5643 = vmatpush1.bf16.msra.mxu0 0
    %5644 = vmatprep.subr.bf16.mxu0 0
    %5645 = vmatpush1.bf16.msra.mxu0 0
    %5646 = vmatprep.subr.bf16.mxu0 0
    %5647 = vmatpush1.bf16.msra.mxu0 0
    %5648 = vmatprep.subr.bf16.mxu0 0
    %5649 = vmatpush1.bf16.msra.mxu0 0
    %5650 = vmatprep.subr.bf16.mxu0 0
    %5651 = vmatpush1.bf16.msra.mxu0 0
    %5652 = vmatprep.subr.bf16.mxu0 0
    %5653 = vmatpush1.bf16.msra.mxu0 0
    %5654 = vmatprep.subr.bf16.mxu0 0
    %5655 = vmatpush1.bf16.msra.mxu0 0
    %5656 = vmatprep.subr.bf16.mxu0 0
    %5657 = vmatpush1.bf16.msra.mxu0 0
    %5658 = vmatprep.subr.bf16.mxu0 0
    %5659 = vmatpush1.bf16.msra.mxu0 0
    %5660 = vmatprep.subr.bf16.mxu0 0
    %5661 = vmatpush1.bf16.msra.mxu0 0
    %5662 = vmatprep.subr.bf16.mxu0 0
    %5663 = vmatpush1.bf16.msra.mxu0 0
    %5664 = vmatprep.subr.bf16.mxu0 0
    %5665 = vmatpush1.bf16.msra.mxu0 0
    %5666 = vmatprep.mubr.bf16.mxu0 0
    %5667 = vmatmul.mubr.bf16.gmra.mrb[0].mxu0 %v5626
    %v5668 = vpop.f32.mrb[0].mxu0
    %v5669 = vadd.f32 0.0, %v5668
    %v5670 = vpop.f32.mrb[0].mxu0
    %v5671 = vadd.f32 0.0, %v5670
    %v5672 = vpop.f32.mrb[0].mxu0
    %v5673 = vpop.f32.mrb[0].mxu0
    %5674 = vdwg.mxu0
    %v5675 = vld [vmem:[%s4 + $0xb80] sm:$0xff]
    %v5676 = vld [vmem:[%s4 + $0xb88] sm:$0xff]
    %v5677 = vld [vmem:[%s4 + $0xb90] sm:$0xff]
    %v5678 = vld [vmem:[%s4 + $0xb98] sm:$0xff]
    %v5679 = vld [vmem:[%s4 + $0xba0] sm:$0xff]
    %v5680 = vld [vmem:[%s4 + $0xba8] sm:$0xff]
    %v5681 = vld [vmem:[%s4 + $0xbb0] sm:$0xff]
    %v5682 = vld [vmem:[%s4 + $0xbb8] sm:$0xff]
    %v5683 = vld [vmem:[%s4 + $0xbc0] sm:$0xff]
    %v5684 = vld [vmem:[%s4 + $0xbc8] sm:$0xff]
    %v5685 = vld [vmem:[%s4 + $0xbd0] sm:$0xff]
    %v5686 = vld [vmem:[%s4 + $0xbd8] sm:$0xff]
    %v5687 = vld [vmem:[%s4 + $0xbe0] sm:$0xff]
    %v5688 = vld [vmem:[%s4 + $0xbe8] sm:$0xff]
    %v5689 = vld [vmem:[%s4 + $0xbf0] sm:$0xff]
    %v5690 = vld [vmem:[%s4 + $0xbf8] sm:$0xff]
    %v5691 = vld [vmem:[%s4 + $0xc00] sm:$0xff]
    %v5692 = vld [vmem:[%s4 + $0xc08] sm:$0xff]
    %v5693 = vld [vmem:[%s4 + $0xc10] sm:$0xff]
    %v5694 = vld [vmem:[%s4 + $0xc18] sm:$0xff]
    %v5695 = vld [vmem:[%s4 + $0xc20] sm:$0xff]
    %v5696 = vld [vmem:[%s4 + $0xc28] sm:$0xff]
    %v5697 = vld [vmem:[%s4 + $0xc30] sm:$0xff]
    %v5698 = vld [vmem:[%s4 + $0xc38] sm:$0xff]
    %v5699 = vld [vmem:[%s4 + $0xc40] sm:$0xff]
    %v5700 = vld [vmem:[%s4 + $0xc48] sm:$0xff]
    %v5701 = vld [vmem:[%s4 + $0xc50] sm:$0xff]
    %v5702 = vld [vmem:[%s4 + $0xc58] sm:$0xff]
    %v5703 = vld [vmem:[%s4 + $0xc60] sm:$0xff]
    %v5704 = vld [vmem:[%s4 + $0xc68] sm:$0xff]
    %v5705 = vld [vmem:[%s4 + $0xc70] sm:$0xff]
    %v5706 = vld [vmem:[%s4 + $0xc78] sm:$0xff]
    %s5707 = scalar_lea.vmem %s3, 97
    %v5708 = vld [vmem:[%s5707] ss:$8 sm:$0x3]
    %v5709 = vld [vmem:[%s4 + $0xc80] sm:$0xff]
    %v5710 = vld [vmem:[%s4 + $0xc88] sm:$0xff]
    %v5711 = vld [vmem:[%s4 + $0xc90] sm:$0xff]
    %v5712 = vld [vmem:[%s4 + $0xc98] sm:$0xff]
    %v5713 = vld [vmem:[%s4 + $0xca0] sm:$0xff]
    %v5714 = vld [vmem:[%s4 + $0xca8] sm:$0xff]
    %v5715 = vld [vmem:[%s4 + $0xcb0] sm:$0xff]
    %v5716 = vld [vmem:[%s4 + $0xcb8] sm:$0xff]
    %v5717 = vld [vmem:[%s4 + $0xcc0] sm:$0xff]
    %v5718 = vld [vmem:[%s4 + $0xcc8] sm:$0xff]
    %v5719 = vld [vmem:[%s4 + $0xcd0] sm:$0xff]
    %v5720 = vld [vmem:[%s4 + $0xcd8] sm:$0xff]
    %v5721 = vld [vmem:[%s4 + $0xce0] sm:$0xff]
    %v5722 = vld [vmem:[%s4 + $0xce8] sm:$0xff]
    %v5723 = vld [vmem:[%s4 + $0xcf0] sm:$0xff]
    %v5724 = vld [vmem:[%s4 + $0xcf8] sm:$0xff]
    %v5725 = vld [vmem:[%s4 + $0xd00] sm:$0xff]
    %v5726 = vld [vmem:[%s4 + $0xd08] sm:$0xff]
    %v5727 = vld [vmem:[%s4 + $0xd10] sm:$0xff]
    %v5728 = vld [vmem:[%s4 + $0xd18] sm:$0xff]
    %v5729 = vld [vmem:[%s4 + $0xd20] sm:$0xff]
    %v5730 = vld [vmem:[%s4 + $0xd28] sm:$0xff]
    %v5731 = vld [vmem:[%s4 + $0xd30] sm:$0xff]
    %v5732 = vld [vmem:[%s4 + $0xd38] sm:$0xff]
    %v5733 = vld [vmem:[%s4 + $0xd40] sm:$0xff]
    %v5734 = vld [vmem:[%s4 + $0xd48] sm:$0xff]
    %v5735 = vld [vmem:[%s4 + $0xd50] sm:$0xff]
    %v5736 = vld [vmem:[%s4 + $0xd58] sm:$0xff]
    %v5737 = vld [vmem:[%s4 + $0xd60] sm:$0xff]
    %v5738 = vld [vmem:[%s4 + $0xd68] sm:$0xff]
    %v5739 = vld [vmem:[%s4 + $0xd70] sm:$0xff]
    %v5740 = vld [vmem:[%s4 + $0xd78] sm:$0xff]
    %s5741 = scalar_lea.vmem %s3, 98
    %v5742 = vld [vmem:[%s5741] ss:$8 sm:$0x3]
    %v5743 = vpack.c.bf16 %v5669, %v5669
    %v5744 = vpack.c.bf16 %v5671, %v5671
    %v5746 = vlaneseq
    %v5747 = vshrl.u32 %v5746, 7
    %v5748 = vsub.s32 0, %v5747
    %v5749 = vrot.slane %v5708, %v5748
    %v5750 = vlaneseq
    %v5751 = vshrl.u32 %v5750, 7
    %v5752 = vsub.s32 1, %v5751
    %v5753 = vrot.slane %v5708, %v5752
    %v5788 = vunpack.c.l.b16 %v5675
    %v5789 = vunpack.c.h.b16 %v5675
    %v5790 = vunpack.c.l.b16 %v5676
    %v5791 = vunpack.c.h.b16 %v5676
    %v5792 = vunpack.c.l.b16 %v5677
    %v5793 = vunpack.c.h.b16 %v5677
    %v5794 = vunpack.c.l.b16 %v5678
    %v5795 = vunpack.c.h.b16 %v5678
    %v5796 = vunpack.c.l.b16 %v5679
    %v5797 = vunpack.c.h.b16 %v5679
    %v5798 = vunpack.c.l.b16 %v5680
    %v5799 = vunpack.c.h.b16 %v5680
    %v5800 = vunpack.c.l.b16 %v5681
    %v5801 = vunpack.c.h.b16 %v5681
    %v5802 = vunpack.c.l.b16 %v5682
    %v5803 = vunpack.c.h.b16 %v5682
    %v5804 = vunpack.c.l.b16 %v5683
    %v5805 = vunpack.c.h.b16 %v5683
    %v5806 = vunpack.c.l.b16 %v5684
    %v5807 = vunpack.c.h.b16 %v5684
    %v5808 = vunpack.c.l.b16 %v5685
    %v5809 = vunpack.c.h.b16 %v5685
    %v5810 = vunpack.c.l.b16 %v5686
    %v5811 = vunpack.c.h.b16 %v5686
    %v5812 = vunpack.c.l.b16 %v5687
    %v5813 = vunpack.c.h.b16 %v5687
    %v5814 = vunpack.c.l.b16 %v5688
    %v5815 = vunpack.c.h.b16 %v5688
    %v5816 = vunpack.c.l.b16 %v5689
    %v5817 = vunpack.c.h.b16 %v5689
    %v5818 = vunpack.c.l.b16 %v5690
    %v5819 = vunpack.c.h.b16 %v5690
    %v5820 = vunpack.c.l.b16 %v5691
    %v5821 = vunpack.c.h.b16 %v5691
    %v5822 = vunpack.c.l.b16 %v5692
    %v5823 = vunpack.c.h.b16 %v5692
    %v5824 = vunpack.c.l.b16 %v5693
    %v5825 = vunpack.c.h.b16 %v5693
    %v5826 = vunpack.c.l.b16 %v5694
    %v5827 = vunpack.c.h.b16 %v5694
    %v5828 = vunpack.c.l.b16 %v5695
    %v5829 = vunpack.c.h.b16 %v5695
    %v5830 = vunpack.c.l.b16 %v5696
    %v5831 = vunpack.c.h.b16 %v5696
    %v5832 = vunpack.c.l.b16 %v5697
    %v5833 = vunpack.c.h.b16 %v5697
    %v5834 = vunpack.c.l.b16 %v5698
    %v5835 = vunpack.c.h.b16 %v5698
    %v5836 = vunpack.c.l.b16 %v5699
    %v5837 = vunpack.c.h.b16 %v5699
    %v5838 = vunpack.c.l.b16 %v5700
    %v5839 = vunpack.c.h.b16 %v5700
    %v5840 = vunpack.c.l.b16 %v5701
    %v5841 = vunpack.c.h.b16 %v5701
    %v5842 = vunpack.c.l.b16 %v5702
    %v5843 = vunpack.c.h.b16 %v5702
    %v5844 = vunpack.c.l.b16 %v5703
    %v5845 = vunpack.c.h.b16 %v5703
    %v5846 = vunpack.c.l.b16 %v5704
    %v5847 = vunpack.c.h.b16 %v5704
    %v5848 = vunpack.c.l.b16 %v5705
    %v5849 = vunpack.c.h.b16 %v5705
    %v5850 = vunpack.c.l.b16 %v5706
    %v5851 = vunpack.c.h.b16 %v5706
    %v5852 = vpack.c.b16 %v5790, %v5788
    %v5853 = vpack.c.b16 %v5791, %v5789
    %v5854 = vpack.c.b16 %v5794, %v5792
    %v5855 = vpack.c.b16 %v5795, %v5793
    %v5856 = vpack.c.b16 %v5798, %v5796
    %v5857 = vpack.c.b16 %v5799, %v5797
    %v5858 = vpack.c.b16 %v5802, %v5800
    %v5859 = vpack.c.b16 %v5803, %v5801
    %v5860 = vpack.c.b16 %v5806, %v5804
    %v5861 = vpack.c.b16 %v5807, %v5805
    %v5862 = vpack.c.b16 %v5810, %v5808
    %v5863 = vpack.c.b16 %v5811, %v5809
    %v5864 = vpack.c.b16 %v5814, %v5812
    %v5865 = vpack.c.b16 %v5815, %v5813
    %v5866 = vpack.c.b16 %v5818, %v5816
    %v5867 = vpack.c.b16 %v5819, %v5817
    %v5868 = vpack.c.b16 %v5822, %v5820
    %v5869 = vpack.c.b16 %v5823, %v5821
    %v5870 = vpack.c.b16 %v5826, %v5824
    %v5871 = vpack.c.b16 %v5827, %v5825
    %v5872 = vpack.c.b16 %v5830, %v5828
    %v5873 = vpack.c.b16 %v5831, %v5829
    %v5874 = vpack.c.b16 %v5834, %v5832
    %v5875 = vpack.c.b16 %v5835, %v5833
    %v5876 = vpack.c.b16 %v5838, %v5836
    %v5877 = vpack.c.b16 %v5839, %v5837
    %v5878 = vpack.c.b16 %v5842, %v5840
    %v5879 = vpack.c.b16 %v5843, %v5841
    %v5880 = vpack.c.b16 %v5846, %v5844
    %v5881 = vpack.c.b16 %v5847, %v5845
    %v5882 = vpack.c.b16 %v5850, %v5848
    %v5883 = vpack.c.b16 %v5851, %v5849
    %5916 = vmatprep.subr.bf16.mxu0 %v5853
    %5917 = vmatpush1.bf16.msra.mxu0 %v5852
    %5918 = vmatprep.subr.bf16.mxu0 %v5855
    %5919 = vmatpush1.bf16.msra.mxu0 %v5854
    %5920 = vmatprep.subr.bf16.mxu0 %v5857
    %5921 = vmatpush1.bf16.msra.mxu0 %v5856
    %5922 = vmatprep.subr.bf16.mxu0 %v5859
    %5923 = vmatpush1.bf16.msra.mxu0 %v5858
    %5924 = vmatprep.subr.bf16.mxu0 %v5861
    %5925 = vmatpush1.bf16.msra.mxu0 %v5860
    %5926 = vmatprep.subr.bf16.mxu0 %v5863
    %5927 = vmatpush1.bf16.msra.mxu0 %v5862
    %5928 = vmatprep.subr.bf16.mxu0 %v5865
    %5929 = vmatpush1.bf16.msra.mxu0 %v5864
    %5930 = vmatprep.subr.bf16.mxu0 %v5867
    %5931 = vmatpush1.bf16.msra.mxu0 %v5866
    %5932 = vmatprep.subr.bf16.mxu0 %v5869
    %5933 = vmatpush1.bf16.msra.mxu0 %v5868
    %5934 = vmatprep.subr.bf16.mxu0 %v5871
    %5935 = vmatpush1.bf16.msra.mxu0 %v5870
    %5936 = vmatprep.subr.bf16.mxu0 %v5873
    %5937 = vmatpush1.bf16.msra.mxu0 %v5872
    %5938 = vmatprep.subr.bf16.mxu0 %v5875
    %5939 = vmatpush1.bf16.msra.mxu0 %v5874
    %5940 = vmatprep.subr.bf16.mxu0 %v5877
    %5941 = vmatpush1.bf16.msra.mxu0 %v5876
    %5942 = vmatprep.subr.bf16.mxu0 %v5879
    %5943 = vmatpush1.bf16.msra.mxu0 %v5878
    %5944 = vmatprep.subr.bf16.mxu0 %v5881
    %5945 = vmatpush1.bf16.msra.mxu0 %v5880
    %5946 = vmatprep.subr.bf16.mxu0 %v5883
    %5947 = vmatpush1.bf16.msra.mxu0 %v5882
    %5948 = vmatprep.mubr.bf16.mxu0 %v5744
    %5949 = vmatmul.mubr.bf16.gmra.mrb[0].mxu0 %v5743
    %v5950 = vpop.f32.mrb[0].mxu0
    %v5951 = vadd.f32 %v5749, %v5950
    %v5952 = vpop.f32.mrb[0].mxu0
    %v5953 = vadd.f32 %v5753, %v5952
    %v5954 = vpop.f32.mrb[0].mxu0
    %v5955 = vpop.f32.mrb[0].mxu0
    %5956 = vdwg.mxu0
    %v5957 = vpack.c.bf16 %v5951, %v5951
    %v5958 = vpack.c.bf16 %v5953, %v5953
    %v5960 = vlaneseq
    %v5961 = vshrl.u32 %v5960, 7
    %v5962 = vsub.s32 0, %v5961
    %v5963 = vrot.slane %v5742, %v5962
    %v5964 = vlaneseq
    %v5965 = vshrl.u32 %v5964, 7
    %v5966 = vsub.s32 1, %v5965
    %v5967 = vrot.slane %v5742, %v5966
    %v6002 = vunpack.c.l.b16 %v5709
    %v6003 = vunpack.c.h.b16 %v5709
    %v6004 = vunpack.c.l.b16 %v5710
    %v6005 = vunpack.c.h.b16 %v5710
    %v6006 = vunpack.c.l.b16 %v5711
    %v6007 = vunpack.c.h.b16 %v5711
    %v6008 = vunpack.c.l.b16 %v5712
    %v6009 = vunpack.c.h.b16 %v5712
    %v6010 = vunpack.c.l.b16 %v5713
    %v6011 = vunpack.c.h.b16 %v5713
    %v6012 = vunpack.c.l.b16 %v5714
    %v6013 = vunpack.c.h.b16 %v5714
    %v6014 = vunpack.c.l.b16 %v5715
    %v6015 = vunpack.c.h.b16 %v5715
    %v6016 = vunpack.c.l.b16 %v5716
    %v6017 = vunpack.c.h.b16 %v5716
    %v6018 = vunpack.c.l.b16 %v5717
    %v6019 = vunpack.c.h.b16 %v5717
    %v6020 = vunpack.c.l.b16 %v5718
    %v6021 = vunpack.c.h.b16 %v5718
    %v6022 = vunpack.c.l.b16 %v5719
    %v6023 = vunpack.c.h.b16 %v5719
    %v6024 = vunpack.c.l.b16 %v5720
    %v6025 = vunpack.c.h.b16 %v5720
    %v6026 = vunpack.c.l.b16 %v5721
    %v6027 = vunpack.c.h.b16 %v5721
    %v6028 = vunpack.c.l.b16 %v5722
    %v6029 = vunpack.c.h.b16 %v5722
    %v6030 = vunpack.c.l.b16 %v5723
    %v6031 = vunpack.c.h.b16 %v5723
    %v6032 = vunpack.c.l.b16 %v5724
    %v6033 = vunpack.c.h.b16 %v5724
    %v6034 = vunpack.c.l.b16 %v5725
    %v6035 = vunpack.c.h.b16 %v5725
    %v6036 = vunpack.c.l.b16 %v5726
    %v6037 = vunpack.c.h.b16 %v5726
    %v6038 = vunpack.c.l.b16 %v5727
    %v6039 = vunpack.c.h.b16 %v5727
    %v6040 = vunpack.c.l.b16 %v5728
    %v6041 = vunpack.c.h.b16 %v5728
    %v6042 = vunpack.c.l.b16 %v5729
    %v6043 = vunpack.c.h.b16 %v5729
    %v6044 = vunpack.c.l.b16 %v5730
    %v6045 = vunpack.c.h.b16 %v5730
    %v6046 = vunpack.c.l.b16 %v5731
    %v6047 = vunpack.c.h.b16 %v5731
    %v6048 = vunpack.c.l.b16 %v5732
    %v6049 = vunpack.c.h.b16 %v5732
    %v6050 = vunpack.c.l.b16 %v5733
    %v6051 = vunpack.c.h.b16 %v5733
    %v6052 = vunpack.c.l.b16 %v5734
    %v6053 = vunpack.c.h.b16 %v5734
    %v6054 = vunpack.c.l.b16 %v5735
    %v6055 = vunpack.c.h.b16 %v5735
    %v6056 = vunpack.c.l.b16 %v5736
    %v6057 = vunpack.c.h.b16 %v5736
    %v6058 = vunpack.c.l.b16 %v5737
    %v6059 = vunpack.c.h.b16 %v5737
    %v6060 = vunpack.c.l.b16 %v5738
    %v6061 = vunpack.c.h.b16 %v5738
    %v6062 = vunpack.c.l.b16 %v5739
    %v6063 = vunpack.c.h.b16 %v5739
    %v6064 = vunpack.c.l.b16 %v5740
    %v6065 = vunpack.c.h.b16 %v5740
    %v6066 = vpack.c.b16 %v6004, %v6002
    %v6067 = vpack.c.b16 %v6005, %v6003
    %v6068 = vpack.c.b16 %v6008, %v6006
    %v6069 = vpack.c.b16 %v6009, %v6007
    %v6070 = vpack.c.b16 %v6012, %v6010
    %v6071 = vpack.c.b16 %v6013, %v6011
    %v6072 = vpack.c.b16 %v6016, %v6014
    %v6073 = vpack.c.b16 %v6017, %v6015
    %v6074 = vpack.c.b16 %v6020, %v6018
    %v6075 = vpack.c.b16 %v6021, %v6019
    %v6076 = vpack.c.b16 %v6024, %v6022
    %v6077 = vpack.c.b16 %v6025, %v6023
    %v6078 = vpack.c.b16 %v6028, %v6026
    %v6079 = vpack.c.b16 %v6029, %v6027
    %v6080 = vpack.c.b16 %v6032, %v6030
    %v6081 = vpack.c.b16 %v6033, %v6031
    %v6082 = vpack.c.b16 %v6036, %v6034
    %v6083 = vpack.c.b16 %v6037, %v6035
    %v6084 = vpack.c.b16 %v6040, %v6038
    %v6085 = vpack.c.b16 %v6041, %v6039
    %v6086 = vpack.c.b16 %v6044, %v6042
    %v6087 = vpack.c.b16 %v6045, %v6043
    %v6088 = vpack.c.b16 %v6048, %v6046
    %v6089 = vpack.c.b16 %v6049, %v6047
    %v6090 = vpack.c.b16 %v6052, %v6050
    %v6091 = vpack.c.b16 %v6053, %v6051
    %v6092 = vpack.c.b16 %v6056, %v6054
    %v6093 = vpack.c.b16 %v6057, %v6055
    %v6094 = vpack.c.b16 %v6060, %v6058
    %v6095 = vpack.c.b16 %v6061, %v6059
    %v6096 = vpack.c.b16 %v6064, %v6062
    %v6097 = vpack.c.b16 %v6065, %v6063
    %6130 = vmatprep.subr.bf16.mxu0 %v6067
    %6131 = vmatpush1.bf16.msra.mxu0 %v6066
    %6132 = vmatprep.subr.bf16.mxu0 %v6069
    %6133 = vmatpush1.bf16.msra.mxu0 %v6068
    %6134 = vmatprep.subr.bf16.mxu0 %v6071
    %6135 = vmatpush1.bf16.msra.mxu0 %v6070
    %6136 = vmatprep.subr.bf16.mxu0 %v6073
    %6137 = vmatpush1.bf16.msra.mxu0 %v6072
    %6138 = vmatprep.subr.bf16.mxu0 %v6075
    %6139 = vmatpush1.bf16.msra.mxu0 %v6074
    %6140 = vmatprep.subr.bf16.mxu0 %v6077
    %6141 = vmatpush1.bf16.msra.mxu0 %v6076
    %6142 = vmatprep.subr.bf16.mxu0 %v6079
    %6143 = vmatpush1.bf16.msra.mxu0 %v6078
    %6144 = vmatprep.subr.bf16.mxu0 %v6081
    %6145 = vmatpush1.bf16.msra.mxu0 %v6080
    %6146 = vmatprep.subr.bf16.mxu0 %v6083
    %6147 = vmatpush1.bf16.msra.mxu0 %v6082
    %6148 = vmatprep.subr.bf16.mxu0 %v6085
    %6149 = vmatpush1.bf16.msra.mxu0 %v6084
    %6150 = vmatprep.subr.bf16.mxu0 %v6087
    %6151 = vmatpush1.bf16.msra.mxu0 %v6086
    %6152 = vmatprep.subr.bf16.mxu0 %v6089
    %6153 = vmatpush1.bf16.msra.mxu0 %v6088
    %6154 = vmatprep.subr.bf16.mxu0 %v6091
    %6155 = vmatpush1.bf16.msra.mxu0 %v6090
    %6156 = vmatprep.subr.bf16.mxu0 %v6093
    %6157 = vmatpush1.bf16.msra.mxu0 %v6092
    %6158 = vmatprep.subr.bf16.mxu0 %v6095
    %6159 = vmatpush1.bf16.msra.mxu0 %v6094
    %6160 = vmatprep.subr.bf16.mxu0 %v6097
    %6161 = vmatpush1.bf16.msra.mxu0 %v6096
    %6162 = vmatprep.mubr.bf16.mxu0 %v5958
    %6163 = vmatmul.mubr.bf16.gmra.mrb[0].mxu0 %v5957
    %v6164 = vpop.f32.mrb[0].mxu0
    %v6165 = vadd.f32 %v5963, %v6164
    %v6166 = vpop.f32.mrb[0].mxu0
    %v6167 = vadd.f32 %v5967, %v6166
    %v6168 = vpop.f32.mrb[0].mxu0
    %v6169 = vpop.f32.mrb[0].mxu0
    %6170 = vdwg.mxu0
    %v6171 = vxor.u32 %v6165, 2147483648
    %v6172 = vxor.u32 %v6167, 2147483648
    %v6173 = vmul.f32 %v6171, 1.442695
    %v6174 = vpow.pop %v6173
    %v6175 = vmul.f32 %v6172, 1.442695
    %v6176 = vpow.pop %v6175
    %v6177 = vadd.f32 %v6174, 1.0
    %v6178 = vadd.f32 %v6176, 1.0
    %v6179 = vrcp.pop %v6177
    %v6180 = vmul.f32 1.0, %v6179
    %v6181 = vrcp.pop %v6178
    %v6182 = vmul.f32 1.0, %v6181
    %v6183 = vmul.f32 %v5951, %v6180
    %v6184 = vmul.f32 %v5953, %v6182
    %v6185 = vmul.f32 %v6183, %v6183
    %v6186 = vmul.f32 %v6184, %v6184
    %vm6187 = vcmask 1041408
    %v6188 = vsel %vm6187, %v6185, 0.0
    %v6189 = vsel %vm6187, %v6186, 0.0
    %v6190 = vadd.f32 %v6188, %v6189
    %6191 = vadd.xlane.f32.xlu0 %v6190
    %v6192 = vpop.xlane.xlu0 %6191
    %v6193 = vadd.f32 %v6192, 1e-12
    %v6194 = vrsqrt.pop %v6193
    %v6195 = vmul.f32 %v6183, %v6194
    %v6196 = vmul.f32 %v6184, %v6194
    %v6197 = vadd.f32 %v6195, 0.0
    %v6198 = vadd.f32 %v6196, 0.0
    %v6199 = vld [vmem:[%s4 + $0xd80] sm:$0xff]
    %v6200 = vld [vmem:[%s4 + $0xd88] sm:$0xff]
    %v6201 = vld [vmem:[%s4 + $0xd90] sm:$0xff]
    %v6202 = vld [vmem:[%s4 + $0xd98] sm:$0xff]
    %v6203 = vld [vmem:[%s4 + $0xda0] sm:$0xff]
    %v6204 = vld [vmem:[%s4 + $0xda8] sm:$0xff]
    %v6205 = vld [vmem:[%s4 + $0xdb0] sm:$0xff]
    %v6206 = vld [vmem:[%s4 + $0xdb8] sm:$0xff]
    %v6207 = vld [vmem:[%s4 + $0xdc0] sm:$0xff]
    %v6208 = vld [vmem:[%s4 + $0xdc8] sm:$0xff]
    %v6209 = vld [vmem:[%s4 + $0xdd0] sm:$0xff]
    %v6210 = vld [vmem:[%s4 + $0xdd8] sm:$0xff]
    %v6211 = vld [vmem:[%s4 + $0xde0] sm:$0xff]
    %v6212 = vld [vmem:[%s4 + $0xde8] sm:$0xff]
    %v6213 = vld [vmem:[%s4 + $0xdf0] sm:$0xff]
    %v6214 = vld [vmem:[%s4 + $0xdf8] sm:$0xff]
    %v6215 = vld [vmem:[%s4 + $0xe00] sm:$0xff]
    %v6216 = vld [vmem:[%s4 + $0xe08] sm:$0xff]
    %v6217 = vld [vmem:[%s4 + $0xe10] sm:$0xff]
    %v6218 = vld [vmem:[%s4 + $0xe18] sm:$0xff]
    %v6219 = vld [vmem:[%s4 + $0xe20] sm:$0xff]
    %v6220 = vld [vmem:[%s4 + $0xe28] sm:$0xff]
    %v6221 = vld [vmem:[%s4 + $0xe30] sm:$0xff]
    %v6222 = vld [vmem:[%s4 + $0xe38] sm:$0xff]
    %v6223 = vld [vmem:[%s4 + $0xe40] sm:$0xff]
    %v6224 = vld [vmem:[%s4 + $0xe48] sm:$0xff]
    %v6225 = vld [vmem:[%s4 + $0xe50] sm:$0xff]
    %v6226 = vld [vmem:[%s4 + $0xe58] sm:$0xff]
    %v6227 = vld [vmem:[%s4 + $0xe60] sm:$0xff]
    %v6228 = vld [vmem:[%s4 + $0xe68] sm:$0xff]
    %v6229 = vld [vmem:[%s4 + $0xe70] sm:$0xff]
    %v6230 = vld [vmem:[%s4 + $0xe78] sm:$0xff]
    %s6231 = scalar_lea.vmem %s3, 99
    %v6232 = vld [vmem:[%s6231] ss:$8 sm:$0x3]
    %v6233 = vld [vmem:[%s4 + $0xe80] sm:$0xff]
    %v6234 = vld [vmem:[%s4 + $0xe88] sm:$0xff]
    %v6235 = vld [vmem:[%s4 + $0xe90] sm:$0xff]
    %v6236 = vld [vmem:[%s4 + $0xe98] sm:$0xff]
    %v6237 = vld [vmem:[%s4 + $0xea0] sm:$0xff]
    %v6238 = vld [vmem:[%s4 + $0xea8] sm:$0xff]
    %v6239 = vld [vmem:[%s4 + $0xeb0] sm:$0xff]
    %v6240 = vld [vmem:[%s4 + $0xeb8] sm:$0xff]
    %v6241 = vld [vmem:[%s4 + $0xec0] sm:$0xff]
    %v6242 = vld [vmem:[%s4 + $0xec8] sm:$0xff]
    %v6243 = vld [vmem:[%s4 + $0xed0] sm:$0xff]
    %v6244 = vld [vmem:[%s4 + $0xed8] sm:$0xff]
    %v6245 = vld [vmem:[%s4 + $0xee0] sm:$0xff]
    %v6246 = vld [vmem:[%s4 + $0xee8] sm:$0xff]
    %v6247 = vld [vmem:[%s4 + $0xef0] sm:$0xff]
    %v6248 = vld [vmem:[%s4 + $0xef8] sm:$0xff]
    %v6249 = vld [vmem:[%s4 + $0xf00] sm:$0xff]
    %v6250 = vld [vmem:[%s4 + $0xf08] sm:$0xff]
    %v6251 = vld [vmem:[%s4 + $0xf10] sm:$0xff]
    %v6252 = vld [vmem:[%s4 + $0xf18] sm:$0xff]
    %v6253 = vld [vmem:[%s4 + $0xf20] sm:$0xff]
    %v6254 = vld [vmem:[%s4 + $0xf28] sm:$0xff]
    %v6255 = vld [vmem:[%s4 + $0xf30] sm:$0xff]
    %v6256 = vld [vmem:[%s4 + $0xf38] sm:$0xff]
    %v6257 = vld [vmem:[%s4 + $0xf40] sm:$0xff]
    %v6258 = vld [vmem:[%s4 + $0xf48] sm:$0xff]
    %v6259 = vld [vmem:[%s4 + $0xf50] sm:$0xff]
    %v6260 = vld [vmem:[%s4 + $0xf58] sm:$0xff]
    %v6261 = vld [vmem:[%s4 + $0xf60] sm:$0xff]
    %v6262 = vld [vmem:[%s4 + $0xf68] sm:$0xff]
    %v6263 = vld [vmem:[%s4 + $0xf70] sm:$0xff]
    %v6264 = vld [vmem:[%s4 + $0xf78] sm:$0xff]
    %s6265 = scalar_lea.vmem %s3, 100
    %v6266 = vld [vmem:[%s6265] ss:$8 sm:$0x3]
    %v6268 = vlaneseq
    %v6269 = vshrl.u32 %v6268, 7
    %v6270 = vsub.s32 0, %v6269
    %v6271 = vrot.slane %v6232, %v6270
    %v6272 = vlaneseq
    %v6273 = vshrl.u32 %v6272, 7
    %v6274 = vsub.s32 1, %v6273
    %v6275 = vrot.slane %v6232, %v6274
    %v6280 = vrot.slane %v5743, 1
    %v6281 = vrot.slane %v5744, 1
    %v6316 = vunpack.c.l.b16 %v6199
    %v6317 = vunpack.c.h.b16 %v6199
    %v6318 = vunpack.c.l.b16 %v6200
    %v6319 = vunpack.c.h.b16 %v6200
    %v6320 = vunpack.c.l.b16 %v6201
    %v6321 = vunpack.c.h.b16 %v6201
    %v6322 = vunpack.c.l.b16 %v6202
    %v6323 = vunpack.c.h.b16 %v6202
    %v6324 = vunpack.c.l.b16 %v6203
    %v6325 = vunpack.c.h.b16 %v6203
    %v6326 = vunpack.c.l.b16 %v6204
    %v6327 = vunpack.c.h.b16 %v6204
    %v6328 = vunpack.c.l.b16 %v6205
    %v6329 = vunpack.c.h.b16 %v6205
    %v6330 = vunpack.c.l.b16 %v6206
    %v6331 = vunpack.c.h.b16 %v6206
    %v6332 = vunpack.c.l.b16 %v6207
    %v6333 = vunpack.c.h.b16 %v6207
    %v6334 = vunpack.c.l.b16 %v6208
    %v6335 = vunpack.c.h.b16 %v6208
    %v6336 = vunpack.c.l.b16 %v6209
    %v6337 = vunpack.c.h.b16 %v6209
    %v6338 = vunpack.c.l.b16 %v6210
    %v6339 = vunpack.c.h.b16 %v6210
    %v6340 = vunpack.c.l.b16 %v6211
    %v6341 = vunpack.c.h.b16 %v6211
    %v6342 = vunpack.c.l.b16 %v6212
    %v6343 = vunpack.c.h.b16 %v6212
    %v6344 = vunpack.c.l.b16 %v6213
    %v6345 = vunpack.c.h.b16 %v6213
    %v6346 = vunpack.c.l.b16 %v6214
    %v6347 = vunpack.c.h.b16 %v6214
    %v6348 = vunpack.c.l.b16 %v6215
    %v6349 = vunpack.c.h.b16 %v6215
    %v6350 = vunpack.c.l.b16 %v6216
    %v6351 = vunpack.c.h.b16 %v6216
    %v6352 = vunpack.c.l.b16 %v6217
    %v6353 = vunpack.c.h.b16 %v6217
    %v6354 = vunpack.c.l.b16 %v6218
    %v6355 = vunpack.c.h.b16 %v6218
    %v6356 = vunpack.c.l.b16 %v6219
    %v6357 = vunpack.c.h.b16 %v6219
    %v6358 = vunpack.c.l.b16 %v6220
    %v6359 = vunpack.c.h.b16 %v6220
    %v6360 = vunpack.c.l.b16 %v6221
    %v6361 = vunpack.c.h.b16 %v6221
    %v6362 = vunpack.c.l.b16 %v6222
    %v6363 = vunpack.c.h.b16 %v6222
    %v6364 = vunpack.c.l.b16 %v6223
    %v6365 = vunpack.c.h.b16 %v6223
    %v6366 = vunpack.c.l.b16 %v6224
    %v6367 = vunpack.c.h.b16 %v6224
    %v6368 = vunpack.c.l.b16 %v6225
    %v6369 = vunpack.c.h.b16 %v6225
    %v6370 = vunpack.c.l.b16 %v6226
    %v6371 = vunpack.c.h.b16 %v6226
    %v6372 = vunpack.c.l.b16 %v6227
    %v6373 = vunpack.c.h.b16 %v6227
    %v6374 = vunpack.c.l.b16 %v6228
    %v6375 = vunpack.c.h.b16 %v6228
    %v6376 = vunpack.c.l.b16 %v6229
    %v6377 = vunpack.c.h.b16 %v6229
    %v6378 = vunpack.c.l.b16 %v6230
    %v6379 = vunpack.c.h.b16 %v6230
    %v6380 = vpack.c.b16 %v6318, %v6316
    %v6381 = vpack.c.b16 %v6319, %v6317
    %v6382 = vpack.c.b16 %v6322, %v6320
    %v6383 = vpack.c.b16 %v6323, %v6321
    %v6384 = vpack.c.b16 %v6326, %v6324
    %v6385 = vpack.c.b16 %v6327, %v6325
    %v6386 = vpack.c.b16 %v6330, %v6328
    %v6387 = vpack.c.b16 %v6331, %v6329
    %v6388 = vpack.c.b16 %v6334, %v6332
    %v6389 = vpack.c.b16 %v6335, %v6333
    %v6390 = vpack.c.b16 %v6338, %v6336
    %v6391 = vpack.c.b16 %v6339, %v6337
    %v6392 = vpack.c.b16 %v6342, %v6340
    %v6393 = vpack.c.b16 %v6343, %v6341
    %v6394 = vpack.c.b16 %v6346, %v6344
    %v6395 = vpack.c.b16 %v6347, %v6345
    %v6396 = vpack.c.b16 %v6350, %v6348
    %v6397 = vpack.c.b16 %v6351, %v6349
    %v6398 = vpack.c.b16 %v6354, %v6352
    %v6399 = vpack.c.b16 %v6355, %v6353
    %v6400 = vpack.c.b16 %v6358, %v6356
    %v6401 = vpack.c.b16 %v6359, %v6357
    %v6402 = vpack.c.b16 %v6362, %v6360
    %v6403 = vpack.c.b16 %v6363, %v6361
    %v6404 = vpack.c.b16 %v6366, %v6364
    %v6405 = vpack.c.b16 %v6367, %v6365
    %v6406 = vpack.c.b16 %v6370, %v6368
    %v6407 = vpack.c.b16 %v6371, %v6369
    %v6408 = vpack.c.b16 %v6374, %v6372
    %v6409 = vpack.c.b16 %v6375, %v6373
    %v6410 = vpack.c.b16 %v6378, %v6376
    %v6411 = vpack.c.b16 %v6379, %v6377
    %6444 = vmatprep.subr.bf16.mxu0 %v6381
    %6445 = vmatpush1.bf16.msra.mxu0 %v6380
    %6446 = vmatprep.subr.bf16.mxu0 %v6383
    %6447 = vmatpush1.bf16.msra.mxu0 %v6382
    %6448 = vmatprep.subr.bf16.mxu0 %v6385
    %6449 = vmatpush1.bf16.msra.mxu0 %v6384
    %6450 = vmatprep.subr.bf16.mxu0 %v6387
    %6451 = vmatpush1.bf16.msra.mxu0 %v6386
    %6452 = vmatprep.subr.bf16.mxu0 %v6389
    %6453 = vmatpush1.bf16.msra.mxu0 %v6388
    %6454 = vmatprep.subr.bf16.mxu0 %v6391
    %6455 = vmatpush1.bf16.msra.mxu0 %v6390
    %6456 = vmatprep.subr.bf16.mxu0 %v6393
    %6457 = vmatpush1.bf16.msra.mxu0 %v6392
    %6458 = vmatprep.subr.bf16.mxu0 %v6395
    %6459 = vmatpush1.bf16.msra.mxu0 %v6394
    %6460 = vmatprep.subr.bf16.mxu0 %v6397
    %6461 = vmatpush1.bf16.msra.mxu0 %v6396
    %6462 = vmatprep.subr.bf16.mxu0 %v6399
    %6463 = vmatpush1.bf16.msra.mxu0 %v6398
    %6464 = vmatprep.subr.bf16.mxu0 %v6401
    %6465 = vmatpush1.bf16.msra.mxu0 %v6400
    %6466 = vmatprep.subr.bf16.mxu0 %v6403
    %6467 = vmatpush1.bf16.msra.mxu0 %v6402
    %6468 = vmatprep.subr.bf16.mxu0 %v6405
    %6469 = vmatpush1.bf16.msra.mxu0 %v6404
    %6470 = vmatprep.subr.bf16.mxu0 %v6407
    %6471 = vmatpush1.bf16.msra.mxu0 %v6406
    %6472 = vmatprep.subr.bf16.mxu0 %v6409
    %6473 = vmatpush1.bf16.msra.mxu0 %v6408
    %6474 = vmatprep.subr.bf16.mxu0 %v6411
    %6475 = vmatpush1.bf16.msra.mxu0 %v6410
    %6476 = vmatprep.mubr.bf16.mxu0 %v6281
    %6477 = vmatmul.mubr.bf16.gmra.mrb[0].mxu0 %v6280
    %v6478 = vpop.f32.mrb[0].mxu0
    %v6479 = vadd.f32 %v6271, %v6478
    %v6480 = vpop.f32.mrb[0].mxu0
    %v6481 = vadd.f32 %v6275, %v6480
    %v6482 = vpop.f32.mrb[0].mxu0
    %v6483 = vpop.f32.mrb[0].mxu0
    %6484 = vdwg.mxu0
    %v6485 = vpack.c.bf16 %v6479, %v6479
    %v6486 = vpack.c.bf16 %v6481, %v6481
    %v6488 = vlaneseq
    %v6489 = vshrl.u32 %v6488, 7
    %v6490 = vsub.s32 0, %v6489
    %v6491 = vrot.slane %v6266, %v6490
    %v6492 = vlaneseq
    %v6493 = vshrl.u32 %v6492, 7
    %v6494 = vsub.s32 1, %v6493
    %v6495 = vrot.slane %v6266, %v6494
    %v6530 = vunpack.c.l.b16 %v6233
    %v6531 = vunpack.c.h.b16 %v6233
    %v6532 = vunpack.c.l.b16 %v6234
    %v6533 = vunpack.c.h.b16 %v6234
    %v6534 = vunpack.c.l.b16 %v6235
    %v6535 = vunpack.c.h.b16 %v6235
    %v6536 = vunpack.c.l.b16 %v6236
    %v6537 = vunpack.c.h.b16 %v6236
    %v6538 = vunpack.c.l.b16 %v6237
    %v6539 = vunpack.c.h.b16 %v6237
    %v6540 = vunpack.c.l.b16 %v6238
    %v6541 = vunpack.c.h.b16 %v6238
    %v6542 = vunpack.c.l.b16 %v6239
    %v6543 = vunpack.c.h.b16 %v6239
    %v6544 = vunpack.c.l.b16 %v6240
    %v6545 = vunpack.c.h.b16 %v6240
    %v6546 = vunpack.c.l.b16 %v6241
    %v6547 = vunpack.c.h.b16 %v6241
    %v6548 = vunpack.c.l.b16 %v6242
    %v6549 = vunpack.c.h.b16 %v6242
    %v6550 = vunpack.c.l.b16 %v6243
    %v6551 = vunpack.c.h.b16 %v6243
    %v6552 = vunpack.c.l.b16 %v6244
    %v6553 = vunpack.c.h.b16 %v6244
    %v6554 = vunpack.c.l.b16 %v6245
    %v6555 = vunpack.c.h.b16 %v6245
    %v6556 = vunpack.c.l.b16 %v6246
    %v6557 = vunpack.c.h.b16 %v6246
    %v6558 = vunpack.c.l.b16 %v6247
    %v6559 = vunpack.c.h.b16 %v6247
    %v6560 = vunpack.c.l.b16 %v6248
    %v6561 = vunpack.c.h.b16 %v6248
    %v6562 = vunpack.c.l.b16 %v6249
    %v6563 = vunpack.c.h.b16 %v6249
    %v6564 = vunpack.c.l.b16 %v6250
    %v6565 = vunpack.c.h.b16 %v6250
    %v6566 = vunpack.c.l.b16 %v6251
    %v6567 = vunpack.c.h.b16 %v6251
    %v6568 = vunpack.c.l.b16 %v6252
    %v6569 = vunpack.c.h.b16 %v6252
    %v6570 = vunpack.c.l.b16 %v6253
    %v6571 = vunpack.c.h.b16 %v6253
    %v6572 = vunpack.c.l.b16 %v6254
    %v6573 = vunpack.c.h.b16 %v6254
    %v6574 = vunpack.c.l.b16 %v6255
    %v6575 = vunpack.c.h.b16 %v6255
    %v6576 = vunpack.c.l.b16 %v6256
    %v6577 = vunpack.c.h.b16 %v6256
    %v6578 = vunpack.c.l.b16 %v6257
    %v6579 = vunpack.c.h.b16 %v6257
    %v6580 = vunpack.c.l.b16 %v6258
    %v6581 = vunpack.c.h.b16 %v6258
    %v6582 = vunpack.c.l.b16 %v6259
    %v6583 = vunpack.c.h.b16 %v6259
    %v6584 = vunpack.c.l.b16 %v6260
    %v6585 = vunpack.c.h.b16 %v6260
    %v6586 = vunpack.c.l.b16 %v6261
    %v6587 = vunpack.c.h.b16 %v6261
    %v6588 = vunpack.c.l.b16 %v6262
    %v6589 = vunpack.c.h.b16 %v6262
    %v6590 = vunpack.c.l.b16 %v6263
    %v6591 = vunpack.c.h.b16 %v6263
    %v6592 = vunpack.c.l.b16 %v6264
    %v6593 = vunpack.c.h.b16 %v6264
    %v6594 = vpack.c.b16 %v6532, %v6530
    %v6595 = vpack.c.b16 %v6533, %v6531
    %v6596 = vpack.c.b16 %v6536, %v6534
    %v6597 = vpack.c.b16 %v6537, %v6535
    %v6598 = vpack.c.b16 %v6540, %v6538
    %v6599 = vpack.c.b16 %v6541, %v6539
    %v6600 = vpack.c.b16 %v6544, %v6542
    %v6601 = vpack.c.b16 %v6545, %v6543
    %v6602 = vpack.c.b16 %v6548, %v6546
    %v6603 = vpack.c.b16 %v6549, %v6547
    %v6604 = vpack.c.b16 %v6552, %v6550
    %v6605 = vpack.c.b16 %v6553, %v6551
    %v6606 = vpack.c.b16 %v6556, %v6554
    %v6607 = vpack.c.b16 %v6557, %v6555
    %v6608 = vpack.c.b16 %v6560, %v6558
    %v6609 = vpack.c.b16 %v6561, %v6559
    %v6610 = vpack.c.b16 %v6564, %v6562
    %v6611 = vpack.c.b16 %v6565, %v6563
    %v6612 = vpack.c.b16 %v6568, %v6566
    %v6613 = vpack.c.b16 %v6569, %v6567
    %v6614 = vpack.c.b16 %v6572, %v6570
    %v6615 = vpack.c.b16 %v6573, %v6571
    %v6616 = vpack.c.b16 %v6576, %v6574
    %v6617 = vpack.c.b16 %v6577, %v6575
    %v6618 = vpack.c.b16 %v6580, %v6578
    %v6619 = vpack.c.b16 %v6581, %v6579
    %v6620 = vpack.c.b16 %v6584, %v6582
    %v6621 = vpack.c.b16 %v6585, %v6583
    %v6622 = vpack.c.b16 %v6588, %v6586
    %v6623 = vpack.c.b16 %v6589, %v6587
    %v6624 = vpack.c.b16 %v6592, %v6590
    %v6625 = vpack.c.b16 %v6593, %v6591
    %6658 = vmatprep.subr.bf16.mxu0 %v6595
    %6659 = vmatpush1.bf16.msra.mxu0 %v6594
    %6660 = vmatprep.subr.bf16.mxu0 %v6597
    %6661 = vmatpush1.bf16.msra.mxu0 %v6596
    %6662 = vmatprep.subr.bf16.mxu0 %v6599
    %6663 = vmatpush1.bf16.msra.mxu0 %v6598
    %6664 = vmatprep.subr.bf16.mxu0 %v6601
    %6665 = vmatpush1.bf16.msra.mxu0 %v6600
    %6666 = vmatprep.subr.bf16.mxu0 %v6603
    %6667 = vmatpush1.bf16.msra.mxu0 %v6602
    %6668 = vmatprep.subr.bf16.mxu0 %v6605
    %6669 = vmatpush1.bf16.msra.mxu0 %v6604
    %6670 = vmatprep.subr.bf16.mxu0 %v6607
    %6671 = vmatpush1.bf16.msra.mxu0 %v6606
    %6672 = vmatprep.subr.bf16.mxu0 %v6609
    %6673 = vmatpush1.bf16.msra.mxu0 %v6608
    %6674 = vmatprep.subr.bf16.mxu0 %v6611
    %6675 = vmatpush1.bf16.msra.mxu0 %v6610
    %6676 = vmatprep.subr.bf16.mxu0 %v6613
    %6677 = vmatpush1.bf16.msra.mxu0 %v6612
    %6678 = vmatprep.subr.bf16.mxu0 %v6615
    %6679 = vmatpush1.bf16.msra.mxu0 %v6614
    %6680 = vmatprep.subr.bf16.mxu0 %v6617
    %6681 = vmatpush1.bf16.msra.mxu0 %v6616
    %6682 = vmatprep.subr.bf16.mxu0 %v6619
    %6683 = vmatpush1.bf16.msra.mxu0 %v6618
    %6684 = vmatprep.subr.bf16.mxu0 %v6621
    %6685 = vmatpush1.bf16.msra.mxu0 %v6620
    %6686 = vmatprep.subr.bf16.mxu0 %v6623
    %6687 = vmatpush1.bf16.msra.mxu0 %v6622
    %6688 = vmatprep.subr.bf16.mxu0 %v6625
    %6689 = vmatpush1.bf16.msra.mxu0 %v6624
    %6690 = vmatprep.mubr.bf16.mxu0 %v6486
    %6691 = vmatmul.mubr.bf16.gmra.mrb[0].mxu0 %v6485
    %v6692 = vpop.f32.mrb[0].mxu0
    %v6693 = vadd.f32 %v6491, %v6692
    %v6694 = vpop.f32.mrb[0].mxu0
    %v6695 = vadd.f32 %v6495, %v6694
    %v6696 = vpop.f32.mrb[0].mxu0
    %v6697 = vpop.f32.mrb[0].mxu0
    %6698 = vdwg.mxu0
    %v6699 = vxor.u32 %v6693, 2147483648
    %v6700 = vxor.u32 %v6695, 2147483648
    %v6701 = vmul.f32 %v6699, 1.442695
    %v6702 = vpow.pop %v6701
    %v6703 = vmul.f32 %v6700, 1.442695
    %v6704 = vpow.pop %v6703
    %v6705 = vadd.f32 %v6702, 1.0
    %v6706 = vadd.f32 %v6704, 1.0
    %v6707 = vrcp.pop %v6705
    %v6708 = vmul.f32 1.0, %v6707
    %v6709 = vrcp.pop %v6706
    %v6710 = vmul.f32 1.0, %v6709
    %v6711 = vmul.f32 %v6479, %v6708
    %v6712 = vmul.f32 %v6481, %v6710
    %v6713 = vmul.f32 %v6711, %v6711
    %v6714 = vmul.f32 %v6712, %v6712
    %v6715 = vsel %vm6187, %v6713, 0.0
    %v6716 = vsel %vm6187, %v6714, 0.0
    %v6717 = vadd.f32 %v6715, %v6716
    %6718 = vadd.xlane.f32.xlu0 %v6717
    %v6719 = vpop.xlane.xlu0 %6718
    %v6720 = vadd.f32 %v6719, 1e-12
    %v6721 = vrsqrt.pop %v6720
    %v6722 = vmul.f32 %v6711, %v6721
    %v6723 = vmul.f32 %v6712, %v6721
    %v6724 = vadd.f32 %v6197, %v6722
    %v6725 = vadd.f32 %v6198, %v6723
    %v6726 = vld [vmem:[%s4 + $0xf80] sm:$0xff]
    %v6727 = vld [vmem:[%s4 + $0xf88] sm:$0xff]
    %v6728 = vld [vmem:[%s4 + $0xf90] sm:$0xff]
    %v6729 = vld [vmem:[%s4 + $0xf98] sm:$0xff]
    %v6730 = vld [vmem:[%s4 + $0xfa0] sm:$0xff]
    %v6731 = vld [vmem:[%s4 + $0xfa8] sm:$0xff]
    %v6732 = vld [vmem:[%s4 + $0xfb0] sm:$0xff]
    %v6733 = vld [vmem:[%s4 + $0xfb8] sm:$0xff]
    %v6734 = vld [vmem:[%s4 + $0xfc0] sm:$0xff]
    %v6735 = vld [vmem:[%s4 + $0xfc8] sm:$0xff]
    %v6736 = vld [vmem:[%s4 + $0xfd0] sm:$0xff]
    %v6737 = vld [vmem:[%s4 + $0xfd8] sm:$0xff]
    %v6738 = vld [vmem:[%s4 + $0xfe0] sm:$0xff]
    %v6739 = vld [vmem:[%s4 + $0xfe8] sm:$0xff]
    %v6740 = vld [vmem:[%s4 + $0xff0] sm:$0xff]
    %v6741 = vld [vmem:[%s4 + $0xff8] sm:$0xff]
    %v6742 = vld [vmem:[%s4 + $0x1000] sm:$0xff]
    %v6743 = vld [vmem:[%s4 + $0x1008] sm:$0xff]
    %v6744 = vld [vmem:[%s4 + $0x1010] sm:$0xff]
    %v6745 = vld [vmem:[%s4 + $0x1018] sm:$0xff]
    %v6746 = vld [vmem:[%s4 + $0x1020] sm:$0xff]
    %v6747 = vld [vmem:[%s4 + $0x1028] sm:$0xff]
    %v6748 = vld [vmem:[%s4 + $0x1030] sm:$0xff]
    %v6749 = vld [vmem:[%s4 + $0x1038] sm:$0xff]
    %v6750 = vld [vmem:[%s4 + $0x1040] sm:$0xff]
    %v6751 = vld [vmem:[%s4 + $0x1048] sm:$0xff]
    %v6752 = vld [vmem:[%s4 + $0x1050] sm:$0xff]
    %v6753 = vld [vmem:[%s4 + $0x1058] sm:$0xff]
    %v6754 = vld [vmem:[%s4 + $0x1060] sm:$0xff]
    %v6755 = vld [vmem:[%s4 + $0x1068] sm:$0xff]
    %v6756 = vld [vmem:[%s4 + $0x1070] sm:$0xff]
    %v6757 = vld [vmem:[%s4 + $0x1078] sm:$0xff]
    %s6758 = scalar_lea.vmem %s3, 101
    %v6759 = vld [vmem:[%s6758] ss:$8 sm:$0x3]
    %v6760 = vld [vmem:[%s4 + $0x1080] sm:$0xff]
    %v6761 = vld [vmem:[%s4 + $0x1088] sm:$0xff]
    %v6762 = vld [vmem:[%s4 + $0x1090] sm:$0xff]
    %v6763 = vld [vmem:[%s4 + $0x1098] sm:$0xff]
    %v6764 = vld [vmem:[%s4 + $0x10a0] sm:$0xff]
    %v6765 = vld [vmem:[%s4 + $0x10a8] sm:$0xff]
    %v6766 = vld [vmem:[%s4 + $0x10b0] sm:$0xff]
    %v6767 = vld [vmem:[%s4 + $0x10b8] sm:$0xff]
    %v6768 = vld [vmem:[%s4 + $0x10c0] sm:$0xff]
    %v6769 = vld [vmem:[%s4 + $0x10c8] sm:$0xff]
    %v6770 = vld [vmem:[%s4 + $0x10d0] sm:$0xff]
    %v6771 = vld [vmem:[%s4 + $0x10d8] sm:$0xff]
    %v6772 = vld [vmem:[%s4 + $0x10e0] sm:$0xff]
    %v6773 = vld [vmem:[%s4 + $0x10e8] sm:$0xff]
    %v6774 = vld [vmem:[%s4 + $0x10f0] sm:$0xff]
    %v6775 = vld [vmem:[%s4 + $0x10f8] sm:$0xff]
    %v6776 = vld [vmem:[%s4 + $0x1100] sm:$0xff]
    %v6777 = vld [vmem:[%s4 + $0x1108] sm:$0xff]
    %v6778 = vld [vmem:[%s4 + $0x1110] sm:$0xff]
    %v6779 = vld [vmem:[%s4 + $0x1118] sm:$0xff]
    %v6780 = vld [vmem:[%s4 + $0x1120] sm:$0xff]
    %v6781 = vld [vmem:[%s4 + $0x1128] sm:$0xff]
    %v6782 = vld [vmem:[%s4 + $0x1130] sm:$0xff]
    %v6783 = vld [vmem:[%s4 + $0x1138] sm:$0xff]
    %v6784 = vld [vmem:[%s4 + $0x1140] sm:$0xff]
    %v6785 = vld [vmem:[%s4 + $0x1148] sm:$0xff]
    %v6786 = vld [vmem:[%s4 + $0x1150] sm:$0xff]
    %v6787 = vld [vmem:[%s4 + $0x1158] sm:$0xff]
    %v6788 = vld [vmem:[%s4 + $0x1160] sm:$0xff]
    %v6789 = vld [vmem:[%s4 + $0x1168] sm:$0xff]
    %v6790 = vld [vmem:[%s4 + $0x1170] sm:$0xff]
    %v6791 = vld [vmem:[%s4 + $0x1178] sm:$0xff]
    %s6792 = scalar_lea.vmem %s3, 102
    %v6793 = vld [vmem:[%s6792] ss:$8 sm:$0x3]
    %v6795 = vlaneseq
    %v6796 = vshrl.u32 %v6795, 7
    %v6797 = vsub.s32 0, %v6796
    %v6798 = vrot.slane %v6759, %v6797
    %v6799 = vlaneseq
    %v6800 = vshrl.u32 %v6799, 7
    %v6801 = vsub.s32 1, %v6800
    %v6802 = vrot.slane %v6759, %v6801
    %v6805 = vrot.slane %v5743, 2
    %v6806 = vrot.slane %v5744, 2
    %v6841 = vunpack.c.l.b16 %v6726
    %v6842 = vunpack.c.h.b16 %v6726
    %v6843 = vunpack.c.l.b16 %v6727
    %v6844 = vunpack.c.h.b16 %v6727
    %v6845 = vunpack.c.l.b16 %v6728
    %v6846 = vunpack.c.h.b16 %v6728
    %v6847 = vunpack.c.l.b16 %v6729
    %v6848 = vunpack.c.h.b16 %v6729
    %v6849 = vunpack.c.l.b16 %v6730
    %v6850 = vunpack.c.h.b16 %v6730
    %v6851 = vunpack.c.l.b16 %v6731
    %v6852 = vunpack.c.h.b16 %v6731
    %v6853 = vunpack.c.l.b16 %v6732
    %v6854 = vunpack.c.h.b16 %v6732
    %v6855 = vunpack.c.l.b16 %v6733
    %v6856 = vunpack.c.h.b16 %v6733
    %v6857 = vunpack.c.l.b16 %v6734
    %v6858 = vunpack.c.h.b16 %v6734
    %v6859 = vunpack.c.l.b16 %v6735
    %v6860 = vunpack.c.h.b16 %v6735
    %v6861 = vunpack.c.l.b16 %v6736
    %v6862 = vunpack.c.h.b16 %v6736
    %v6863 = vunpack.c.l.b16 %v6737
    %v6864 = vunpack.c.h.b16 %v6737
    %v6865 = vunpack.c.l.b16 %v6738
    %v6866 = vunpack.c.h.b16 %v6738
    %v6867 = vunpack.c.l.b16 %v6739
    %v6868 = vunpack.c.h.b16 %v6739
    %v6869 = vunpack.c.l.b16 %v6740
    %v6870 = vunpack.c.h.b16 %v6740
    %v6871 = vunpack.c.l.b16 %v6741
    %v6872 = vunpack.c.h.b16 %v6741
    %v6873 = vunpack.c.l.b16 %v6742
    %v6874 = vunpack.c.h.b16 %v6742
    %v6875 = vunpack.c.l.b16 %v6743
    %v6876 = vunpack.c.h.b16 %v6743
    %v6877 = vunpack.c.l.b16 %v6744
    %v6878 = vunpack.c.h.b16 %v6744
    %v6879 = vunpack.c.l.b16 %v6745
    %v6880 = vunpack.c.h.b16 %v6745
    %v6881 = vunpack.c.l.b16 %v6746
    %v6882 = vunpack.c.h.b16 %v6746
    %v6883 = vunpack.c.l.b16 %v6747
    %v6884 = vunpack.c.h.b16 %v6747
    %v6885 = vunpack.c.l.b16 %v6748
    %v6886 = vunpack.c.h.b16 %v6748
    %v6887 = vunpack.c.l.b16 %v6749
    %v6888 = vunpack.c.h.b16 %v6749
    %v6889 = vunpack.c.l.b16 %v6750
    %v6890 = vunpack.c.h.b16 %v6750
    %v6891 = vunpack.c.l.b16 %v6751
    %v6892 = vunpack.c.h.b16 %v6751
    %v6893 = vunpack.c.l.b16 %v6752
    %v6894 = vunpack.c.h.b16 %v6752
    %v6895 = vunpack.c.l.b16 %v6753
    %v6896 = vunpack.c.h.b16 %v6753
    %v6897 = vunpack.c.l.b16 %v6754
    %v6898 = vunpack.c.h.b16 %v6754
    %v6899 = vunpack.c.l.b16 %v6755
    %v6900 = vunpack.c.h.b16 %v6755
    %v6901 = vunpack.c.l.b16 %v6756
    %v6902 = vunpack.c.h.b16 %v6756
    %v6903 = vunpack.c.l.b16 %v6757
    %v6904 = vunpack.c.h.b16 %v6757
    %v6905 = vpack.c.b16 %v6843, %v6841
    %v6906 = vpack.c.b16 %v6844, %v6842
    %v6907 = vpack.c.b16 %v6847, %v6845
    %v6908 = vpack.c.b16 %v6848, %v6846
    %v6909 = vpack.c.b16 %v6851, %v6849
    %v6910 = vpack.c.b16 %v6852, %v6850
    %v6911 = vpack.c.b16 %v6855, %v6853
    %v6912 = vpack.c.b16 %v6856, %v6854
    %v6913 = vpack.c.b16 %v6859, %v6857
    %v6914 = vpack.c.b16 %v6860, %v6858
    %v6915 = vpack.c.b16 %v6863, %v6861
    %v6916 = vpack.c.b16 %v6864, %v6862
    %v6917 = vpack.c.b16 %v6867, %v6865
    %v6918 = vpack.c.b16 %v6868, %v6866
    %v6919 = vpack.c.b16 %v6871, %v6869
    %v6920 = vpack.c.b16 %v6872, %v6870
    %v6921 = vpack.c.b16 %v6875, %v6873
    %v6922 = vpack.c.b16 %v6876, %v6874
    %v6923 = vpack.c.b16 %v6879, %v6877
    %v6924 = vpack.c.b16 %v6880, %v6878
    %v6925 = vpack.c.b16 %v6883, %v6881
    %v6926 = vpack.c.b16 %v6884, %v6882
    %v6927 = vpack.c.b16 %v6887, %v6885
    %v6928 = vpack.c.b16 %v6888, %v6886
    %v6929 = vpack.c.b16 %v6891, %v6889
    %v6930 = vpack.c.b16 %v6892, %v6890
    %v6931 = vpack.c.b16 %v6895, %v6893
    %v6932 = vpack.c.b16 %v6896, %v6894
    %v6933 = vpack.c.b16 %v6899, %v6897
    %v6934 = vpack.c.b16 %v6900, %v6898
    %v6935 = vpack.c.b16 %v6903, %v6901
    %v6936 = vpack.c.b16 %v6904, %v6902
    %6969 = vmatprep.subr.bf16.mxu0 %v6906
    %6970 = vmatpush1.bf16.msra.mxu0 %v6905
    %6971 = vmatprep.subr.bf16.mxu0 %v6908
    %6972 = vmatpush1.bf16.msra.mxu0 %v6907
    %6973 = vmatprep.subr.bf16.mxu0 %v6910
    %6974 = vmatpush1.bf16.msra.mxu0 %v6909
    %6975 = vmatprep.subr.bf16.mxu0 %v6912
    %6976 = vmatpush1.bf16.msra.mxu0 %v6911
    %6977 = vmatprep.subr.bf16.mxu0 %v6914
    %6978 = vmatpush1.bf16.msra.mxu0 %v6913
    %6979 = vmatprep.subr.bf16.mxu0 %v6916
    %6980 = vmatpush1.bf16.msra.mxu0 %v6915
    %6981 = vmatprep.subr.bf16.mxu0 %v6918
    %6982 = vmatpush1.bf16.msra.mxu0 %v6917
    %6983 = vmatprep.subr.bf16.mxu0 %v6920
    %6984 = vmatpush1.bf16.msra.mxu0 %v6919
    %6985 = vmatprep.subr.bf16.mxu0 %v6922
    %6986 = vmatpush1.bf16.msra.mxu0 %v6921
    %6987 = vmatprep.subr.bf16.mxu0 %v6924
    %6988 = vmatpush1.bf16.msra.mxu0 %v6923
    %6989 = vmatprep.subr.bf16.mxu0 %v6926
    %6990 = vmatpush1.bf16.msra.mxu0 %v6925
    %6991 = vmatprep.subr.bf16.mxu0 %v6928
    %6992 = vmatpush1.bf16.msra.mxu0 %v6927
    %6993 = vmatprep.subr.bf16.mxu0 %v6930
    %6994 = vmatpush1.bf16.msra.mxu0 %v6929
    %6995 = vmatprep.subr.bf16.mxu0 %v6932
    %6996 = vmatpush1.bf16.msra.mxu0 %v6931
    %6997 = vmatprep.subr.bf16.mxu0 %v6934
    %6998 = vmatpush1.bf16.msra.mxu0 %v6933
    %6999 = vmatprep.subr.bf16.mxu0 %v6936
    %7000 = vmatpush1.bf16.msra.mxu0 %v6935
    %7001 = vmatprep.mubr.bf16.mxu0 %v6806
    %7002 = vmatmul.mubr.bf16.gmra.mrb[0].mxu0 %v6805
    %v7003 = vpop.f32.mrb[0].mxu0
    %v7004 = vadd.f32 %v6798, %v7003
    %v7005 = vpop.f32.mrb[0].mxu0
    %v7006 = vadd.f32 %v6802, %v7005
    %v7007 = vpop.f32.mrb[0].mxu0
    %v7008 = vpop.f32.mrb[0].mxu0
    %7009 = vdwg.mxu0
    %v7010 = vpack.c.bf16 %v7004, %v7004
    %v7011 = vpack.c.bf16 %v7006, %v7006
    %v7013 = vlaneseq
    %v7014 = vshrl.u32 %v7013, 7
    %v7015 = vsub.s32 0, %v7014
    %v7016 = vrot.slane %v6793, %v7015
    %v7017 = vlaneseq
    %v7018 = vshrl.u32 %v7017, 7
    %v7019 = vsub.s32 1, %v7018
    %v7020 = vrot.slane %v6793, %v7019
    %v7055 = vunpack.c.l.b16 %v6760
    %v7056 = vunpack.c.h.b16 %v6760
    %v7057 = vunpack.c.l.b16 %v6761
    %v7058 = vunpack.c.h.b16 %v6761
    %v7059 = vunpack.c.l.b16 %v6762
    %v7060 = vunpack.c.h.b16 %v6762
    %v7061 = vunpack.c.l.b16 %v6763
    %v7062 = vunpack.c.h.b16 %v6763
    %v7063 = vunpack.c.l.b16 %v6764
    %v7064 = vunpack.c.h.b16 %v6764
    %v7065 = vunpack.c.l.b16 %v6765
    %v7066 = vunpack.c.h.b16 %v6765
    %v7067 = vunpack.c.l.b16 %v6766
    %v7068 = vunpack.c.h.b16 %v6766
    %v7069 = vunpack.c.l.b16 %v6767
    %v7070 = vunpack.c.h.b16 %v6767
    %v7071 = vunpack.c.l.b16 %v6768
    %v7072 = vunpack.c.h.b16 %v6768
    %v7073 = vunpack.c.l.b16 %v6769
    %v7074 = vunpack.c.h.b16 %v6769
    %v7075 = vunpack.c.l.b16 %v6770
    %v7076 = vunpack.c.h.b16 %v6770
    %v7077 = vunpack.c.l.b16 %v6771
    %v7078 = vunpack.c.h.b16 %v6771
    %v7079 = vunpack.c.l.b16 %v6772
    %v7080 = vunpack.c.h.b16 %v6772
    %v7081 = vunpack.c.l.b16 %v6773
    %v7082 = vunpack.c.h.b16 %v6773
    %v7083 = vunpack.c.l.b16 %v6774
    %v7084 = vunpack.c.h.b16 %v6774
    %v7085 = vunpack.c.l.b16 %v6775
    %v7086 = vunpack.c.h.b16 %v6775
    %v7087 = vunpack.c.l.b16 %v6776
    %v7088 = vunpack.c.h.b16 %v6776
    %v7089 = vunpack.c.l.b16 %v6777
    %v7090 = vunpack.c.h.b16 %v6777
    %v7091 = vunpack.c.l.b16 %v6778
    %v7092 = vunpack.c.h.b16 %v6778
    %v7093 = vunpack.c.l.b16 %v6779
    %v7094 = vunpack.c.h.b16 %v6779
    %v7095 = vunpack.c.l.b16 %v6780
    %v7096 = vunpack.c.h.b16 %v6780
    %v7097 = vunpack.c.l.b16 %v6781
    %v7098 = vunpack.c.h.b16 %v6781
    %v7099 = vunpack.c.l.b16 %v6782
    %v7100 = vunpack.c.h.b16 %v6782
    %v7101 = vunpack.c.l.b16 %v6783
    %v7102 = vunpack.c.h.b16 %v6783
    %v7103 = vunpack.c.l.b16 %v6784
    %v7104 = vunpack.c.h.b16 %v6784
    %v7105 = vunpack.c.l.b16 %v6785
    %v7106 = vunpack.c.h.b16 %v6785
    %v7107 = vunpack.c.l.b16 %v6786
    %v7108 = vunpack.c.h.b16 %v6786
    %v7109 = vunpack.c.l.b16 %v6787
    %v7110 = vunpack.c.h.b16 %v6787
    %v7111 = vunpack.c.l.b16 %v6788
    %v7112 = vunpack.c.h.b16 %v6788
    %v7113 = vunpack.c.l.b16 %v6789
    %v7114 = vunpack.c.h.b16 %v6789
    %v7115 = vunpack.c.l.b16 %v6790
    %v7116 = vunpack.c.h.b16 %v6790
    %v7117 = vunpack.c.l.b16 %v6791
    %v7118 = vunpack.c.h.b16 %v6791
    %v7119 = vpack.c.b16 %v7057, %v7055
    %v7120 = vpack.c.b16 %v7058, %v7056
    %v7121 = vpack.c.b16 %v7061, %v7059
    %v7122 = vpack.c.b16 %v7062, %v7060
    %v7123 = vpack.c.b16 %v7065, %v7063
    %v7124 = vpack.c.b16 %v7066, %v7064
    %v7125 = vpack.c.b16 %v7069, %v7067
    %v7126 = vpack.c.b16 %v7070, %v7068
    %v7127 = vpack.c.b16 %v7073, %v7071
    %v7128 = vpack.c.b16 %v7074, %v7072
    %v7129 = vpack.c.b16 %v7077, %v7075
    %v7130 = vpack.c.b16 %v7078, %v7076
    %v7131 = vpack.c.b16 %v7081, %v7079
    %v7132 = vpack.c.b16 %v7082, %v7080
    %v7133 = vpack.c.b16 %v7085, %v7083
    %v7134 = vpack.c.b16 %v7086, %v7084
    %v7135 = vpack.c.b16 %v7089, %v7087
    %v7136 = vpack.c.b16 %v7090, %v7088
    %v7137 = vpack.c.b16 %v7093, %v7091
    %v7138 = vpack.c.b16 %v7094, %v7092
    %v7139 = vpack.c.b16 %v7097, %v7095
    %v7140 = vpack.c.b16 %v7098, %v7096
    %v7141 = vpack.c.b16 %v7101, %v7099
    %v7142 = vpack.c.b16 %v7102, %v7100
    %v7143 = vpack.c.b16 %v7105, %v7103
    %v7144 = vpack.c.b16 %v7106, %v7104
    %v7145 = vpack.c.b16 %v7109, %v7107
    %v7146 = vpack.c.b16 %v7110, %v7108
    %v7147 = vpack.c.b16 %v7113, %v7111
    %v7148 = vpack.c.b16 %v7114, %v7112
    %v7149 = vpack.c.b16 %v7117, %v7115
    %v7150 = vpack.c.b16 %v7118, %v7116
    %7183 = vmatprep.subr.bf16.mxu0 %v7120
    %7184 = vmatpush1.bf16.msra.mxu0 %v7119
    %7185 = vmatprep.subr.bf16.mxu0 %v7122
    %7186 = vmatpush1.bf16.msra.mxu0 %v7121
    %7187 = vmatprep.subr.bf16.mxu0 %v7124
    %7188 = vmatpush1.bf16.msra.mxu0 %v7123
    %7189 = vmatprep.subr.bf16.mxu0 %v7126
    %7190 = vmatpush1.bf16.msra.mxu0 %v7125
    %7191 = vmatprep.subr.bf16.mxu0 %v7128
    %7192 = vmatpush1.bf16.msra.mxu0 %v7127
    %7193 = vmatprep.subr.bf16.mxu0 %v7130
    %7194 = vmatpush1.bf16.msra.mxu0 %v7129
    %7195 = vmatprep.subr.bf16.mxu0 %v7132
    %7196 = vmatpush1.bf16.msra.mxu0 %v7131
    %7197 = vmatprep.subr.bf16.mxu0 %v7134
    %7198 = vmatpush1.bf16.msra.mxu0 %v7133
    %7199 = vmatprep.subr.bf16.mxu0 %v7136
    %7200 = vmatpush1.bf16.msra.mxu0 %v7135
    %7201 = vmatprep.subr.bf16.mxu0 %v7138
    %7202 = vmatpush1.bf16.msra.mxu0 %v7137
    %7203 = vmatprep.subr.bf16.mxu0 %v7140
    %7204 = vmatpush1.bf16.msra.mxu0 %v7139
    %7205 = vmatprep.subr.bf16.mxu0 %v7142
    %7206 = vmatpush1.bf16.msra.mxu0 %v7141
    %7207 = vmatprep.subr.bf16.mxu0 %v7144
    %7208 = vmatpush1.bf16.msra.mxu0 %v7143
    %7209 = vmatprep.subr.bf16.mxu0 %v7146
    %7210 = vmatpush1.bf16.msra.mxu0 %v7145
    %7211 = vmatprep.subr.bf16.mxu0 %v7148
    %7212 = vmatpush1.bf16.msra.mxu0 %v7147
    %7213 = vmatprep.subr.bf16.mxu0 %v7150
    %7214 = vmatpush1.bf16.msra.mxu0 %v7149
    %7215 = vmatprep.mubr.bf16.mxu0 %v7011
    %7216 = vmatmul.mubr.bf16.gmra.mrb[0].mxu0 %v7010
    %v7217 = vpop.f32.mrb[0].mxu0
    %v7218 = vadd.f32 %v7016, %v7217
    %v7219 = vpop.f32.mrb[0].mxu0
    %v7220 = vadd.f32 %v7020, %v7219
    %v7221 = vpop.f32.mrb[0].mxu0
    %v7222 = vpop.f32.mrb[0].mxu0
    %7223 = vdwg.mxu0
    %v7224 = vxor.u32 %v7218, 2147483648
    %v7225 = vxor.u32 %v7220, 2147483648
    %v7226 = vmul.f32 %v7224, 1.442695
    %v7227 = vpow.pop %v7226
    %v7228 = vmul.f32 %v7225, 1.442695
    %v7229 = vpow.pop %v7228
    %v7230 = vadd.f32 %v7227, 1.0
    %v7231 = vadd.f32 %v7229, 1.0
    %v7232 = vrcp.pop %v7230
    %v7233 = vmul.f32 1.0, %v7232
    %v7234 = vrcp.pop %v7231
    %v7235 = vmul.f32 1.0, %v7234
    %v7236 = vmul.f32 %v7004, %v7233
    %v7237 = vmul.f32 %v7006, %v7235
    %v7238 = vmul.f32 %v7236, %v7236
    %v7239 = vmul.f32 %v7237, %v7237
    %v7240 = vsel %vm6187, %v7238, 0.0
    %v7241 = vsel %vm6187, %v7239, 0.0
    %v7242 = vadd.f32 %v7240, %v7241
    %7243 = vadd.xlane.f32.xlu0 %v7242
    %v7244 = vpop.xlane.xlu0 %7243
    %v7245 = vadd.f32 %v7244, 1e-12
    %v7246 = vrsqrt.pop %v7245
    %v7247 = vmul.f32 %v7236, %v7246
    %v7248 = vmul.f32 %v7237, %v7246
    %v7249 = vadd.f32 %v6724, %v7247
    %v7250 = vadd.f32 %v6725, %v7248
    %v7251 = vmul.f32 %v7249, 0.33333334
    %v7252 = vmul.f32 %v7250, 0.33333334
    %v7255 = vcombine.low %v7251, %v7252
    %v7257 = vunpack.c.l.s4 1983009808
    %v7258 = vunpack.c.0.s8 %v7257
    %v7259 = vlaneseq
    %v7260 = vshrl.u32 %v7259, 7
    %v7261 = vsub.s32 %v7258, %v7260
    %v7262 = vrot.slane %v7255, %v7261
    %7264 = vst [vmem:[#allocation3] sm:$0xf] %v7262
    %v7265 = vld [vmem:[%s4 + $0x1180] sm:$0xff]
    %v7266 = vld [vmem:[%s4 + $0x1188] sm:$0xff]
    %v7267 = vld [vmem:[%s4 + $0x1190] sm:$0xff]
    %v7268 = vld [vmem:[%s4 + $0x1198] sm:$0xff]
    %v7269 = vld [vmem:[%s4 + $0x11a0] sm:$0xff]
    %v7270 = vld [vmem:[%s4 + $0x11a8] sm:$0xff]
    %v7271 = vld [vmem:[%s4 + $0x11b0] sm:$0xff]
    %v7272 = vld [vmem:[%s4 + $0x11b8] sm:$0xff]
    %v7273 = vld [vmem:[%s4 + $0x11c0] sm:$0xff]
    %v7274 = vld [vmem:[%s4 + $0x11c8] sm:$0xff]
    %v7275 = vld [vmem:[%s4 + $0x11d0] sm:$0xff]
    %v7276 = vld [vmem:[%s4 + $0x11d8] sm:$0xff]
    %v7277 = vld [vmem:[%s4 + $0x11e0] sm:$0xff]
    %v7278 = vld [vmem:[%s4 + $0x11e8] sm:$0xff]
    %v7279 = vld [vmem:[%s4 + $0x11f0] sm:$0xff]
    %v7280 = vld [vmem:[%s4 + $0x11f8] sm:$0xff]
    %v7281 = vld [vmem:[%s4 + $0x1200] sm:$0xff]
    %v7282 = vld [vmem:[%s4 + $0x1208] sm:$0xff]
    %v7283 = vld [vmem:[%s4 + $0x1210] sm:$0xff]
    %v7284 = vld [vmem:[%s4 + $0x1218] sm:$0xff]
    %v7285 = vld [vmem:[%s4 + $0x1220] sm:$0xff]
    %v7286 = vld [vmem:[%s4 + $0x1228] sm:$0xff]
    %v7287 = vld [vmem:[%s4 + $0x1230] sm:$0xff]
    %v7288 = vld [vmem:[%s4 + $0x1238] sm:$0xff]
    %v7289 = vld [vmem:[%s4 + $0x1240] sm:$0xff]
    %v7290 = vld [vmem:[%s4 + $0x1248] sm:$0xff]
    %v7291 = vld [vmem:[%s4 + $0x1250] sm:$0xff]
    %v7292 = vld [vmem:[%s4 + $0x1258] sm:$0xff]
    %v7293 = vld [vmem:[%s4 + $0x1260] sm:$0xff]
    %v7294 = vld [vmem:[%s4 + $0x1268] sm:$0xff]
    %v7295 = vld [vmem:[%s4 + $0x1270] sm:$0xff]
    %v7296 = vld [vmem:[%s4 + $0x1278] sm:$0xff]
    %v7297 = vpack.c.bf16 %v7251, %v7251
    %v7298 = vpack.c.bf16 %v7252, %v7252
    %s7299 = scalar_lea.vmem %s3, 103
    %v7300 = vld [vmem:[%s7299] ss:$8 sm:$0x3]
    %v7302 = vlaneseq
    %v7303 = vshrl.u32 %v7302, 7
    %v7304 = vsub.s32 0, %v7303
    %v7305 = vrot.slane %v7300, %v7304
    %v7306 = vlaneseq
    %v7307 = vshrl.u32 %v7306, 7
    %v7308 = vsub.s32 1, %v7307
    %v7309 = vrot.slane %v7300, %v7308
    %v7344 = vunpack.c.l.b16 %v7265
    %v7345 = vunpack.c.h.b16 %v7265
    %v7346 = vunpack.c.l.b16 %v7266
    %v7347 = vunpack.c.h.b16 %v7266
    %v7348 = vunpack.c.l.b16 %v7267
    %v7349 = vunpack.c.h.b16 %v7267
    %v7350 = vunpack.c.l.b16 %v7268
    %v7351 = vunpack.c.h.b16 %v7268
    %v7352 = vunpack.c.l.b16 %v7269
    %v7353 = vunpack.c.h.b16 %v7269
    %v7354 = vunpack.c.l.b16 %v7270
    %v7355 = vunpack.c.h.b16 %v7270
    %v7356 = vunpack.c.l.b16 %v7271
    %v7357 = vunpack.c.h.b16 %v7271
    %v7358 = vunpack.c.l.b16 %v7272
    %v7359 = vunpack.c.h.b16 %v7272
    %v7360 = vunpack.c.l.b16 %v7273
    %v7361 = vunpack.c.h.b16 %v7273
    %v7362 = vunpack.c.l.b16 %v7274
    %v7363 = vunpack.c.h.b16 %v7274
    %v7364 = vunpack.c.l.b16 %v7275
    %v7365 = vunpack.c.h.b16 %v7275
    %v7366 = vunpack.c.l.b16 %v7276
    %v7367 = vunpack.c.h.b16 %v7276
    %v7368 = vunpack.c.l.b16 %v7277
    %v7369 = vunpack.c.h.b16 %v7277
    %v7370 = vunpack.c.l.b16 %v7278
    %v7371 = vunpack.c.h.b16 %v7278
    %v7372 = vunpack.c.l.b16 %v7279
    %v7373 = vunpack.c.h.b16 %v7279
    %v7374 = vunpack.c.l.b16 %v7280
    %v7375 = vunpack.c.h.b16 %v7280
    %v7376 = vunpack.c.l.b16 %v7281
    %v7377 = vunpack.c.h.b16 %v7281
    %v7378 = vunpack.c.l.b16 %v7282
    %v7379 = vunpack.c.h.b16 %v7282
    %v7380 = vunpack.c.l.b16 %v7283
    %v7381 = vunpack.c.h.b16 %v7283
    %v7382 = vunpack.c.l.b16 %v7284
    %v7383 = vunpack.c.h.b16 %v7284
    %v7384 = vunpack.c.l.b16 %v7285
    %v7385 = vunpack.c.h.b16 %v7285
    %v7386 = vunpack.c.l.b16 %v7286
    %v7387 = vunpack.c.h.b16 %v7286
    %v7388 = vunpack.c.l.b16 %v7287
    %v7389 = vunpack.c.h.b16 %v7287
    %v7390 = vunpack.c.l.b16 %v7288
    %v7391 = vunpack.c.h.b16 %v7288
    %v7392 = vunpack.c.l.b16 %v7289
    %v7393 = vunpack.c.h.b16 %v7289
    %v7394 = vunpack.c.l.b16 %v7290
    %v7395 = vunpack.c.h.b16 %v7290
    %v7396 = vunpack.c.l.b16 %v7291
    %v7397 = vunpack.c.h.b16 %v7291
    %v7398 = vunpack.c.l.b16 %v7292
    %v7399 = vunpack.c.h.b16 %v7292
    %v7400 = vunpack.c.l.b16 %v7293
    %v7401 = vunpack.c.h.b16 %v7293
    %v7402 = vunpack.c.l.b16 %v7294
    %v7403 = vunpack.c.h.b16 %v7294
    %v7404 = vunpack.c.l.b16 %v7295
    %v7405 = vunpack.c.h.b16 %v7295
    %v7406 = vunpack.c.l.b16 %v7296
    %v7407 = vunpack.c.h.b16 %v7296
    %v7408 = vpack.c.b16 %v7346, %v7344
    %v7409 = vpack.c.b16 %v7347, %v7345
    %v7410 = vpack.c.b16 %v7350, %v7348
    %v7411 = vpack.c.b16 %v7351, %v7349
    %v7412 = vpack.c.b16 %v7354, %v7352
    %v7413 = vpack.c.b16 %v7355, %v7353
    %v7414 = vpack.c.b16 %v7358, %v7356
    %v7415 = vpack.c.b16 %v7359, %v7357
    %v7416 = vpack.c.b16 %v7362, %v7360
    %v7417 = vpack.c.b16 %v7363, %v7361
    %v7418 = vpack.c.b16 %v7366, %v7364
    %v7419 = vpack.c.b16 %v7367, %v7365
    %v7420 = vpack.c.b16 %v7370, %v7368
    %v7421 = vpack.c.b16 %v7371, %v7369
    %v7422 = vpack.c.b16 %v7374, %v7372
    %v7423 = vpack.c.b16 %v7375, %v7373
    %v7424 = vpack.c.b16 %v7378, %v7376
    %v7425 = vpack.c.b16 %v7379, %v7377
    %v7426 = vpack.c.b16 %v7382, %v7380
    %v7427 = vpack.c.b16 %v7383, %v7381
    %v7428 = vpack.c.b16 %v7386, %v7384
    %v7429 = vpack.c.b16 %v7387, %v7385
    %v7430 = vpack.c.b16 %v7390, %v7388
    %v7431 = vpack.c.b16 %v7391, %v7389
    %v7432 = vpack.c.b16 %v7394, %v7392
    %v7433 = vpack.c.b16 %v7395, %v7393
    %v7434 = vpack.c.b16 %v7398, %v7396
    %v7435 = vpack.c.b16 %v7399, %v7397
    %v7436 = vpack.c.b16 %v7402, %v7400
    %v7437 = vpack.c.b16 %v7403, %v7401
    %v7438 = vpack.c.b16 %v7406, %v7404
    %v7439 = vpack.c.b16 %v7407, %v7405
    %7472 = vmatprep.subr.bf16.mxu0 %v7409
    %7473 = vmatpush1.bf16.msra.mxu0 %v7408
    %7474 = vmatprep.subr.bf16.mxu0 %v7411
    %7475 = vmatpush1.bf16.msra.mxu0 %v7410
    %7476 = vmatprep.subr.bf16.mxu0 %v7413
    %7477 = vmatpush1.bf16.msra.mxu0 %v7412
    %7478 = vmatprep.subr.bf16.mxu0 %v7415
    %7479 = vmatpush1.bf16.msra.mxu0 %v7414
    %7480 = vmatprep.subr.bf16.mxu0 %v7417
    %7481 = vmatpush1.bf16.msra.mxu0 %v7416
    %7482 = vmatprep.subr.bf16.mxu0 %v7419
    %7483 = vmatpush1.bf16.msra.mxu0 %v7418
    %7484 = vmatprep.subr.bf16.mxu0 %v7421
    %7485 = vmatpush1.bf16.msra.mxu0 %v7420
    %7486 = vmatprep.subr.bf16.mxu0 %v7423
    %7487 = vmatpush1.bf16.msra.mxu0 %v7422
    %7488 = vmatprep.subr.bf16.mxu0 %v7425
    %7489 = vmatpush1.bf16.msra.mxu0 %v7424
    %7490 = vmatprep.subr.bf16.mxu0 %v7427
    %7491 = vmatpush1.bf16.msra.mxu0 %v7426
    %7492 = vmatprep.subr.bf16.mxu0 %v7429
    %7493 = vmatpush1.bf16.msra.mxu0 %v7428
    %7494 = vmatprep.subr.bf16.mxu0 %v7431
    %7495 = vmatpush1.bf16.msra.mxu0 %v7430
    %7496 = vmatprep.subr.bf16.mxu0 %v7433
    %7497 = vmatpush1.bf16.msra.mxu0 %v7432
    %7498 = vmatprep.subr.bf16.mxu0 %v7435
    %7499 = vmatpush1.bf16.msra.mxu0 %v7434
    %7500 = vmatprep.subr.bf16.mxu0 %v7437
    %7501 = vmatpush1.bf16.msra.mxu0 %v7436
    %7502 = vmatprep.subr.bf16.mxu0 %v7439
    %7503 = vmatpush1.bf16.msra.mxu0 %v7438
    %7504 = vmatprep.mubr.bf16.mxu0 %v7298
    %7505 = vmatmul.mubr.bf16.gmra.mrb[0].mxu0 %v7297
    %v7506 = vpop.f32.mrb[0].mxu0
    %v7507 = vadd.f32 %v7305, %v7506
    %v7508 = vpop.f32.mrb[0].mxu0
    %v7509 = vadd.f32 %v7309, %v7508
    %v7510 = vpop.f32.mrb[0].mxu0
    %v7511 = vpop.f32.mrb[0].mxu0
    %7512 = vdwg.mxu0
    %v7513 = vmax.f32 %v7507, 0.0
    %v7514 = vmax.f32 %v7509, 0.0
    %v7515 = vld [vmem:[%s4 + $0x1280] sm:$0xff]
    %v7516 = vld [vmem:[%s4 + $0x1288] sm:$0xff]
    %v7517 = vld [vmem:[%s4 + $0x1290] sm:$0xff]
    %v7518 = vld [vmem:[%s4 + $0x1298] sm:$0xff]
    %v7519 = vld [vmem:[%s4 + $0x12a0] sm:$0xff]
    %v7520 = vld [vmem:[%s4 + $0x12a8] sm:$0xff]
    %v7521 = vld [vmem:[%s4 + $0x12b0] sm:$0xff]
    %v7522 = vld [vmem:[%s4 + $0x12b8] sm:$0xff]
    %v7523 = vld [vmem:[%s4 + $0x12c0] sm:$0xff]
    %v7524 = vld [vmem:[%s4 + $0x12c8] sm:$0xff]
    %v7525 = vld [vmem:[%s4 + $0x12d0] sm:$0xff]
    %v7526 = vld [vmem:[%s4 + $0x12d8] sm:$0xff]
    %v7527 = vld [vmem:[%s4 + $0x12e0] sm:$0xff]
    %v7528 = vld [vmem:[%s4 + $0x12e8] sm:$0xff]
    %v7529 = vld [vmem:[%s4 + $0x12f0] sm:$0xff]
    %v7530 = vld [vmem:[%s4 + $0x12f8] sm:$0xff]
    %v7531 = vld [vmem:[%s4 + $0x1300] sm:$0xff]
    %v7532 = vld [vmem:[%s4 + $0x1308] sm:$0xff]
    %v7533 = vld [vmem:[%s4 + $0x1310] sm:$0xff]
    %v7534 = vld [vmem:[%s4 + $0x1318] sm:$0xff]
    %v7535 = vld [vmem:[%s4 + $0x1320] sm:$0xff]
    %v7536 = vld [vmem:[%s4 + $0x1328] sm:$0xff]
    %v7537 = vld [vmem:[%s4 + $0x1330] sm:$0xff]
    %v7538 = vld [vmem:[%s4 + $0x1338] sm:$0xff]
    %v7539 = vld [vmem:[%s4 + $0x1340] sm:$0xff]
    %v7540 = vld [vmem:[%s4 + $0x1348] sm:$0xff]
    %v7541 = vld [vmem:[%s4 + $0x1350] sm:$0xff]
    %v7542 = vld [vmem:[%s4 + $0x1358] sm:$0xff]
    %v7543 = vld [vmem:[%s4 + $0x1360] sm:$0xff]
    %v7544 = vld [vmem:[%s4 + $0x1368] sm:$0xff]
    %v7545 = vld [vmem:[%s4 + $0x1370] sm:$0xff]
    %v7546 = vld [vmem:[%s4 + $0x1378] sm:$0xff]
    %v7547 = vpack.c.bf16 %v7513, %v7513
    %v7548 = vpack.c.bf16 %v7514, %v7514
    %s7549 = scalar_lea.vmem %s3, 128
    %v7550 = vld [vmem:[%s7549] ss:$8 sm:$0x3]
    %v7552 = vlaneseq
    %v7553 = vshrl.u32 %v7552, 7
    %v7554 = vsub.s32 0, %v7553
    %v7555 = vrot.slane %v7550, %v7554
    %v7556 = vlaneseq
    %v7557 = vshrl.u32 %v7556, 7
    %v7558 = vsub.s32 1, %v7557
    %v7559 = vrot.slane %v7550, %v7558
    %v7594 = vunpack.c.l.b16 %v7515
    %v7595 = vunpack.c.h.b16 %v7515
    %v7596 = vunpack.c.l.b16 %v7516
    %v7597 = vunpack.c.h.b16 %v7516
    %v7598 = vunpack.c.l.b16 %v7517
    %v7599 = vunpack.c.h.b16 %v7517
    %v7600 = vunpack.c.l.b16 %v7518
    %v7601 = vunpack.c.h.b16 %v7518
    %v7602 = vunpack.c.l.b16 %v7519
    %v7603 = vunpack.c.h.b16 %v7519
    %v7604 = vunpack.c.l.b16 %v7520
    %v7605 = vunpack.c.h.b16 %v7520
    %v7606 = vunpack.c.l.b16 %v7521
    %v7607 = vunpack.c.h.b16 %v7521
    %v7608 = vunpack.c.l.b16 %v7522
    %v7609 = vunpack.c.h.b16 %v7522
    %v7610 = vunpack.c.l.b16 %v7523
    %v7611 = vunpack.c.h.b16 %v7523
    %v7612 = vunpack.c.l.b16 %v7524
    %v7613 = vunpack.c.h.b16 %v7524
    %v7614 = vunpack.c.l.b16 %v7525
    %v7615 = vunpack.c.h.b16 %v7525
    %v7616 = vunpack.c.l.b16 %v7526
    %v7617 = vunpack.c.h.b16 %v7526
    %v7618 = vunpack.c.l.b16 %v7527
    %v7619 = vunpack.c.h.b16 %v7527
    %v7620 = vunpack.c.l.b16 %v7528
    %v7621 = vunpack.c.h.b16 %v7528
    %v7622 = vunpack.c.l.b16 %v7529
    %v7623 = vunpack.c.h.b16 %v7529
    %v7624 = vunpack.c.l.b16 %v7530
    %v7625 = vunpack.c.h.b16 %v7530
    %v7626 = vunpack.c.l.b16 %v7531
    %v7627 = vunpack.c.h.b16 %v7531
    %v7628 = vunpack.c.l.b16 %v7532
    %v7629 = vunpack.c.h.b16 %v7532
    %v7630 = vunpack.c.l.b16 %v7533
    %v7631 = vunpack.c.h.b16 %v7533
    %v7632 = vunpack.c.l.b16 %v7534
    %v7633 = vunpack.c.h.b16 %v7534
    %v7634 = vunpack.c.l.b16 %v7535
    %v7635 = vunpack.c.h.b16 %v7535
    %v7636 = vunpack.c.l.b16 %v7536
    %v7637 = vunpack.c.h.b16 %v7536
    %v7638 = vunpack.c.l.b16 %v7537
    %v7639 = vunpack.c.h.b16 %v7537
    %v7640 = vunpack.c.l.b16 %v7538
    %v7641 = vunpack.c.h.b16 %v7538
    %v7642 = vunpack.c.l.b16 %v7539
    %v7643 = vunpack.c.h.b16 %v7539
    %v7644 = vunpack.c.l.b16 %v7540
    %v7645 = vunpack.c.h.b16 %v7540
    %v7646 = vunpack.c.l.b16 %v7541
    %v7647 = vunpack.c.h.b16 %v7541
    %v7648 = vunpack.c.l.b16 %v7542
    %v7649 = vunpack.c.h.b16 %v7542
    %v7650 = vunpack.c.l.b16 %v7543
    %v7651 = vunpack.c.h.b16 %v7543
    %v7652 = vunpack.c.l.b16 %v7544
    %v7653 = vunpack.c.h.b16 %v7544
    %v7654 = vunpack.c.l.b16 %v7545
    %v7655 = vunpack.c.h.b16 %v7545
    %v7656 = vunpack.c.l.b16 %v7546
    %v7657 = vunpack.c.h.b16 %v7546
    %v7658 = vpack.c.b16 %v7596, %v7594
    %v7659 = vpack.c.b16 %v7597, %v7595
    %v7660 = vpack.c.b16 %v7600, %v7598
    %v7661 = vpack.c.b16 %v7601, %v7599
    %v7662 = vpack.c.b16 %v7604, %v7602
    %v7663 = vpack.c.b16 %v7605, %v7603
    %v7664 = vpack.c.b16 %v7608, %v7606
    %v7665 = vpack.c.b16 %v7609, %v7607
    %v7666 = vpack.c.b16 %v7612, %v7610
    %v7667 = vpack.c.b16 %v7613, %v7611
    %v7668 = vpack.c.b16 %v7616, %v7614
    %v7669 = vpack.c.b16 %v7617, %v7615
    %v7670 = vpack.c.b16 %v7620, %v7618
    %v7671 = vpack.c.b16 %v7621, %v7619
    %v7672 = vpack.c.b16 %v7624, %v7622
    %v7673 = vpack.c.b16 %v7625, %v7623
    %v7674 = vpack.c.b16 %v7628, %v7626
    %v7675 = vpack.c.b16 %v7629, %v7627
    %v7676 = vpack.c.b16 %v7632, %v7630
    %v7677 = vpack.c.b16 %v7633, %v7631
    %v7678 = vpack.c.b16 %v7636, %v7634
    %v7679 = vpack.c.b16 %v7637, %v7635
    %v7680 = vpack.c.b16 %v7640, %v7638
    %v7681 = vpack.c.b16 %v7641, %v7639
    %v7682 = vpack.c.b16 %v7644, %v7642
    %v7683 = vpack.c.b16 %v7645, %v7643
    %v7684 = vpack.c.b16 %v7648, %v7646
    %v7685 = vpack.c.b16 %v7649, %v7647
    %v7686 = vpack.c.b16 %v7652, %v7650
    %v7687 = vpack.c.b16 %v7653, %v7651
    %v7688 = vpack.c.b16 %v7656, %v7654
    %v7689 = vpack.c.b16 %v7657, %v7655
    %7722 = vmatprep.subr.bf16.mxu0 %v7659
    %7723 = vmatpush1.bf16.msra.mxu0 %v7658
    %7724 = vmatprep.subr.bf16.mxu0 %v7661
    %7725 = vmatpush1.bf16.msra.mxu0 %v7660
    %7726 = vmatprep.subr.bf16.mxu0 %v7663
    %7727 = vmatpush1.bf16.msra.mxu0 %v7662
    %7728 = vmatprep.subr.bf16.mxu0 %v7665
    %7729 = vmatpush1.bf16.msra.mxu0 %v7664
    %7730 = vmatprep.subr.bf16.mxu0 %v7667
    %7731 = vmatpush1.bf16.msra.mxu0 %v7666
    %7732 = vmatprep.subr.bf16.mxu0 %v7669
    %7733 = vmatpush1.bf16.msra.mxu0 %v7668
    %7734 = vmatprep.subr.bf16.mxu0 %v7671
    %7735 = vmatpush1.bf16.msra.mxu0 %v7670
    %7736 = vmatprep.subr.bf16.mxu0 %v7673
    %7737 = vmatpush1.bf16.msra.mxu0 %v7672
    %7738 = vmatprep.subr.bf16.mxu0 %v7675
    %7739 = vmatpush1.bf16.msra.mxu0 %v7674
    %7740 = vmatprep.subr.bf16.mxu0 %v7677
    %7741 = vmatpush1.bf16.msra.mxu0 %v7676
    %7742 = vmatprep.subr.bf16.mxu0 %v7679
    %7743 = vmatpush1.bf16.msra.mxu0 %v7678
    %7744 = vmatprep.subr.bf16.mxu0 %v7681
    %7745 = vmatpush1.bf16.msra.mxu0 %v7680
    %7746 = vmatprep.subr.bf16.mxu0 %v7683
    %7747 = vmatpush1.bf16.msra.mxu0 %v7682
    %7748 = vmatprep.subr.bf16.mxu0 %v7685
    %7749 = vmatpush1.bf16.msra.mxu0 %v7684
    %7750 = vmatprep.subr.bf16.mxu0 %v7687
    %7751 = vmatpush1.bf16.msra.mxu0 %v7686
    %7752 = vmatprep.subr.bf16.mxu0 %v7689
    %7753 = vmatpush1.bf16.msra.mxu0 %v7688
    %7754 = vmatprep.mubr.bf16.mxu0 %v7548
    %7755 = vmatmul.mubr.bf16.gmra.mrb[0].mxu0 %v7547
    %v7756 = vpop.f32.mrb[0].mxu0
    %v7757 = vadd.f32 %v7555, %v7756
    %v7758 = vpop.f32.mrb[0].mxu0
    %v7759 = vadd.f32 %v7559, %v7758
    %v7760 = vpop.f32.mrb[0].mxu0
    %v7761 = vpop.f32.mrb[0].mxu0
    %7762 = vdwg.mxu0
    %v7763 = vadd.f32 %v7757, %v7251
    %v7764 = vadd.f32 %v7759, %v7252
    %s7765 = scalar_lea.vmem %s3, 129
    %v7766 = vld [vmem:[%s7765] ss:$8 sm:$0x3]
    %v7768 = vlaneseq
    %v7769 = vshrl.u32 %v7768, 7
    %v7770 = vsub.s32 0, %v7769
    %v7771 = vrot.slane %v7766, %v7770
    %v7772 = vlaneseq
    %v7773 = vshrl.u32 %v7772, 7
    %v7774 = vsub.s32 1, %v7773
    %v7775 = vrot.slane %v7766, %v7774
    %v7778 = vmul.f32 %v7763, %v7771
    %v7779 = vmul.f32 %v7764, %v7775
    %v7780 = vsel %vm6187, %v7778, 0.0
    %v7781 = vsel %vm6187, %v7779, 0.0
    %v7782 = vadd.f32 %v7780, %v7781
    %7783 = vadd.xlane.f32.xlu0 %v7782
    %v7784 = vpop.xlane.xlu0 %7783
    %v7785 = vld [vmem:[%s3 + $0x82] ss:$0 sm:$0xff]
    %v7786 = vadd.f32 %v7784, %v7785
    %vm7787 = vcmask 1024
    %7788 = vst.msk [vmem:[%s6] sm:$0x3] %vm7787, %v7786
    // Predicated region
    $region26: #{mult_model_forward.1} parent=1 // pred_check
      _
    $region27: #{mult_model_forward.1} parent=1 // pred_check_branch
      %7790 = sbr.rel (0) target = $region29
    $region28: #{mult_model_forward.1} parent=1 // pred_region
      _
    $region29: #{mult_model_forward.1} parent=1 // pred_fallthru
      _
    // Predicated region
    $region30: #{mult_model_forward.1} parent=1 // pred_check
      _
    $region31: #{mult_model_forward.1} parent=1 // pred_check_branch
      %7792 = sbr.rel (0) target = $region33
    $region32: #{mult_model_forward.1} parent=1 // pred_region
      %s7794 = ssub.s32 64, 64
      %7795 = vsyncadd [#allocation4], %s7794
      %s7797 = sshll.u32 [#allocation3], 4
      %s7798 = int_to_ptr.vmem [resolvable:$true] %s7797
      %7800 = dma.vmem_to_hbm [thread:$0]  %s7798, 64, %s7, [#allocation4]
    $region33: #{mult_model_forward.1} parent=1 // pred_fallthru
      _
    // Predicated region
    $region34: #{mult_model_forward.1} parent=1 // pred_check
      _
    $region35: #{mult_model_forward.1} parent=1 // pred_check_branch
      %7802 = sbr.rel (0) target = $region37
    $region36: #{mult_model_forward.1} parent=1 // pred_region
      _
    $region37: #{mult_model_forward.1} parent=1 // pred_fallthru
      _
    // Predicated region
    $region38: #{mult_model_forward.1} parent=1 // pred_check
      _
    $region39: #{mult_model_forward.1} parent=1 // pred_check_branch
      %7804 = sbr.rel (0) target = $region41
    $region40: #{mult_model_forward.1} parent=1 // pred_region
      %7805 = dma.done [#allocation4], 64
    $region41: #{mult_model_forward.1} parent=1 // pred_fallthru
      _
    %7806 = vsyncpa [#allocation4], 1

</llo_original>
